<compile_context>
chip_gen: v5e
topology: v5e:2x2
jax: 0.10.0
libtpu: 0.0.40
codegen_flags: <defaults>
</compile_context>

<pallas_src>
import jax
import jax.numpy as jnp
from jax import lax
from jax.experimental import pallas as pl
from jax.experimental.pallas import tpu as pltpu

EPS = 1e-5


def _bn_relu(y, gb):
    """Training-mode BatchNorm1d (batch stats, biased var) + ReLU.

    y:  (B, C) f32 pre-activation
    gb: (2, C) f32, row 0 = gamma, row 1 = beta
    Scale/shift form: out = max(y*scale + shift, 0); rsqrt -> EUP slot.
    """
    mean = jnp.mean(y, axis=0, keepdims=True)
    var = jnp.mean((y - mean) ** 2, axis=0, keepdims=True)   # two-pass: stable
    scale = gb[0:1, :] * lax.rsqrt(var + EPS)
    shift = gb[1:2, :] - mean * scale
    return jnp.maximum(y * scale + shift, 0.0)


def pooled_fc_head_kernel(feat_ref, w1_ref, gb1_ref, w2_ref, gb2_ref,
                          w3_ref, b3_ref, o_ref, pooled_ref):
    n = pl.program_id(0)

    # ---- global max-pool over point tiles (running accumulator in VMEM) ----
    @pl.when(n == 0)
    def _():
        pooled_ref[...] = jnp.full_like(pooled_ref, -jnp.inf)

    # feat tile: (B, TN, 1024) bf16; max is exact in bf16, cross-sublane reduce
    # goes to the XLU slot (compute is essentially free in this mem-bound loop).
    tile_max = jnp.max(feat_ref[...], axis=1).astype(jnp.float32)     # (B, 1024)
    pooled_ref[...] = jnp.maximum(pooled_ref[...], tile_max)

    # ---- fc head epilogue on the last point tile ----
    @pl.when(n == pl.num_programs(0) - 1)
    def _():
        x = pooled_ref[...].astype(jnp.bfloat16)   # exact: values came from bf16
        # fc1 -> bn1 -> relu (Linear bias dropped: cancelled by BN mean sub)
        h = jnp.dot(x, w1_ref[...], preferred_element_type=jnp.float32)
        h = _bn_relu(h, gb1_ref[...])
        # fc2 -> bn2 -> relu
        h = jnp.dot(h.astype(jnp.bfloat16), w2_ref[...],
                    preferred_element_type=jnp.float32)
        h = _bn_relu(h, gb2_ref[...])
        # fc3: plain Linear (bias kept; "+ identity" pre-folded into it).
        # Output columns zero-padded to 128 lanes -> unmasked vst.
        o = jnp.dot(h.astype(jnp.bfloat16), w3_ref[...],
                    preferred_element_type=jnp.float32) + b3_ref[...]
        o_ref[...] = o.astype(o_ref.dtype)


def pooled_fc_head_forward(feat, w1, gb1, w2, gb2, w3_pad, b3_pad, *, tile_n=128):
    """feat: (B, N, 1024) bf16 per-point features (post conv2d3/conv5 + ReLU).
    Weights bf16, pre-transposed to (in, out).  Returns (B, out_pad) f32,
    out_pad a multiple of 128."""
    B, N, C_IN = feat.shape
    H1, H2 = w1.shape[1], w2.shape[1]
    OUT_PAD = w3_pad.shape[1]

    assert B >= 2, "train-mode BatchNorm batch statistics degenerate for B < 2"
    tile_n = min(tile_n, N)
    # TODO(synk): ragged point counts need a masked (-inf padded) last tile.
    assert N % tile_n == 0, "N must be a multiple of the point tile size"
    grid = (N // tile_n,)

    flops = 2 * B * (C_IN * H1 + H1 * H2 + H2 * OUT_PAD) + B * N * C_IN
    bytes_accessed = (feat.size * feat.dtype.itemsize
                      + (w1.size + w2.size + w3_pad.size) * 2
                      + (gb1.size + gb2.size + b3_pad.size) * 4
                      + B * OUT_PAD * 4)

    return pl.pallas_call(
        pooled_fc_head_kernel,
        out_shape=jax.ShapeDtypeStruct((B, OUT_PAD), jnp.float32),
        grid_spec=pltpu.PrefetchScalarGridSpec(
            num_scalar_prefetch=0,
            grid=grid,
            in_specs=[
                # per-point features: streamed one point-tile per grid step
                pl.BlockSpec((B, tile_n, C_IN), lambda n: (0, n, 0)),
                # weights / BN params: constant block index -> VMEM-resident,
                # DMA'd once and hidden behind the feature stream
                pl.BlockSpec((C_IN, H1), lambda n: (0, 0)),
                pl.BlockSpec((2, H1), lambda n: (0, 0)),
                pl.BlockSpec((H1, H2), lambda n: (0, 0)),
                pl.BlockSpec((2, H2), lambda n: (0, 0)),
                pl.BlockSpec((H2, OUT_PAD), lambda n: (0, 0)),
                pl.BlockSpec((1, OUT_PAD), lambda n: (0, 0)),
            ],
            out_specs=pl.BlockSpec((B, OUT_PAD), lambda n: (0, 0)),
            scratch_shapes=[pltpu.VMEM((B, C_IN), jnp.float32)],   # pooled max
        ),
        compiler_params=pltpu.CompilerParams(
            dimension_semantics=("arbitrary",),      # reduction axis
            vmem_limit_bytes=32 * 1024 * 1024,
        ),
        cost_estimate=pl.CostEstimate(
            flops=int(flops),
            transcendentals=int(H1 + H2),
            bytes_accessed=int(bytes_accessed)),
    )(feat, w1, gb1, w2, gb2, w3_pad, b3_pad)


# ----------------------------- references ----------------------------------

def reference_pooled_fc_head(feat, w1, b1, gb1, w2, b2, gb2, w3, b3_eff):
    """PyTorch-faithful reference (keeps fc1/fc2 biases, textbook BN formula)
    using the same bf16 weight values / matmul casts as the kernel."""
    def bn_relu(y, gb):
        mean = jnp.mean(y, axis=0, keepdims=True)
        var = jnp.mean((y - mean) ** 2, axis=0, keepdims=True)
        y = gb[0:1] * (y - mean) / jnp.sqrt(var + EPS) + gb[1:2]
        return jnp.maximum(y, 0.0)

    x = jnp.max(feat.astype(jnp.float32), axis=1)                    # (B, 1024)
    h = jnp.dot(x.astype(jnp.bfloat16), w1, preferred_element_type=jnp.float32) + b1
    h = bn_relu(h, gb1)
    h = jnp.dot(h.astype(jnp.bfloat16), w2, preferred_element_type=jnp.float32) + b2
    h = bn_relu(h, gb2)
    return jnp.dot(h.astype(jnp.bfloat16), w3, preferred_element_type=jnp.float32) + b3_eff


def reference_pooled_fc_head_f32(feat_f32, w1, b1, gb1, w2, b2, gb2, w3, b3_eff):
    """Pure-f32 model (no bf16 anywhere) -- fidelity check target."""
    def bn_relu(y, gb):
        mean = jnp.mean(y, axis=0, keepdims=True)
        var = jnp.mean((y - mean) ** 2, axis=0, keepdims=True)
        y = gb[0:1] * (y - mean) / jnp.sqrt(var + EPS) + gb[1:2]
        return jnp.maximum(y, 0.0)

    x = jnp.max(feat_f32, axis=1)
    h = bn_relu(jnp.dot(x, w1) + b1, gb1)
    h = bn_relu(jnp.dot(h, w2) + b2, gb2)
    return jnp.dot(h, w3) + b3_eff


if __name__ == "__main__":
    # Shapes implied by PointNet's transform_net: per-point 1024-dim features,
    # global max-pool over N points, then 1024 -> 512 -> 256 -> K*K (K=3).
    B, N, IN, H1, H2, K = 16, 256, 1024, 512, 256, 3
    OUT = K * K
    OUT_PAD = ((OUT + 127) // 128) * 128          # lane-dense final output (9 -> 128)

    key = jax.random.PRNGKey(0)
    kf, k1, k2, k3 = jax.random.split(key, 4)

    # Per-point features as produced by conv2d3/conv5 (ReLU'd, hence >= 0),
    # laid out (B, N, C) with the feature dim on lanes; fed to the kernel in bf16.
    feat_f32 = jax.nn.relu(jax.random.normal(kf, (B, N, IN), dtype=jnp.float32))
    feat = feat_f32.astype(jnp.bfloat16)

    def linear_init(k, fan_in, fan_out):
        bound = 1.0 / jnp.sqrt(fan_in)
        kw, kb = jax.random.split(k)
        w = jax.random.uniform(kw, (fan_in, fan_out), jnp.float32, -bound, bound)
        b = jax.random.uniform(kb, (1, fan_out), jnp.float32, -bound, bound)
        return w, b

    w1, b1 = linear_init(k1, IN, H1)
    w2, b2 = linear_init(k2, H1, H2)
    w3, b3 = linear_init(k3, H2, OUT)

    # BatchNorm1d default init packed as (2, C): row 0 = gamma(=1), row 1 = beta(=0).
    gb1 = jnp.concatenate([jnp.ones((1, H1)), jnp.zeros((1, H1))], 0).astype(jnp.float32)
    gb2 = jnp.concatenate([jnp.ones((1, H2)), jnp.zeros((1, H2))], 0).astype(jnp.float32)

    # bf16 weights (halved HBM bytes); f32 accumulation happens on the MXU.
    w1_b = w1.astype(jnp.bfloat16)
    w2_b = w2.astype(jnp.bfloat16)

    # Fold transform_net's "+ flattened identity" into the fc3 bias, then pad
    # fc3 weight/bias columns to the 128-lane boundary (padding stays zero).
    # (For the classifier head, use the plain fc3 bias and num_class columns.)
    b3_eff = b3 + jnp.eye(K, dtype=jnp.float32).reshape(1, OUT)
    w3_pad = jnp.zeros((H2, OUT_PAD), jnp.bfloat16).at[:, :OUT].set(w3.astype(jnp.bfloat16))
    b3_pad = jnp.zeros((1, OUT_PAD), jnp.float32).at[:, :OUT].set(b3_eff)

    out_pad = pooled_fc_head_forward(feat, w1_b, gb1, w2_b, gb2, w3_pad, b3_pad)
    jax.block_until_ready(out_pad)

    transform = out_pad[:, :OUT].reshape(B, K, K)   # (B, 3, 3) transform matrices

    # Tight check against a reference that applies the identical bf16 casts.
    ref = reference_pooled_fc_head(feat, w1_b, b1, gb1, w2_b, b2, gb2,
                                   w3.astype(jnp.bfloat16), b3_eff).reshape(B, K, K)
    assert transform.shape == (B, K, K)
    assert bool(jnp.all(jnp.isfinite(transform)))
    assert jnp.allclose(transform, ref, atol=2e-3, rtol=2e-3), (
        float(jnp.max(jnp.abs(transform - ref))))

    # Loose fidelity check against the full-f32 PyTorch-equivalent model
    # (quantifies the bf16 weight/activation approximation).
    ref_f32 = reference_pooled_fc_head_f32(feat_f32, w1, b1, gb1, w2, b2, gb2,
                                           w3, b3_eff).reshape(B, K, K)
    assert jnp.allclose(transform, ref_f32, atol=1e-1), (
        float(jnp.max(jnp.abs(transform - ref_f32))))

    print("KERNEL_OK")
</pallas_src>

<mosaic_0001>
module attributes {stable_mosaic.version = 11 : i64} {
  func.func @pooled_fc_head_kernel(%arg0: i32, %arg1: memref<16x128x1024xbf16, #tpu.memory_space<vmem>>, %arg2: memref<1024x512xbf16, #tpu.memory_space<vmem>>, %arg3: memref<2x512xf32, #tpu.memory_space<vmem>>, %arg4: memref<512x256xbf16, #tpu.memory_space<vmem>>, %arg5: memref<2x256xf32, #tpu.memory_space<vmem>>, %arg6: memref<256x128xbf16, #tpu.memory_space<vmem>>, %arg7: memref<1x128xf32, #tpu.memory_space<vmem>>, %arg8: memref<16x128xf32, #tpu.memory_space<vmem>>, %arg9: memref<16x1024xf32, #tpu.memory_space<vmem>>) attributes {dimension_semantics = [#tpu.dimension_semantics<arbitrary>], iteration_bounds = array<i64: 2>, scalar_prefetch = 0 : i64, scratch_operands = 1 : i64, tpu.core_type = #tpu.core_type<tc>, window_params = [{transform_indices = @transform_0, window_bounds = array<i64: 16, 128, 1024>}, {pipeline_mode = #tpu.pipeline_mode<synchronous>, transform_indices = @transform_1, window_bounds = array<i64: 1024, 512>}, {pipeline_mode = #tpu.pipeline_mode<synchronous>, transform_indices = @transform_2, window_bounds = array<i64: 2, 512>}, {pipeline_mode = #tpu.pipeline_mode<synchronous>, transform_indices = @transform_3, window_bounds = array<i64: 512, 256>}, {pipeline_mode = #tpu.pipeline_mode<synchronous>, transform_indices = @transform_4, window_bounds = array<i64: 2, 256>}, {pipeline_mode = #tpu.pipeline_mode<synchronous>, transform_indices = @transform_5, window_bounds = array<i64: 256, 128>}, {pipeline_mode = #tpu.pipeline_mode<synchronous>, transform_indices = @transform_6, window_bounds = array<i64: 1, 128>}, {pipeline_mode = #tpu.pipeline_mode<synchronous>, transform_indices = @transform_7, window_bounds = array<i64: 16, 128>}]} {
    %c0_i32 = arith.constant 0 : i32
    %0 = arith.cmpi eq, %arg0, %c0_i32 : i32
    %1 = arith.extui %0 : i1 to i32
    %c0_i32_0 = arith.constant 0 : i32
    %2 = arith.cmpi ne, %1, %c0_i32_0 : i32
    scf.if %2 {
      %cst_8 = arith.constant 0xFF800000 : f32
      %12 = vector.broadcast %cst_8 : f32 to vector<16x1024xf32>
      %c0_9 = arith.constant 0 : index
      %c0_10 = arith.constant 0 : index
      %13 = vector.load %arg9[%c0_9, %c0_10] : memref<16x1024xf32, #tpu.memory_space<vmem>>, vector<16x1024xf32>
      tpu.vector_store %arg9[%c0_9, %c0_10], %12 {strides = array<i32>} : memref<16x1024xf32, #tpu.memory_space<vmem>>, vector<16x1024xf32>,
    } else {
    }
    %c0 = arith.constant 0 : index
    %c0_1 = arith.constant 0 : index
    %c0_2 = arith.constant 0 : index
    %3 = vector.load %arg1[%c0, %c0_1, %c0_2] : memref<16x128x1024xbf16, #tpu.memory_space<vmem>>, vector<16x128x1024xbf16>
    %cst = arith.constant dense<0xFF80> : vector<16x1024xbf16>
    %4 = vector.multi_reduction <maximumf>, %3, %cst [1] : vector<16x128x1024xbf16> to vector<16x1024xbf16>
    %5 = arith.extf %4 : vector<16x1024xbf16> to vector<16x1024xf32>
    %c0_3 = arith.constant 0 : index
    %c0_4 = arith.constant 0 : index
    %6 = vector.load %arg9[%c0_3, %c0_4] : memref<16x1024xf32, #tpu.memory_space<vmem>>, vector<16x1024xf32>
    %7 = arith.maximumf %6, %5 : vector<16x1024xf32>
    %c0_5 = arith.constant 0 : index
    %c0_6 = arith.constant 0 : index
    %8 = vector.load %arg9[%c0_5, %c0_6] : memref<16x1024xf32, #tpu.memory_space<vmem>>, vector<16x1024xf32>
    tpu.vector_store %arg9[%c0_5, %c0_6], %7 {strides = array<i32>} : memref<16x1024xf32, #tpu.memory_space<vmem>>, vector<16x1024xf32>,
    %c1_i32 = arith.constant 1 : i32
    %9 = arith.cmpi eq, %arg0, %c1_i32 : i32
    %10 = arith.extui %9 : i1 to i32
    %c0_i32_7 = arith.constant 0 : i32
    %11 = arith.cmpi ne, %10, %c0_i32_7 : i32
    scf.if %11 {
      %c0_8 = arith.constant 0 : index
      %c0_9 = arith.constant 0 : index
      %12 = vector.load %arg9[%c0_8, %c0_9] : memref<16x1024xf32, #tpu.memory_space<vmem>>, vector<16x1024xf32>
      %13 = arith.truncf %12 : vector<16x1024xf32> to vector<16x1024xbf16>
      %c0_10 = arith.constant 0 : index
      %c0_11 = arith.constant 0 : index
      %14 = vector.load %arg2[%c0_10, %c0_11] : memref<1024x512xbf16, #tpu.memory_space<vmem>>, vector<1024x512xbf16>
      %cst_12 = arith.constant dense<0.000000e+00> : vector<16x512xf32>
      %15 = tpu.matmul %13, %14, %cst_12 {dimension_numbers = #tpu.dot_dimension_numbers<[1], [0], [0], [1], [0, 0, 1, 1], [], []>} : vector<16x1024xbf16>, vector<1024x512xbf16>, vector<16x512xf32> -> vector<16x512xf32>
      %c0_13 = arith.constant 0 : index
      %c0_14 = arith.constant 0 : index
      %16 = vector.load %arg3[%c0_13, %c0_14] : memref<2x512xf32, #tpu.memory_space<vmem>>, vector<2x512xf32>
      %cst_15 = arith.constant dense<0.000000e+00> : vector<512xf32>
      %17 = vector.multi_reduction <add>, %15, %cst_15 [0] : vector<16x512xf32> to vector<512xf32>
      %18 = vector.shape_cast %17 : vector<512xf32> to vector<1x512xf32>
      %cst_16 = arith.constant 1.600000e+01 : f32
      %19 = vector.broadcast %cst_16 : f32 to vector<1x512xf32>
      %20 = arith.divf %18, %19 : vector<1x512xf32>
      %21 = vector.broadcast %20 : vector<1x512xf32> to vector<16x512xf32>
      %22 = arith.subf %15, %21 : vector<16x512xf32>
      %23 = arith.mulf %22, %22 : vector<16x512xf32>
      %cst_17 = arith.constant dense<0.000000e+00> : vector<512xf32>
      %24 = vector.multi_reduction <add>, %23, %cst_17 [0] : vector<16x512xf32> to vector<512xf32>
      %25 = vector.shape_cast %24 : vector<512xf32> to vector<1x512xf32>
      %cst_18 = arith.constant 1.600000e+01 : f32
      %26 = vector.broadcast %cst_18 : f32 to vector<1x512xf32>
      %27 = arith.divf %25, %26 : vector<1x512xf32>
      %28 = vector.extract_strided_slice %16 {offsets = [0, 0], sizes = [1, 512], strides = [1, 1]} : vector<2x512xf32> to vector<1x512xf32>
      %cst_19 = arith.constant 9.99999974E-6 : f32
      %29 = vector.broadcast %cst_19 : f32 to vector<1x512xf32>
      %30 = arith.addf %27, %29 : vector<1x512xf32>
      %31 = math.rsqrt %30 : vector<1x512xf32>
      %32 = arith.mulf %28, %31 : vector<1x512xf32>
      %33 = vector.extract_strided_slice %16 {offsets = [1, 0], sizes = [1, 512], strides = [1, 1]} : vector<2x512xf32> to vector<1x512xf32>
      %34 = arith.mulf %20, %32 : vector<1x512xf32>
      %35 = arith.subf %33, %34 : vector<1x512xf32>
      %36 = vector.broadcast %32 : vector<1x512xf32> to vector<16x512xf32>
      %37 = arith.mulf %15, %36 : vector<16x512xf32>
      %38 = vector.broadcast %35 : vector<1x512xf32> to vector<16x512xf32>
      %39 = arith.addf %37, %38 : vector<16x512xf32>
      %cst_20 = arith.constant 0.000000e+00 : f32
      %40 = vector.broadcast %cst_20 : f32 to vector<16x512xf32>
      %41 = arith.maximumf %39, %40 : vector<16x512xf32>
      %42 = arith.truncf %41 : vector<16x512xf32> to vector<16x512xbf16>
      %c0_21 = arith.constant 0 : index
      %c0_22 = arith.constant 0 : index
      %43 = vector.load %arg4[%c0_21, %c0_22] : memref<512x256xbf16, #tpu.memory_space<vmem>>, vector<512x256xbf16>
      %cst_23 = arith.constant dense<0.000000e+00> : vector<16x256xf32>
      %44 = tpu.matmul %42, %43, %cst_23 {dimension_numbers = #tpu.dot_dimension_numbers<[1], [0], [0], [1], [0, 0, 1, 1], [], []>} : vector<16x512xbf16>, vector<512x256xbf16>, vector<16x256xf32> -> vector<16x256xf32>
      %c0_24 = arith.constant 0 : index
      %c0_25 = arith.constant 0 : index
      %45 = vector.load %arg5[%c0_24, %c0_25] : memref<2x256xf32, #tpu.memory_space<vmem>>, vector<2x256xf32>
      %cst_26 = arith.constant dense<0.000000e+00> : vector<256xf32>
      %46 = vector.multi_reduction <add>, %44, %cst_26 [0] : vector<16x256xf32> to vector<256xf32>
      %47 = vector.shape_cast %46 : vector<256xf32> to vector<1x256xf32>
      %cst_27 = arith.constant 1.600000e+01 : f32
      %48 = vector.broadcast %cst_27 : f32 to vector<1x256xf32>
      %49 = arith.divf %47, %48 : vector<1x256xf32>
      %50 = vector.broadcast %49 : vector<1x256xf32> to vector<16x256xf32>
      %51 = arith.subf %44, %50 : vector<16x256xf32>
      %52 = arith.mulf %51, %51 : vector<16x256xf32>
      %cst_28 = arith.constant dense<0.000000e+00> : vector<256xf32>
      %53 = vector.multi_reduction <add>, %52, %cst_28 [0] : vector<16x256xf32> to vector<256xf32>
      %54 = vector.shape_cast %53 : vector<256xf32> to vector<1x256xf32>
      %cst_29 = arith.constant 1.600000e+01 : f32
      %55 = vector.broadcast %cst_29 : f32 to vector<1x256xf32>
      %56 = arith.divf %54, %55 : vector<1x256xf32>
      %57 = vector.extract_strided_slice %45 {offsets = [0, 0], sizes = [1, 256], strides = [1, 1]} : vector<2x256xf32> to vector<1x256xf32>
      %cst_30 = arith.constant 9.99999974E-6 : f32
      %58 = vector.broadcast %cst_30 : f32 to vector<1x256xf32>
      %59 = arith.addf %56, %58 : vector<1x256xf32>
      %60 = math.rsqrt %59 : vector<1x256xf32>
      %61 = arith.mulf %57, %60 : vector<1x256xf32>
      %62 = vector.extract_strided_slice %45 {offsets = [1, 0], sizes = [1, 256], strides = [1, 1]} : vector<2x256xf32> to vector<1x256xf32>
      %63 = arith.mulf %49, %61 : vector<1x256xf32>
      %64 = arith.subf %62, %63 : vector<1x256xf32>
      %65 = vector.broadcast %61 : vector<1x256xf32> to vector<16x256xf32>
      %66 = arith.mulf %44, %65 : vector<16x256xf32>
      %67 = vector.broadcast %64 : vector<1x256xf32> to vector<16x256xf32>
      %68 = arith.addf %66, %67 : vector<16x256xf32>
      %cst_31 = arith.constant 0.000000e+00 : f32
      %69 = vector.broadcast %cst_31 : f32 to vector<16x256xf32>
      %70 = arith.maximumf %68, %69 : vector<16x256xf32>
      %71 = arith.truncf %70 : vector<16x256xf32> to vector<16x256xbf16>
      %c0_32 = arith.constant 0 : index
      %c0_33 = arith.constant 0 : index
      %72 = vector.load %arg6[%c0_32, %c0_33] : memref<256x128xbf16, #tpu.memory_space<vmem>>, vector<256x128xbf16>
      %cst_34 = arith.constant dense<0.000000e+00> : vector<16x128xf32>
      %73 = tpu.matmul %71, %72, %cst_34 {dimension_numbers = #tpu.dot_dimension_numbers<[1], [0], [0], [1], [0, 0, 1, 1], [], []>} : vector<16x256xbf16>, vector<256x128xbf16>, vector<16x128xf32> -> vector<16x128xf32>
      %c0_35 = arith.constant 0 : index
      %c0_36 = arith.constant 0 : index
      %74 = vector.load %arg7[%c0_35, %c0_36] : memref<1x128xf32, #tpu.memory_space<vmem>>, vector<1x128xf32>
      %75 = vector.broadcast %74 : vector<1x128xf32> to vector<16x128xf32>
      %76 = arith.addf %73, %75 : vector<16x128xf32>
      %c0_37 = arith.constant 0 : index
      %c0_38 = arith.constant 0 : index
      %77 = vector.load %arg8[%c0_37, %c0_38] : memref<16x128xf32, #tpu.memory_space<vmem>>, vector<16x128xf32>
      tpu.vector_store %arg8[%c0_37, %c0_38], %76 {strides = array<i32>} : memref<16x128xf32, #tpu.memory_space<vmem>>, vector<16x128xf32>,
    } else {
    }
    return
  }
  func.func @transform_0(%arg0: i32) -> (i32, i32, i32) {
    %c0_i32 = arith.constant 0 : i32
    %c0_i32_0 = arith.constant 0 : i32
    %c0_i32_1 = arith.constant 0 : i32
    return %c0_i32, %arg0, %c0_i32_0 : i32, i32, i32
  }
  func.func @transform_1(%arg0: i32) -> (i32, i32) {
    %c0_i32 = arith.constant 0 : i32
    %c0_i32_0 = arith.constant 0 : i32
    %c0_i32_1 = arith.constant 0 : i32
    return %c0_i32, %c0_i32_0 : i32, i32
  }
  func.func @transform_2(%arg0: i32) -> (i32, i32) {
    %c0_i32 = arith.constant 0 : i32
    %c0_i32_0 = arith.constant 0 : i32
    %c0_i32_1 = arith.constant 0 : i32
    return %c0_i32, %c0_i32_0 : i32, i32
  }
  func.func @transform_3(%arg0: i32) -> (i32, i32) {
    %c0_i32 = arith.constant 0 : i32
    %c0_i32_0 = arith.constant 0 : i32
    %c0_i32_1 = arith.constant 0 : i32
    return %c0_i32, %c0_i32_0 : i32, i32
  }
  func.func @transform_4(%arg0: i32) -> (i32, i32) {
    %c0_i32 = arith.constant 0 : i32
    %c0_i32_0 = arith.constant 0 : i32
    %c0_i32_1 = arith.constant 0 : i32
    return %c0_i32, %c0_i32_0 : i32, i32
  }
  func.func @transform_5(%arg0: i32) -> (i32, i32) {
    %c0_i32 = arith.constant 0 : i32
    %c0_i32_0 = arith.constant 0 : i32
    %c0_i32_1 = arith.constant 0 : i32
    return %c0_i32, %c0_i32_0 : i32, i32
  }
  func.func @transform_6(%arg0: i32) -> (i32, i32) {
    %c0_i32 = arith.constant 0 : i32
    %c0_i32_0 = arith.constant 0 : i32
    %c0_i32_1 = arith.constant 0 : i32
    return %c0_i32, %c0_i32_0 : i32, i32
  }
  func.func @transform_7(%arg0: i32) -> (i32, i32) {
    %c0_i32 = arith.constant 0 : i32
    %c0_i32_0 = arith.constant 0 : i32
    %c0_i32_1 = arith.constant 0 : i32
    return %c0_i32, %c0_i32_0 : i32, i32
  }
}

</mosaic_0001>

<llo_original>
// kernel: tpu_custom_call.1
$region0: #{tpu_custom_call.1}
  #allocation0 [shape = 'u32[]', space=smem, size = 0x4, offset = 0x4, fixed_abs, tag = 'smem constant byte address 0x4 - core index']
  #allocation1 [shape = 'u32[72,128]{1,0:T(1,128)}', space=vmem, size = 0x9000, scoped, tag = 'internal scratch']
  #allocation2 [shape = 'f32[16,1024]{1,0:T(8,128)}', space=vmem, size = 0x10000, scoped, tag = 'scratch operand']
  #allocation16 [shape = 's32[]', space=sflag, size = 0x4, offset = 0, fixed_abs, tag = 'sflag constant byte address 0x0 - dummy sync flag']
  %s0 = inlined_call_operand.hbm [shape: bf16[16,256,1024], index: 0, kind: input, shape index: {}]
  %s1 = inlined_call_operand.hbm [shape: bf16[1024,512], index: 1, kind: input, shape index: {}]
  %s2 = inlined_call_operand.hbm [shape: f32[2,512], index: 2, kind: input, shape index: {}]
  %s3 = inlined_call_operand.hbm [shape: bf16[512,256], index: 3, kind: input, shape index: {}]
  %s4 = inlined_call_operand.hbm [shape: f32[2,256], index: 4, kind: input, shape index: {}]
  %s5 = inlined_call_operand.hbm [shape: bf16[256,128], index: 5, kind: input, shape index: {}]
  %s6 = inlined_call_operand.hbm [shape: f32[1,128], index: 6, kind: input, shape index: {}]
  %s7 = inlined_call_operand.hbm [shape: f32[16,128], index: 7, kind: output, shape index: {}]
  %s8 = sld [smem:[#allocation0]]
  $region97: #{tpu_custom_call.1} parent=0
    _
  %s10 = ssub.s32 1, %s8
  %s11 = scalar_select 0, %s10, %s8
  $region1: #{tpu_custom_call.1} parent=0
    #allocation3 [shape = 'u8[8388608]{0}', space=vmem, size = 0x800000, scoped, tag = 'input window, operand 0']
    #allocation4 [shape = 's32[2]{0}', space=sflag, size = 0x8, scoped, tag = 'scoped memory for tpu_custom_call.1']
    #allocation5 [shape = 's32[2]{0}', space=sflag, size = 0x8, scoped, tag = 'scoped memory for tpu_custom_call.1']
    #allocation6 [shape = 'u8[1048576]{0}', space=vmem, size = 0x100000, scoped, tag = 'input window, operand 1, single buffered']
    #allocation7 [shape = 's32[1]{0}', space=sflag, size = 0x4, scoped, tag = 'scoped memory for tpu_custom_call.1']
    #allocation8 [shape = 'u8[4096]{0}', space=vmem, size = 0x1000, scoped, tag = 'input window, operand 2, single buffered']
    #allocation9 [shape = 'u8[262144]{0}', space=vmem, size = 0x40000, scoped, tag = 'input window, operand 3, single buffered']
    #allocation10 [shape = 's32[1]{0}', space=sflag, size = 0x4, scoped, tag = 'scoped memory for tpu_custom_call.1']
    #allocation11 [shape = 'u8[2048]{0}', space=vmem, size = 0x800, scoped, tag = 'input window, operand 4, single buffered']
    #allocation12 [shape = 'u8[65536]{0}', space=vmem, size = 0x10000, scoped, tag = 'input window, operand 5, single buffered']
    #allocation13 [shape = 's32[1]{0}', space=sflag, size = 0x4, scoped, tag = 'scoped memory for tpu_custom_call.1']
    #allocation14 [shape = 'u8[512]{0}', space=vmem, size = 0x400, scoped, tag = 'input window, operand 6, single buffered']
    #allocation15 [shape = 'u8[8192]{0}', space=vmem, size = 0x2000, scoped, tag = 'output window, operand 0, single buffered']
    %12 = vsyncpa [#allocation4], 0
    %s13 = scalar_lea.sflag [#allocation4], 1
    %14 = vsyncpa %s13, 0
    %15 = vsyncpa [#allocation7], 0
    %16 = vsyncpa [#allocation10], 0
    %17 = vsyncpa [#allocation13], 0
    %18 = vsyncpa [#allocation5], 0
    loop: start=0, step=1, limit=4
    $region2: #{tpu_custom_call.1} parent=1 // loop_pre_header
      _
    $region3: #{tpu_custom_call.1} parent=1 // loop_header
      %s20 = sphi 0, %s24
      %p21 = scmp.ge.s32.totalorder %s20, 4
      %s30 = sphi 0, %s32
      %s33 = sphi 0, %s30
      %s34 = sphi 0, %s33
      %s50 = sphi 0, %s34
      %s54 = sphi 0, %s54
      %s56 = sphi 0, %s54
      %s57 = sphi 0, %s56
      %s71 = sphi 0, %s57
      %s75 = sphi 0, %s75
      %s77 = sphi 0, %s75
      %s78 = sphi 0, %s77
      %s92 = sphi 0, %s78
      %s96 = sphi 0, %s96
      %s98 = sphi 0, %s96
      %s99 = sphi 0, %s98
      %s113 = sphi 0, %s99
      %s117 = sphi 0, %s117
      %s119 = sphi 0, %s117
      %s120 = sphi 0, %s119
      %s134 = sphi 0, %s120
      %s138 = sphi 0, %s138
      %s140 = sphi 0, %s138
      %s141 = sphi 0, %s140
      %s155 = sphi 0, %s141
      %s159 = sphi 0, %s159
      %s161 = sphi 0, %s159
      %s162 = sphi 0, %s161
      %s176 = sphi 0, %s162
      %s180 = sphi 0, %s180
      %s182 = sphi 0, %s180
      %s183 = sphi 0, %s182
      %s197 = sphi 0, %s183
    $region4: #{tpu_custom_call.1} parent=1 // loop_header_branch
      %23 = sbr.rel (%p21) target = $region8
    $region5: #{tpu_custom_call.1} parent=1 // loop_body
      %s25 = ssub.s32 %s20, 1
      %s26 = ssub.s32 %s20, 2
      %s27 = sadd.s32 %s20, 1
      %s28 = ssub.s32 %s20, %s27
      %p29 = scmp.eq.s32.totalorder %s28, 0
      %s31 = sadd.s32 %s30, 1
      %s32 = scalar_select %p29, %s30, %s31
      %p35 = pneg %p29
      %p36 = scmp.eq.s32.totalorder %s20, 1
      %p37 = por %p35, %p36
      %p38 = scmp.ne.s32.totalorder %s30, %s33
      %p39 = scmp.eq.s32.totalorder %s20, 0
      %p40 = por %p38, %p39
      %p41 = scmp.ne.s32.totalorder %s30, %s33
      %p42 = scmp.eq.s32.totalorder %s25, 1
      %p43 = por %p41, %p42
      %p44 = scmp.ne.s32.totalorder %s33, %s34
      %p45 = scmp.eq.s32.totalorder %s25, 0
      %p46 = por %p44, %p45
      %p47 = scmp.ne.s32.totalorder %s33, %s34
      %p48 = scmp.eq.s32.totalorder %s26, 1
      %p49 = por %p47, %p48
      %p51 = scmp.ne.s32.totalorder %s34, %s50
      %p52 = scmp.eq.s32.totalorder %s26, 0
      %p53 = por %p51, %p52
      %s55 = sadd.s32 %s54, 1
      %p58 = scmp.eq.s32.totalorder %s20, 1
      %p59 = scmp.ne.s32.totalorder %s54, %s56
      %p60 = scmp.eq.s32.totalorder %s20, 0
      %p61 = por %p59, %p60
      %p62 = scmp.ne.s32.totalorder %s54, %s56
      %p63 = scmp.eq.s32.totalorder %s25, 1
      %p64 = por %p62, %p63
      %p65 = scmp.ne.s32.totalorder %s56, %s57
      %p66 = scmp.eq.s32.totalorder %s25, 0
      %p67 = por %p65, %p66
      %p68 = scmp.ne.s32.totalorder %s56, %s57
      %p69 = scmp.eq.s32.totalorder %s26, 1
      %p70 = por %p68, %p69
      %p72 = scmp.ne.s32.totalorder %s57, %s71
      %p73 = scmp.eq.s32.totalorder %s26, 0
      %p74 = por %p72, %p73
      %s76 = sadd.s32 %s75, 1
      %p79 = scmp.eq.s32.totalorder %s20, 1
      %p80 = scmp.ne.s32.totalorder %s75, %s77
      %p81 = scmp.eq.s32.totalorder %s20, 0
      %p82 = por %p80, %p81
      %p83 = scmp.ne.s32.totalorder %s75, %s77
      %p84 = scmp.eq.s32.totalorder %s25, 1
      %p85 = por %p83, %p84
      %p86 = scmp.ne.s32.totalorder %s77, %s78
      %p87 = scmp.eq.s32.totalorder %s25, 0
      %p88 = por %p86, %p87
      %p89 = scmp.ne.s32.totalorder %s77, %s78
      %p90 = scmp.eq.s32.totalorder %s26, 1
      %p91 = por %p89, %p90
      %p93 = scmp.ne.s32.totalorder %s78, %s92
      %p94 = scmp.eq.s32.totalorder %s26, 0
      %p95 = por %p93, %p94
      %s97 = sadd.s32 %s96, 1
      %p100 = scmp.eq.s32.totalorder %s20, 1
      %p101 = scmp.ne.s32.totalorder %s96, %s98
      %p102 = scmp.eq.s32.totalorder %s20, 0
      %p103 = por %p101, %p102
      %p104 = scmp.ne.s32.totalorder %s96, %s98
      %p105 = scmp.eq.s32.totalorder %s25, 1
      %p106 = por %p104, %p105
      %p107 = scmp.ne.s32.totalorder %s98, %s99
      %p108 = scmp.eq.s32.totalorder %s25, 0
      %p109 = por %p107, %p108
      %p110 = scmp.ne.s32.totalorder %s98, %s99
      %p111 = scmp.eq.s32.totalorder %s26, 1
      %p112 = por %p110, %p111
      %p114 = scmp.ne.s32.totalorder %s99, %s113
      %p115 = scmp.eq.s32.totalorder %s26, 0
      %p116 = por %p114, %p115
      %s118 = sadd.s32 %s117, 1
      %p121 = scmp.eq.s32.totalorder %s20, 1
      %p122 = scmp.ne.s32.totalorder %s117, %s119
      %p123 = scmp.eq.s32.totalorder %s20, 0
      %p124 = por %p122, %p123
      %p125 = scmp.ne.s32.totalorder %s117, %s119
      %p126 = scmp.eq.s32.totalorder %s25, 1
      %p127 = por %p125, %p126
      %p128 = scmp.ne.s32.totalorder %s119, %s120
      %p129 = scmp.eq.s32.totalorder %s25, 0
      %p130 = por %p128, %p129
      %p131 = scmp.ne.s32.totalorder %s119, %s120
      %p132 = scmp.eq.s32.totalorder %s26, 1
      %p133 = por %p131, %p132
      %p135 = scmp.ne.s32.totalorder %s120, %s134
      %p136 = scmp.eq.s32.totalorder %s26, 0
      %p137 = por %p135, %p136
      %s139 = sadd.s32 %s138, 1
      %p142 = scmp.eq.s32.totalorder %s20, 1
      %p143 = scmp.ne.s32.totalorder %s138, %s140
      %p144 = scmp.eq.s32.totalorder %s20, 0
      %p145 = por %p143, %p144
      %p146 = scmp.ne.s32.totalorder %s138, %s140
      %p147 = scmp.eq.s32.totalorder %s25, 1
      %p148 = por %p146, %p147
      %p149 = scmp.ne.s32.totalorder %s140, %s141
      %p150 = scmp.eq.s32.totalorder %s25, 0
      %p151 = por %p149, %p150
      %p152 = scmp.ne.s32.totalorder %s140, %s141
      %p153 = scmp.eq.s32.totalorder %s26, 1
      %p154 = por %p152, %p153
      %p156 = scmp.ne.s32.totalorder %s141, %s155
      %p157 = scmp.eq.s32.totalorder %s26, 0
      %p158 = por %p156, %p157
      %s160 = sadd.s32 %s159, 1
      %p163 = scmp.eq.s32.totalorder %s20, 1
      %p164 = scmp.ne.s32.totalorder %s159, %s161
      %p165 = scmp.eq.s32.totalorder %s20, 0
      %p166 = por %p164, %p165
      %p167 = scmp.ne.s32.totalorder %s159, %s161
      %p168 = scmp.eq.s32.totalorder %s25, 1
      %p169 = por %p167, %p168
      %p170 = scmp.ne.s32.totalorder %s161, %s162
      %p171 = scmp.eq.s32.totalorder %s25, 0
      %p172 = por %p170, %p171
      %p173 = scmp.ne.s32.totalorder %s161, %s162
      %p174 = scmp.eq.s32.totalorder %s26, 1
      %p175 = por %p173, %p174
      %p177 = scmp.ne.s32.totalorder %s162, %s176
      %p178 = scmp.eq.s32.totalorder %s26, 0
      %p179 = por %p177, %p178
      %s181 = sadd.s32 %s180, 1
      %p184 = scmp.eq.s32.totalorder %s20, 1
      %p185 = scmp.ne.s32.totalorder %s180, %s182
      %p186 = scmp.eq.s32.totalorder %s20, 0
      %p187 = por %p185, %p186
      %p188 = scmp.ne.s32.totalorder %s180, %s182
      %p189 = scmp.eq.s32.totalorder %s25, 1
      %p190 = por %p188, %p189
      %p191 = scmp.ne.s32.totalorder %s182, %s183
      %p192 = scmp.eq.s32.totalorder %s25, 0
      %p193 = por %p191, %p192
      %p194 = scmp.ne.s32.totalorder %s182, %s183
      %p195 = scmp.eq.s32.totalorder %s26, 1
      %p196 = por %p194, %p195
      %p198 = scmp.ne.s32.totalorder %s183, %s197
      %p199 = scmp.eq.s32.totalorder %s26, 0
      %p200 = por %p198, %p199
      %p201 = scmp.le.s32.totalorder 1, %s20
      %p202 = scmp.lt.s32.totalorder %s20, 3
      %p203 = pnand %p201, %p202
      %p204 = pneg %p203
      // Predicated region
      $region9: #{tpu_custom_call.1} parent=5 // pred_check
        _
      $region10: #{tpu_custom_call.1} parent=5 // pred_check_branch
        %206 = sbr.rel (%p203) target = $region12
      $region11: #{tpu_custom_call.1} parent=5 // pred_region
        %s207 = ssub.s32 %s20, 1
        // Predicated region
        $region13: #{tpu_custom_call.1} parent=11 // pred_check
          %p208 = pneg %p67
        $region14: #{tpu_custom_call.1} parent=11 // pred_check_branch
          %210 = sbr.rel (%p208) target = $region16
        $region15: #{tpu_custom_call.1} parent=11 // pred_region
          %212 = vsyncadd [#allocation7], 0
          %s213 = sshll.u32 %s1, 4
          %s214 = int_to_ptr.hbm [resolvable:$true] %s213
          %s215 = sshll.u32 [#allocation6], 4
          %s216 = int_to_ptr.vmem [resolvable:$true] %s215
          %221 = dma.hbm_to_vmem [thread:$0]  %s214, 32768, %s216, [#allocation7], 256, 256, 16
        $region16: #{tpu_custom_call.1} parent=11 // pred_fallthru
          _
        // Predicated region
        $region17: #{tpu_custom_call.1} parent=11 // pred_check
          %p222 = pneg %p88
        $region18: #{tpu_custom_call.1} parent=11 // pred_check_branch
          %224 = sbr.rel (%p222) target = $region20
        $region19: #{tpu_custom_call.1} parent=11 // pred_region
          %226 = vsyncadd [#allocation7], 0
          %s228 = sshll.u32 %s2, 4
          %s229 = int_to_ptr.hbm [resolvable:$true] %s228
          %s230 = sshll.u32 [#allocation8], 4
          %s231 = int_to_ptr.vmem [resolvable:$true] %s230
          %233 = dma.hbm_to_vmem [thread:$0]  %s229, 128, %s231, [#allocation7]
        $region20: #{tpu_custom_call.1} parent=11 // pred_fallthru
          _
        // Predicated region
        $region21: #{tpu_custom_call.1} parent=11 // pred_check
          %p234 = pneg %p109
        $region22: #{tpu_custom_call.1} parent=11 // pred_check_branch
          %236 = sbr.rel (%p234) target = $region24
        $region23: #{tpu_custom_call.1} parent=11 // pred_region
          %238 = vsyncadd [#allocation10], 0
          %s239 = sshll.u32 %s3, 4
          %s240 = int_to_ptr.hbm [resolvable:$true] %s239
          %s241 = sshll.u32 [#allocation9], 4
          %s242 = int_to_ptr.vmem [resolvable:$true] %s241
          %247 = dma.hbm_to_vmem [thread:$0]  %s240, 8192, %s242, [#allocation10], 128, 128, 8
        $region24: #{tpu_custom_call.1} parent=11 // pred_fallthru
          _
        // Predicated region
        $region25: #{tpu_custom_call.1} parent=11 // pred_check
          %p248 = pneg %p130
        $region26: #{tpu_custom_call.1} parent=11 // pred_check_branch
          %250 = sbr.rel (%p248) target = $region28
        $region27: #{tpu_custom_call.1} parent=11 // pred_region
          %252 = vsyncadd [#allocation10], 0
          %s254 = sshll.u32 %s4, 4
          %s255 = int_to_ptr.hbm [resolvable:$true] %s254
          %s256 = sshll.u32 [#allocation11], 4
          %s257 = int_to_ptr.vmem [resolvable:$true] %s256
          %259 = dma.hbm_to_vmem [thread:$0]  %s255, 64, %s257, [#allocation10]
        $region28: #{tpu_custom_call.1} parent=11 // pred_fallthru
          _
        // Predicated region
        $region29: #{tpu_custom_call.1} parent=11 // pred_check
          %p260 = pneg %p151
        $region30: #{tpu_custom_call.1} parent=11 // pred_check_branch
          %262 = sbr.rel (%p260) target = $region32
        $region31: #{tpu_custom_call.1} parent=11 // pred_region
          %264 = vsyncadd [#allocation13], 0
          %s265 = sshll.u32 %s5, 4
          %s266 = int_to_ptr.hbm [resolvable:$true] %s265
          %s267 = sshll.u32 [#allocation12], 4
          %s268 = int_to_ptr.vmem [resolvable:$true] %s267
          %273 = dma.hbm_to_vmem [thread:$0]  %s266, 2048, %s268, [#allocation13], 64, 64, 4
        $region32: #{tpu_custom_call.1} parent=11 // pred_fallthru
          _
        // Predicated region
        $region33: #{tpu_custom_call.1} parent=11 // pred_check
          %p274 = pneg %p172
        $region34: #{tpu_custom_call.1} parent=11 // pred_check_branch
          %276 = sbr.rel (%p274) target = $region36
        $region35: #{tpu_custom_call.1} parent=11 // pred_region
          %278 = vsyncadd [#allocation13], 0
          %s280 = sshll.u32 %s6, 4
          %s281 = int_to_ptr.hbm [resolvable:$true] %s280
          %s282 = sshll.u32 [#allocation14], 4
          %s283 = int_to_ptr.vmem [resolvable:$true] %s282
          %285 = dma.hbm_to_vmem [thread:$0]  %s281, 16, %s283, [#allocation13]
        $region36: #{tpu_custom_call.1} parent=11 // pred_fallthru
          _
      $region12: #{tpu_custom_call.1} parent=5 // pred_fallthru
        _
      %p286 = scmp.lt.s32.totalorder %s20, 2
      // Predicated region
      $region37: #{tpu_custom_call.1} parent=5 // pred_check
        %p287 = pneg %p286
      $region38: #{tpu_custom_call.1} parent=5 // pred_check_branch
        %289 = sbr.rel (%p287) target = $region40
      $region39: #{tpu_custom_call.1} parent=5 // pred_region
        // Predicated region
        $region41: #{tpu_custom_call.1} parent=39 // pred_check
          %p290 = pneg %p40
        $region42: #{tpu_custom_call.1} parent=39 // pred_check_branch
          %292 = sbr.rel (%p290) target = $region44
        $region43: #{tpu_custom_call.1} parent=39 // pred_region
          #allocation17 [shape = 'u32[6]{0}', space=smem, size = 0x18, scoped, tag = 'DMA stride descriptor']
          %s293 = sand.u32 %s30, 1
          %s294 = scalar_lea.sflag [#allocation4], %s293
          %s295 = sand.u32 %s30, 1
          %s296 = smul.addr %s295, 8192
          %s297 = scalar_lea.vmem [#allocation3], %s296
          %s298 = smul.u32 16, %s20
          %300 = vsyncadd %s294, 0
          %s301 = smul.addr %s298, 8
          %s302 = smul.addr %s301, 4
          %s303 = scalar_lea.hbm %s0, %s302
          %s305 = sshll.u32 1, 14
          %s306 = sxor.u32 4294967295, %s305
          %s308 = sld [smem:[#allocation0]]
          %s309 = sadd.s32 2, %s308
          %s311 = sshll.u32 7, 26
          %s312 = sxor.u32 4294967295, %s311
          %s313 = sand.u32 0, %s312
          %s314 = sshll.u32 %s309, 26
          %s315 = sor.u32 %s313, %s314
          %s316 = sshll.u32 %s303, 4
          %s317 = int_to_ptr.hbm [resolvable:$true] %s316
          %s318 = sshll.u32 %s297, 4
          %s319 = int_to_ptr.vmem [resolvable:$true] %s318
          %325 = sst [smem:[#allocation17]] 16384
          %s326 = scalar_lea.smem [#allocation17], 1
          %327 = sst [smem:[%s326]] 8192
          %s328 = scalar_lea.smem [#allocation17], 2
          %329 = sst [smem:[%s328]] 16
          %s330 = scalar_lea.smem [#allocation17], 3
          %331 = sst [smem:[%s330]] 512
          %s332 = scalar_lea.smem [#allocation17], 4
          %333 = sst [smem:[%s332]] 512
          %s334 = scalar_lea.smem [#allocation17], 5
          %335 = sst [smem:[%s334]] 32
          %337 = dma.general %s317, 131072, %s319, %s294, [#allocation16], [#allocation17], %s315, 0
        $region44: #{tpu_custom_call.1} parent=39 // pred_fallthru
          _
      $region40: #{tpu_custom_call.1} parent=5 // pred_fallthru
        _
      %p338 = scmp.le.s32.totalorder 1, %s20
      %p339 = scmp.lt.s32.totalorder %s20, 3
      %p340 = pnand %p338, %p339
      %p341 = pneg %p340
      // Predicated region
      $region45: #{tpu_custom_call.1} parent=5 // pred_check
        _
      $region46: #{tpu_custom_call.1} parent=5 // pred_check_branch
        %343 = sbr.rel (%p340) target = $region48
      $region47: #{tpu_custom_call.1} parent=5 // pred_region
        %s344 = ssub.s32 %s20, 1
        %s345 = sand.u32 %s33, 1
        %s346 = scalar_lea.sflag [#allocation4], %s345
        %s347 = sand.u32 %s33, 1
        %s348 = smul.addr %s347, 8192
        %s349 = scalar_lea.vmem [#allocation3], %s348
        // Predicated region
        $region49: #{tpu_custom_call.1} parent=47 // pred_check
          %p350 = pneg %p46
        $region50: #{tpu_custom_call.1} parent=47 // pred_check_branch
          %352 = sbr.rel (%p350) target = $region52
        $region51: #{tpu_custom_call.1} parent=47 // pred_region
          %354 = dma.done %s346, 131072
        $region52: #{tpu_custom_call.1} parent=47 // pred_fallthru
          _
        // Predicated region
        $region53: #{tpu_custom_call.1} parent=47 // pred_check
          %p355 = pneg %p67
        $region54: #{tpu_custom_call.1} parent=47 // pred_check_branch
          %357 = sbr.rel (%p355) target = $region56
        $region55: #{tpu_custom_call.1} parent=47 // pred_region
          %359 = dma.done [#allocation7], 32768
        $region56: #{tpu_custom_call.1} parent=47 // pred_fallthru
          _
        // Predicated region
        $region57: #{tpu_custom_call.1} parent=47 // pred_check
          %p360 = pneg %p88
        $region58: #{tpu_custom_call.1} parent=47 // pred_check_branch
          %362 = sbr.rel (%p360) target = $region60
        $region59: #{tpu_custom_call.1} parent=47 // pred_region
          %364 = dma.done [#allocation7], 128
        $region60: #{tpu_custom_call.1} parent=47 // pred_fallthru
          _
        // Predicated region
        $region61: #{tpu_custom_call.1} parent=47 // pred_check
          %p365 = pneg %p109
        $region62: #{tpu_custom_call.1} parent=47 // pred_check_branch
          %367 = sbr.rel (%p365) target = $region64
        $region63: #{tpu_custom_call.1} parent=47 // pred_region
          %369 = dma.done [#allocation10], 8192
        $region64: #{tpu_custom_call.1} parent=47 // pred_fallthru
          _
        // Predicated region
        $region65: #{tpu_custom_call.1} parent=47 // pred_check
          %p370 = pneg %p130
        $region66: #{tpu_custom_call.1} parent=47 // pred_check_branch
          %372 = sbr.rel (%p370) target = $region68
        $region67: #{tpu_custom_call.1} parent=47 // pred_region
          %374 = dma.done [#allocation10], 64
        $region68: #{tpu_custom_call.1} parent=47 // pred_fallthru
          _
        // Predicated region
        $region69: #{tpu_custom_call.1} parent=47 // pred_check
          %p375 = pneg %p151
        $region70: #{tpu_custom_call.1} parent=47 // pred_check_branch
          %377 = sbr.rel (%p375) target = $region72
        $region71: #{tpu_custom_call.1} parent=47 // pred_region
          %379 = dma.done [#allocation13], 2048
        $region72: #{tpu_custom_call.1} parent=47 // pred_fallthru
          _
        // Predicated region
        $region73: #{tpu_custom_call.1} parent=47 // pred_check
          %p380 = pneg %p172
        $region74: #{tpu_custom_call.1} parent=47 // pred_check_branch
          %382 = sbr.rel (%p380) target = $region76
        $region75: #{tpu_custom_call.1} parent=47 // pred_region
          %384 = dma.done [#allocation13], 16
        $region76: #{tpu_custom_call.1} parent=47 // pred_fallthru
          _
        %s385 = sand.u32 %s33, 1
        %s386 = scalar_lea.sflag [#allocation4], %s385
        %s387 = sand.u32 %s33, 1
        %s388 = smul.addr %s387, 8192
        %s389 = scalar_lea.vmem [#allocation3], %s388
        %p390 = pneg %p46
        %p391 = pneg %p43
        %p392 = pneg %p67
        %p393 = pneg %p64
        %p394 = pneg %p88
        %p395 = pneg %p85
        %p396 = pneg %p109
        %p397 = pneg %p106
        %p398 = pneg %p130
        %p399 = pneg %p127
        %p400 = pneg %p151
        %p401 = pneg %p148
        %p402 = pneg %p172
        %p403 = pneg %p169
        %p404 = pneg %p193
        %p405 = pneg %p190
        %s406 = smul.u32 16, %s25
        %p407 = scmp.eq.s32.totalorder %s25, 0
        // Predicated region
        $region77: #{tpu_custom_call.1} parent=47 // pred_check
          %p408 = pneg %p407
        $region78: #{tpu_custom_call.1} parent=47 // pred_check_branch
          %410 = sbr.rel (%p408) target = $region80
        $region79: #{tpu_custom_call.1} parent=47 // pred_region
          %411 = vst [vmem:[#allocation2] sm:$0xff] -inf
          %412 = vst [vmem:[#allocation2 + $0x8] sm:$0xff] -inf
          %413 = vst [vmem:[#allocation2 + $0x10] sm:$0xff] -inf
          %414 = vst [vmem:[#allocation2 + $0x18] sm:$0xff] -inf
          %415 = vst [vmem:[#allocation2 + $0x20] sm:$0xff] -inf
          %416 = vst [vmem:[#allocation2 + $0x28] sm:$0xff] -inf
          %417 = vst [vmem:[#allocation2 + $0x30] sm:$0xff] -inf
          %418 = vst [vmem:[#allocation2 + $0x38] sm:$0xff] -inf
          %419 = vst [vmem:[#allocation2 + $0x40] sm:$0xff] -inf
          %420 = vst [vmem:[#allocation2 + $0x48] sm:$0xff] -inf
          %421 = vst [vmem:[#allocation2 + $0x50] sm:$0xff] -inf
          %422 = vst [vmem:[#allocation2 + $0x58] sm:$0xff] -inf
          %423 = vst [vmem:[#allocation2 + $0x60] sm:$0xff] -inf
          %424 = vst [vmem:[#allocation2 + $0x68] sm:$0xff] -inf
          %425 = vst [vmem:[#allocation2 + $0x70] sm:$0xff] -inf
          %426 = vst [vmem:[#allocation2 + $0x78] sm:$0xff] -inf
        $region80: #{tpu_custom_call.1} parent=47 // pred_fallthru
          _
        %v427 = vld [vmem:[%s349] sm:$0xff]
        %v428 = vld [vmem:[%s349 + $0x8] sm:$0xff]
        %v429 = vld [vmem:[%s349 + $0x10] sm:$0xff]
        %v430 = vld [vmem:[%s349 + $0x18] sm:$0xff]
        %v431 = vld [vmem:[%s349 + $0x20] sm:$0xff]
        %v432 = vld [vmem:[%s349 + $0x28] sm:$0xff]
        %v433 = vld [vmem:[%s349 + $0x30] sm:$0xff]
        %v434 = vld [vmem:[%s349 + $0x38] sm:$0xff]
        %v435 = vld [vmem:[%s349 + $0x40] sm:$0xff]
        %v436 = vld [vmem:[%s349 + $0x48] sm:$0xff]
        %v437 = vld [vmem:[%s349 + $0x50] sm:$0xff]
        %v438 = vld [vmem:[%s349 + $0x58] sm:$0xff]
        %v439 = vld [vmem:[%s349 + $0x60] sm:$0xff]
        %v440 = vld [vmem:[%s349 + $0x68] sm:$0xff]
        %v441 = vld [vmem:[%s349 + $0x70] sm:$0xff]
        %v442 = vld [vmem:[%s349 + $0x78] sm:$0xff]
        %v443 = vld [vmem:[%s349 + $0x80] sm:$0xff]
        %v444 = vld [vmem:[%s349 + $0x88] sm:$0xff]
        %v445 = vld [vmem:[%s349 + $0x90] sm:$0xff]
        %v446 = vld [vmem:[%s349 + $0x98] sm:$0xff]
        %v447 = vld [vmem:[%s349 + $0xa0] sm:$0xff]
        %v448 = vld [vmem:[%s349 + $0xa8] sm:$0xff]
        %v449 = vld [vmem:[%s349 + $0xb0] sm:$0xff]
        %v450 = vld [vmem:[%s349 + $0xb8] sm:$0xff]
        %v451 = vld [vmem:[%s349 + $0xc0] sm:$0xff]
        %v452 = vld [vmem:[%s349 + $0xc8] sm:$0xff]
        %v453 = vld [vmem:[%s349 + $0xd0] sm:$0xff]
        %v454 = vld [vmem:[%s349 + $0xd8] sm:$0xff]
        %v455 = vld [vmem:[%s349 + $0xe0] sm:$0xff]
        %v456 = vld [vmem:[%s349 + $0xe8] sm:$0xff]
        %v457 = vld [vmem:[%s349 + $0xf0] sm:$0xff]
        %v458 = vld [vmem:[%s349 + $0xf8] sm:$0xff]
        %v459 = vld [vmem:[%s349 + $0x100] sm:$0xff]
        %v460 = vld [vmem:[%s349 + $0x108] sm:$0xff]
        %v461 = vld [vmem:[%s349 + $0x110] sm:$0xff]
        %v462 = vld [vmem:[%s349 + $0x118] sm:$0xff]
        %v463 = vld [vmem:[%s349 + $0x120] sm:$0xff]
        %v464 = vld [vmem:[%s349 + $0x128] sm:$0xff]
        %v465 = vld [vmem:[%s349 + $0x130] sm:$0xff]
        %v466 = vld [vmem:[%s349 + $0x138] sm:$0xff]
        %v467 = vld [vmem:[%s349 + $0x140] sm:$0xff]
        %v468 = vld [vmem:[%s349 + $0x148] sm:$0xff]
        %v469 = vld [vmem:[%s349 + $0x150] sm:$0xff]
        %v470 = vld [vmem:[%s349 + $0x158] sm:$0xff]
        %v471 = vld [vmem:[%s349 + $0x160] sm:$0xff]
        %v472 = vld [vmem:[%s349 + $0x168] sm:$0xff]
        %v473 = vld [vmem:[%s349 + $0x170] sm:$0xff]
        %v474 = vld [vmem:[%s349 + $0x178] sm:$0xff]
        %v475 = vld [vmem:[%s349 + $0x180] sm:$0xff]
        %v476 = vld [vmem:[%s349 + $0x188] sm:$0xff]
        %v477 = vld [vmem:[%s349 + $0x190] sm:$0xff]
        %v478 = vld [vmem:[%s349 + $0x198] sm:$0xff]
        %v479 = vld [vmem:[%s349 + $0x1a0] sm:$0xff]
        %v480 = vld [vmem:[%s349 + $0x1a8] sm:$0xff]
        %v481 = vld [vmem:[%s349 + $0x1b0] sm:$0xff]
        %v482 = vld [vmem:[%s349 + $0x1b8] sm:$0xff]
        %v483 = vld [vmem:[%s349 + $0x1c0] sm:$0xff]
        %v484 = vld [vmem:[%s349 + $0x1c8] sm:$0xff]
        %v485 = vld [vmem:[%s349 + $0x1d0] sm:$0xff]
        %v486 = vld [vmem:[%s349 + $0x1d8] sm:$0xff]
        %v487 = vld [vmem:[%s349 + $0x1e0] sm:$0xff]
        %v488 = vld [vmem:[%s349 + $0x1e8] sm:$0xff]
        %v489 = vld [vmem:[%s349 + $0x1f0] sm:$0xff]
        %v490 = vld [vmem:[%s349 + $0x1f8] sm:$0xff]
        %v491 = vld [vmem:[%s349 + $0x200] sm:$0xff]
        %v492 = vld [vmem:[%s349 + $0x208] sm:$0xff]
        %v493 = vld [vmem:[%s349 + $0x210] sm:$0xff]
        %v494 = vld [vmem:[%s349 + $0x218] sm:$0xff]
        %v495 = vld [vmem:[%s349 + $0x220] sm:$0xff]
        %v496 = vld [vmem:[%s349 + $0x228] sm:$0xff]
        %v497 = vld [vmem:[%s349 + $0x230] sm:$0xff]
        %v498 = vld [vmem:[%s349 + $0x238] sm:$0xff]
        %v499 = vld [vmem:[%s349 + $0x240] sm:$0xff]
        %v500 = vld [vmem:[%s349 + $0x248] sm:$0xff]
        %v501 = vld [vmem:[%s349 + $0x250] sm:$0xff]
        %v502 = vld [vmem:[%s349 + $0x258] sm:$0xff]
        %v503 = vld [vmem:[%s349 + $0x260] sm:$0xff]
        %v504 = vld [vmem:[%s349 + $0x268] sm:$0xff]
        %v505 = vld [vmem:[%s349 + $0x270] sm:$0xff]
        %v506 = vld [vmem:[%s349 + $0x278] sm:$0xff]
        %v507 = vld [vmem:[%s349 + $0x280] sm:$0xff]
        %v508 = vld [vmem:[%s349 + $0x288] sm:$0xff]
        %v509 = vld [vmem:[%s349 + $0x290] sm:$0xff]
        %v510 = vld [vmem:[%s349 + $0x298] sm:$0xff]
        %v511 = vld [vmem:[%s349 + $0x2a0] sm:$0xff]
        %v512 = vld [vmem:[%s349 + $0x2a8] sm:$0xff]
        %v513 = vld [vmem:[%s349 + $0x2b0] sm:$0xff]
        %v514 = vld [vmem:[%s349 + $0x2b8] sm:$0xff]
        %v515 = vld [vmem:[%s349 + $0x2c0] sm:$0xff]
        %v516 = vld [vmem:[%s349 + $0x2c8] sm:$0xff]
        %v517 = vld [vmem:[%s349 + $0x2d0] sm:$0xff]
        %v518 = vld [vmem:[%s349 + $0x2d8] sm:$0xff]
        %v519 = vld [vmem:[%s349 + $0x2e0] sm:$0xff]
        %v520 = vld [vmem:[%s349 + $0x2e8] sm:$0xff]
        %v521 = vld [vmem:[%s349 + $0x2f0] sm:$0xff]
        %v522 = vld [vmem:[%s349 + $0x2f8] sm:$0xff]
        %v523 = vld [vmem:[%s349 + $0x300] sm:$0xff]
        %v524 = vld [vmem:[%s349 + $0x308] sm:$0xff]
        %v525 = vld [vmem:[%s349 + $0x310] sm:$0xff]
        %v526 = vld [vmem:[%s349 + $0x318] sm:$0xff]
        %v527 = vld [vmem:[%s349 + $0x320] sm:$0xff]
        %v528 = vld [vmem:[%s349 + $0x328] sm:$0xff]
        %v529 = vld [vmem:[%s349 + $0x330] sm:$0xff]
        %v530 = vld [vmem:[%s349 + $0x338] sm:$0xff]
        %v531 = vld [vmem:[%s349 + $0x340] sm:$0xff]
        %v532 = vld [vmem:[%s349 + $0x348] sm:$0xff]
        %v533 = vld [vmem:[%s349 + $0x350] sm:$0xff]
        %v534 = vld [vmem:[%s349 + $0x358] sm:$0xff]
        %v535 = vld [vmem:[%s349 + $0x360] sm:$0xff]
        %v536 = vld [vmem:[%s349 + $0x368] sm:$0xff]
        %v537 = vld [vmem:[%s349 + $0x370] sm:$0xff]
        %v538 = vld [vmem:[%s349 + $0x378] sm:$0xff]
        %v539 = vld [vmem:[%s349 + $0x380] sm:$0xff]
        %v540 = vld [vmem:[%s349 + $0x388] sm:$0xff]
        %v541 = vld [vmem:[%s349 + $0x390] sm:$0xff]
        %v542 = vld [vmem:[%s349 + $0x398] sm:$0xff]
        %v543 = vld [vmem:[%s349 + $0x3a0] sm:$0xff]
        %v544 = vld [vmem:[%s349 + $0x3a8] sm:$0xff]
        %v545 = vld [vmem:[%s349 + $0x3b0] sm:$0xff]
        %v546 = vld [vmem:[%s349 + $0x3b8] sm:$0xff]
        %v547 = vld [vmem:[%s349 + $0x3c0] sm:$0xff]
        %v548 = vld [vmem:[%s349 + $0x3c8] sm:$0xff]
        %v549 = vld [vmem:[%s349 + $0x3d0] sm:$0xff]
        %v550 = vld [vmem:[%s349 + $0x3d8] sm:$0xff]
        %v551 = vld [vmem:[%s349 + $0x3e0] sm:$0xff]
        %v552 = vld [vmem:[%s349 + $0x3e8] sm:$0xff]
        %v553 = vld [vmem:[%s349 + $0x3f0] sm:$0xff]
        %v554 = vld [vmem:[%s349 + $0x3f8] sm:$0xff]
        %v555 = vld [vmem:[%s349 + $0x400] sm:$0xff]
        %v556 = vld [vmem:[%s349 + $0x408] sm:$0xff]
        %v557 = vld [vmem:[%s349 + $0x410] sm:$0xff]
        %v558 = vld [vmem:[%s349 + $0x418] sm:$0xff]
        %v559 = vld [vmem:[%s349 + $0x420] sm:$0xff]
        %v560 = vld [vmem:[%s349 + $0x428] sm:$0xff]
        %v561 = vld [vmem:[%s349 + $0x430] sm:$0xff]
        %v562 = vld [vmem:[%s349 + $0x438] sm:$0xff]
        %v563 = vld [vmem:[%s349 + $0x440] sm:$0xff]
        %v564 = vld [vmem:[%s349 + $0x448] sm:$0xff]
        %v565 = vld [vmem:[%s349 + $0x450] sm:$0xff]
        %v566 = vld [vmem:[%s349 + $0x458] sm:$0xff]
        %v567 = vld [vmem:[%s349 + $0x460] sm:$0xff]
        %v568 = vld [vmem:[%s349 + $0x468] sm:$0xff]
        %v569 = vld [vmem:[%s349 + $0x470] sm:$0xff]
        %v570 = vld [vmem:[%s349 + $0x478] sm:$0xff]
        %v571 = vld [vmem:[%s349 + $0x480] sm:$0xff]
        %v572 = vld [vmem:[%s349 + $0x488] sm:$0xff]
        %v573 = vld [vmem:[%s349 + $0x490] sm:$0xff]
        %v574 = vld [vmem:[%s349 + $0x498] sm:$0xff]
        %v575 = vld [vmem:[%s349 + $0x4a0] sm:$0xff]
        %v576 = vld [vmem:[%s349 + $0x4a8] sm:$0xff]
        %v577 = vld [vmem:[%s349 + $0x4b0] sm:$0xff]
        %v578 = vld [vmem:[%s349 + $0x4b8] sm:$0xff]
        %v579 = vld [vmem:[%s349 + $0x4c0] sm:$0xff]
        %v580 = vld [vmem:[%s349 + $0x4c8] sm:$0xff]
        %v581 = vld [vmem:[%s349 + $0x4d0] sm:$0xff]
        %v582 = vld [vmem:[%s349 + $0x4d8] sm:$0xff]
        %v583 = vld [vmem:[%s349 + $0x4e0] sm:$0xff]
        %v584 = vld [vmem:[%s349 + $0x4e8] sm:$0xff]
        %v585 = vld [vmem:[%s349 + $0x4f0] sm:$0xff]
        %v586 = vld [vmem:[%s349 + $0x4f8] sm:$0xff]
        %v587 = vld [vmem:[%s349 + $0x500] sm:$0xff]
        %v588 = vld [vmem:[%s349 + $0x508] sm:$0xff]
        %v589 = vld [vmem:[%s349 + $0x510] sm:$0xff]
        %v590 = vld [vmem:[%s349 + $0x518] sm:$0xff]
        %v591 = vld [vmem:[%s349 + $0x520] sm:$0xff]
        %v592 = vld [vmem:[%s349 + $0x528] sm:$0xff]
        %v593 = vld [vmem:[%s349 + $0x530] sm:$0xff]
        %v594 = vld [vmem:[%s349 + $0x538] sm:$0xff]
        %v595 = vld [vmem:[%s349 + $0x540] sm:$0xff]
        %v596 = vld [vmem:[%s349 + $0x548] sm:$0xff]
        %v597 = vld [vmem:[%s349 + $0x550] sm:$0xff]
        %v598 = vld [vmem:[%s349 + $0x558] sm:$0xff]
        %v599 = vld [vmem:[%s349 + $0x560] sm:$0xff]
        %v600 = vld [vmem:[%s349 + $0x568] sm:$0xff]
        %v601 = vld [vmem:[%s349 + $0x570] sm:$0xff]
        %v602 = vld [vmem:[%s349 + $0x578] sm:$0xff]
        %v603 = vld [vmem:[%s349 + $0x580] sm:$0xff]
        %v604 = vld [vmem:[%s349 + $0x588] sm:$0xff]
        %v605 = vld [vmem:[%s349 + $0x590] sm:$0xff]
        %v606 = vld [vmem:[%s349 + $0x598] sm:$0xff]
        %v607 = vld [vmem:[%s349 + $0x5a0] sm:$0xff]
        %v608 = vld [vmem:[%s349 + $0x5a8] sm:$0xff]
        %v609 = vld [vmem:[%s349 + $0x5b0] sm:$0xff]
        %v610 = vld [vmem:[%s349 + $0x5b8] sm:$0xff]
        %v611 = vld [vmem:[%s349 + $0x5c0] sm:$0xff]
        %v612 = vld [vmem:[%s349 + $0x5c8] sm:$0xff]
        %v613 = vld [vmem:[%s349 + $0x5d0] sm:$0xff]
        %v614 = vld [vmem:[%s349 + $0x5d8] sm:$0xff]
        %v615 = vld [vmem:[%s349 + $0x5e0] sm:$0xff]
        %v616 = vld [vmem:[%s349 + $0x5e8] sm:$0xff]
        %v617 = vld [vmem:[%s349 + $0x5f0] sm:$0xff]
        %v618 = vld [vmem:[%s349 + $0x5f8] sm:$0xff]
        %v619 = vld [vmem:[%s349 + $0x600] sm:$0xff]
        %v620 = vld [vmem:[%s349 + $0x608] sm:$0xff]
        %v621 = vld [vmem:[%s349 + $0x610] sm:$0xff]
        %v622 = vld [vmem:[%s349 + $0x618] sm:$0xff]
        %v623 = vld [vmem:[%s349 + $0x620] sm:$0xff]
        %v624 = vld [vmem:[%s349 + $0x628] sm:$0xff]
        %v625 = vld [vmem:[%s349 + $0x630] sm:$0xff]
        %v626 = vld [vmem:[%s349 + $0x638] sm:$0xff]
        %v627 = vld [vmem:[%s349 + $0x640] sm:$0xff]
        %v628 = vld [vmem:[%s349 + $0x648] sm:$0xff]
        %v629 = vld [vmem:[%s349 + $0x650] sm:$0xff]
        %v630 = vld [vmem:[%s349 + $0x658] sm:$0xff]
        %v631 = vld [vmem:[%s349 + $0x660] sm:$0xff]
        %v632 = vld [vmem:[%s349 + $0x668] sm:$0xff]
        %v633 = vld [vmem:[%s349 + $0x670] sm:$0xff]
        %v634 = vld [vmem:[%s349 + $0x678] sm:$0xff]
        %v635 = vld [vmem:[%s349 + $0x680] sm:$0xff]
        %v636 = vld [vmem:[%s349 + $0x688] sm:$0xff]
        %v637 = vld [vmem:[%s349 + $0x690] sm:$0xff]
        %v638 = vld [vmem:[%s349 + $0x698] sm:$0xff]
        %v639 = vld [vmem:[%s349 + $0x6a0] sm:$0xff]
        %v640 = vld [vmem:[%s349 + $0x6a8] sm:$0xff]
        %v641 = vld [vmem:[%s349 + $0x6b0] sm:$0xff]
        %v642 = vld [vmem:[%s349 + $0x6b8] sm:$0xff]
        %v643 = vld [vmem:[%s349 + $0x6c0] sm:$0xff]
        %v644 = vld [vmem:[%s349 + $0x6c8] sm:$0xff]
        %v645 = vld [vmem:[%s349 + $0x6d0] sm:$0xff]
        %v646 = vld [vmem:[%s349 + $0x6d8] sm:$0xff]
        %v647 = vld [vmem:[%s349 + $0x6e0] sm:$0xff]
        %v648 = vld [vmem:[%s349 + $0x6e8] sm:$0xff]
        %v649 = vld [vmem:[%s349 + $0x6f0] sm:$0xff]
        %v650 = vld [vmem:[%s349 + $0x6f8] sm:$0xff]
        %v651 = vld [vmem:[%s349 + $0x700] sm:$0xff]
        %v652 = vld [vmem:[%s349 + $0x708] sm:$0xff]
        %v653 = vld [vmem:[%s349 + $0x710] sm:$0xff]
        %v654 = vld [vmem:[%s349 + $0x718] sm:$0xff]
        %v655 = vld [vmem:[%s349 + $0x720] sm:$0xff]
        %v656 = vld [vmem:[%s349 + $0x728] sm:$0xff]
        %v657 = vld [vmem:[%s349 + $0x730] sm:$0xff]
        %v658 = vld [vmem:[%s349 + $0x738] sm:$0xff]
        %v659 = vld [vmem:[%s349 + $0x740] sm:$0xff]
        %v660 = vld [vmem:[%s349 + $0x748] sm:$0xff]
        %v661 = vld [vmem:[%s349 + $0x750] sm:$0xff]
        %v662 = vld [vmem:[%s349 + $0x758] sm:$0xff]
        %v663 = vld [vmem:[%s349 + $0x760] sm:$0xff]
        %v664 = vld [vmem:[%s349 + $0x768] sm:$0xff]
        %v665 = vld [vmem:[%s349 + $0x770] sm:$0xff]
        %v666 = vld [vmem:[%s349 + $0x778] sm:$0xff]
        %v667 = vld [vmem:[%s349 + $0x780] sm:$0xff]
        %v668 = vld [vmem:[%s349 + $0x788] sm:$0xff]
        %v669 = vld [vmem:[%s349 + $0x790] sm:$0xff]
        %v670 = vld [vmem:[%s349 + $0x798] sm:$0xff]
        %v671 = vld [vmem:[%s349 + $0x7a0] sm:$0xff]
        %v672 = vld [vmem:[%s349 + $0x7a8] sm:$0xff]
        %v673 = vld [vmem:[%s349 + $0x7b0] sm:$0xff]
        %v674 = vld [vmem:[%s349 + $0x7b8] sm:$0xff]
        %v675 = vld [vmem:[%s349 + $0x7c0] sm:$0xff]
        %v676 = vld [vmem:[%s349 + $0x7c8] sm:$0xff]
        %v677 = vld [vmem:[%s349 + $0x7d0] sm:$0xff]
        %v678 = vld [vmem:[%s349 + $0x7d8] sm:$0xff]
        %v679 = vld [vmem:[%s349 + $0x7e0] sm:$0xff]
        %v680 = vld [vmem:[%s349 + $0x7e8] sm:$0xff]
        %v681 = vld [vmem:[%s349 + $0x7f0] sm:$0xff]
        %v682 = vld [vmem:[%s349 + $0x7f8] sm:$0xff]
        %v683 = vld [vmem:[%s349 + $0x800] sm:$0xff]
        %v684 = vld [vmem:[%s349 + $0x808] sm:$0xff]
        %v685 = vld [vmem:[%s349 + $0x810] sm:$0xff]
        %v686 = vld [vmem:[%s349 + $0x818] sm:$0xff]
        %v687 = vld [vmem:[%s349 + $0x820] sm:$0xff]
        %v688 = vld [vmem:[%s349 + $0x828] sm:$0xff]
        %v689 = vld [vmem:[%s349 + $0x830] sm:$0xff]
        %v690 = vld [vmem:[%s349 + $0x838] sm:$0xff]
        %v691 = vld [vmem:[%s349 + $0x840] sm:$0xff]
        %v692 = vld [vmem:[%s349 + $0x848] sm:$0xff]
        %v693 = vld [vmem:[%s349 + $0x850] sm:$0xff]
        %v694 = vld [vmem:[%s349 + $0x858] sm:$0xff]
        %v695 = vld [vmem:[%s349 + $0x860] sm:$0xff]
        %v696 = vld [vmem:[%s349 + $0x868] sm:$0xff]
        %v697 = vld [vmem:[%s349 + $0x870] sm:$0xff]
        %v698 = vld [vmem:[%s349 + $0x878] sm:$0xff]
        %v699 = vld [vmem:[%s349 + $0x880] sm:$0xff]
        %v700 = vld [vmem:[%s349 + $0x888] sm:$0xff]
        %v701 = vld [vmem:[%s349 + $0x890] sm:$0xff]
        %v702 = vld [vmem:[%s349 + $0x898] sm:$0xff]
        %v703 = vld [vmem:[%s349 + $0x8a0] sm:$0xff]
        %v704 = vld [vmem:[%s349 + $0x8a8] sm:$0xff]
        %v705 = vld [vmem:[%s349 + $0x8b0] sm:$0xff]
        %v706 = vld [vmem:[%s349 + $0x8b8] sm:$0xff]
        %v707 = vld [vmem:[%s349 + $0x8c0] sm:$0xff]
        %v708 = vld [vmem:[%s349 + $0x8c8] sm:$0xff]
        %v709 = vld [vmem:[%s349 + $0x8d0] sm:$0xff]
        %v710 = vld [vmem:[%s349 + $0x8d8] sm:$0xff]
        %v711 = vld [vmem:[%s349 + $0x8e0] sm:$0xff]
        %v712 = vld [vmem:[%s349 + $0x8e8] sm:$0xff]
        %v713 = vld [vmem:[%s349 + $0x8f0] sm:$0xff]
        %v714 = vld [vmem:[%s349 + $0x8f8] sm:$0xff]
        %v715 = vld [vmem:[%s349 + $0x900] sm:$0xff]
        %v716 = vld [vmem:[%s349 + $0x908] sm:$0xff]
        %v717 = vld [vmem:[%s349 + $0x910] sm:$0xff]
        %v718 = vld [vmem:[%s349 + $0x918] sm:$0xff]
        %v719 = vld [vmem:[%s349 + $0x920] sm:$0xff]
        %v720 = vld [vmem:[%s349 + $0x928] sm:$0xff]
        %v721 = vld [vmem:[%s349 + $0x930] sm:$0xff]
        %v722 = vld [vmem:[%s349 + $0x938] sm:$0xff]
        %v723 = vld [vmem:[%s349 + $0x940] sm:$0xff]
        %v724 = vld [vmem:[%s349 + $0x948] sm:$0xff]
        %v725 = vld [vmem:[%s349 + $0x950] sm:$0xff]
        %v726 = vld [vmem:[%s349 + $0x958] sm:$0xff]
        %v727 = vld [vmem:[%s349 + $0x960] sm:$0xff]
        %v728 = vld [vmem:[%s349 + $0x968] sm:$0xff]
        %v729 = vld [vmem:[%s349 + $0x970] sm:$0xff]
        %v730 = vld [vmem:[%s349 + $0x978] sm:$0xff]
        %v731 = vld [vmem:[%s349 + $0x980] sm:$0xff]
        %v732 = vld [vmem:[%s349 + $0x988] sm:$0xff]
        %v733 = vld [vmem:[%s349 + $0x990] sm:$0xff]
        %v734 = vld [vmem:[%s349 + $0x998] sm:$0xff]
        %v735 = vld [vmem:[%s349 + $0x9a0] sm:$0xff]
        %v736 = vld [vmem:[%s349 + $0x9a8] sm:$0xff]
        %v737 = vld [vmem:[%s349 + $0x9b0] sm:$0xff]
        %v738 = vld [vmem:[%s349 + $0x9b8] sm:$0xff]
        %v739 = vld [vmem:[%s349 + $0x9c0] sm:$0xff]
        %v740 = vld [vmem:[%s349 + $0x9c8] sm:$0xff]
        %v741 = vld [vmem:[%s349 + $0x9d0] sm:$0xff]
        %v742 = vld [vmem:[%s349 + $0x9d8] sm:$0xff]
        %v743 = vld [vmem:[%s349 + $0x9e0] sm:$0xff]
        %v744 = vld [vmem:[%s349 + $0x9e8] sm:$0xff]
        %v745 = vld [vmem:[%s349 + $0x9f0] sm:$0xff]
        %v746 = vld [vmem:[%s349 + $0x9f8] sm:$0xff]
        %v747 = vld [vmem:[%s349 + $0xa00] sm:$0xff]
        %v748 = vld [vmem:[%s349 + $0xa08] sm:$0xff]
        %v749 = vld [vmem:[%s349 + $0xa10] sm:$0xff]
        %v750 = vld [vmem:[%s349 + $0xa18] sm:$0xff]
        %v751 = vld [vmem:[%s349 + $0xa20] sm:$0xff]
        %v752 = vld [vmem:[%s349 + $0xa28] sm:$0xff]
        %v753 = vld [vmem:[%s349 + $0xa30] sm:$0xff]
        %v754 = vld [vmem:[%s349 + $0xa38] sm:$0xff]
        %v755 = vld [vmem:[%s349 + $0xa40] sm:$0xff]
        %v756 = vld [vmem:[%s349 + $0xa48] sm:$0xff]
        %v757 = vld [vmem:[%s349 + $0xa50] sm:$0xff]
        %v758 = vld [vmem:[%s349 + $0xa58] sm:$0xff]
        %v759 = vld [vmem:[%s349 + $0xa60] sm:$0xff]
        %v760 = vld [vmem:[%s349 + $0xa68] sm:$0xff]
        %v761 = vld [vmem:[%s349 + $0xa70] sm:$0xff]
        %v762 = vld [vmem:[%s349 + $0xa78] sm:$0xff]
        %v763 = vld [vmem:[%s349 + $0xa80] sm:$0xff]
        %v764 = vld [vmem:[%s349 + $0xa88] sm:$0xff]
        %v765 = vld [vmem:[%s349 + $0xa90] sm:$0xff]
        %v766 = vld [vmem:[%s349 + $0xa98] sm:$0xff]
        %v767 = vld [vmem:[%s349 + $0xaa0] sm:$0xff]
        %v768 = vld [vmem:[%s349 + $0xaa8] sm:$0xff]
        %v769 = vld [vmem:[%s349 + $0xab0] sm:$0xff]
        %v770 = vld [vmem:[%s349 + $0xab8] sm:$0xff]
        %v771 = vld [vmem:[%s349 + $0xac0] sm:$0xff]
        %v772 = vld [vmem:[%s349 + $0xac8] sm:$0xff]
        %v773 = vld [vmem:[%s349 + $0xad0] sm:$0xff]
        %v774 = vld [vmem:[%s349 + $0xad8] sm:$0xff]
        %v775 = vld [vmem:[%s349 + $0xae0] sm:$0xff]
        %v776 = vld [vmem:[%s349 + $0xae8] sm:$0xff]
        %v777 = vld [vmem:[%s349 + $0xaf0] sm:$0xff]
        %v778 = vld [vmem:[%s349 + $0xaf8] sm:$0xff]
        %v779 = vld [vmem:[%s349 + $0xb00] sm:$0xff]
        %v780 = vld [vmem:[%s349 + $0xb08] sm:$0xff]
        %v781 = vld [vmem:[%s349 + $0xb10] sm:$0xff]
        %v782 = vld [vmem:[%s349 + $0xb18] sm:$0xff]
        %v783 = vld [vmem:[%s349 + $0xb20] sm:$0xff]
        %v784 = vld [vmem:[%s349 + $0xb28] sm:$0xff]
        %v785 = vld [vmem:[%s349 + $0xb30] sm:$0xff]
        %v786 = vld [vmem:[%s349 + $0xb38] sm:$0xff]
        %v787 = vld [vmem:[%s349 + $0xb40] sm:$0xff]
        %v788 = vld [vmem:[%s349 + $0xb48] sm:$0xff]
        %v789 = vld [vmem:[%s349 + $0xb50] sm:$0xff]
        %v790 = vld [vmem:[%s349 + $0xb58] sm:$0xff]
        %v791 = vld [vmem:[%s349 + $0xb60] sm:$0xff]
        %v792 = vld [vmem:[%s349 + $0xb68] sm:$0xff]
        %v793 = vld [vmem:[%s349 + $0xb70] sm:$0xff]
        %v794 = vld [vmem:[%s349 + $0xb78] sm:$0xff]
        %v795 = vld [vmem:[%s349 + $0xb80] sm:$0xff]
        %v796 = vld [vmem:[%s349 + $0xb88] sm:$0xff]
        %v797 = vld [vmem:[%s349 + $0xb90] sm:$0xff]
        %v798 = vld [vmem:[%s349 + $0xb98] sm:$0xff]
        %v799 = vld [vmem:[%s349 + $0xba0] sm:$0xff]
        %v800 = vld [vmem:[%s349 + $0xba8] sm:$0xff]
        %v801 = vld [vmem:[%s349 + $0xbb0] sm:$0xff]
        %v802 = vld [vmem:[%s349 + $0xbb8] sm:$0xff]
        %v803 = vld [vmem:[%s349 + $0xbc0] sm:$0xff]
        %v804 = vld [vmem:[%s349 + $0xbc8] sm:$0xff]
        %v805 = vld [vmem:[%s349 + $0xbd0] sm:$0xff]
        %v806 = vld [vmem:[%s349 + $0xbd8] sm:$0xff]
        %v807 = vld [vmem:[%s349 + $0xbe0] sm:$0xff]
        %v808 = vld [vmem:[%s349 + $0xbe8] sm:$0xff]
        %v809 = vld [vmem:[%s349 + $0xbf0] sm:$0xff]
        %v810 = vld [vmem:[%s349 + $0xbf8] sm:$0xff]
        %v811 = vld [vmem:[%s349 + $0xc00] sm:$0xff]
        %v812 = vld [vmem:[%s349 + $0xc08] sm:$0xff]
        %v813 = vld [vmem:[%s349 + $0xc10] sm:$0xff]
        %v814 = vld [vmem:[%s349 + $0xc18] sm:$0xff]
        %v815 = vld [vmem:[%s349 + $0xc20] sm:$0xff]
        %v816 = vld [vmem:[%s349 + $0xc28] sm:$0xff]
        %v817 = vld [vmem:[%s349 + $0xc30] sm:$0xff]
        %v818 = vld [vmem:[%s349 + $0xc38] sm:$0xff]
        %v819 = vld [vmem:[%s349 + $0xc40] sm:$0xff]
        %v820 = vld [vmem:[%s349 + $0xc48] sm:$0xff]
        %v821 = vld [vmem:[%s349 + $0xc50] sm:$0xff]
        %v822 = vld [vmem:[%s349 + $0xc58] sm:$0xff]
        %v823 = vld [vmem:[%s349 + $0xc60] sm:$0xff]
        %v824 = vld [vmem:[%s349 + $0xc68] sm:$0xff]
        %v825 = vld [vmem:[%s349 + $0xc70] sm:$0xff]
        %v826 = vld [vmem:[%s349 + $0xc78] sm:$0xff]
        %v827 = vld [vmem:[%s349 + $0xc80] sm:$0xff]
        %v828 = vld [vmem:[%s349 + $0xc88] sm:$0xff]
        %v829 = vld [vmem:[%s349 + $0xc90] sm:$0xff]
        %v830 = vld [vmem:[%s349 + $0xc98] sm:$0xff]
        %v831 = vld [vmem:[%s349 + $0xca0] sm:$0xff]
        %v832 = vld [vmem:[%s349 + $0xca8] sm:$0xff]
        %v833 = vld [vmem:[%s349 + $0xcb0] sm:$0xff]
        %v834 = vld [vmem:[%s349 + $0xcb8] sm:$0xff]
        %v835 = vld [vmem:[%s349 + $0xcc0] sm:$0xff]
        %v836 = vld [vmem:[%s349 + $0xcc8] sm:$0xff]
        %v837 = vld [vmem:[%s349 + $0xcd0] sm:$0xff]
        %v838 = vld [vmem:[%s349 + $0xcd8] sm:$0xff]
        %v839 = vld [vmem:[%s349 + $0xce0] sm:$0xff]
        %v840 = vld [vmem:[%s349 + $0xce8] sm:$0xff]
        %v841 = vld [vmem:[%s349 + $0xcf0] sm:$0xff]
        %v842 = vld [vmem:[%s349 + $0xcf8] sm:$0xff]
        %v843 = vld [vmem:[%s349 + $0xd00] sm:$0xff]
        %v844 = vld [vmem:[%s349 + $0xd08] sm:$0xff]
        %v845 = vld [vmem:[%s349 + $0xd10] sm:$0xff]
        %v846 = vld [vmem:[%s349 + $0xd18] sm:$0xff]
        %v847 = vld [vmem:[%s349 + $0xd20] sm:$0xff]
        %v848 = vld [vmem:[%s349 + $0xd28] sm:$0xff]
        %v849 = vld [vmem:[%s349 + $0xd30] sm:$0xff]
        %v850 = vld [vmem:[%s349 + $0xd38] sm:$0xff]
        %v851 = vld [vmem:[%s349 + $0xd40] sm:$0xff]
        %v852 = vld [vmem:[%s349 + $0xd48] sm:$0xff]
        %v853 = vld [vmem:[%s349 + $0xd50] sm:$0xff]
        %v854 = vld [vmem:[%s349 + $0xd58] sm:$0xff]
        %v855 = vld [vmem:[%s349 + $0xd60] sm:$0xff]
        %v856 = vld [vmem:[%s349 + $0xd68] sm:$0xff]
        %v857 = vld [vmem:[%s349 + $0xd70] sm:$0xff]
        %v858 = vld [vmem:[%s349 + $0xd78] sm:$0xff]
        %v859 = vld [vmem:[%s349 + $0xd80] sm:$0xff]
        %v860 = vld [vmem:[%s349 + $0xd88] sm:$0xff]
        %v861 = vld [vmem:[%s349 + $0xd90] sm:$0xff]
        %v862 = vld [vmem:[%s349 + $0xd98] sm:$0xff]
        %v863 = vld [vmem:[%s349 + $0xda0] sm:$0xff]
        %v864 = vld [vmem:[%s349 + $0xda8] sm:$0xff]
        %v865 = vld [vmem:[%s349 + $0xdb0] sm:$0xff]
        %v866 = vld [vmem:[%s349 + $0xdb8] sm:$0xff]
        %v867 = vld [vmem:[%s349 + $0xdc0] sm:$0xff]
        %v868 = vld [vmem:[%s349 + $0xdc8] sm:$0xff]
        %v869 = vld [vmem:[%s349 + $0xdd0] sm:$0xff]
        %v870 = vld [vmem:[%s349 + $0xdd8] sm:$0xff]
        %v871 = vld [vmem:[%s349 + $0xde0] sm:$0xff]
        %v872 = vld [vmem:[%s349 + $0xde8] sm:$0xff]
        %v873 = vld [vmem:[%s349 + $0xdf0] sm:$0xff]
        %v874 = vld [vmem:[%s349 + $0xdf8] sm:$0xff]
        %v875 = vld [vmem:[%s349 + $0xe00] sm:$0xff]
        %v876 = vld [vmem:[%s349 + $0xe08] sm:$0xff]
        %v877 = vld [vmem:[%s349 + $0xe10] sm:$0xff]
        %v878 = vld [vmem:[%s349 + $0xe18] sm:$0xff]
        %v879 = vld [vmem:[%s349 + $0xe20] sm:$0xff]
        %v880 = vld [vmem:[%s349 + $0xe28] sm:$0xff]
        %v881 = vld [vmem:[%s349 + $0xe30] sm:$0xff]
        %v882 = vld [vmem:[%s349 + $0xe38] sm:$0xff]
        %v883 = vld [vmem:[%s349 + $0xe40] sm:$0xff]
        %v884 = vld [vmem:[%s349 + $0xe48] sm:$0xff]
        %v885 = vld [vmem:[%s349 + $0xe50] sm:$0xff]
        %v886 = vld [vmem:[%s349 + $0xe58] sm:$0xff]
        %v887 = vld [vmem:[%s349 + $0xe60] sm:$0xff]
        %v888 = vld [vmem:[%s349 + $0xe68] sm:$0xff]
        %v889 = vld [vmem:[%s349 + $0xe70] sm:$0xff]
        %v890 = vld [vmem:[%s349 + $0xe78] sm:$0xff]
        %v891 = vld [vmem:[%s349 + $0xe80] sm:$0xff]
        %v892 = vld [vmem:[%s349 + $0xe88] sm:$0xff]
        %v893 = vld [vmem:[%s349 + $0xe90] sm:$0xff]
        %v894 = vld [vmem:[%s349 + $0xe98] sm:$0xff]
        %v895 = vld [vmem:[%s349 + $0xea0] sm:$0xff]
        %v896 = vld [vmem:[%s349 + $0xea8] sm:$0xff]
        %v897 = vld [vmem:[%s349 + $0xeb0] sm:$0xff]
        %v898 = vld [vmem:[%s349 + $0xeb8] sm:$0xff]
        %v899 = vld [vmem:[%s349 + $0xec0] sm:$0xff]
        %v900 = vld [vmem:[%s349 + $0xec8] sm:$0xff]
        %v901 = vld [vmem:[%s349 + $0xed0] sm:$0xff]
        %v902 = vld [vmem:[%s349 + $0xed8] sm:$0xff]
        %v903 = vld [vmem:[%s349 + $0xee0] sm:$0xff]
        %v904 = vld [vmem:[%s349 + $0xee8] sm:$0xff]
        %v905 = vld [vmem:[%s349 + $0xef0] sm:$0xff]
        %v906 = vld [vmem:[%s349 + $0xef8] sm:$0xff]
        %v907 = vld [vmem:[%s349 + $0xf00] sm:$0xff]
        %v908 = vld [vmem:[%s349 + $0xf08] sm:$0xff]
        %v909 = vld [vmem:[%s349 + $0xf10] sm:$0xff]
        %v910 = vld [vmem:[%s349 + $0xf18] sm:$0xff]
        %v911 = vld [vmem:[%s349 + $0xf20] sm:$0xff]
        %v912 = vld [vmem:[%s349 + $0xf28] sm:$0xff]
        %v913 = vld [vmem:[%s349 + $0xf30] sm:$0xff]
        %v914 = vld [vmem:[%s349 + $0xf38] sm:$0xff]
        %v915 = vld [vmem:[%s349 + $0xf40] sm:$0xff]
        %v916 = vld [vmem:[%s349 + $0xf48] sm:$0xff]
        %v917 = vld [vmem:[%s349 + $0xf50] sm:$0xff]
        %v918 = vld [vmem:[%s349 + $0xf58] sm:$0xff]
        %v919 = vld [vmem:[%s349 + $0xf60] sm:$0xff]
        %v920 = vld [vmem:[%s349 + $0xf68] sm:$0xff]
        %v921 = vld [vmem:[%s349 + $0xf70] sm:$0xff]
        %v922 = vld [vmem:[%s349 + $0xf78] sm:$0xff]
        %v923 = vld [vmem:[%s349 + $0xf80] sm:$0xff]
        %v924 = vld [vmem:[%s349 + $0xf88] sm:$0xff]
        %v925 = vld [vmem:[%s349 + $0xf90] sm:$0xff]
        %v926 = vld [vmem:[%s349 + $0xf98] sm:$0xff]
        %v927 = vld [vmem:[%s349 + $0xfa0] sm:$0xff]
        %v928 = vld [vmem:[%s349 + $0xfa8] sm:$0xff]
        %v929 = vld [vmem:[%s349 + $0xfb0] sm:$0xff]
        %v930 = vld [vmem:[%s349 + $0xfb8] sm:$0xff]
        %v931 = vld [vmem:[%s349 + $0xfc0] sm:$0xff]
        %v932 = vld [vmem:[%s349 + $0xfc8] sm:$0xff]
        %v933 = vld [vmem:[%s349 + $0xfd0] sm:$0xff]
        %v934 = vld [vmem:[%s349 + $0xfd8] sm:$0xff]
        %v935 = vld [vmem:[%s349 + $0xfe0] sm:$0xff]
        %v936 = vld [vmem:[%s349 + $0xfe8] sm:$0xff]
        %v937 = vld [vmem:[%s349 + $0xff0] sm:$0xff]
        %v938 = vld [vmem:[%s349 + $0xff8] sm:$0xff]
        %v939 = vld [vmem:[%s349 + $0x1000] sm:$0xff]
        %v940 = vld [vmem:[%s349 + $0x1008] sm:$0xff]
        %v941 = vld [vmem:[%s349 + $0x1010] sm:$0xff]
        %v942 = vld [vmem:[%s349 + $0x1018] sm:$0xff]
        %v943 = vld [vmem:[%s349 + $0x1020] sm:$0xff]
        %v944 = vld [vmem:[%s349 + $0x1028] sm:$0xff]
        %v945 = vld [vmem:[%s349 + $0x1030] sm:$0xff]
        %v946 = vld [vmem:[%s349 + $0x1038] sm:$0xff]
        %v947 = vld [vmem:[%s349 + $0x1040] sm:$0xff]
        %v948 = vld [vmem:[%s349 + $0x1048] sm:$0xff]
        %v949 = vld [vmem:[%s349 + $0x1050] sm:$0xff]
        %v950 = vld [vmem:[%s349 + $0x1058] sm:$0xff]
        %v951 = vld [vmem:[%s349 + $0x1060] sm:$0xff]
        %v952 = vld [vmem:[%s349 + $0x1068] sm:$0xff]
        %v953 = vld [vmem:[%s349 + $0x1070] sm:$0xff]
        %v954 = vld [vmem:[%s349 + $0x1078] sm:$0xff]
        %v955 = vld [vmem:[%s349 + $0x1080] sm:$0xff]
        %v956 = vld [vmem:[%s349 + $0x1088] sm:$0xff]
        %v957 = vld [vmem:[%s349 + $0x1090] sm:$0xff]
        %v958 = vld [vmem:[%s349 + $0x1098] sm:$0xff]
        %v959 = vld [vmem:[%s349 + $0x10a0] sm:$0xff]
        %v960 = vld [vmem:[%s349 + $0x10a8] sm:$0xff]
        %v961 = vld [vmem:[%s349 + $0x10b0] sm:$0xff]
        %v962 = vld [vmem:[%s349 + $0x10b8] sm:$0xff]
        %v963 = vld [vmem:[%s349 + $0x10c0] sm:$0xff]
        %v964 = vld [vmem:[%s349 + $0x10c8] sm:$0xff]
        %v965 = vld [vmem:[%s349 + $0x10d0] sm:$0xff]
        %v966 = vld [vmem:[%s349 + $0x10d8] sm:$0xff]
        %v967 = vld [vmem:[%s349 + $0x10e0] sm:$0xff]
        %v968 = vld [vmem:[%s349 + $0x10e8] sm:$0xff]
        %v969 = vld [vmem:[%s349 + $0x10f0] sm:$0xff]
        %v970 = vld [vmem:[%s349 + $0x10f8] sm:$0xff]
        %v971 = vld [vmem:[%s349 + $0x1100] sm:$0xff]
        %v972 = vld [vmem:[%s349 + $0x1108] sm:$0xff]
        %v973 = vld [vmem:[%s349 + $0x1110] sm:$0xff]
        %v974 = vld [vmem:[%s349 + $0x1118] sm:$0xff]
        %v975 = vld [vmem:[%s349 + $0x1120] sm:$0xff]
        %v976 = vld [vmem:[%s349 + $0x1128] sm:$0xff]
        %v977 = vld [vmem:[%s349 + $0x1130] sm:$0xff]
        %v978 = vld [vmem:[%s349 + $0x1138] sm:$0xff]
        %v979 = vld [vmem:[%s349 + $0x1140] sm:$0xff]
        %v980 = vld [vmem:[%s349 + $0x1148] sm:$0xff]
        %v981 = vld [vmem:[%s349 + $0x1150] sm:$0xff]
        %v982 = vld [vmem:[%s349 + $0x1158] sm:$0xff]
        %v983 = vld [vmem:[%s349 + $0x1160] sm:$0xff]
        %v984 = vld [vmem:[%s349 + $0x1168] sm:$0xff]
        %v985 = vld [vmem:[%s349 + $0x1170] sm:$0xff]
        %v986 = vld [vmem:[%s349 + $0x1178] sm:$0xff]
        %v987 = vld [vmem:[%s349 + $0x1180] sm:$0xff]
        %v988 = vld [vmem:[%s349 + $0x1188] sm:$0xff]
        %v989 = vld [vmem:[%s349 + $0x1190] sm:$0xff]
        %v990 = vld [vmem:[%s349 + $0x1198] sm:$0xff]
        %v991 = vld [vmem:[%s349 + $0x11a0] sm:$0xff]
        %v992 = vld [vmem:[%s349 + $0x11a8] sm:$0xff]
        %v993 = vld [vmem:[%s349 + $0x11b0] sm:$0xff]
        %v994 = vld [vmem:[%s349 + $0x11b8] sm:$0xff]
        %v995 = vld [vmem:[%s349 + $0x11c0] sm:$0xff]
        %v996 = vld [vmem:[%s349 + $0x11c8] sm:$0xff]
        %v997 = vld [vmem:[%s349 + $0x11d0] sm:$0xff]
        %v998 = vld [vmem:[%s349 + $0x11d8] sm:$0xff]
        %v999 = vld [vmem:[%s349 + $0x11e0] sm:$0xff]
        %v1000 = vld [vmem:[%s349 + $0x11e8] sm:$0xff]
        %v1001 = vld [vmem:[%s349 + $0x11f0] sm:$0xff]
        %v1002 = vld [vmem:[%s349 + $0x11f8] sm:$0xff]
        %v1003 = vld [vmem:[%s349 + $0x1200] sm:$0xff]
        %v1004 = vld [vmem:[%s349 + $0x1208] sm:$0xff]
        %v1005 = vld [vmem:[%s349 + $0x1210] sm:$0xff]
        %v1006 = vld [vmem:[%s349 + $0x1218] sm:$0xff]
        %v1007 = vld [vmem:[%s349 + $0x1220] sm:$0xff]
        %v1008 = vld [vmem:[%s349 + $0x1228] sm:$0xff]
        %v1009 = vld [vmem:[%s349 + $0x1230] sm:$0xff]
        %v1010 = vld [vmem:[%s349 + $0x1238] sm:$0xff]
        %v1011 = vld [vmem:[%s349 + $0x1240] sm:$0xff]
        %v1012 = vld [vmem:[%s349 + $0x1248] sm:$0xff]
        %v1013 = vld [vmem:[%s349 + $0x1250] sm:$0xff]
        %v1014 = vld [vmem:[%s349 + $0x1258] sm:$0xff]
        %v1015 = vld [vmem:[%s349 + $0x1260] sm:$0xff]
        %v1016 = vld [vmem:[%s349 + $0x1268] sm:$0xff]
        %v1017 = vld [vmem:[%s349 + $0x1270] sm:$0xff]
        %v1018 = vld [vmem:[%s349 + $0x1278] sm:$0xff]
        %v1019 = vld [vmem:[%s349 + $0x1280] sm:$0xff]
        %v1020 = vld [vmem:[%s349 + $0x1288] sm:$0xff]
        %v1021 = vld [vmem:[%s349 + $0x1290] sm:$0xff]
        %v1022 = vld [vmem:[%s349 + $0x1298] sm:$0xff]
        %v1023 = vld [vmem:[%s349 + $0x12a0] sm:$0xff]
        %v1024 = vld [vmem:[%s349 + $0x12a8] sm:$0xff]
        %v1025 = vld [vmem:[%s349 + $0x12b0] sm:$0xff]
        %v1026 = vld [vmem:[%s349 + $0x12b8] sm:$0xff]
        %v1027 = vld [vmem:[%s349 + $0x12c0] sm:$0xff]
        %v1028 = vld [vmem:[%s349 + $0x12c8] sm:$0xff]
        %v1029 = vld [vmem:[%s349 + $0x12d0] sm:$0xff]
        %v1030 = vld [vmem:[%s349 + $0x12d8] sm:$0xff]
        %v1031 = vld [vmem:[%s349 + $0x12e0] sm:$0xff]
        %v1032 = vld [vmem:[%s349 + $0x12e8] sm:$0xff]
        %v1033 = vld [vmem:[%s349 + $0x12f0] sm:$0xff]
        %v1034 = vld [vmem:[%s349 + $0x12f8] sm:$0xff]
        %v1035 = vld [vmem:[%s349 + $0x1300] sm:$0xff]
        %v1036 = vld [vmem:[%s349 + $0x1308] sm:$0xff]
        %v1037 = vld [vmem:[%s349 + $0x1310] sm:$0xff]
        %v1038 = vld [vmem:[%s349 + $0x1318] sm:$0xff]
        %v1039 = vld [vmem:[%s349 + $0x1320] sm:$0xff]
        %v1040 = vld [vmem:[%s349 + $0x1328] sm:$0xff]
        %v1041 = vld [vmem:[%s349 + $0x1330] sm:$0xff]
        %v1042 = vld [vmem:[%s349 + $0x1338] sm:$0xff]
        %v1043 = vld [vmem:[%s349 + $0x1340] sm:$0xff]
        %v1044 = vld [vmem:[%s349 + $0x1348] sm:$0xff]
        %v1045 = vld [vmem:[%s349 + $0x1350] sm:$0xff]
        %v1046 = vld [vmem:[%s349 + $0x1358] sm:$0xff]
        %v1047 = vld [vmem:[%s349 + $0x1360] sm:$0xff]
        %v1048 = vld [vmem:[%s349 + $0x1368] sm:$0xff]
        %v1049 = vld [vmem:[%s349 + $0x1370] sm:$0xff]
        %v1050 = vld [vmem:[%s349 + $0x1378] sm:$0xff]
        %v1051 = vld [vmem:[%s349 + $0x1380] sm:$0xff]
        %v1052 = vld [vmem:[%s349 + $0x1388] sm:$0xff]
        %v1053 = vld [vmem:[%s349 + $0x1390] sm:$0xff]
        %v1054 = vld [vmem:[%s349 + $0x1398] sm:$0xff]
        %v1055 = vld [vmem:[%s349 + $0x13a0] sm:$0xff]
        %v1056 = vld [vmem:[%s349 + $0x13a8] sm:$0xff]
        %v1057 = vld [vmem:[%s349 + $0x13b0] sm:$0xff]
        %v1058 = vld [vmem:[%s349 + $0x13b8] sm:$0xff]
        %v1059 = vld [vmem:[%s349 + $0x13c0] sm:$0xff]
        %v1060 = vld [vmem:[%s349 + $0x13c8] sm:$0xff]
        %v1061 = vld [vmem:[%s349 + $0x13d0] sm:$0xff]
        %v1062 = vld [vmem:[%s349 + $0x13d8] sm:$0xff]
        %v1063 = vld [vmem:[%s349 + $0x13e0] sm:$0xff]
        %v1064 = vld [vmem:[%s349 + $0x13e8] sm:$0xff]
        %v1065 = vld [vmem:[%s349 + $0x13f0] sm:$0xff]
        %v1066 = vld [vmem:[%s349 + $0x13f8] sm:$0xff]
        %v1067 = vld [vmem:[%s349 + $0x1400] sm:$0xff]
        %v1068 = vld [vmem:[%s349 + $0x1408] sm:$0xff]
        %v1069 = vld [vmem:[%s349 + $0x1410] sm:$0xff]
        %v1070 = vld [vmem:[%s349 + $0x1418] sm:$0xff]
        %v1071 = vld [vmem:[%s349 + $0x1420] sm:$0xff]
        %v1072 = vld [vmem:[%s349 + $0x1428] sm:$0xff]
        %v1073 = vld [vmem:[%s349 + $0x1430] sm:$0xff]
        %v1074 = vld [vmem:[%s349 + $0x1438] sm:$0xff]
        %v1075 = vld [vmem:[%s349 + $0x1440] sm:$0xff]
        %v1076 = vld [vmem:[%s349 + $0x1448] sm:$0xff]
        %v1077 = vld [vmem:[%s349 + $0x1450] sm:$0xff]
        %v1078 = vld [vmem:[%s349 + $0x1458] sm:$0xff]
        %v1079 = vld [vmem:[%s349 + $0x1460] sm:$0xff]
        %v1080 = vld [vmem:[%s349 + $0x1468] sm:$0xff]
        %v1081 = vld [vmem:[%s349 + $0x1470] sm:$0xff]
        %v1082 = vld [vmem:[%s349 + $0x1478] sm:$0xff]
        %v1083 = vld [vmem:[%s349 + $0x1480] sm:$0xff]
        %v1084 = vld [vmem:[%s349 + $0x1488] sm:$0xff]
        %v1085 = vld [vmem:[%s349 + $0x1490] sm:$0xff]
        %v1086 = vld [vmem:[%s349 + $0x1498] sm:$0xff]
        %v1087 = vld [vmem:[%s349 + $0x14a0] sm:$0xff]
        %v1088 = vld [vmem:[%s349 + $0x14a8] sm:$0xff]
        %v1089 = vld [vmem:[%s349 + $0x14b0] sm:$0xff]
        %v1090 = vld [vmem:[%s349 + $0x14b8] sm:$0xff]
        %v1091 = vld [vmem:[%s349 + $0x14c0] sm:$0xff]
        %v1092 = vld [vmem:[%s349 + $0x14c8] sm:$0xff]
        %v1093 = vld [vmem:[%s349 + $0x14d0] sm:$0xff]
        %v1094 = vld [vmem:[%s349 + $0x14d8] sm:$0xff]
        %v1095 = vld [vmem:[%s349 + $0x14e0] sm:$0xff]
        %v1096 = vld [vmem:[%s349 + $0x14e8] sm:$0xff]
        %v1097 = vld [vmem:[%s349 + $0x14f0] sm:$0xff]
        %v1098 = vld [vmem:[%s349 + $0x14f8] sm:$0xff]
        %v1099 = vld [vmem:[%s349 + $0x1500] sm:$0xff]
        %v1100 = vld [vmem:[%s349 + $0x1508] sm:$0xff]
        %v1101 = vld [vmem:[%s349 + $0x1510] sm:$0xff]
        %v1102 = vld [vmem:[%s349 + $0x1518] sm:$0xff]
        %v1103 = vld [vmem:[%s349 + $0x1520] sm:$0xff]
        %v1104 = vld [vmem:[%s349 + $0x1528] sm:$0xff]
        %v1105 = vld [vmem:[%s349 + $0x1530] sm:$0xff]
        %v1106 = vld [vmem:[%s349 + $0x1538] sm:$0xff]
        %v1107 = vld [vmem:[%s349 + $0x1540] sm:$0xff]
        %v1108 = vld [vmem:[%s349 + $0x1548] sm:$0xff]
        %v1109 = vld [vmem:[%s349 + $0x1550] sm:$0xff]
        %v1110 = vld [vmem:[%s349 + $0x1558] sm:$0xff]
        %v1111 = vld [vmem:[%s349 + $0x1560] sm:$0xff]
        %v1112 = vld [vmem:[%s349 + $0x1568] sm:$0xff]
        %v1113 = vld [vmem:[%s349 + $0x1570] sm:$0xff]
        %v1114 = vld [vmem:[%s349 + $0x1578] sm:$0xff]
        %v1115 = vld [vmem:[%s349 + $0x1580] sm:$0xff]
        %v1116 = vld [vmem:[%s349 + $0x1588] sm:$0xff]
        %v1117 = vld [vmem:[%s349 + $0x1590] sm:$0xff]
        %v1118 = vld [vmem:[%s349 + $0x1598] sm:$0xff]
        %v1119 = vld [vmem:[%s349 + $0x15a0] sm:$0xff]
        %v1120 = vld [vmem:[%s349 + $0x15a8] sm:$0xff]
        %v1121 = vld [vmem:[%s349 + $0x15b0] sm:$0xff]
        %v1122 = vld [vmem:[%s349 + $0x15b8] sm:$0xff]
        %v1123 = vld [vmem:[%s349 + $0x15c0] sm:$0xff]
        %v1124 = vld [vmem:[%s349 + $0x15c8] sm:$0xff]
        %v1125 = vld [vmem:[%s349 + $0x15d0] sm:$0xff]
        %v1126 = vld [vmem:[%s349 + $0x15d8] sm:$0xff]
        %v1127 = vld [vmem:[%s349 + $0x15e0] sm:$0xff]
        %v1128 = vld [vmem:[%s349 + $0x15e8] sm:$0xff]
        %v1129 = vld [vmem:[%s349 + $0x15f0] sm:$0xff]
        %v1130 = vld [vmem:[%s349 + $0x15f8] sm:$0xff]
        %v1131 = vld [vmem:[%s349 + $0x1600] sm:$0xff]
        %v1132 = vld [vmem:[%s349 + $0x1608] sm:$0xff]
        %v1133 = vld [vmem:[%s349 + $0x1610] sm:$0xff]
        %v1134 = vld [vmem:[%s349 + $0x1618] sm:$0xff]
        %v1135 = vld [vmem:[%s349 + $0x1620] sm:$0xff]
        %v1136 = vld [vmem:[%s349 + $0x1628] sm:$0xff]
        %v1137 = vld [vmem:[%s349 + $0x1630] sm:$0xff]
        %v1138 = vld [vmem:[%s349 + $0x1638] sm:$0xff]
        %v1139 = vld [vmem:[%s349 + $0x1640] sm:$0xff]
        %v1140 = vld [vmem:[%s349 + $0x1648] sm:$0xff]
        %v1141 = vld [vmem:[%s349 + $0x1650] sm:$0xff]
        %v1142 = vld [vmem:[%s349 + $0x1658] sm:$0xff]
        %v1143 = vld [vmem:[%s349 + $0x1660] sm:$0xff]
        %v1144 = vld [vmem:[%s349 + $0x1668] sm:$0xff]
        %v1145 = vld [vmem:[%s349 + $0x1670] sm:$0xff]
        %v1146 = vld [vmem:[%s349 + $0x1678] sm:$0xff]
        %v1147 = vld [vmem:[%s349 + $0x1680] sm:$0xff]
        %v1148 = vld [vmem:[%s349 + $0x1688] sm:$0xff]
        %v1149 = vld [vmem:[%s349 + $0x1690] sm:$0xff]
        %v1150 = vld [vmem:[%s349 + $0x1698] sm:$0xff]
        %v1151 = vld [vmem:[%s349 + $0x16a0] sm:$0xff]
        %v1152 = vld [vmem:[%s349 + $0x16a8] sm:$0xff]
        %v1153 = vld [vmem:[%s349 + $0x16b0] sm:$0xff]
        %v1154 = vld [vmem:[%s349 + $0x16b8] sm:$0xff]
        %v1155 = vld [vmem:[%s349 + $0x16c0] sm:$0xff]
        %v1156 = vld [vmem:[%s349 + $0x16c8] sm:$0xff]
        %v1157 = vld [vmem:[%s349 + $0x16d0] sm:$0xff]
        %v1158 = vld [vmem:[%s349 + $0x16d8] sm:$0xff]
        %v1159 = vld [vmem:[%s349 + $0x16e0] sm:$0xff]
        %v1160 = vld [vmem:[%s349 + $0x16e8] sm:$0xff]
        %v1161 = vld [vmem:[%s349 + $0x16f0] sm:$0xff]
        %v1162 = vld [vmem:[%s349 + $0x16f8] sm:$0xff]
        %v1163 = vld [vmem:[%s349 + $0x1700] sm:$0xff]
        %v1164 = vld [vmem:[%s349 + $0x1708] sm:$0xff]
        %v1165 = vld [vmem:[%s349 + $0x1710] sm:$0xff]
        %v1166 = vld [vmem:[%s349 + $0x1718] sm:$0xff]
        %v1167 = vld [vmem:[%s349 + $0x1720] sm:$0xff]
        %v1168 = vld [vmem:[%s349 + $0x1728] sm:$0xff]
        %v1169 = vld [vmem:[%s349 + $0x1730] sm:$0xff]
        %v1170 = vld [vmem:[%s349 + $0x1738] sm:$0xff]
        %v1171 = vld [vmem:[%s349 + $0x1740] sm:$0xff]
        %v1172 = vld [vmem:[%s349 + $0x1748] sm:$0xff]
        %v1173 = vld [vmem:[%s349 + $0x1750] sm:$0xff]
        %v1174 = vld [vmem:[%s349 + $0x1758] sm:$0xff]
        %v1175 = vld [vmem:[%s349 + $0x1760] sm:$0xff]
        %v1176 = vld [vmem:[%s349 + $0x1768] sm:$0xff]
        %v1177 = vld [vmem:[%s349 + $0x1770] sm:$0xff]
        %v1178 = vld [vmem:[%s349 + $0x1778] sm:$0xff]
        %v1179 = vld [vmem:[%s349 + $0x1780] sm:$0xff]
        %v1180 = vld [vmem:[%s349 + $0x1788] sm:$0xff]
        %v1181 = vld [vmem:[%s349 + $0x1790] sm:$0xff]
        %v1182 = vld [vmem:[%s349 + $0x1798] sm:$0xff]
        %v1183 = vld [vmem:[%s349 + $0x17a0] sm:$0xff]
        %v1184 = vld [vmem:[%s349 + $0x17a8] sm:$0xff]
        %v1185 = vld [vmem:[%s349 + $0x17b0] sm:$0xff]
        %v1186 = vld [vmem:[%s349 + $0x17b8] sm:$0xff]
        %v1187 = vld [vmem:[%s349 + $0x17c0] sm:$0xff]
        %v1188 = vld [vmem:[%s349 + $0x17c8] sm:$0xff]
        %v1189 = vld [vmem:[%s349 + $0x17d0] sm:$0xff]
        %v1190 = vld [vmem:[%s349 + $0x17d8] sm:$0xff]
        %v1191 = vld [vmem:[%s349 + $0x17e0] sm:$0xff]
        %v1192 = vld [vmem:[%s349 + $0x17e8] sm:$0xff]
        %v1193 = vld [vmem:[%s349 + $0x17f0] sm:$0xff]
        %v1194 = vld [vmem:[%s349 + $0x17f8] sm:$0xff]
        %v1195 = vld [vmem:[%s349 + $0x1800] sm:$0xff]
        %v1196 = vld [vmem:[%s349 + $0x1808] sm:$0xff]
        %v1197 = vld [vmem:[%s349 + $0x1810] sm:$0xff]
        %v1198 = vld [vmem:[%s349 + $0x1818] sm:$0xff]
        %v1199 = vld [vmem:[%s349 + $0x1820] sm:$0xff]
        %v1200 = vld [vmem:[%s349 + $0x1828] sm:$0xff]
        %v1201 = vld [vmem:[%s349 + $0x1830] sm:$0xff]
        %v1202 = vld [vmem:[%s349 + $0x1838] sm:$0xff]
        %v1203 = vld [vmem:[%s349 + $0x1840] sm:$0xff]
        %v1204 = vld [vmem:[%s349 + $0x1848] sm:$0xff]
        %v1205 = vld [vmem:[%s349 + $0x1850] sm:$0xff]
        %v1206 = vld [vmem:[%s349 + $0x1858] sm:$0xff]
        %v1207 = vld [vmem:[%s349 + $0x1860] sm:$0xff]
        %v1208 = vld [vmem:[%s349 + $0x1868] sm:$0xff]
        %v1209 = vld [vmem:[%s349 + $0x1870] sm:$0xff]
        %v1210 = vld [vmem:[%s349 + $0x1878] sm:$0xff]
        %v1211 = vld [vmem:[%s349 + $0x1880] sm:$0xff]
        %v1212 = vld [vmem:[%s349 + $0x1888] sm:$0xff]
        %v1213 = vld [vmem:[%s349 + $0x1890] sm:$0xff]
        %v1214 = vld [vmem:[%s349 + $0x1898] sm:$0xff]
        %v1215 = vld [vmem:[%s349 + $0x18a0] sm:$0xff]
        %v1216 = vld [vmem:[%s349 + $0x18a8] sm:$0xff]
        %v1217 = vld [vmem:[%s349 + $0x18b0] sm:$0xff]
        %v1218 = vld [vmem:[%s349 + $0x18b8] sm:$0xff]
        %v1219 = vld [vmem:[%s349 + $0x18c0] sm:$0xff]
        %v1220 = vld [vmem:[%s349 + $0x18c8] sm:$0xff]
        %v1221 = vld [vmem:[%s349 + $0x18d0] sm:$0xff]
        %v1222 = vld [vmem:[%s349 + $0x18d8] sm:$0xff]
        %v1223 = vld [vmem:[%s349 + $0x18e0] sm:$0xff]
        %v1224 = vld [vmem:[%s349 + $0x18e8] sm:$0xff]
        %v1225 = vld [vmem:[%s349 + $0x18f0] sm:$0xff]
        %v1226 = vld [vmem:[%s349 + $0x18f8] sm:$0xff]
        %v1227 = vld [vmem:[%s349 + $0x1900] sm:$0xff]
        %v1228 = vld [vmem:[%s349 + $0x1908] sm:$0xff]
        %v1229 = vld [vmem:[%s349 + $0x1910] sm:$0xff]
        %v1230 = vld [vmem:[%s349 + $0x1918] sm:$0xff]
        %v1231 = vld [vmem:[%s349 + $0x1920] sm:$0xff]
        %v1232 = vld [vmem:[%s349 + $0x1928] sm:$0xff]
        %v1233 = vld [vmem:[%s349 + $0x1930] sm:$0xff]
        %v1234 = vld [vmem:[%s349 + $0x1938] sm:$0xff]
        %v1235 = vld [vmem:[%s349 + $0x1940] sm:$0xff]
        %v1236 = vld [vmem:[%s349 + $0x1948] sm:$0xff]
        %v1237 = vld [vmem:[%s349 + $0x1950] sm:$0xff]
        %v1238 = vld [vmem:[%s349 + $0x1958] sm:$0xff]
        %v1239 = vld [vmem:[%s349 + $0x1960] sm:$0xff]
        %v1240 = vld [vmem:[%s349 + $0x1968] sm:$0xff]
        %v1241 = vld [vmem:[%s349 + $0x1970] sm:$0xff]
        %v1242 = vld [vmem:[%s349 + $0x1978] sm:$0xff]
        %v1243 = vld [vmem:[%s349 + $0x1980] sm:$0xff]
        %v1244 = vld [vmem:[%s349 + $0x1988] sm:$0xff]
        %v1245 = vld [vmem:[%s349 + $0x1990] sm:$0xff]
        %v1246 = vld [vmem:[%s349 + $0x1998] sm:$0xff]
        %v1247 = vld [vmem:[%s349 + $0x19a0] sm:$0xff]
        %v1248 = vld [vmem:[%s349 + $0x19a8] sm:$0xff]
        %v1249 = vld [vmem:[%s349 + $0x19b0] sm:$0xff]
        %v1250 = vld [vmem:[%s349 + $0x19b8] sm:$0xff]
        %v1251 = vld [vmem:[%s349 + $0x19c0] sm:$0xff]
        %v1252 = vld [vmem:[%s349 + $0x19c8] sm:$0xff]
        %v1253 = vld [vmem:[%s349 + $0x19d0] sm:$0xff]
        %v1254 = vld [vmem:[%s349 + $0x19d8] sm:$0xff]
        %v1255 = vld [vmem:[%s349 + $0x19e0] sm:$0xff]
        %v1256 = vld [vmem:[%s349 + $0x19e8] sm:$0xff]
        %v1257 = vld [vmem:[%s349 + $0x19f0] sm:$0xff]
        %v1258 = vld [vmem:[%s349 + $0x19f8] sm:$0xff]
        %v1259 = vld [vmem:[%s349 + $0x1a00] sm:$0xff]
        %v1260 = vld [vmem:[%s349 + $0x1a08] sm:$0xff]
        %v1261 = vld [vmem:[%s349 + $0x1a10] sm:$0xff]
        %v1262 = vld [vmem:[%s349 + $0x1a18] sm:$0xff]
        %v1263 = vld [vmem:[%s349 + $0x1a20] sm:$0xff]
        %v1264 = vld [vmem:[%s349 + $0x1a28] sm:$0xff]
        %v1265 = vld [vmem:[%s349 + $0x1a30] sm:$0xff]
        %v1266 = vld [vmem:[%s349 + $0x1a38] sm:$0xff]
        %v1267 = vld [vmem:[%s349 + $0x1a40] sm:$0xff]
        %v1268 = vld [vmem:[%s349 + $0x1a48] sm:$0xff]
        %v1269 = vld [vmem:[%s349 + $0x1a50] sm:$0xff]
        %v1270 = vld [vmem:[%s349 + $0x1a58] sm:$0xff]
        %v1271 = vld [vmem:[%s349 + $0x1a60] sm:$0xff]
        %v1272 = vld [vmem:[%s349 + $0x1a68] sm:$0xff]
        %v1273 = vld [vmem:[%s349 + $0x1a70] sm:$0xff]
        %v1274 = vld [vmem:[%s349 + $0x1a78] sm:$0xff]
        %v1275 = vld [vmem:[%s349 + $0x1a80] sm:$0xff]
        %v1276 = vld [vmem:[%s349 + $0x1a88] sm:$0xff]
        %v1277 = vld [vmem:[%s349 + $0x1a90] sm:$0xff]
        %v1278 = vld [vmem:[%s349 + $0x1a98] sm:$0xff]
        %v1279 = vld [vmem:[%s349 + $0x1aa0] sm:$0xff]
        %v1280 = vld [vmem:[%s349 + $0x1aa8] sm:$0xff]
        %v1281 = vld [vmem:[%s349 + $0x1ab0] sm:$0xff]
        %v1282 = vld [vmem:[%s349 + $0x1ab8] sm:$0xff]
        %v1283 = vld [vmem:[%s349 + $0x1ac0] sm:$0xff]
        %v1284 = vld [vmem:[%s349 + $0x1ac8] sm:$0xff]
        %v1285 = vld [vmem:[%s349 + $0x1ad0] sm:$0xff]
        %v1286 = vld [vmem:[%s349 + $0x1ad8] sm:$0xff]
        %v1287 = vld [vmem:[%s349 + $0x1ae0] sm:$0xff]
        %v1288 = vld [vmem:[%s349 + $0x1ae8] sm:$0xff]
        %v1289 = vld [vmem:[%s349 + $0x1af0] sm:$0xff]
        %v1290 = vld [vmem:[%s349 + $0x1af8] sm:$0xff]
        %v1291 = vld [vmem:[%s349 + $0x1b00] sm:$0xff]
        %v1292 = vld [vmem:[%s349 + $0x1b08] sm:$0xff]
        %v1293 = vld [vmem:[%s349 + $0x1b10] sm:$0xff]
        %v1294 = vld [vmem:[%s349 + $0x1b18] sm:$0xff]
        %v1295 = vld [vmem:[%s349 + $0x1b20] sm:$0xff]
        %v1296 = vld [vmem:[%s349 + $0x1b28] sm:$0xff]
        %v1297 = vld [vmem:[%s349 + $0x1b30] sm:$0xff]
        %v1298 = vld [vmem:[%s349 + $0x1b38] sm:$0xff]
        %v1299 = vld [vmem:[%s349 + $0x1b40] sm:$0xff]
        %v1300 = vld [vmem:[%s349 + $0x1b48] sm:$0xff]
        %v1301 = vld [vmem:[%s349 + $0x1b50] sm:$0xff]
        %v1302 = vld [vmem:[%s349 + $0x1b58] sm:$0xff]
        %v1303 = vld [vmem:[%s349 + $0x1b60] sm:$0xff]
        %v1304 = vld [vmem:[%s349 + $0x1b68] sm:$0xff]
        %v1305 = vld [vmem:[%s349 + $0x1b70] sm:$0xff]
        %v1306 = vld [vmem:[%s349 + $0x1b78] sm:$0xff]
        %v1307 = vld [vmem:[%s349 + $0x1b80] sm:$0xff]
        %v1308 = vld [vmem:[%s349 + $0x1b88] sm:$0xff]
        %v1309 = vld [vmem:[%s349 + $0x1b90] sm:$0xff]
        %v1310 = vld [vmem:[%s349 + $0x1b98] sm:$0xff]
        %v1311 = vld [vmem:[%s349 + $0x1ba0] sm:$0xff]
        %v1312 = vld [vmem:[%s349 + $0x1ba8] sm:$0xff]
        %v1313 = vld [vmem:[%s349 + $0x1bb0] sm:$0xff]
        %v1314 = vld [vmem:[%s349 + $0x1bb8] sm:$0xff]
        %v1315 = vld [vmem:[%s349 + $0x1bc0] sm:$0xff]
        %v1316 = vld [vmem:[%s349 + $0x1bc8] sm:$0xff]
        %v1317 = vld [vmem:[%s349 + $0x1bd0] sm:$0xff]
        %v1318 = vld [vmem:[%s349 + $0x1bd8] sm:$0xff]
        %v1319 = vld [vmem:[%s349 + $0x1be0] sm:$0xff]
        %v1320 = vld [vmem:[%s349 + $0x1be8] sm:$0xff]
        %v1321 = vld [vmem:[%s349 + $0x1bf0] sm:$0xff]
        %v1322 = vld [vmem:[%s349 + $0x1bf8] sm:$0xff]
        %v1323 = vld [vmem:[%s349 + $0x1c00] sm:$0xff]
        %v1324 = vld [vmem:[%s349 + $0x1c08] sm:$0xff]
        %v1325 = vld [vmem:[%s349 + $0x1c10] sm:$0xff]
        %v1326 = vld [vmem:[%s349 + $0x1c18] sm:$0xff]
        %v1327 = vld [vmem:[%s349 + $0x1c20] sm:$0xff]
        %v1328 = vld [vmem:[%s349 + $0x1c28] sm:$0xff]
        %v1329 = vld [vmem:[%s349 + $0x1c30] sm:$0xff]
        %v1330 = vld [vmem:[%s349 + $0x1c38] sm:$0xff]
        %v1331 = vld [vmem:[%s349 + $0x1c40] sm:$0xff]
        %v1332 = vld [vmem:[%s349 + $0x1c48] sm:$0xff]
        %v1333 = vld [vmem:[%s349 + $0x1c50] sm:$0xff]
        %v1334 = vld [vmem:[%s349 + $0x1c58] sm:$0xff]
        %v1335 = vld [vmem:[%s349 + $0x1c60] sm:$0xff]
        %v1336 = vld [vmem:[%s349 + $0x1c68] sm:$0xff]
        %v1337 = vld [vmem:[%s349 + $0x1c70] sm:$0xff]
        %v1338 = vld [vmem:[%s349 + $0x1c78] sm:$0xff]
        %v1339 = vld [vmem:[%s349 + $0x1c80] sm:$0xff]
        %v1340 = vld [vmem:[%s349 + $0x1c88] sm:$0xff]
        %v1341 = vld [vmem:[%s349 + $0x1c90] sm:$0xff]
        %v1342 = vld [vmem:[%s349 + $0x1c98] sm:$0xff]
        %v1343 = vld [vmem:[%s349 + $0x1ca0] sm:$0xff]
        %v1344 = vld [vmem:[%s349 + $0x1ca8] sm:$0xff]
        %v1345 = vld [vmem:[%s349 + $0x1cb0] sm:$0xff]
        %v1346 = vld [vmem:[%s349 + $0x1cb8] sm:$0xff]
        %v1347 = vld [vmem:[%s349 + $0x1cc0] sm:$0xff]
        %v1348 = vld [vmem:[%s349 + $0x1cc8] sm:$0xff]
        %v1349 = vld [vmem:[%s349 + $0x1cd0] sm:$0xff]
        %v1350 = vld [vmem:[%s349 + $0x1cd8] sm:$0xff]
        %v1351 = vld [vmem:[%s349 + $0x1ce0] sm:$0xff]
        %v1352 = vld [vmem:[%s349 + $0x1ce8] sm:$0xff]
        %v1353 = vld [vmem:[%s349 + $0x1cf0] sm:$0xff]
        %v1354 = vld [vmem:[%s349 + $0x1cf8] sm:$0xff]
        %v1355 = vld [vmem:[%s349 + $0x1d00] sm:$0xff]
        %v1356 = vld [vmem:[%s349 + $0x1d08] sm:$0xff]
        %v1357 = vld [vmem:[%s349 + $0x1d10] sm:$0xff]
        %v1358 = vld [vmem:[%s349 + $0x1d18] sm:$0xff]
        %v1359 = vld [vmem:[%s349 + $0x1d20] sm:$0xff]
        %v1360 = vld [vmem:[%s349 + $0x1d28] sm:$0xff]
        %v1361 = vld [vmem:[%s349 + $0x1d30] sm:$0xff]
        %v1362 = vld [vmem:[%s349 + $0x1d38] sm:$0xff]
        %v1363 = vld [vmem:[%s349 + $0x1d40] sm:$0xff]
        %v1364 = vld [vmem:[%s349 + $0x1d48] sm:$0xff]
        %v1365 = vld [vmem:[%s349 + $0x1d50] sm:$0xff]
        %v1366 = vld [vmem:[%s349 + $0x1d58] sm:$0xff]
        %v1367 = vld [vmem:[%s349 + $0x1d60] sm:$0xff]
        %v1368 = vld [vmem:[%s349 + $0x1d68] sm:$0xff]
        %v1369 = vld [vmem:[%s349 + $0x1d70] sm:$0xff]
        %v1370 = vld [vmem:[%s349 + $0x1d78] sm:$0xff]
        %v1371 = vld [vmem:[%s349 + $0x1d80] sm:$0xff]
        %v1372 = vld [vmem:[%s349 + $0x1d88] sm:$0xff]
        %v1373 = vld [vmem:[%s349 + $0x1d90] sm:$0xff]
        %v1374 = vld [vmem:[%s349 + $0x1d98] sm:$0xff]
        %v1375 = vld [vmem:[%s349 + $0x1da0] sm:$0xff]
        %v1376 = vld [vmem:[%s349 + $0x1da8] sm:$0xff]
        %v1377 = vld [vmem:[%s349 + $0x1db0] sm:$0xff]
        %v1378 = vld [vmem:[%s349 + $0x1db8] sm:$0xff]
        %v1379 = vld [vmem:[%s349 + $0x1dc0] sm:$0xff]
        %v1380 = vld [vmem:[%s349 + $0x1dc8] sm:$0xff]
        %v1381 = vld [vmem:[%s349 + $0x1dd0] sm:$0xff]
        %v1382 = vld [vmem:[%s349 + $0x1dd8] sm:$0xff]
        %v1383 = vld [vmem:[%s349 + $0x1de0] sm:$0xff]
        %v1384 = vld [vmem:[%s349 + $0x1de8] sm:$0xff]
        %v1385 = vld [vmem:[%s349 + $0x1df0] sm:$0xff]
        %v1386 = vld [vmem:[%s349 + $0x1df8] sm:$0xff]
        %v1387 = vld [vmem:[%s349 + $0x1e00] sm:$0xff]
        %v1388 = vld [vmem:[%s349 + $0x1e08] sm:$0xff]
        %v1389 = vld [vmem:[%s349 + $0x1e10] sm:$0xff]
        %v1390 = vld [vmem:[%s349 + $0x1e18] sm:$0xff]
        %v1391 = vld [vmem:[%s349 + $0x1e20] sm:$0xff]
        %v1392 = vld [vmem:[%s349 + $0x1e28] sm:$0xff]
        %v1393 = vld [vmem:[%s349 + $0x1e30] sm:$0xff]
        %v1394 = vld [vmem:[%s349 + $0x1e38] sm:$0xff]
        %v1395 = vld [vmem:[%s349 + $0x1e40] sm:$0xff]
        %v1396 = vld [vmem:[%s349 + $0x1e48] sm:$0xff]
        %v1397 = vld [vmem:[%s349 + $0x1e50] sm:$0xff]
        %v1398 = vld [vmem:[%s349 + $0x1e58] sm:$0xff]
        %v1399 = vld [vmem:[%s349 + $0x1e60] sm:$0xff]
        %v1400 = vld [vmem:[%s349 + $0x1e68] sm:$0xff]
        %v1401 = vld [vmem:[%s349 + $0x1e70] sm:$0xff]
        %v1402 = vld [vmem:[%s349 + $0x1e78] sm:$0xff]
        %v1403 = vld [vmem:[%s349 + $0x1e80] sm:$0xff]
        %v1404 = vld [vmem:[%s349 + $0x1e88] sm:$0xff]
        %v1405 = vld [vmem:[%s349 + $0x1e90] sm:$0xff]
        %v1406 = vld [vmem:[%s349 + $0x1e98] sm:$0xff]
        %v1407 = vld [vmem:[%s349 + $0x1ea0] sm:$0xff]
        %v1408 = vld [vmem:[%s349 + $0x1ea8] sm:$0xff]
        %v1409 = vld [vmem:[%s349 + $0x1eb0] sm:$0xff]
        %v1410 = vld [vmem:[%s349 + $0x1eb8] sm:$0xff]
        %v1411 = vld [vmem:[%s349 + $0x1ec0] sm:$0xff]
        %v1412 = vld [vmem:[%s349 + $0x1ec8] sm:$0xff]
        %v1413 = vld [vmem:[%s349 + $0x1ed0] sm:$0xff]
        %v1414 = vld [vmem:[%s349 + $0x1ed8] sm:$0xff]
        %v1415 = vld [vmem:[%s349 + $0x1ee0] sm:$0xff]
        %v1416 = vld [vmem:[%s349 + $0x1ee8] sm:$0xff]
        %v1417 = vld [vmem:[%s349 + $0x1ef0] sm:$0xff]
        %v1418 = vld [vmem:[%s349 + $0x1ef8] sm:$0xff]
        %v1419 = vld [vmem:[%s349 + $0x1f00] sm:$0xff]
        %v1420 = vld [vmem:[%s349 + $0x1f08] sm:$0xff]
        %v1421 = vld [vmem:[%s349 + $0x1f10] sm:$0xff]
        %v1422 = vld [vmem:[%s349 + $0x1f18] sm:$0xff]
        %v1423 = vld [vmem:[%s349 + $0x1f20] sm:$0xff]
        %v1424 = vld [vmem:[%s349 + $0x1f28] sm:$0xff]
        %v1425 = vld [vmem:[%s349 + $0x1f30] sm:$0xff]
        %v1426 = vld [vmem:[%s349 + $0x1f38] sm:$0xff]
        %v1427 = vld [vmem:[%s349 + $0x1f40] sm:$0xff]
        %v1428 = vld [vmem:[%s349 + $0x1f48] sm:$0xff]
        %v1429 = vld [vmem:[%s349 + $0x1f50] sm:$0xff]
        %v1430 = vld [vmem:[%s349 + $0x1f58] sm:$0xff]
        %v1431 = vld [vmem:[%s349 + $0x1f60] sm:$0xff]
        %v1432 = vld [vmem:[%s349 + $0x1f68] sm:$0xff]
        %v1433 = vld [vmem:[%s349 + $0x1f70] sm:$0xff]
        %v1434 = vld [vmem:[%s349 + $0x1f78] sm:$0xff]
        %v1435 = vld [vmem:[%s349 + $0x1f80] sm:$0xff]
        %v1436 = vld [vmem:[%s349 + $0x1f88] sm:$0xff]
        %v1437 = vld [vmem:[%s349 + $0x1f90] sm:$0xff]
        %v1438 = vld [vmem:[%s349 + $0x1f98] sm:$0xff]
        %v1439 = vld [vmem:[%s349 + $0x1fa0] sm:$0xff]
        %v1440 = vld [vmem:[%s349 + $0x1fa8] sm:$0xff]
        %v1441 = vld [vmem:[%s349 + $0x1fb0] sm:$0xff]
        %v1442 = vld [vmem:[%s349 + $0x1fb8] sm:$0xff]
        %v1443 = vld [vmem:[%s349 + $0x1fc0] sm:$0xff]
        %v1444 = vld [vmem:[%s349 + $0x1fc8] sm:$0xff]
        %v1445 = vld [vmem:[%s349 + $0x1fd0] sm:$0xff]
        %v1446 = vld [vmem:[%s349 + $0x1fd8] sm:$0xff]
        %v1447 = vld [vmem:[%s349 + $0x1fe0] sm:$0xff]
        %v1448 = vld [vmem:[%s349 + $0x1fe8] sm:$0xff]
        %v1449 = vld [vmem:[%s349 + $0x1ff0] sm:$0xff]
        %v1450 = vld [vmem:[%s349 + $0x1ff8] sm:$0xff]
        %v1451 = vunpack.c.l.bf16 %v427
        %v1452 = vunpack.c.h.bf16 %v427
        %v1453 = vunpack.c.l.bf16 %v428
        %v1454 = vunpack.c.h.bf16 %v428
        %v1455 = vunpack.c.l.bf16 %v429
        %v1456 = vunpack.c.h.bf16 %v429
        %v1457 = vunpack.c.l.bf16 %v430
        %v1458 = vunpack.c.h.bf16 %v430
        %v1459 = vunpack.c.l.bf16 %v431
        %v1460 = vunpack.c.h.bf16 %v431
        %v1461 = vunpack.c.l.bf16 %v432
        %v1462 = vunpack.c.h.bf16 %v432
        %v1463 = vunpack.c.l.bf16 %v433
        %v1464 = vunpack.c.h.bf16 %v433
        %v1465 = vunpack.c.l.bf16 %v434
        %v1466 = vunpack.c.h.bf16 %v434
        %v1467 = vunpack.c.l.bf16 %v435
        %v1468 = vunpack.c.h.bf16 %v435
        %v1469 = vunpack.c.l.bf16 %v436
        %v1470 = vunpack.c.h.bf16 %v436
        %v1471 = vunpack.c.l.bf16 %v437
        %v1472 = vunpack.c.h.bf16 %v437
        %v1473 = vunpack.c.l.bf16 %v438
        %v1474 = vunpack.c.h.bf16 %v438
        %v1475 = vunpack.c.l.bf16 %v439
        %v1476 = vunpack.c.h.bf16 %v439
        %v1477 = vunpack.c.l.bf16 %v440
        %v1478 = vunpack.c.h.bf16 %v440
        %v1479 = vunpack.c.l.bf16 %v441
        %v1480 = vunpack.c.h.bf16 %v441
        %v1481 = vunpack.c.l.bf16 %v442
        %v1482 = vunpack.c.h.bf16 %v442
        %v1483 = vunpack.c.l.bf16 %v443
        %v1484 = vunpack.c.h.bf16 %v443
        %v1485 = vunpack.c.l.bf16 %v444
        %v1486 = vunpack.c.h.bf16 %v444
        %v1487 = vunpack.c.l.bf16 %v445
        %v1488 = vunpack.c.h.bf16 %v445
        %v1489 = vunpack.c.l.bf16 %v446
        %v1490 = vunpack.c.h.bf16 %v446
        %v1491 = vunpack.c.l.bf16 %v447
        %v1492 = vunpack.c.h.bf16 %v447
        %v1493 = vunpack.c.l.bf16 %v448
        %v1494 = vunpack.c.h.bf16 %v448
        %v1495 = vunpack.c.l.bf16 %v449
        %v1496 = vunpack.c.h.bf16 %v449
        %v1497 = vunpack.c.l.bf16 %v450
        %v1498 = vunpack.c.h.bf16 %v450
        %v1499 = vunpack.c.l.bf16 %v451
        %v1500 = vunpack.c.h.bf16 %v451
        %v1501 = vunpack.c.l.bf16 %v452
        %v1502 = vunpack.c.h.bf16 %v452
        %v1503 = vunpack.c.l.bf16 %v453
        %v1504 = vunpack.c.h.bf16 %v453
        %v1505 = vunpack.c.l.bf16 %v454
        %v1506 = vunpack.c.h.bf16 %v454
        %v1507 = vunpack.c.l.bf16 %v455
        %v1508 = vunpack.c.h.bf16 %v455
        %v1509 = vunpack.c.l.bf16 %v456
        %v1510 = vunpack.c.h.bf16 %v456
        %v1511 = vunpack.c.l.bf16 %v457
        %v1512 = vunpack.c.h.bf16 %v457
        %v1513 = vunpack.c.l.bf16 %v458
        %v1514 = vunpack.c.h.bf16 %v458
        %v1515 = vunpack.c.l.bf16 %v459
        %v1516 = vunpack.c.h.bf16 %v459
        %v1517 = vunpack.c.l.bf16 %v460
        %v1518 = vunpack.c.h.bf16 %v460
        %v1519 = vunpack.c.l.bf16 %v461
        %v1520 = vunpack.c.h.bf16 %v461
        %v1521 = vunpack.c.l.bf16 %v462
        %v1522 = vunpack.c.h.bf16 %v462
        %v1523 = vunpack.c.l.bf16 %v463
        %v1524 = vunpack.c.h.bf16 %v463
        %v1525 = vunpack.c.l.bf16 %v464
        %v1526 = vunpack.c.h.bf16 %v464
        %v1527 = vunpack.c.l.bf16 %v465
        %v1528 = vunpack.c.h.bf16 %v465
        %v1529 = vunpack.c.l.bf16 %v466
        %v1530 = vunpack.c.h.bf16 %v466
        %v1531 = vunpack.c.l.bf16 %v467
        %v1532 = vunpack.c.h.bf16 %v467
        %v1533 = vunpack.c.l.bf16 %v468
        %v1534 = vunpack.c.h.bf16 %v468
        %v1535 = vunpack.c.l.bf16 %v469
        %v1536 = vunpack.c.h.bf16 %v469
        %v1537 = vunpack.c.l.bf16 %v470
        %v1538 = vunpack.c.h.bf16 %v470
        %v1539 = vunpack.c.l.bf16 %v471
        %v1540 = vunpack.c.h.bf16 %v471
        %v1541 = vunpack.c.l.bf16 %v472
        %v1542 = vunpack.c.h.bf16 %v472
        %v1543 = vunpack.c.l.bf16 %v473
        %v1544 = vunpack.c.h.bf16 %v473
        %v1545 = vunpack.c.l.bf16 %v474
        %v1546 = vunpack.c.h.bf16 %v474
        %v1547 = vunpack.c.l.bf16 %v475
        %v1548 = vunpack.c.h.bf16 %v475
        %v1549 = vunpack.c.l.bf16 %v476
        %v1550 = vunpack.c.h.bf16 %v476
        %v1551 = vunpack.c.l.bf16 %v477
        %v1552 = vunpack.c.h.bf16 %v477
        %v1553 = vunpack.c.l.bf16 %v478
        %v1554 = vunpack.c.h.bf16 %v478
        %v1555 = vunpack.c.l.bf16 %v479
        %v1556 = vunpack.c.h.bf16 %v479
        %v1557 = vunpack.c.l.bf16 %v480
        %v1558 = vunpack.c.h.bf16 %v480
        %v1559 = vunpack.c.l.bf16 %v481
        %v1560 = vunpack.c.h.bf16 %v481
        %v1561 = vunpack.c.l.bf16 %v482
        %v1562 = vunpack.c.h.bf16 %v482
        %v1563 = vunpack.c.l.bf16 %v483
        %v1564 = vunpack.c.h.bf16 %v483
        %v1565 = vunpack.c.l.bf16 %v484
        %v1566 = vunpack.c.h.bf16 %v484
        %v1567 = vunpack.c.l.bf16 %v485
        %v1568 = vunpack.c.h.bf16 %v485
        %v1569 = vunpack.c.l.bf16 %v486
        %v1570 = vunpack.c.h.bf16 %v486
        %v1571 = vunpack.c.l.bf16 %v487
        %v1572 = vunpack.c.h.bf16 %v487
        %v1573 = vunpack.c.l.bf16 %v488
        %v1574 = vunpack.c.h.bf16 %v488
        %v1575 = vunpack.c.l.bf16 %v489
        %v1576 = vunpack.c.h.bf16 %v489
        %v1577 = vunpack.c.l.bf16 %v490
        %v1578 = vunpack.c.h.bf16 %v490
        %v1579 = vunpack.c.l.bf16 %v491
        %v1580 = vunpack.c.h.bf16 %v491
        %v1581 = vunpack.c.l.bf16 %v492
        %v1582 = vunpack.c.h.bf16 %v492
        %v1583 = vunpack.c.l.bf16 %v493
        %v1584 = vunpack.c.h.bf16 %v493
        %v1585 = vunpack.c.l.bf16 %v494
        %v1586 = vunpack.c.h.bf16 %v494
        %v1587 = vunpack.c.l.bf16 %v495
        %v1588 = vunpack.c.h.bf16 %v495
        %v1589 = vunpack.c.l.bf16 %v496
        %v1590 = vunpack.c.h.bf16 %v496
        %v1591 = vunpack.c.l.bf16 %v497
        %v1592 = vunpack.c.h.bf16 %v497
        %v1593 = vunpack.c.l.bf16 %v498
        %v1594 = vunpack.c.h.bf16 %v498
        %v1595 = vunpack.c.l.bf16 %v499
        %v1596 = vunpack.c.h.bf16 %v499
        %v1597 = vunpack.c.l.bf16 %v500
        %v1598 = vunpack.c.h.bf16 %v500
        %v1599 = vunpack.c.l.bf16 %v501
        %v1600 = vunpack.c.h.bf16 %v501
        %v1601 = vunpack.c.l.bf16 %v502
        %v1602 = vunpack.c.h.bf16 %v502
        %v1603 = vunpack.c.l.bf16 %v503
        %v1604 = vunpack.c.h.bf16 %v503
        %v1605 = vunpack.c.l.bf16 %v504
        %v1606 = vunpack.c.h.bf16 %v504
        %v1607 = vunpack.c.l.bf16 %v505
        %v1608 = vunpack.c.h.bf16 %v505
        %v1609 = vunpack.c.l.bf16 %v506
        %v1610 = vunpack.c.h.bf16 %v506
        %v1611 = vunpack.c.l.bf16 %v507
        %v1612 = vunpack.c.h.bf16 %v507
        %v1613 = vunpack.c.l.bf16 %v508
        %v1614 = vunpack.c.h.bf16 %v508
        %v1615 = vunpack.c.l.bf16 %v509
        %v1616 = vunpack.c.h.bf16 %v509
        %v1617 = vunpack.c.l.bf16 %v510
        %v1618 = vunpack.c.h.bf16 %v510
        %v1619 = vunpack.c.l.bf16 %v511
        %v1620 = vunpack.c.h.bf16 %v511
        %v1621 = vunpack.c.l.bf16 %v512
        %v1622 = vunpack.c.h.bf16 %v512
        %v1623 = vunpack.c.l.bf16 %v513
        %v1624 = vunpack.c.h.bf16 %v513
        %v1625 = vunpack.c.l.bf16 %v514
        %v1626 = vunpack.c.h.bf16 %v514
        %v1627 = vunpack.c.l.bf16 %v515
        %v1628 = vunpack.c.h.bf16 %v515
        %v1629 = vunpack.c.l.bf16 %v516
        %v1630 = vunpack.c.h.bf16 %v516
        %v1631 = vunpack.c.l.bf16 %v517
        %v1632 = vunpack.c.h.bf16 %v517
        %v1633 = vunpack.c.l.bf16 %v518
        %v1634 = vunpack.c.h.bf16 %v518
        %v1635 = vunpack.c.l.bf16 %v519
        %v1636 = vunpack.c.h.bf16 %v519
        %v1637 = vunpack.c.l.bf16 %v520
        %v1638 = vunpack.c.h.bf16 %v520
        %v1639 = vunpack.c.l.bf16 %v521
        %v1640 = vunpack.c.h.bf16 %v521
        %v1641 = vunpack.c.l.bf16 %v522
        %v1642 = vunpack.c.h.bf16 %v522
        %v1643 = vunpack.c.l.bf16 %v523
        %v1644 = vunpack.c.h.bf16 %v523
        %v1645 = vunpack.c.l.bf16 %v524
        %v1646 = vunpack.c.h.bf16 %v524
        %v1647 = vunpack.c.l.bf16 %v525
        %v1648 = vunpack.c.h.bf16 %v525
        %v1649 = vunpack.c.l.bf16 %v526
        %v1650 = vunpack.c.h.bf16 %v526
        %v1651 = vunpack.c.l.bf16 %v527
        %v1652 = vunpack.c.h.bf16 %v527
        %v1653 = vunpack.c.l.bf16 %v528
        %v1654 = vunpack.c.h.bf16 %v528
        %v1655 = vunpack.c.l.bf16 %v529
        %v1656 = vunpack.c.h.bf16 %v529
        %v1657 = vunpack.c.l.bf16 %v530
        %v1658 = vunpack.c.h.bf16 %v530
        %v1659 = vunpack.c.l.bf16 %v531
        %v1660 = vunpack.c.h.bf16 %v531
        %v1661 = vunpack.c.l.bf16 %v532
        %v1662 = vunpack.c.h.bf16 %v532
        %v1663 = vunpack.c.l.bf16 %v533
        %v1664 = vunpack.c.h.bf16 %v533
        %v1665 = vunpack.c.l.bf16 %v534
        %v1666 = vunpack.c.h.bf16 %v534
        %v1667 = vunpack.c.l.bf16 %v535
        %v1668 = vunpack.c.h.bf16 %v535
        %v1669 = vunpack.c.l.bf16 %v536
        %v1670 = vunpack.c.h.bf16 %v536
        %v1671 = vunpack.c.l.bf16 %v537
        %v1672 = vunpack.c.h.bf16 %v537
        %v1673 = vunpack.c.l.bf16 %v538
        %v1674 = vunpack.c.h.bf16 %v538
        %v1675 = vunpack.c.l.bf16 %v539
        %v1676 = vunpack.c.h.bf16 %v539
        %v1677 = vunpack.c.l.bf16 %v540
        %v1678 = vunpack.c.h.bf16 %v540
        %v1679 = vunpack.c.l.bf16 %v541
        %v1680 = vunpack.c.h.bf16 %v541
        %v1681 = vunpack.c.l.bf16 %v542
        %v1682 = vunpack.c.h.bf16 %v542
        %v1683 = vunpack.c.l.bf16 %v543
        %v1684 = vunpack.c.h.bf16 %v543
        %v1685 = vunpack.c.l.bf16 %v544
        %v1686 = vunpack.c.h.bf16 %v544
        %v1687 = vunpack.c.l.bf16 %v545
        %v1688 = vunpack.c.h.bf16 %v545
        %v1689 = vunpack.c.l.bf16 %v546
        %v1690 = vunpack.c.h.bf16 %v546
        %v1691 = vunpack.c.l.bf16 %v547
        %v1692 = vunpack.c.h.bf16 %v547
        %v1693 = vunpack.c.l.bf16 %v548
        %v1694 = vunpack.c.h.bf16 %v548
        %v1695 = vunpack.c.l.bf16 %v549
        %v1696 = vunpack.c.h.bf16 %v549
        %v1697 = vunpack.c.l.bf16 %v550
        %v1698 = vunpack.c.h.bf16 %v550
        %v1699 = vunpack.c.l.bf16 %v551
        %v1700 = vunpack.c.h.bf16 %v551
        %v1701 = vunpack.c.l.bf16 %v552
        %v1702 = vunpack.c.h.bf16 %v552
        %v1703 = vunpack.c.l.bf16 %v553
        %v1704 = vunpack.c.h.bf16 %v553
        %v1705 = vunpack.c.l.bf16 %v554
        %v1706 = vunpack.c.h.bf16 %v554
        %v1707 = vunpack.c.l.bf16 %v555
        %v1708 = vunpack.c.h.bf16 %v555
        %v1709 = vunpack.c.l.bf16 %v556
        %v1710 = vunpack.c.h.bf16 %v556
        %v1711 = vunpack.c.l.bf16 %v557
        %v1712 = vunpack.c.h.bf16 %v557
        %v1713 = vunpack.c.l.bf16 %v558
        %v1714 = vunpack.c.h.bf16 %v558
        %v1715 = vunpack.c.l.bf16 %v559
        %v1716 = vunpack.c.h.bf16 %v559
        %v1717 = vunpack.c.l.bf16 %v560
        %v1718 = vunpack.c.h.bf16 %v560
        %v1719 = vunpack.c.l.bf16 %v561
        %v1720 = vunpack.c.h.bf16 %v561
        %v1721 = vunpack.c.l.bf16 %v562
        %v1722 = vunpack.c.h.bf16 %v562
        %v1723 = vunpack.c.l.bf16 %v563
        %v1724 = vunpack.c.h.bf16 %v563
        %v1725 = vunpack.c.l.bf16 %v564
        %v1726 = vunpack.c.h.bf16 %v564
        %v1727 = vunpack.c.l.bf16 %v565
        %v1728 = vunpack.c.h.bf16 %v565
        %v1729 = vunpack.c.l.bf16 %v566
        %v1730 = vunpack.c.h.bf16 %v566
        %v1731 = vunpack.c.l.bf16 %v567
        %v1732 = vunpack.c.h.bf16 %v567
        %v1733 = vunpack.c.l.bf16 %v568
        %v1734 = vunpack.c.h.bf16 %v568
        %v1735 = vunpack.c.l.bf16 %v569
        %v1736 = vunpack.c.h.bf16 %v569
        %v1737 = vunpack.c.l.bf16 %v570
        %v1738 = vunpack.c.h.bf16 %v570
        %v1739 = vunpack.c.l.bf16 %v571
        %v1740 = vunpack.c.h.bf16 %v571
        %v1741 = vunpack.c.l.bf16 %v572
        %v1742 = vunpack.c.h.bf16 %v572
        %v1743 = vunpack.c.l.bf16 %v573
        %v1744 = vunpack.c.h.bf16 %v573
        %v1745 = vunpack.c.l.bf16 %v574
        %v1746 = vunpack.c.h.bf16 %v574
        %v1747 = vunpack.c.l.bf16 %v575
        %v1748 = vunpack.c.h.bf16 %v575
        %v1749 = vunpack.c.l.bf16 %v576
        %v1750 = vunpack.c.h.bf16 %v576
        %v1751 = vunpack.c.l.bf16 %v577
        %v1752 = vunpack.c.h.bf16 %v577
        %v1753 = vunpack.c.l.bf16 %v578
        %v1754 = vunpack.c.h.bf16 %v578
        %v1755 = vunpack.c.l.bf16 %v579
        %v1756 = vunpack.c.h.bf16 %v579
        %v1757 = vunpack.c.l.bf16 %v580
        %v1758 = vunpack.c.h.bf16 %v580
        %v1759 = vunpack.c.l.bf16 %v581
        %v1760 = vunpack.c.h.bf16 %v581
        %v1761 = vunpack.c.l.bf16 %v582
        %v1762 = vunpack.c.h.bf16 %v582
        %v1763 = vunpack.c.l.bf16 %v583
        %v1764 = vunpack.c.h.bf16 %v583
        %v1765 = vunpack.c.l.bf16 %v584
        %v1766 = vunpack.c.h.bf16 %v584
        %v1767 = vunpack.c.l.bf16 %v585
        %v1768 = vunpack.c.h.bf16 %v585
        %v1769 = vunpack.c.l.bf16 %v586
        %v1770 = vunpack.c.h.bf16 %v586
        %v1771 = vunpack.c.l.bf16 %v587
        %v1772 = vunpack.c.h.bf16 %v587
        %v1773 = vunpack.c.l.bf16 %v588
        %v1774 = vunpack.c.h.bf16 %v588
        %v1775 = vunpack.c.l.bf16 %v589
        %v1776 = vunpack.c.h.bf16 %v589
        %v1777 = vunpack.c.l.bf16 %v590
        %v1778 = vunpack.c.h.bf16 %v590
        %v1779 = vunpack.c.l.bf16 %v591
        %v1780 = vunpack.c.h.bf16 %v591
        %v1781 = vunpack.c.l.bf16 %v592
        %v1782 = vunpack.c.h.bf16 %v592
        %v1783 = vunpack.c.l.bf16 %v593
        %v1784 = vunpack.c.h.bf16 %v593
        %v1785 = vunpack.c.l.bf16 %v594
        %v1786 = vunpack.c.h.bf16 %v594
        %v1787 = vunpack.c.l.bf16 %v595
        %v1788 = vunpack.c.h.bf16 %v595
        %v1789 = vunpack.c.l.bf16 %v596
        %v1790 = vunpack.c.h.bf16 %v596
        %v1791 = vunpack.c.l.bf16 %v597
        %v1792 = vunpack.c.h.bf16 %v597
        %v1793 = vunpack.c.l.bf16 %v598
        %v1794 = vunpack.c.h.bf16 %v598
        %v1795 = vunpack.c.l.bf16 %v599
        %v1796 = vunpack.c.h.bf16 %v599
        %v1797 = vunpack.c.l.bf16 %v600
        %v1798 = vunpack.c.h.bf16 %v600
        %v1799 = vunpack.c.l.bf16 %v601
        %v1800 = vunpack.c.h.bf16 %v601
        %v1801 = vunpack.c.l.bf16 %v602
        %v1802 = vunpack.c.h.bf16 %v602
        %v1803 = vunpack.c.l.bf16 %v603
        %v1804 = vunpack.c.h.bf16 %v603
        %v1805 = vunpack.c.l.bf16 %v604
        %v1806 = vunpack.c.h.bf16 %v604
        %v1807 = vunpack.c.l.bf16 %v605
        %v1808 = vunpack.c.h.bf16 %v605
        %v1809 = vunpack.c.l.bf16 %v606
        %v1810 = vunpack.c.h.bf16 %v606
        %v1811 = vunpack.c.l.bf16 %v607
        %v1812 = vunpack.c.h.bf16 %v607
        %v1813 = vunpack.c.l.bf16 %v608
        %v1814 = vunpack.c.h.bf16 %v608
        %v1815 = vunpack.c.l.bf16 %v609
        %v1816 = vunpack.c.h.bf16 %v609
        %v1817 = vunpack.c.l.bf16 %v610
        %v1818 = vunpack.c.h.bf16 %v610
        %v1819 = vunpack.c.l.bf16 %v611
        %v1820 = vunpack.c.h.bf16 %v611
        %v1821 = vunpack.c.l.bf16 %v612
        %v1822 = vunpack.c.h.bf16 %v612
        %v1823 = vunpack.c.l.bf16 %v613
        %v1824 = vunpack.c.h.bf16 %v613
        %v1825 = vunpack.c.l.bf16 %v614
        %v1826 = vunpack.c.h.bf16 %v614
        %v1827 = vunpack.c.l.bf16 %v615
        %v1828 = vunpack.c.h.bf16 %v615
        %v1829 = vunpack.c.l.bf16 %v616
        %v1830 = vunpack.c.h.bf16 %v616
        %v1831 = vunpack.c.l.bf16 %v617
        %v1832 = vunpack.c.h.bf16 %v617
        %v1833 = vunpack.c.l.bf16 %v618
        %v1834 = vunpack.c.h.bf16 %v618
        %v1835 = vunpack.c.l.bf16 %v619
        %v1836 = vunpack.c.h.bf16 %v619
        %v1837 = vunpack.c.l.bf16 %v620
        %v1838 = vunpack.c.h.bf16 %v620
        %v1839 = vunpack.c.l.bf16 %v621
        %v1840 = vunpack.c.h.bf16 %v621
        %v1841 = vunpack.c.l.bf16 %v622
        %v1842 = vunpack.c.h.bf16 %v622
        %v1843 = vunpack.c.l.bf16 %v623
        %v1844 = vunpack.c.h.bf16 %v623
        %v1845 = vunpack.c.l.bf16 %v624
        %v1846 = vunpack.c.h.bf16 %v624
        %v1847 = vunpack.c.l.bf16 %v625
        %v1848 = vunpack.c.h.bf16 %v625
        %v1849 = vunpack.c.l.bf16 %v626
        %v1850 = vunpack.c.h.bf16 %v626
        %v1851 = vunpack.c.l.bf16 %v627
        %v1852 = vunpack.c.h.bf16 %v627
        %v1853 = vunpack.c.l.bf16 %v628
        %v1854 = vunpack.c.h.bf16 %v628
        %v1855 = vunpack.c.l.bf16 %v629
        %v1856 = vunpack.c.h.bf16 %v629
        %v1857 = vunpack.c.l.bf16 %v630
        %v1858 = vunpack.c.h.bf16 %v630
        %v1859 = vunpack.c.l.bf16 %v631
        %v1860 = vunpack.c.h.bf16 %v631
        %v1861 = vunpack.c.l.bf16 %v632
        %v1862 = vunpack.c.h.bf16 %v632
        %v1863 = vunpack.c.l.bf16 %v633
        %v1864 = vunpack.c.h.bf16 %v633
        %v1865 = vunpack.c.l.bf16 %v634
        %v1866 = vunpack.c.h.bf16 %v634
        %v1867 = vunpack.c.l.bf16 %v635
        %v1868 = vunpack.c.h.bf16 %v635
        %v1869 = vunpack.c.l.bf16 %v636
        %v1870 = vunpack.c.h.bf16 %v636
        %v1871 = vunpack.c.l.bf16 %v637
        %v1872 = vunpack.c.h.bf16 %v637
        %v1873 = vunpack.c.l.bf16 %v638
        %v1874 = vunpack.c.h.bf16 %v638
        %v1875 = vunpack.c.l.bf16 %v639
        %v1876 = vunpack.c.h.bf16 %v639
        %v1877 = vunpack.c.l.bf16 %v640
        %v1878 = vunpack.c.h.bf16 %v640
        %v1879 = vunpack.c.l.bf16 %v641
        %v1880 = vunpack.c.h.bf16 %v641
        %v1881 = vunpack.c.l.bf16 %v642
        %v1882 = vunpack.c.h.bf16 %v642
        %v1883 = vunpack.c.l.bf16 %v643
        %v1884 = vunpack.c.h.bf16 %v643
        %v1885 = vunpack.c.l.bf16 %v644
        %v1886 = vunpack.c.h.bf16 %v644
        %v1887 = vunpack.c.l.bf16 %v645
        %v1888 = vunpack.c.h.bf16 %v645
        %v1889 = vunpack.c.l.bf16 %v646
        %v1890 = vunpack.c.h.bf16 %v646
        %v1891 = vunpack.c.l.bf16 %v647
        %v1892 = vunpack.c.h.bf16 %v647
        %v1893 = vunpack.c.l.bf16 %v648
        %v1894 = vunpack.c.h.bf16 %v648
        %v1895 = vunpack.c.l.bf16 %v649
        %v1896 = vunpack.c.h.bf16 %v649
        %v1897 = vunpack.c.l.bf16 %v650
        %v1898 = vunpack.c.h.bf16 %v650
        %v1899 = vunpack.c.l.bf16 %v651
        %v1900 = vunpack.c.h.bf16 %v651
        %v1901 = vunpack.c.l.bf16 %v652
        %v1902 = vunpack.c.h.bf16 %v652
        %v1903 = vunpack.c.l.bf16 %v653
        %v1904 = vunpack.c.h.bf16 %v653
        %v1905 = vunpack.c.l.bf16 %v654
        %v1906 = vunpack.c.h.bf16 %v654
        %v1907 = vunpack.c.l.bf16 %v655
        %v1908 = vunpack.c.h.bf16 %v655
        %v1909 = vunpack.c.l.bf16 %v656
        %v1910 = vunpack.c.h.bf16 %v656
        %v1911 = vunpack.c.l.bf16 %v657
        %v1912 = vunpack.c.h.bf16 %v657
        %v1913 = vunpack.c.l.bf16 %v658
        %v1914 = vunpack.c.h.bf16 %v658
        %v1915 = vunpack.c.l.bf16 %v659
        %v1916 = vunpack.c.h.bf16 %v659
        %v1917 = vunpack.c.l.bf16 %v660
        %v1918 = vunpack.c.h.bf16 %v660
        %v1919 = vunpack.c.l.bf16 %v661
        %v1920 = vunpack.c.h.bf16 %v661
        %v1921 = vunpack.c.l.bf16 %v662
        %v1922 = vunpack.c.h.bf16 %v662
        %v1923 = vunpack.c.l.bf16 %v663
        %v1924 = vunpack.c.h.bf16 %v663
        %v1925 = vunpack.c.l.bf16 %v664
        %v1926 = vunpack.c.h.bf16 %v664
        %v1927 = vunpack.c.l.bf16 %v665
        %v1928 = vunpack.c.h.bf16 %v665
        %v1929 = vunpack.c.l.bf16 %v666
        %v1930 = vunpack.c.h.bf16 %v666
        %v1931 = vunpack.c.l.bf16 %v667
        %v1932 = vunpack.c.h.bf16 %v667
        %v1933 = vunpack.c.l.bf16 %v668
        %v1934 = vunpack.c.h.bf16 %v668
        %v1935 = vunpack.c.l.bf16 %v669
        %v1936 = vunpack.c.h.bf16 %v669
        %v1937 = vunpack.c.l.bf16 %v670
        %v1938 = vunpack.c.h.bf16 %v670
        %v1939 = vunpack.c.l.bf16 %v671
        %v1940 = vunpack.c.h.bf16 %v671
        %v1941 = vunpack.c.l.bf16 %v672
        %v1942 = vunpack.c.h.bf16 %v672
        %v1943 = vunpack.c.l.bf16 %v673
        %v1944 = vunpack.c.h.bf16 %v673
        %v1945 = vunpack.c.l.bf16 %v674
        %v1946 = vunpack.c.h.bf16 %v674
        %v1947 = vunpack.c.l.bf16 %v675
        %v1948 = vunpack.c.h.bf16 %v675
        %v1949 = vunpack.c.l.bf16 %v676
        %v1950 = vunpack.c.h.bf16 %v676
        %v1951 = vunpack.c.l.bf16 %v677
        %v1952 = vunpack.c.h.bf16 %v677
        %v1953 = vunpack.c.l.bf16 %v678
        %v1954 = vunpack.c.h.bf16 %v678
        %v1955 = vunpack.c.l.bf16 %v679
        %v1956 = vunpack.c.h.bf16 %v679
        %v1957 = vunpack.c.l.bf16 %v680
        %v1958 = vunpack.c.h.bf16 %v680
        %v1959 = vunpack.c.l.bf16 %v681
        %v1960 = vunpack.c.h.bf16 %v681
        %v1961 = vunpack.c.l.bf16 %v682
        %v1962 = vunpack.c.h.bf16 %v682
        %v1963 = vunpack.c.l.bf16 %v683
        %v1964 = vunpack.c.h.bf16 %v683
        %v1965 = vunpack.c.l.bf16 %v684
        %v1966 = vunpack.c.h.bf16 %v684
        %v1967 = vunpack.c.l.bf16 %v685
        %v1968 = vunpack.c.h.bf16 %v685
        %v1969 = vunpack.c.l.bf16 %v686
        %v1970 = vunpack.c.h.bf16 %v686
        %v1971 = vunpack.c.l.bf16 %v687
        %v1972 = vunpack.c.h.bf16 %v687
        %v1973 = vunpack.c.l.bf16 %v688
        %v1974 = vunpack.c.h.bf16 %v688
        %v1975 = vunpack.c.l.bf16 %v689
        %v1976 = vunpack.c.h.bf16 %v689
        %v1977 = vunpack.c.l.bf16 %v690
        %v1978 = vunpack.c.h.bf16 %v690
        %v1979 = vunpack.c.l.bf16 %v691
        %v1980 = vunpack.c.h.bf16 %v691
        %v1981 = vunpack.c.l.bf16 %v692
        %v1982 = vunpack.c.h.bf16 %v692
        %v1983 = vunpack.c.l.bf16 %v693
        %v1984 = vunpack.c.h.bf16 %v693
        %v1985 = vunpack.c.l.bf16 %v694
        %v1986 = vunpack.c.h.bf16 %v694
        %v1987 = vunpack.c.l.bf16 %v695
        %v1988 = vunpack.c.h.bf16 %v695
        %v1989 = vunpack.c.l.bf16 %v696
        %v1990 = vunpack.c.h.bf16 %v696
        %v1991 = vunpack.c.l.bf16 %v697
        %v1992 = vunpack.c.h.bf16 %v697
        %v1993 = vunpack.c.l.bf16 %v698
        %v1994 = vunpack.c.h.bf16 %v698
        %v1995 = vunpack.c.l.bf16 %v699
        %v1996 = vunpack.c.h.bf16 %v699
        %v1997 = vunpack.c.l.bf16 %v700
        %v1998 = vunpack.c.h.bf16 %v700
        %v1999 = vunpack.c.l.bf16 %v701
        %v2000 = vunpack.c.h.bf16 %v701
        %v2001 = vunpack.c.l.bf16 %v702
        %v2002 = vunpack.c.h.bf16 %v702
        %v2003 = vunpack.c.l.bf16 %v703
        %v2004 = vunpack.c.h.bf16 %v703
        %v2005 = vunpack.c.l.bf16 %v704
        %v2006 = vunpack.c.h.bf16 %v704
        %v2007 = vunpack.c.l.bf16 %v705
        %v2008 = vunpack.c.h.bf16 %v705
        %v2009 = vunpack.c.l.bf16 %v706
        %v2010 = vunpack.c.h.bf16 %v706
        %v2011 = vunpack.c.l.bf16 %v707
        %v2012 = vunpack.c.h.bf16 %v707
        %v2013 = vunpack.c.l.bf16 %v708
        %v2014 = vunpack.c.h.bf16 %v708
        %v2015 = vunpack.c.l.bf16 %v709
        %v2016 = vunpack.c.h.bf16 %v709
        %v2017 = vunpack.c.l.bf16 %v710
        %v2018 = vunpack.c.h.bf16 %v710
        %v2019 = vunpack.c.l.bf16 %v711
        %v2020 = vunpack.c.h.bf16 %v711
        %v2021 = vunpack.c.l.bf16 %v712
        %v2022 = vunpack.c.h.bf16 %v712
        %v2023 = vunpack.c.l.bf16 %v713
        %v2024 = vunpack.c.h.bf16 %v713
        %v2025 = vunpack.c.l.bf16 %v714
        %v2026 = vunpack.c.h.bf16 %v714
        %v2027 = vunpack.c.l.bf16 %v715
        %v2028 = vunpack.c.h.bf16 %v715
        %v2029 = vunpack.c.l.bf16 %v716
        %v2030 = vunpack.c.h.bf16 %v716
        %v2031 = vunpack.c.l.bf16 %v717
        %v2032 = vunpack.c.h.bf16 %v717
        %v2033 = vunpack.c.l.bf16 %v718
        %v2034 = vunpack.c.h.bf16 %v718
        %v2035 = vunpack.c.l.bf16 %v719
        %v2036 = vunpack.c.h.bf16 %v719
        %v2037 = vunpack.c.l.bf16 %v720
        %v2038 = vunpack.c.h.bf16 %v720
        %v2039 = vunpack.c.l.bf16 %v721
        %v2040 = vunpack.c.h.bf16 %v721
        %v2041 = vunpack.c.l.bf16 %v722
        %v2042 = vunpack.c.h.bf16 %v722
        %v2043 = vunpack.c.l.bf16 %v723
        %v2044 = vunpack.c.h.bf16 %v723
        %v2045 = vunpack.c.l.bf16 %v724
        %v2046 = vunpack.c.h.bf16 %v724
        %v2047 = vunpack.c.l.bf16 %v725
        %v2048 = vunpack.c.h.bf16 %v725
        %v2049 = vunpack.c.l.bf16 %v726
        %v2050 = vunpack.c.h.bf16 %v726
        %v2051 = vunpack.c.l.bf16 %v727
        %v2052 = vunpack.c.h.bf16 %v727
        %v2053 = vunpack.c.l.bf16 %v728
        %v2054 = vunpack.c.h.bf16 %v728
        %v2055 = vunpack.c.l.bf16 %v729
        %v2056 = vunpack.c.h.bf16 %v729
        %v2057 = vunpack.c.l.bf16 %v730
        %v2058 = vunpack.c.h.bf16 %v730
        %v2059 = vunpack.c.l.bf16 %v731
        %v2060 = vunpack.c.h.bf16 %v731
        %v2061 = vunpack.c.l.bf16 %v732
        %v2062 = vunpack.c.h.bf16 %v732
        %v2063 = vunpack.c.l.bf16 %v733
        %v2064 = vunpack.c.h.bf16 %v733
        %v2065 = vunpack.c.l.bf16 %v734
        %v2066 = vunpack.c.h.bf16 %v734
        %v2067 = vunpack.c.l.bf16 %v735
        %v2068 = vunpack.c.h.bf16 %v735
        %v2069 = vunpack.c.l.bf16 %v736
        %v2070 = vunpack.c.h.bf16 %v736
        %v2071 = vunpack.c.l.bf16 %v737
        %v2072 = vunpack.c.h.bf16 %v737
        %v2073 = vunpack.c.l.bf16 %v738
        %v2074 = vunpack.c.h.bf16 %v738
        %v2075 = vunpack.c.l.bf16 %v739
        %v2076 = vunpack.c.h.bf16 %v739
        %v2077 = vunpack.c.l.bf16 %v740
        %v2078 = vunpack.c.h.bf16 %v740
        %v2079 = vunpack.c.l.bf16 %v741
        %v2080 = vunpack.c.h.bf16 %v741
        %v2081 = vunpack.c.l.bf16 %v742
        %v2082 = vunpack.c.h.bf16 %v742
        %v2083 = vunpack.c.l.bf16 %v743
        %v2084 = vunpack.c.h.bf16 %v743
        %v2085 = vunpack.c.l.bf16 %v744
        %v2086 = vunpack.c.h.bf16 %v744
        %v2087 = vunpack.c.l.bf16 %v745
        %v2088 = vunpack.c.h.bf16 %v745
        %v2089 = vunpack.c.l.bf16 %v746
        %v2090 = vunpack.c.h.bf16 %v746
        %v2091 = vunpack.c.l.bf16 %v747
        %v2092 = vunpack.c.h.bf16 %v747
        %v2093 = vunpack.c.l.bf16 %v748
        %v2094 = vunpack.c.h.bf16 %v748
        %v2095 = vunpack.c.l.bf16 %v749
        %v2096 = vunpack.c.h.bf16 %v749
        %v2097 = vunpack.c.l.bf16 %v750
        %v2098 = vunpack.c.h.bf16 %v750
        %v2099 = vunpack.c.l.bf16 %v751
        %v2100 = vunpack.c.h.bf16 %v751
        %v2101 = vunpack.c.l.bf16 %v752
        %v2102 = vunpack.c.h.bf16 %v752
        %v2103 = vunpack.c.l.bf16 %v753
        %v2104 = vunpack.c.h.bf16 %v753
        %v2105 = vunpack.c.l.bf16 %v754
        %v2106 = vunpack.c.h.bf16 %v754
        %v2107 = vunpack.c.l.bf16 %v755
        %v2108 = vunpack.c.h.bf16 %v755
        %v2109 = vunpack.c.l.bf16 %v756
        %v2110 = vunpack.c.h.bf16 %v756
        %v2111 = vunpack.c.l.bf16 %v757
        %v2112 = vunpack.c.h.bf16 %v757
        %v2113 = vunpack.c.l.bf16 %v758
        %v2114 = vunpack.c.h.bf16 %v758
        %v2115 = vunpack.c.l.bf16 %v759
        %v2116 = vunpack.c.h.bf16 %v759
        %v2117 = vunpack.c.l.bf16 %v760
        %v2118 = vunpack.c.h.bf16 %v760
        %v2119 = vunpack.c.l.bf16 %v761
        %v2120 = vunpack.c.h.bf16 %v761
        %v2121 = vunpack.c.l.bf16 %v762
        %v2122 = vunpack.c.h.bf16 %v762
        %v2123 = vunpack.c.l.bf16 %v763
        %v2124 = vunpack.c.h.bf16 %v763
        %v2125 = vunpack.c.l.bf16 %v764
        %v2126 = vunpack.c.h.bf16 %v764
        %v2127 = vunpack.c.l.bf16 %v765
        %v2128 = vunpack.c.h.bf16 %v765
        %v2129 = vunpack.c.l.bf16 %v766
        %v2130 = vunpack.c.h.bf16 %v766
        %v2131 = vunpack.c.l.bf16 %v767
        %v2132 = vunpack.c.h.bf16 %v767
        %v2133 = vunpack.c.l.bf16 %v768
        %v2134 = vunpack.c.h.bf16 %v768
        %v2135 = vunpack.c.l.bf16 %v769
        %v2136 = vunpack.c.h.bf16 %v769
        %v2137 = vunpack.c.l.bf16 %v770
        %v2138 = vunpack.c.h.bf16 %v770
        %v2139 = vunpack.c.l.bf16 %v771
        %v2140 = vunpack.c.h.bf16 %v771
        %v2141 = vunpack.c.l.bf16 %v772
        %v2142 = vunpack.c.h.bf16 %v772
        %v2143 = vunpack.c.l.bf16 %v773
        %v2144 = vunpack.c.h.bf16 %v773
        %v2145 = vunpack.c.l.bf16 %v774
        %v2146 = vunpack.c.h.bf16 %v774
        %v2147 = vunpack.c.l.bf16 %v775
        %v2148 = vunpack.c.h.bf16 %v775
        %v2149 = vunpack.c.l.bf16 %v776
        %v2150 = vunpack.c.h.bf16 %v776
        %v2151 = vunpack.c.l.bf16 %v777
        %v2152 = vunpack.c.h.bf16 %v777
        %v2153 = vunpack.c.l.bf16 %v778
        %v2154 = vunpack.c.h.bf16 %v778
        %v2155 = vunpack.c.l.bf16 %v779
        %v2156 = vunpack.c.h.bf16 %v779
        %v2157 = vunpack.c.l.bf16 %v780
        %v2158 = vunpack.c.h.bf16 %v780
        %v2159 = vunpack.c.l.bf16 %v781
        %v2160 = vunpack.c.h.bf16 %v781
        %v2161 = vunpack.c.l.bf16 %v782
        %v2162 = vunpack.c.h.bf16 %v782
        %v2163 = vunpack.c.l.bf16 %v783
        %v2164 = vunpack.c.h.bf16 %v783
        %v2165 = vunpack.c.l.bf16 %v784
        %v2166 = vunpack.c.h.bf16 %v784
        %v2167 = vunpack.c.l.bf16 %v785
        %v2168 = vunpack.c.h.bf16 %v785
        %v2169 = vunpack.c.l.bf16 %v786
        %v2170 = vunpack.c.h.bf16 %v786
        %v2171 = vunpack.c.l.bf16 %v787
        %v2172 = vunpack.c.h.bf16 %v787
        %v2173 = vunpack.c.l.bf16 %v788
        %v2174 = vunpack.c.h.bf16 %v788
        %v2175 = vunpack.c.l.bf16 %v789
        %v2176 = vunpack.c.h.bf16 %v789
        %v2177 = vunpack.c.l.bf16 %v790
        %v2178 = vunpack.c.h.bf16 %v790
        %v2179 = vunpack.c.l.bf16 %v791
        %v2180 = vunpack.c.h.bf16 %v791
        %v2181 = vunpack.c.l.bf16 %v792
        %v2182 = vunpack.c.h.bf16 %v792
        %v2183 = vunpack.c.l.bf16 %v793
        %v2184 = vunpack.c.h.bf16 %v793
        %v2185 = vunpack.c.l.bf16 %v794
        %v2186 = vunpack.c.h.bf16 %v794
        %v2187 = vunpack.c.l.bf16 %v795
        %v2188 = vunpack.c.h.bf16 %v795
        %v2189 = vunpack.c.l.bf16 %v796
        %v2190 = vunpack.c.h.bf16 %v796
        %v2191 = vunpack.c.l.bf16 %v797
        %v2192 = vunpack.c.h.bf16 %v797
        %v2193 = vunpack.c.l.bf16 %v798
        %v2194 = vunpack.c.h.bf16 %v798
        %v2195 = vunpack.c.l.bf16 %v799
        %v2196 = vunpack.c.h.bf16 %v799
        %v2197 = vunpack.c.l.bf16 %v800
        %v2198 = vunpack.c.h.bf16 %v800
        %v2199 = vunpack.c.l.bf16 %v801
        %v2200 = vunpack.c.h.bf16 %v801
        %v2201 = vunpack.c.l.bf16 %v802
        %v2202 = vunpack.c.h.bf16 %v802
        %v2203 = vunpack.c.l.bf16 %v803
        %v2204 = vunpack.c.h.bf16 %v803
        %v2205 = vunpack.c.l.bf16 %v804
        %v2206 = vunpack.c.h.bf16 %v804
        %v2207 = vunpack.c.l.bf16 %v805
        %v2208 = vunpack.c.h.bf16 %v805
        %v2209 = vunpack.c.l.bf16 %v806
        %v2210 = vunpack.c.h.bf16 %v806
        %v2211 = vunpack.c.l.bf16 %v807
        %v2212 = vunpack.c.h.bf16 %v807
        %v2213 = vunpack.c.l.bf16 %v808
        %v2214 = vunpack.c.h.bf16 %v808
        %v2215 = vunpack.c.l.bf16 %v809
        %v2216 = vunpack.c.h.bf16 %v809
        %v2217 = vunpack.c.l.bf16 %v810
        %v2218 = vunpack.c.h.bf16 %v810
        %v2219 = vunpack.c.l.bf16 %v811
        %v2220 = vunpack.c.h.bf16 %v811
        %v2221 = vunpack.c.l.bf16 %v812
        %v2222 = vunpack.c.h.bf16 %v812
        %v2223 = vunpack.c.l.bf16 %v813
        %v2224 = vunpack.c.h.bf16 %v813
        %v2225 = vunpack.c.l.bf16 %v814
        %v2226 = vunpack.c.h.bf16 %v814
        %v2227 = vunpack.c.l.bf16 %v815
        %v2228 = vunpack.c.h.bf16 %v815
        %v2229 = vunpack.c.l.bf16 %v816
        %v2230 = vunpack.c.h.bf16 %v816
        %v2231 = vunpack.c.l.bf16 %v817
        %v2232 = vunpack.c.h.bf16 %v817
        %v2233 = vunpack.c.l.bf16 %v818
        %v2234 = vunpack.c.h.bf16 %v818
        %v2235 = vunpack.c.l.bf16 %v819
        %v2236 = vunpack.c.h.bf16 %v819
        %v2237 = vunpack.c.l.bf16 %v820
        %v2238 = vunpack.c.h.bf16 %v820
        %v2239 = vunpack.c.l.bf16 %v821
        %v2240 = vunpack.c.h.bf16 %v821
        %v2241 = vunpack.c.l.bf16 %v822
        %v2242 = vunpack.c.h.bf16 %v822
        %v2243 = vunpack.c.l.bf16 %v823
        %v2244 = vunpack.c.h.bf16 %v823
        %v2245 = vunpack.c.l.bf16 %v824
        %v2246 = vunpack.c.h.bf16 %v824
        %v2247 = vunpack.c.l.bf16 %v825
        %v2248 = vunpack.c.h.bf16 %v825
        %v2249 = vunpack.c.l.bf16 %v826
        %v2250 = vunpack.c.h.bf16 %v826
        %v2251 = vunpack.c.l.bf16 %v827
        %v2252 = vunpack.c.h.bf16 %v827
        %v2253 = vunpack.c.l.bf16 %v828
        %v2254 = vunpack.c.h.bf16 %v828
        %v2255 = vunpack.c.l.bf16 %v829
        %v2256 = vunpack.c.h.bf16 %v829
        %v2257 = vunpack.c.l.bf16 %v830
        %v2258 = vunpack.c.h.bf16 %v830
        %v2259 = vunpack.c.l.bf16 %v831
        %v2260 = vunpack.c.h.bf16 %v831
        %v2261 = vunpack.c.l.bf16 %v832
        %v2262 = vunpack.c.h.bf16 %v832
        %v2263 = vunpack.c.l.bf16 %v833
        %v2264 = vunpack.c.h.bf16 %v833
        %v2265 = vunpack.c.l.bf16 %v834
        %v2266 = vunpack.c.h.bf16 %v834
        %v2267 = vunpack.c.l.bf16 %v835
        %v2268 = vunpack.c.h.bf16 %v835
        %v2269 = vunpack.c.l.bf16 %v836
        %v2270 = vunpack.c.h.bf16 %v836
        %v2271 = vunpack.c.l.bf16 %v837
        %v2272 = vunpack.c.h.bf16 %v837
        %v2273 = vunpack.c.l.bf16 %v838
        %v2274 = vunpack.c.h.bf16 %v838
        %v2275 = vunpack.c.l.bf16 %v839
        %v2276 = vunpack.c.h.bf16 %v839
        %v2277 = vunpack.c.l.bf16 %v840
        %v2278 = vunpack.c.h.bf16 %v840
        %v2279 = vunpack.c.l.bf16 %v841
        %v2280 = vunpack.c.h.bf16 %v841
        %v2281 = vunpack.c.l.bf16 %v842
        %v2282 = vunpack.c.h.bf16 %v842
        %v2283 = vunpack.c.l.bf16 %v843
        %v2284 = vunpack.c.h.bf16 %v843
        %v2285 = vunpack.c.l.bf16 %v844
        %v2286 = vunpack.c.h.bf16 %v844
        %v2287 = vunpack.c.l.bf16 %v845
        %v2288 = vunpack.c.h.bf16 %v845
        %v2289 = vunpack.c.l.bf16 %v846
        %v2290 = vunpack.c.h.bf16 %v846
        %v2291 = vunpack.c.l.bf16 %v847
        %v2292 = vunpack.c.h.bf16 %v847
        %v2293 = vunpack.c.l.bf16 %v848
        %v2294 = vunpack.c.h.bf16 %v848
        %v2295 = vunpack.c.l.bf16 %v849
        %v2296 = vunpack.c.h.bf16 %v849
        %v2297 = vunpack.c.l.bf16 %v850
        %v2298 = vunpack.c.h.bf16 %v850
        %v2299 = vunpack.c.l.bf16 %v851
        %v2300 = vunpack.c.h.bf16 %v851
        %v2301 = vunpack.c.l.bf16 %v852
        %v2302 = vunpack.c.h.bf16 %v852
        %v2303 = vunpack.c.l.bf16 %v853
        %v2304 = vunpack.c.h.bf16 %v853
        %v2305 = vunpack.c.l.bf16 %v854
        %v2306 = vunpack.c.h.bf16 %v854
        %v2307 = vunpack.c.l.bf16 %v855
        %v2308 = vunpack.c.h.bf16 %v855
        %v2309 = vunpack.c.l.bf16 %v856
        %v2310 = vunpack.c.h.bf16 %v856
        %v2311 = vunpack.c.l.bf16 %v857
        %v2312 = vunpack.c.h.bf16 %v857
        %v2313 = vunpack.c.l.bf16 %v858
        %v2314 = vunpack.c.h.bf16 %v858
        %v2315 = vunpack.c.l.bf16 %v859
        %v2316 = vunpack.c.h.bf16 %v859
        %v2317 = vunpack.c.l.bf16 %v860
        %v2318 = vunpack.c.h.bf16 %v860
        %v2319 = vunpack.c.l.bf16 %v861
        %v2320 = vunpack.c.h.bf16 %v861
        %v2321 = vunpack.c.l.bf16 %v862
        %v2322 = vunpack.c.h.bf16 %v862
        %v2323 = vunpack.c.l.bf16 %v863
        %v2324 = vunpack.c.h.bf16 %v863
        %v2325 = vunpack.c.l.bf16 %v864
        %v2326 = vunpack.c.h.bf16 %v864
        %v2327 = vunpack.c.l.bf16 %v865
        %v2328 = vunpack.c.h.bf16 %v865
        %v2329 = vunpack.c.l.bf16 %v866
        %v2330 = vunpack.c.h.bf16 %v866
        %v2331 = vunpack.c.l.bf16 %v867
        %v2332 = vunpack.c.h.bf16 %v867
        %v2333 = vunpack.c.l.bf16 %v868
        %v2334 = vunpack.c.h.bf16 %v868
        %v2335 = vunpack.c.l.bf16 %v869
        %v2336 = vunpack.c.h.bf16 %v869
        %v2337 = vunpack.c.l.bf16 %v870
        %v2338 = vunpack.c.h.bf16 %v870
        %v2339 = vunpack.c.l.bf16 %v871
        %v2340 = vunpack.c.h.bf16 %v871
        %v2341 = vunpack.c.l.bf16 %v872
        %v2342 = vunpack.c.h.bf16 %v872
        %v2343 = vunpack.c.l.bf16 %v873
        %v2344 = vunpack.c.h.bf16 %v873
        %v2345 = vunpack.c.l.bf16 %v874
        %v2346 = vunpack.c.h.bf16 %v874
        %v2347 = vunpack.c.l.bf16 %v875
        %v2348 = vunpack.c.h.bf16 %v875
        %v2349 = vunpack.c.l.bf16 %v876
        %v2350 = vunpack.c.h.bf16 %v876
        %v2351 = vunpack.c.l.bf16 %v877
        %v2352 = vunpack.c.h.bf16 %v877
        %v2353 = vunpack.c.l.bf16 %v878
        %v2354 = vunpack.c.h.bf16 %v878
        %v2355 = vunpack.c.l.bf16 %v879
        %v2356 = vunpack.c.h.bf16 %v879
        %v2357 = vunpack.c.l.bf16 %v880
        %v2358 = vunpack.c.h.bf16 %v880
        %v2359 = vunpack.c.l.bf16 %v881
        %v2360 = vunpack.c.h.bf16 %v881
        %v2361 = vunpack.c.l.bf16 %v882
        %v2362 = vunpack.c.h.bf16 %v882
        %v2363 = vunpack.c.l.bf16 %v883
        %v2364 = vunpack.c.h.bf16 %v883
        %v2365 = vunpack.c.l.bf16 %v884
        %v2366 = vunpack.c.h.bf16 %v884
        %v2367 = vunpack.c.l.bf16 %v885
        %v2368 = vunpack.c.h.bf16 %v885
        %v2369 = vunpack.c.l.bf16 %v886
        %v2370 = vunpack.c.h.bf16 %v886
        %v2371 = vunpack.c.l.bf16 %v887
        %v2372 = vunpack.c.h.bf16 %v887
        %v2373 = vunpack.c.l.bf16 %v888
        %v2374 = vunpack.c.h.bf16 %v888
        %v2375 = vunpack.c.l.bf16 %v889
        %v2376 = vunpack.c.h.bf16 %v889
        %v2377 = vunpack.c.l.bf16 %v890
        %v2378 = vunpack.c.h.bf16 %v890
        %v2379 = vunpack.c.l.bf16 %v891
        %v2380 = vunpack.c.h.bf16 %v891
        %v2381 = vunpack.c.l.bf16 %v892
        %v2382 = vunpack.c.h.bf16 %v892
        %v2383 = vunpack.c.l.bf16 %v893
        %v2384 = vunpack.c.h.bf16 %v893
        %v2385 = vunpack.c.l.bf16 %v894
        %v2386 = vunpack.c.h.bf16 %v894
        %v2387 = vunpack.c.l.bf16 %v895
        %v2388 = vunpack.c.h.bf16 %v895
        %v2389 = vunpack.c.l.bf16 %v896
        %v2390 = vunpack.c.h.bf16 %v896
        %v2391 = vunpack.c.l.bf16 %v897
        %v2392 = vunpack.c.h.bf16 %v897
        %v2393 = vunpack.c.l.bf16 %v898
        %v2394 = vunpack.c.h.bf16 %v898
        %v2395 = vunpack.c.l.bf16 %v899
        %v2396 = vunpack.c.h.bf16 %v899
        %v2397 = vunpack.c.l.bf16 %v900
        %v2398 = vunpack.c.h.bf16 %v900
        %v2399 = vunpack.c.l.bf16 %v901
        %v2400 = vunpack.c.h.bf16 %v901
        %v2401 = vunpack.c.l.bf16 %v902
        %v2402 = vunpack.c.h.bf16 %v902
        %v2403 = vunpack.c.l.bf16 %v903
        %v2404 = vunpack.c.h.bf16 %v903
        %v2405 = vunpack.c.l.bf16 %v904
        %v2406 = vunpack.c.h.bf16 %v904
        %v2407 = vunpack.c.l.bf16 %v905
        %v2408 = vunpack.c.h.bf16 %v905
        %v2409 = vunpack.c.l.bf16 %v906
        %v2410 = vunpack.c.h.bf16 %v906
        %v2411 = vunpack.c.l.bf16 %v907
        %v2412 = vunpack.c.h.bf16 %v907
        %v2413 = vunpack.c.l.bf16 %v908
        %v2414 = vunpack.c.h.bf16 %v908
        %v2415 = vunpack.c.l.bf16 %v909
        %v2416 = vunpack.c.h.bf16 %v909
        %v2417 = vunpack.c.l.bf16 %v910
        %v2418 = vunpack.c.h.bf16 %v910
        %v2419 = vunpack.c.l.bf16 %v911
        %v2420 = vunpack.c.h.bf16 %v911
        %v2421 = vunpack.c.l.bf16 %v912
        %v2422 = vunpack.c.h.bf16 %v912
        %v2423 = vunpack.c.l.bf16 %v913
        %v2424 = vunpack.c.h.bf16 %v913
        %v2425 = vunpack.c.l.bf16 %v914
        %v2426 = vunpack.c.h.bf16 %v914
        %v2427 = vunpack.c.l.bf16 %v915
        %v2428 = vunpack.c.h.bf16 %v915
        %v2429 = vunpack.c.l.bf16 %v916
        %v2430 = vunpack.c.h.bf16 %v916
        %v2431 = vunpack.c.l.bf16 %v917
        %v2432 = vunpack.c.h.bf16 %v917
        %v2433 = vunpack.c.l.bf16 %v918
        %v2434 = vunpack.c.h.bf16 %v918
        %v2435 = vunpack.c.l.bf16 %v919
        %v2436 = vunpack.c.h.bf16 %v919
        %v2437 = vunpack.c.l.bf16 %v920
        %v2438 = vunpack.c.h.bf16 %v920
        %v2439 = vunpack.c.l.bf16 %v921
        %v2440 = vunpack.c.h.bf16 %v921
        %v2441 = vunpack.c.l.bf16 %v922
        %v2442 = vunpack.c.h.bf16 %v922
        %v2443 = vunpack.c.l.bf16 %v923
        %v2444 = vunpack.c.h.bf16 %v923
        %v2445 = vunpack.c.l.bf16 %v924
        %v2446 = vunpack.c.h.bf16 %v924
        %v2447 = vunpack.c.l.bf16 %v925
        %v2448 = vunpack.c.h.bf16 %v925
        %v2449 = vunpack.c.l.bf16 %v926
        %v2450 = vunpack.c.h.bf16 %v926
        %v2451 = vunpack.c.l.bf16 %v927
        %v2452 = vunpack.c.h.bf16 %v927
        %v2453 = vunpack.c.l.bf16 %v928
        %v2454 = vunpack.c.h.bf16 %v928
        %v2455 = vunpack.c.l.bf16 %v929
        %v2456 = vunpack.c.h.bf16 %v929
        %v2457 = vunpack.c.l.bf16 %v930
        %v2458 = vunpack.c.h.bf16 %v930
        %v2459 = vunpack.c.l.bf16 %v931
        %v2460 = vunpack.c.h.bf16 %v931
        %v2461 = vunpack.c.l.bf16 %v932
        %v2462 = vunpack.c.h.bf16 %v932
        %v2463 = vunpack.c.l.bf16 %v933
        %v2464 = vunpack.c.h.bf16 %v933
        %v2465 = vunpack.c.l.bf16 %v934
        %v2466 = vunpack.c.h.bf16 %v934
        %v2467 = vunpack.c.l.bf16 %v935
        %v2468 = vunpack.c.h.bf16 %v935
        %v2469 = vunpack.c.l.bf16 %v936
        %v2470 = vunpack.c.h.bf16 %v936
        %v2471 = vunpack.c.l.bf16 %v937
        %v2472 = vunpack.c.h.bf16 %v937
        %v2473 = vunpack.c.l.bf16 %v938
        %v2474 = vunpack.c.h.bf16 %v938
        %v2475 = vunpack.c.l.bf16 %v939
        %v2476 = vunpack.c.h.bf16 %v939
        %v2477 = vunpack.c.l.bf16 %v940
        %v2478 = vunpack.c.h.bf16 %v940
        %v2479 = vunpack.c.l.bf16 %v941
        %v2480 = vunpack.c.h.bf16 %v941
        %v2481 = vunpack.c.l.bf16 %v942
        %v2482 = vunpack.c.h.bf16 %v942
        %v2483 = vunpack.c.l.bf16 %v943
        %v2484 = vunpack.c.h.bf16 %v943
        %v2485 = vunpack.c.l.bf16 %v944
        %v2486 = vunpack.c.h.bf16 %v944
        %v2487 = vunpack.c.l.bf16 %v945
        %v2488 = vunpack.c.h.bf16 %v945
        %v2489 = vunpack.c.l.bf16 %v946
        %v2490 = vunpack.c.h.bf16 %v946
        %v2491 = vunpack.c.l.bf16 %v947
        %v2492 = vunpack.c.h.bf16 %v947
        %v2493 = vunpack.c.l.bf16 %v948
        %v2494 = vunpack.c.h.bf16 %v948
        %v2495 = vunpack.c.l.bf16 %v949
        %v2496 = vunpack.c.h.bf16 %v949
        %v2497 = vunpack.c.l.bf16 %v950
        %v2498 = vunpack.c.h.bf16 %v950
        %v2499 = vunpack.c.l.bf16 %v951
        %v2500 = vunpack.c.h.bf16 %v951
        %v2501 = vunpack.c.l.bf16 %v952
        %v2502 = vunpack.c.h.bf16 %v952
        %v2503 = vunpack.c.l.bf16 %v953
        %v2504 = vunpack.c.h.bf16 %v953
        %v2505 = vunpack.c.l.bf16 %v954
        %v2506 = vunpack.c.h.bf16 %v954
        %v2507 = vunpack.c.l.bf16 %v955
        %v2508 = vunpack.c.h.bf16 %v955
        %v2509 = vunpack.c.l.bf16 %v956
        %v2510 = vunpack.c.h.bf16 %v956
        %v2511 = vunpack.c.l.bf16 %v957
        %v2512 = vunpack.c.h.bf16 %v957
        %v2513 = vunpack.c.l.bf16 %v958
        %v2514 = vunpack.c.h.bf16 %v958
        %v2515 = vunpack.c.l.bf16 %v959
        %v2516 = vunpack.c.h.bf16 %v959
        %v2517 = vunpack.c.l.bf16 %v960
        %v2518 = vunpack.c.h.bf16 %v960
        %v2519 = vunpack.c.l.bf16 %v961
        %v2520 = vunpack.c.h.bf16 %v961
        %v2521 = vunpack.c.l.bf16 %v962
        %v2522 = vunpack.c.h.bf16 %v962
        %v2523 = vunpack.c.l.bf16 %v963
        %v2524 = vunpack.c.h.bf16 %v963
        %v2525 = vunpack.c.l.bf16 %v964
        %v2526 = vunpack.c.h.bf16 %v964
        %v2527 = vunpack.c.l.bf16 %v965
        %v2528 = vunpack.c.h.bf16 %v965
        %v2529 = vunpack.c.l.bf16 %v966
        %v2530 = vunpack.c.h.bf16 %v966
        %v2531 = vunpack.c.l.bf16 %v967
        %v2532 = vunpack.c.h.bf16 %v967
        %v2533 = vunpack.c.l.bf16 %v968
        %v2534 = vunpack.c.h.bf16 %v968
        %v2535 = vunpack.c.l.bf16 %v969
        %v2536 = vunpack.c.h.bf16 %v969
        %v2537 = vunpack.c.l.bf16 %v970
        %v2538 = vunpack.c.h.bf16 %v970
        %v2539 = vunpack.c.l.bf16 %v971
        %v2540 = vunpack.c.h.bf16 %v971
        %v2541 = vunpack.c.l.bf16 %v972
        %v2542 = vunpack.c.h.bf16 %v972
        %v2543 = vunpack.c.l.bf16 %v973
        %v2544 = vunpack.c.h.bf16 %v973
        %v2545 = vunpack.c.l.bf16 %v974
        %v2546 = vunpack.c.h.bf16 %v974
        %v2547 = vunpack.c.l.bf16 %v975
        %v2548 = vunpack.c.h.bf16 %v975
        %v2549 = vunpack.c.l.bf16 %v976
        %v2550 = vunpack.c.h.bf16 %v976
        %v2551 = vunpack.c.l.bf16 %v977
        %v2552 = vunpack.c.h.bf16 %v977
        %v2553 = vunpack.c.l.bf16 %v978
        %v2554 = vunpack.c.h.bf16 %v978
        %v2555 = vunpack.c.l.bf16 %v979
        %v2556 = vunpack.c.h.bf16 %v979
        %v2557 = vunpack.c.l.bf16 %v980
        %v2558 = vunpack.c.h.bf16 %v980
        %v2559 = vunpack.c.l.bf16 %v981
        %v2560 = vunpack.c.h.bf16 %v981
        %v2561 = vunpack.c.l.bf16 %v982
        %v2562 = vunpack.c.h.bf16 %v982
        %v2563 = vunpack.c.l.bf16 %v983
        %v2564 = vunpack.c.h.bf16 %v983
        %v2565 = vunpack.c.l.bf16 %v984
        %v2566 = vunpack.c.h.bf16 %v984
        %v2567 = vunpack.c.l.bf16 %v985
        %v2568 = vunpack.c.h.bf16 %v985
        %v2569 = vunpack.c.l.bf16 %v986
        %v2570 = vunpack.c.h.bf16 %v986
        %v2571 = vunpack.c.l.bf16 %v987
        %v2572 = vunpack.c.h.bf16 %v987
        %v2573 = vunpack.c.l.bf16 %v988
        %v2574 = vunpack.c.h.bf16 %v988
        %v2575 = vunpack.c.l.bf16 %v989
        %v2576 = vunpack.c.h.bf16 %v989
        %v2577 = vunpack.c.l.bf16 %v990
        %v2578 = vunpack.c.h.bf16 %v990
        %v2579 = vunpack.c.l.bf16 %v991
        %v2580 = vunpack.c.h.bf16 %v991
        %v2581 = vunpack.c.l.bf16 %v992
        %v2582 = vunpack.c.h.bf16 %v992
        %v2583 = vunpack.c.l.bf16 %v993
        %v2584 = vunpack.c.h.bf16 %v993
        %v2585 = vunpack.c.l.bf16 %v994
        %v2586 = vunpack.c.h.bf16 %v994
        %v2587 = vunpack.c.l.bf16 %v995
        %v2588 = vunpack.c.h.bf16 %v995
        %v2589 = vunpack.c.l.bf16 %v996
        %v2590 = vunpack.c.h.bf16 %v996
        %v2591 = vunpack.c.l.bf16 %v997
        %v2592 = vunpack.c.h.bf16 %v997
        %v2593 = vunpack.c.l.bf16 %v998
        %v2594 = vunpack.c.h.bf16 %v998
        %v2595 = vunpack.c.l.bf16 %v999
        %v2596 = vunpack.c.h.bf16 %v999
        %v2597 = vunpack.c.l.bf16 %v1000
        %v2598 = vunpack.c.h.bf16 %v1000
        %v2599 = vunpack.c.l.bf16 %v1001
        %v2600 = vunpack.c.h.bf16 %v1001
        %v2601 = vunpack.c.l.bf16 %v1002
        %v2602 = vunpack.c.h.bf16 %v1002
        %v2603 = vunpack.c.l.bf16 %v1003
        %v2604 = vunpack.c.h.bf16 %v1003
        %v2605 = vunpack.c.l.bf16 %v1004
        %v2606 = vunpack.c.h.bf16 %v1004
        %v2607 = vunpack.c.l.bf16 %v1005
        %v2608 = vunpack.c.h.bf16 %v1005
        %v2609 = vunpack.c.l.bf16 %v1006
        %v2610 = vunpack.c.h.bf16 %v1006
        %v2611 = vunpack.c.l.bf16 %v1007
        %v2612 = vunpack.c.h.bf16 %v1007
        %v2613 = vunpack.c.l.bf16 %v1008
        %v2614 = vunpack.c.h.bf16 %v1008
        %v2615 = vunpack.c.l.bf16 %v1009
        %v2616 = vunpack.c.h.bf16 %v1009
        %v2617 = vunpack.c.l.bf16 %v1010
        %v2618 = vunpack.c.h.bf16 %v1010
        %v2619 = vunpack.c.l.bf16 %v1011
        %v2620 = vunpack.c.h.bf16 %v1011
        %v2621 = vunpack.c.l.bf16 %v1012
        %v2622 = vunpack.c.h.bf16 %v1012
        %v2623 = vunpack.c.l.bf16 %v1013
        %v2624 = vunpack.c.h.bf16 %v1013
        %v2625 = vunpack.c.l.bf16 %v1014
        %v2626 = vunpack.c.h.bf16 %v1014
        %v2627 = vunpack.c.l.bf16 %v1015
        %v2628 = vunpack.c.h.bf16 %v1015
        %v2629 = vunpack.c.l.bf16 %v1016
        %v2630 = vunpack.c.h.bf16 %v1016
        %v2631 = vunpack.c.l.bf16 %v1017
        %v2632 = vunpack.c.h.bf16 %v1017
        %v2633 = vunpack.c.l.bf16 %v1018
        %v2634 = vunpack.c.h.bf16 %v1018
        %v2635 = vunpack.c.l.bf16 %v1019
        %v2636 = vunpack.c.h.bf16 %v1019
        %v2637 = vunpack.c.l.bf16 %v1020
        %v2638 = vunpack.c.h.bf16 %v1020
        %v2639 = vunpack.c.l.bf16 %v1021
        %v2640 = vunpack.c.h.bf16 %v1021
        %v2641 = vunpack.c.l.bf16 %v1022
        %v2642 = vunpack.c.h.bf16 %v1022
        %v2643 = vunpack.c.l.bf16 %v1023
        %v2644 = vunpack.c.h.bf16 %v1023
        %v2645 = vunpack.c.l.bf16 %v1024
        %v2646 = vunpack.c.h.bf16 %v1024
        %v2647 = vunpack.c.l.bf16 %v1025
        %v2648 = vunpack.c.h.bf16 %v1025
        %v2649 = vunpack.c.l.bf16 %v1026
        %v2650 = vunpack.c.h.bf16 %v1026
        %v2651 = vunpack.c.l.bf16 %v1027
        %v2652 = vunpack.c.h.bf16 %v1027
        %v2653 = vunpack.c.l.bf16 %v1028
        %v2654 = vunpack.c.h.bf16 %v1028
        %v2655 = vunpack.c.l.bf16 %v1029
        %v2656 = vunpack.c.h.bf16 %v1029
        %v2657 = vunpack.c.l.bf16 %v1030
        %v2658 = vunpack.c.h.bf16 %v1030
        %v2659 = vunpack.c.l.bf16 %v1031
        %v2660 = vunpack.c.h.bf16 %v1031
        %v2661 = vunpack.c.l.bf16 %v1032
        %v2662 = vunpack.c.h.bf16 %v1032
        %v2663 = vunpack.c.l.bf16 %v1033
        %v2664 = vunpack.c.h.bf16 %v1033
        %v2665 = vunpack.c.l.bf16 %v1034
        %v2666 = vunpack.c.h.bf16 %v1034
        %v2667 = vunpack.c.l.bf16 %v1035
        %v2668 = vunpack.c.h.bf16 %v1035
        %v2669 = vunpack.c.l.bf16 %v1036
        %v2670 = vunpack.c.h.bf16 %v1036
        %v2671 = vunpack.c.l.bf16 %v1037
        %v2672 = vunpack.c.h.bf16 %v1037
        %v2673 = vunpack.c.l.bf16 %v1038
        %v2674 = vunpack.c.h.bf16 %v1038
        %v2675 = vunpack.c.l.bf16 %v1039
        %v2676 = vunpack.c.h.bf16 %v1039
        %v2677 = vunpack.c.l.bf16 %v1040
        %v2678 = vunpack.c.h.bf16 %v1040
        %v2679 = vunpack.c.l.bf16 %v1041
        %v2680 = vunpack.c.h.bf16 %v1041
        %v2681 = vunpack.c.l.bf16 %v1042
        %v2682 = vunpack.c.h.bf16 %v1042
        %v2683 = vunpack.c.l.bf16 %v1043
        %v2684 = vunpack.c.h.bf16 %v1043
        %v2685 = vunpack.c.l.bf16 %v1044
        %v2686 = vunpack.c.h.bf16 %v1044
        %v2687 = vunpack.c.l.bf16 %v1045
        %v2688 = vunpack.c.h.bf16 %v1045
        %v2689 = vunpack.c.l.bf16 %v1046
        %v2690 = vunpack.c.h.bf16 %v1046
        %v2691 = vunpack.c.l.bf16 %v1047
        %v2692 = vunpack.c.h.bf16 %v1047
        %v2693 = vunpack.c.l.bf16 %v1048
        %v2694 = vunpack.c.h.bf16 %v1048
        %v2695 = vunpack.c.l.bf16 %v1049
        %v2696 = vunpack.c.h.bf16 %v1049
        %v2697 = vunpack.c.l.bf16 %v1050
        %v2698 = vunpack.c.h.bf16 %v1050
        %v2699 = vunpack.c.l.bf16 %v1051
        %v2700 = vunpack.c.h.bf16 %v1051
        %v2701 = vunpack.c.l.bf16 %v1052
        %v2702 = vunpack.c.h.bf16 %v1052
        %v2703 = vunpack.c.l.bf16 %v1053
        %v2704 = vunpack.c.h.bf16 %v1053
        %v2705 = vunpack.c.l.bf16 %v1054
        %v2706 = vunpack.c.h.bf16 %v1054
        %v2707 = vunpack.c.l.bf16 %v1055
        %v2708 = vunpack.c.h.bf16 %v1055
        %v2709 = vunpack.c.l.bf16 %v1056
        %v2710 = vunpack.c.h.bf16 %v1056
        %v2711 = vunpack.c.l.bf16 %v1057
        %v2712 = vunpack.c.h.bf16 %v1057
        %v2713 = vunpack.c.l.bf16 %v1058
        %v2714 = vunpack.c.h.bf16 %v1058
        %v2715 = vunpack.c.l.bf16 %v1059
        %v2716 = vunpack.c.h.bf16 %v1059
        %v2717 = vunpack.c.l.bf16 %v1060
        %v2718 = vunpack.c.h.bf16 %v1060
        %v2719 = vunpack.c.l.bf16 %v1061
        %v2720 = vunpack.c.h.bf16 %v1061
        %v2721 = vunpack.c.l.bf16 %v1062
        %v2722 = vunpack.c.h.bf16 %v1062
        %v2723 = vunpack.c.l.bf16 %v1063
        %v2724 = vunpack.c.h.bf16 %v1063
        %v2725 = vunpack.c.l.bf16 %v1064
        %v2726 = vunpack.c.h.bf16 %v1064
        %v2727 = vunpack.c.l.bf16 %v1065
        %v2728 = vunpack.c.h.bf16 %v1065
        %v2729 = vunpack.c.l.bf16 %v1066
        %v2730 = vunpack.c.h.bf16 %v1066
        %v2731 = vunpack.c.l.bf16 %v1067
        %v2732 = vunpack.c.h.bf16 %v1067
        %v2733 = vunpack.c.l.bf16 %v1068
        %v2734 = vunpack.c.h.bf16 %v1068
        %v2735 = vunpack.c.l.bf16 %v1069
        %v2736 = vunpack.c.h.bf16 %v1069
        %v2737 = vunpack.c.l.bf16 %v1070
        %v2738 = vunpack.c.h.bf16 %v1070
        %v2739 = vunpack.c.l.bf16 %v1071
        %v2740 = vunpack.c.h.bf16 %v1071
        %v2741 = vunpack.c.l.bf16 %v1072
        %v2742 = vunpack.c.h.bf16 %v1072
        %v2743 = vunpack.c.l.bf16 %v1073
        %v2744 = vunpack.c.h.bf16 %v1073
        %v2745 = vunpack.c.l.bf16 %v1074
        %v2746 = vunpack.c.h.bf16 %v1074
        %v2747 = vunpack.c.l.bf16 %v1075
        %v2748 = vunpack.c.h.bf16 %v1075
        %v2749 = vunpack.c.l.bf16 %v1076
        %v2750 = vunpack.c.h.bf16 %v1076
        %v2751 = vunpack.c.l.bf16 %v1077
        %v2752 = vunpack.c.h.bf16 %v1077
        %v2753 = vunpack.c.l.bf16 %v1078
        %v2754 = vunpack.c.h.bf16 %v1078
        %v2755 = vunpack.c.l.bf16 %v1079
        %v2756 = vunpack.c.h.bf16 %v1079
        %v2757 = vunpack.c.l.bf16 %v1080
        %v2758 = vunpack.c.h.bf16 %v1080
        %v2759 = vunpack.c.l.bf16 %v1081
        %v2760 = vunpack.c.h.bf16 %v1081
        %v2761 = vunpack.c.l.bf16 %v1082
        %v2762 = vunpack.c.h.bf16 %v1082
        %v2763 = vunpack.c.l.bf16 %v1083
        %v2764 = vunpack.c.h.bf16 %v1083
        %v2765 = vunpack.c.l.bf16 %v1084
        %v2766 = vunpack.c.h.bf16 %v1084
        %v2767 = vunpack.c.l.bf16 %v1085
        %v2768 = vunpack.c.h.bf16 %v1085
        %v2769 = vunpack.c.l.bf16 %v1086
        %v2770 = vunpack.c.h.bf16 %v1086
        %v2771 = vunpack.c.l.bf16 %v1087
        %v2772 = vunpack.c.h.bf16 %v1087
        %v2773 = vunpack.c.l.bf16 %v1088
        %v2774 = vunpack.c.h.bf16 %v1088
        %v2775 = vunpack.c.l.bf16 %v1089
        %v2776 = vunpack.c.h.bf16 %v1089
        %v2777 = vunpack.c.l.bf16 %v1090
        %v2778 = vunpack.c.h.bf16 %v1090
        %v2779 = vunpack.c.l.bf16 %v1091
        %v2780 = vunpack.c.h.bf16 %v1091
        %v2781 = vunpack.c.l.bf16 %v1092
        %v2782 = vunpack.c.h.bf16 %v1092
        %v2783 = vunpack.c.l.bf16 %v1093
        %v2784 = vunpack.c.h.bf16 %v1093
        %v2785 = vunpack.c.l.bf16 %v1094
        %v2786 = vunpack.c.h.bf16 %v1094
        %v2787 = vunpack.c.l.bf16 %v1095
        %v2788 = vunpack.c.h.bf16 %v1095
        %v2789 = vunpack.c.l.bf16 %v1096
        %v2790 = vunpack.c.h.bf16 %v1096
        %v2791 = vunpack.c.l.bf16 %v1097
        %v2792 = vunpack.c.h.bf16 %v1097
        %v2793 = vunpack.c.l.bf16 %v1098
        %v2794 = vunpack.c.h.bf16 %v1098
        %v2795 = vunpack.c.l.bf16 %v1099
        %v2796 = vunpack.c.h.bf16 %v1099
        %v2797 = vunpack.c.l.bf16 %v1100
        %v2798 = vunpack.c.h.bf16 %v1100
        %v2799 = vunpack.c.l.bf16 %v1101
        %v2800 = vunpack.c.h.bf16 %v1101
        %v2801 = vunpack.c.l.bf16 %v1102
        %v2802 = vunpack.c.h.bf16 %v1102
        %v2803 = vunpack.c.l.bf16 %v1103
        %v2804 = vunpack.c.h.bf16 %v1103
        %v2805 = vunpack.c.l.bf16 %v1104
        %v2806 = vunpack.c.h.bf16 %v1104
        %v2807 = vunpack.c.l.bf16 %v1105
        %v2808 = vunpack.c.h.bf16 %v1105
        %v2809 = vunpack.c.l.bf16 %v1106
        %v2810 = vunpack.c.h.bf16 %v1106
        %v2811 = vunpack.c.l.bf16 %v1107
        %v2812 = vunpack.c.h.bf16 %v1107
        %v2813 = vunpack.c.l.bf16 %v1108
        %v2814 = vunpack.c.h.bf16 %v1108
        %v2815 = vunpack.c.l.bf16 %v1109
        %v2816 = vunpack.c.h.bf16 %v1109
        %v2817 = vunpack.c.l.bf16 %v1110
        %v2818 = vunpack.c.h.bf16 %v1110
        %v2819 = vunpack.c.l.bf16 %v1111
        %v2820 = vunpack.c.h.bf16 %v1111
        %v2821 = vunpack.c.l.bf16 %v1112
        %v2822 = vunpack.c.h.bf16 %v1112
        %v2823 = vunpack.c.l.bf16 %v1113
        %v2824 = vunpack.c.h.bf16 %v1113
        %v2825 = vunpack.c.l.bf16 %v1114
        %v2826 = vunpack.c.h.bf16 %v1114
        %v2827 = vunpack.c.l.bf16 %v1115
        %v2828 = vunpack.c.h.bf16 %v1115
        %v2829 = vunpack.c.l.bf16 %v1116
        %v2830 = vunpack.c.h.bf16 %v1116
        %v2831 = vunpack.c.l.bf16 %v1117
        %v2832 = vunpack.c.h.bf16 %v1117
        %v2833 = vunpack.c.l.bf16 %v1118
        %v2834 = vunpack.c.h.bf16 %v1118
        %v2835 = vunpack.c.l.bf16 %v1119
        %v2836 = vunpack.c.h.bf16 %v1119
        %v2837 = vunpack.c.l.bf16 %v1120
        %v2838 = vunpack.c.h.bf16 %v1120
        %v2839 = vunpack.c.l.bf16 %v1121
        %v2840 = vunpack.c.h.bf16 %v1121
        %v2841 = vunpack.c.l.bf16 %v1122
        %v2842 = vunpack.c.h.bf16 %v1122
        %v2843 = vunpack.c.l.bf16 %v1123
        %v2844 = vunpack.c.h.bf16 %v1123
        %v2845 = vunpack.c.l.bf16 %v1124
        %v2846 = vunpack.c.h.bf16 %v1124
        %v2847 = vunpack.c.l.bf16 %v1125
        %v2848 = vunpack.c.h.bf16 %v1125
        %v2849 = vunpack.c.l.bf16 %v1126
        %v2850 = vunpack.c.h.bf16 %v1126
        %v2851 = vunpack.c.l.bf16 %v1127
        %v2852 = vunpack.c.h.bf16 %v1127
        %v2853 = vunpack.c.l.bf16 %v1128
        %v2854 = vunpack.c.h.bf16 %v1128
        %v2855 = vunpack.c.l.bf16 %v1129
        %v2856 = vunpack.c.h.bf16 %v1129
        %v2857 = vunpack.c.l.bf16 %v1130
        %v2858 = vunpack.c.h.bf16 %v1130
        %v2859 = vunpack.c.l.bf16 %v1131
        %v2860 = vunpack.c.h.bf16 %v1131
        %v2861 = vunpack.c.l.bf16 %v1132
        %v2862 = vunpack.c.h.bf16 %v1132
        %v2863 = vunpack.c.l.bf16 %v1133
        %v2864 = vunpack.c.h.bf16 %v1133
        %v2865 = vunpack.c.l.bf16 %v1134
        %v2866 = vunpack.c.h.bf16 %v1134
        %v2867 = vunpack.c.l.bf16 %v1135
        %v2868 = vunpack.c.h.bf16 %v1135
        %v2869 = vunpack.c.l.bf16 %v1136
        %v2870 = vunpack.c.h.bf16 %v1136
        %v2871 = vunpack.c.l.bf16 %v1137
        %v2872 = vunpack.c.h.bf16 %v1137
        %v2873 = vunpack.c.l.bf16 %v1138
        %v2874 = vunpack.c.h.bf16 %v1138
        %v2875 = vunpack.c.l.bf16 %v1139
        %v2876 = vunpack.c.h.bf16 %v1139
        %v2877 = vunpack.c.l.bf16 %v1140
        %v2878 = vunpack.c.h.bf16 %v1140
        %v2879 = vunpack.c.l.bf16 %v1141
        %v2880 = vunpack.c.h.bf16 %v1141
        %v2881 = vunpack.c.l.bf16 %v1142
        %v2882 = vunpack.c.h.bf16 %v1142
        %v2883 = vunpack.c.l.bf16 %v1143
        %v2884 = vunpack.c.h.bf16 %v1143
        %v2885 = vunpack.c.l.bf16 %v1144
        %v2886 = vunpack.c.h.bf16 %v1144
        %v2887 = vunpack.c.l.bf16 %v1145
        %v2888 = vunpack.c.h.bf16 %v1145
        %v2889 = vunpack.c.l.bf16 %v1146
        %v2890 = vunpack.c.h.bf16 %v1146
        %v2891 = vunpack.c.l.bf16 %v1147
        %v2892 = vunpack.c.h.bf16 %v1147
        %v2893 = vunpack.c.l.bf16 %v1148
        %v2894 = vunpack.c.h.bf16 %v1148
        %v2895 = vunpack.c.l.bf16 %v1149
        %v2896 = vunpack.c.h.bf16 %v1149
        %v2897 = vunpack.c.l.bf16 %v1150
        %v2898 = vunpack.c.h.bf16 %v1150
        %v2899 = vunpack.c.l.bf16 %v1151
        %v2900 = vunpack.c.h.bf16 %v1151
        %v2901 = vunpack.c.l.bf16 %v1152
        %v2902 = vunpack.c.h.bf16 %v1152
        %v2903 = vunpack.c.l.bf16 %v1153
        %v2904 = vunpack.c.h.bf16 %v1153
        %v2905 = vunpack.c.l.bf16 %v1154
        %v2906 = vunpack.c.h.bf16 %v1154
        %v2907 = vunpack.c.l.bf16 %v1155
        %v2908 = vunpack.c.h.bf16 %v1155
        %v2909 = vunpack.c.l.bf16 %v1156
        %v2910 = vunpack.c.h.bf16 %v1156
        %v2911 = vunpack.c.l.bf16 %v1157
        %v2912 = vunpack.c.h.bf16 %v1157
        %v2913 = vunpack.c.l.bf16 %v1158
        %v2914 = vunpack.c.h.bf16 %v1158
        %v2915 = vunpack.c.l.bf16 %v1159
        %v2916 = vunpack.c.h.bf16 %v1159
        %v2917 = vunpack.c.l.bf16 %v1160
        %v2918 = vunpack.c.h.bf16 %v1160
        %v2919 = vunpack.c.l.bf16 %v1161
        %v2920 = vunpack.c.h.bf16 %v1161
        %v2921 = vunpack.c.l.bf16 %v1162
        %v2922 = vunpack.c.h.bf16 %v1162
        %v2923 = vunpack.c.l.bf16 %v1163
        %v2924 = vunpack.c.h.bf16 %v1163
        %v2925 = vunpack.c.l.bf16 %v1164
        %v2926 = vunpack.c.h.bf16 %v1164
        %v2927 = vunpack.c.l.bf16 %v1165
        %v2928 = vunpack.c.h.bf16 %v1165
        %v2929 = vunpack.c.l.bf16 %v1166
        %v2930 = vunpack.c.h.bf16 %v1166
        %v2931 = vunpack.c.l.bf16 %v1167
        %v2932 = vunpack.c.h.bf16 %v1167
        %v2933 = vunpack.c.l.bf16 %v1168
        %v2934 = vunpack.c.h.bf16 %v1168
        %v2935 = vunpack.c.l.bf16 %v1169
        %v2936 = vunpack.c.h.bf16 %v1169
        %v2937 = vunpack.c.l.bf16 %v1170
        %v2938 = vunpack.c.h.bf16 %v1170
        %v2939 = vunpack.c.l.bf16 %v1171
        %v2940 = vunpack.c.h.bf16 %v1171
        %v2941 = vunpack.c.l.bf16 %v1172
        %v2942 = vunpack.c.h.bf16 %v1172
        %v2943 = vunpack.c.l.bf16 %v1173
        %v2944 = vunpack.c.h.bf16 %v1173
        %v2945 = vunpack.c.l.bf16 %v1174
        %v2946 = vunpack.c.h.bf16 %v1174
        %v2947 = vunpack.c.l.bf16 %v1175
        %v2948 = vunpack.c.h.bf16 %v1175
        %v2949 = vunpack.c.l.bf16 %v1176
        %v2950 = vunpack.c.h.bf16 %v1176
        %v2951 = vunpack.c.l.bf16 %v1177
        %v2952 = vunpack.c.h.bf16 %v1177
        %v2953 = vunpack.c.l.bf16 %v1178
        %v2954 = vunpack.c.h.bf16 %v1178
        %v2955 = vunpack.c.l.bf16 %v1179
        %v2956 = vunpack.c.h.bf16 %v1179
        %v2957 = vunpack.c.l.bf16 %v1180
        %v2958 = vunpack.c.h.bf16 %v1180
        %v2959 = vunpack.c.l.bf16 %v1181
        %v2960 = vunpack.c.h.bf16 %v1181
        %v2961 = vunpack.c.l.bf16 %v1182
        %v2962 = vunpack.c.h.bf16 %v1182
        %v2963 = vunpack.c.l.bf16 %v1183
        %v2964 = vunpack.c.h.bf16 %v1183
        %v2965 = vunpack.c.l.bf16 %v1184
        %v2966 = vunpack.c.h.bf16 %v1184
        %v2967 = vunpack.c.l.bf16 %v1185
        %v2968 = vunpack.c.h.bf16 %v1185
        %v2969 = vunpack.c.l.bf16 %v1186
        %v2970 = vunpack.c.h.bf16 %v1186
        %v2971 = vunpack.c.l.bf16 %v1187
        %v2972 = vunpack.c.h.bf16 %v1187
        %v2973 = vunpack.c.l.bf16 %v1188
        %v2974 = vunpack.c.h.bf16 %v1188
        %v2975 = vunpack.c.l.bf16 %v1189
        %v2976 = vunpack.c.h.bf16 %v1189
        %v2977 = vunpack.c.l.bf16 %v1190
        %v2978 = vunpack.c.h.bf16 %v1190
        %v2979 = vunpack.c.l.bf16 %v1191
        %v2980 = vunpack.c.h.bf16 %v1191
        %v2981 = vunpack.c.l.bf16 %v1192
        %v2982 = vunpack.c.h.bf16 %v1192
        %v2983 = vunpack.c.l.bf16 %v1193
        %v2984 = vunpack.c.h.bf16 %v1193
        %v2985 = vunpack.c.l.bf16 %v1194
        %v2986 = vunpack.c.h.bf16 %v1194
        %v2987 = vunpack.c.l.bf16 %v1195
        %v2988 = vunpack.c.h.bf16 %v1195
        %v2989 = vunpack.c.l.bf16 %v1196
        %v2990 = vunpack.c.h.bf16 %v1196
        %v2991 = vunpack.c.l.bf16 %v1197
        %v2992 = vunpack.c.h.bf16 %v1197
        %v2993 = vunpack.c.l.bf16 %v1198
        %v2994 = vunpack.c.h.bf16 %v1198
        %v2995 = vunpack.c.l.bf16 %v1199
        %v2996 = vunpack.c.h.bf16 %v1199
        %v2997 = vunpack.c.l.bf16 %v1200
        %v2998 = vunpack.c.h.bf16 %v1200
        %v2999 = vunpack.c.l.bf16 %v1201
        %v3000 = vunpack.c.h.bf16 %v1201
        %v3001 = vunpack.c.l.bf16 %v1202
        %v3002 = vunpack.c.h.bf16 %v1202
        %v3003 = vunpack.c.l.bf16 %v1203
        %v3004 = vunpack.c.h.bf16 %v1203
        %v3005 = vunpack.c.l.bf16 %v1204
        %v3006 = vunpack.c.h.bf16 %v1204
        %v3007 = vunpack.c.l.bf16 %v1205
        %v3008 = vunpack.c.h.bf16 %v1205
        %v3009 = vunpack.c.l.bf16 %v1206
        %v3010 = vunpack.c.h.bf16 %v1206
        %v3011 = vunpack.c.l.bf16 %v1207
        %v3012 = vunpack.c.h.bf16 %v1207
        %v3013 = vunpack.c.l.bf16 %v1208
        %v3014 = vunpack.c.h.bf16 %v1208
        %v3015 = vunpack.c.l.bf16 %v1209
        %v3016 = vunpack.c.h.bf16 %v1209
        %v3017 = vunpack.c.l.bf16 %v1210
        %v3018 = vunpack.c.h.bf16 %v1210
        %v3019 = vunpack.c.l.bf16 %v1211
        %v3020 = vunpack.c.h.bf16 %v1211
        %v3021 = vunpack.c.l.bf16 %v1212
        %v3022 = vunpack.c.h.bf16 %v1212
        %v3023 = vunpack.c.l.bf16 %v1213
        %v3024 = vunpack.c.h.bf16 %v1213
        %v3025 = vunpack.c.l.bf16 %v1214
        %v3026 = vunpack.c.h.bf16 %v1214
        %v3027 = vunpack.c.l.bf16 %v1215
        %v3028 = vunpack.c.h.bf16 %v1215
        %v3029 = vunpack.c.l.bf16 %v1216
        %v3030 = vunpack.c.h.bf16 %v1216
        %v3031 = vunpack.c.l.bf16 %v1217
        %v3032 = vunpack.c.h.bf16 %v1217
        %v3033 = vunpack.c.l.bf16 %v1218
        %v3034 = vunpack.c.h.bf16 %v1218
        %v3035 = vunpack.c.l.bf16 %v1219
        %v3036 = vunpack.c.h.bf16 %v1219
        %v3037 = vunpack.c.l.bf16 %v1220
        %v3038 = vunpack.c.h.bf16 %v1220
        %v3039 = vunpack.c.l.bf16 %v1221
        %v3040 = vunpack.c.h.bf16 %v1221
        %v3041 = vunpack.c.l.bf16 %v1222
        %v3042 = vunpack.c.h.bf16 %v1222
        %v3043 = vunpack.c.l.bf16 %v1223
        %v3044 = vunpack.c.h.bf16 %v1223
        %v3045 = vunpack.c.l.bf16 %v1224
        %v3046 = vunpack.c.h.bf16 %v1224
        %v3047 = vunpack.c.l.bf16 %v1225
        %v3048 = vunpack.c.h.bf16 %v1225
        %v3049 = vunpack.c.l.bf16 %v1226
        %v3050 = vunpack.c.h.bf16 %v1226
        %v3051 = vunpack.c.l.bf16 %v1227
        %v3052 = vunpack.c.h.bf16 %v1227
        %v3053 = vunpack.c.l.bf16 %v1228
        %v3054 = vunpack.c.h.bf16 %v1228
        %v3055 = vunpack.c.l.bf16 %v1229
        %v3056 = vunpack.c.h.bf16 %v1229
        %v3057 = vunpack.c.l.bf16 %v1230
        %v3058 = vunpack.c.h.bf16 %v1230
        %v3059 = vunpack.c.l.bf16 %v1231
        %v3060 = vunpack.c.h.bf16 %v1231
        %v3061 = vunpack.c.l.bf16 %v1232
        %v3062 = vunpack.c.h.bf16 %v1232
        %v3063 = vunpack.c.l.bf16 %v1233
        %v3064 = vunpack.c.h.bf16 %v1233
        %v3065 = vunpack.c.l.bf16 %v1234
        %v3066 = vunpack.c.h.bf16 %v1234
        %v3067 = vunpack.c.l.bf16 %v1235
        %v3068 = vunpack.c.h.bf16 %v1235
        %v3069 = vunpack.c.l.bf16 %v1236
        %v3070 = vunpack.c.h.bf16 %v1236
        %v3071 = vunpack.c.l.bf16 %v1237
        %v3072 = vunpack.c.h.bf16 %v1237
        %v3073 = vunpack.c.l.bf16 %v1238
        %v3074 = vunpack.c.h.bf16 %v1238
        %v3075 = vunpack.c.l.bf16 %v1239
        %v3076 = vunpack.c.h.bf16 %v1239
        %v3077 = vunpack.c.l.bf16 %v1240
        %v3078 = vunpack.c.h.bf16 %v1240
        %v3079 = vunpack.c.l.bf16 %v1241
        %v3080 = vunpack.c.h.bf16 %v1241
        %v3081 = vunpack.c.l.bf16 %v1242
        %v3082 = vunpack.c.h.bf16 %v1242
        %v3083 = vunpack.c.l.bf16 %v1243
        %v3084 = vunpack.c.h.bf16 %v1243
        %v3085 = vunpack.c.l.bf16 %v1244
        %v3086 = vunpack.c.h.bf16 %v1244
        %v3087 = vunpack.c.l.bf16 %v1245
        %v3088 = vunpack.c.h.bf16 %v1245
        %v3089 = vunpack.c.l.bf16 %v1246
        %v3090 = vunpack.c.h.bf16 %v1246
        %v3091 = vunpack.c.l.bf16 %v1247
        %v3092 = vunpack.c.h.bf16 %v1247
        %v3093 = vunpack.c.l.bf16 %v1248
        %v3094 = vunpack.c.h.bf16 %v1248
        %v3095 = vunpack.c.l.bf16 %v1249
        %v3096 = vunpack.c.h.bf16 %v1249
        %v3097 = vunpack.c.l.bf16 %v1250
        %v3098 = vunpack.c.h.bf16 %v1250
        %v3099 = vunpack.c.l.bf16 %v1251
        %v3100 = vunpack.c.h.bf16 %v1251
        %v3101 = vunpack.c.l.bf16 %v1252
        %v3102 = vunpack.c.h.bf16 %v1252
        %v3103 = vunpack.c.l.bf16 %v1253
        %v3104 = vunpack.c.h.bf16 %v1253
        %v3105 = vunpack.c.l.bf16 %v1254
        %v3106 = vunpack.c.h.bf16 %v1254
        %v3107 = vunpack.c.l.bf16 %v1255
        %v3108 = vunpack.c.h.bf16 %v1255
        %v3109 = vunpack.c.l.bf16 %v1256
        %v3110 = vunpack.c.h.bf16 %v1256
        %v3111 = vunpack.c.l.bf16 %v1257
        %v3112 = vunpack.c.h.bf16 %v1257
        %v3113 = vunpack.c.l.bf16 %v1258
        %v3114 = vunpack.c.h.bf16 %v1258
        %v3115 = vunpack.c.l.bf16 %v1259
        %v3116 = vunpack.c.h.bf16 %v1259
        %v3117 = vunpack.c.l.bf16 %v1260
        %v3118 = vunpack.c.h.bf16 %v1260
        %v3119 = vunpack.c.l.bf16 %v1261
        %v3120 = vunpack.c.h.bf16 %v1261
        %v3121 = vunpack.c.l.bf16 %v1262
        %v3122 = vunpack.c.h.bf16 %v1262
        %v3123 = vunpack.c.l.bf16 %v1263
        %v3124 = vunpack.c.h.bf16 %v1263
        %v3125 = vunpack.c.l.bf16 %v1264
        %v3126 = vunpack.c.h.bf16 %v1264
        %v3127 = vunpack.c.l.bf16 %v1265
        %v3128 = vunpack.c.h.bf16 %v1265
        %v3129 = vunpack.c.l.bf16 %v1266
        %v3130 = vunpack.c.h.bf16 %v1266
        %v3131 = vunpack.c.l.bf16 %v1267
        %v3132 = vunpack.c.h.bf16 %v1267
        %v3133 = vunpack.c.l.bf16 %v1268
        %v3134 = vunpack.c.h.bf16 %v1268
        %v3135 = vunpack.c.l.bf16 %v1269
        %v3136 = vunpack.c.h.bf16 %v1269
        %v3137 = vunpack.c.l.bf16 %v1270
        %v3138 = vunpack.c.h.bf16 %v1270
        %v3139 = vunpack.c.l.bf16 %v1271
        %v3140 = vunpack.c.h.bf16 %v1271
        %v3141 = vunpack.c.l.bf16 %v1272
        %v3142 = vunpack.c.h.bf16 %v1272
        %v3143 = vunpack.c.l.bf16 %v1273
        %v3144 = vunpack.c.h.bf16 %v1273
        %v3145 = vunpack.c.l.bf16 %v1274
        %v3146 = vunpack.c.h.bf16 %v1274
        %v3147 = vunpack.c.l.bf16 %v1275
        %v3148 = vunpack.c.h.bf16 %v1275
        %v3149 = vunpack.c.l.bf16 %v1276
        %v3150 = vunpack.c.h.bf16 %v1276
        %v3151 = vunpack.c.l.bf16 %v1277
        %v3152 = vunpack.c.h.bf16 %v1277
        %v3153 = vunpack.c.l.bf16 %v1278
        %v3154 = vunpack.c.h.bf16 %v1278
        %v3155 = vunpack.c.l.bf16 %v1279
        %v3156 = vunpack.c.h.bf16 %v1279
        %v3157 = vunpack.c.l.bf16 %v1280
        %v3158 = vunpack.c.h.bf16 %v1280
        %v3159 = vunpack.c.l.bf16 %v1281
        %v3160 = vunpack.c.h.bf16 %v1281
        %v3161 = vunpack.c.l.bf16 %v1282
        %v3162 = vunpack.c.h.bf16 %v1282
        %v3163 = vunpack.c.l.bf16 %v1283
        %v3164 = vunpack.c.h.bf16 %v1283
        %v3165 = vunpack.c.l.bf16 %v1284
        %v3166 = vunpack.c.h.bf16 %v1284
        %v3167 = vunpack.c.l.bf16 %v1285
        %v3168 = vunpack.c.h.bf16 %v1285
        %v3169 = vunpack.c.l.bf16 %v1286
        %v3170 = vunpack.c.h.bf16 %v1286
        %v3171 = vunpack.c.l.bf16 %v1287
        %v3172 = vunpack.c.h.bf16 %v1287
        %v3173 = vunpack.c.l.bf16 %v1288
        %v3174 = vunpack.c.h.bf16 %v1288
        %v3175 = vunpack.c.l.bf16 %v1289
        %v3176 = vunpack.c.h.bf16 %v1289
        %v3177 = vunpack.c.l.bf16 %v1290
        %v3178 = vunpack.c.h.bf16 %v1290
        %v3179 = vunpack.c.l.bf16 %v1291
        %v3180 = vunpack.c.h.bf16 %v1291
        %v3181 = vunpack.c.l.bf16 %v1292
        %v3182 = vunpack.c.h.bf16 %v1292
        %v3183 = vunpack.c.l.bf16 %v1293
        %v3184 = vunpack.c.h.bf16 %v1293
        %v3185 = vunpack.c.l.bf16 %v1294
        %v3186 = vunpack.c.h.bf16 %v1294
        %v3187 = vunpack.c.l.bf16 %v1295
        %v3188 = vunpack.c.h.bf16 %v1295
        %v3189 = vunpack.c.l.bf16 %v1296
        %v3190 = vunpack.c.h.bf16 %v1296
        %v3191 = vunpack.c.l.bf16 %v1297
        %v3192 = vunpack.c.h.bf16 %v1297
        %v3193 = vunpack.c.l.bf16 %v1298
        %v3194 = vunpack.c.h.bf16 %v1298
        %v3195 = vunpack.c.l.bf16 %v1299
        %v3196 = vunpack.c.h.bf16 %v1299
        %v3197 = vunpack.c.l.bf16 %v1300
        %v3198 = vunpack.c.h.bf16 %v1300
        %v3199 = vunpack.c.l.bf16 %v1301
        %v3200 = vunpack.c.h.bf16 %v1301
        %v3201 = vunpack.c.l.bf16 %v1302
        %v3202 = vunpack.c.h.bf16 %v1302
        %v3203 = vunpack.c.l.bf16 %v1303
        %v3204 = vunpack.c.h.bf16 %v1303
        %v3205 = vunpack.c.l.bf16 %v1304
        %v3206 = vunpack.c.h.bf16 %v1304
        %v3207 = vunpack.c.l.bf16 %v1305
        %v3208 = vunpack.c.h.bf16 %v1305
        %v3209 = vunpack.c.l.bf16 %v1306
        %v3210 = vunpack.c.h.bf16 %v1306
        %v3211 = vunpack.c.l.bf16 %v1307
        %v3212 = vunpack.c.h.bf16 %v1307
        %v3213 = vunpack.c.l.bf16 %v1308
        %v3214 = vunpack.c.h.bf16 %v1308
        %v3215 = vunpack.c.l.bf16 %v1309
        %v3216 = vunpack.c.h.bf16 %v1309
        %v3217 = vunpack.c.l.bf16 %v1310
        %v3218 = vunpack.c.h.bf16 %v1310
        %v3219 = vunpack.c.l.bf16 %v1311
        %v3220 = vunpack.c.h.bf16 %v1311
        %v3221 = vunpack.c.l.bf16 %v1312
        %v3222 = vunpack.c.h.bf16 %v1312
        %v3223 = vunpack.c.l.bf16 %v1313
        %v3224 = vunpack.c.h.bf16 %v1313
        %v3225 = vunpack.c.l.bf16 %v1314
        %v3226 = vunpack.c.h.bf16 %v1314
        %v3227 = vunpack.c.l.bf16 %v1315
        %v3228 = vunpack.c.h.bf16 %v1315
        %v3229 = vunpack.c.l.bf16 %v1316
        %v3230 = vunpack.c.h.bf16 %v1316
        %v3231 = vunpack.c.l.bf16 %v1317
        %v3232 = vunpack.c.h.bf16 %v1317
        %v3233 = vunpack.c.l.bf16 %v1318
        %v3234 = vunpack.c.h.bf16 %v1318
        %v3235 = vunpack.c.l.bf16 %v1319
        %v3236 = vunpack.c.h.bf16 %v1319
        %v3237 = vunpack.c.l.bf16 %v1320
        %v3238 = vunpack.c.h.bf16 %v1320
        %v3239 = vunpack.c.l.bf16 %v1321
        %v3240 = vunpack.c.h.bf16 %v1321
        %v3241 = vunpack.c.l.bf16 %v1322
        %v3242 = vunpack.c.h.bf16 %v1322
        %v3243 = vunpack.c.l.bf16 %v1323
        %v3244 = vunpack.c.h.bf16 %v1323
        %v3245 = vunpack.c.l.bf16 %v1324
        %v3246 = vunpack.c.h.bf16 %v1324
        %v3247 = vunpack.c.l.bf16 %v1325
        %v3248 = vunpack.c.h.bf16 %v1325
        %v3249 = vunpack.c.l.bf16 %v1326
        %v3250 = vunpack.c.h.bf16 %v1326
        %v3251 = vunpack.c.l.bf16 %v1327
        %v3252 = vunpack.c.h.bf16 %v1327
        %v3253 = vunpack.c.l.bf16 %v1328
        %v3254 = vunpack.c.h.bf16 %v1328
        %v3255 = vunpack.c.l.bf16 %v1329
        %v3256 = vunpack.c.h.bf16 %v1329
        %v3257 = vunpack.c.l.bf16 %v1330
        %v3258 = vunpack.c.h.bf16 %v1330
        %v3259 = vunpack.c.l.bf16 %v1331
        %v3260 = vunpack.c.h.bf16 %v1331
        %v3261 = vunpack.c.l.bf16 %v1332
        %v3262 = vunpack.c.h.bf16 %v1332
        %v3263 = vunpack.c.l.bf16 %v1333
        %v3264 = vunpack.c.h.bf16 %v1333
        %v3265 = vunpack.c.l.bf16 %v1334
        %v3266 = vunpack.c.h.bf16 %v1334
        %v3267 = vunpack.c.l.bf16 %v1335
        %v3268 = vunpack.c.h.bf16 %v1335
        %v3269 = vunpack.c.l.bf16 %v1336
        %v3270 = vunpack.c.h.bf16 %v1336
        %v3271 = vunpack.c.l.bf16 %v1337
        %v3272 = vunpack.c.h.bf16 %v1337
        %v3273 = vunpack.c.l.bf16 %v1338
        %v3274 = vunpack.c.h.bf16 %v1338
        %v3275 = vunpack.c.l.bf16 %v1339
        %v3276 = vunpack.c.h.bf16 %v1339
        %v3277 = vunpack.c.l.bf16 %v1340
        %v3278 = vunpack.c.h.bf16 %v1340
        %v3279 = vunpack.c.l.bf16 %v1341
        %v3280 = vunpack.c.h.bf16 %v1341
        %v3281 = vunpack.c.l.bf16 %v1342
        %v3282 = vunpack.c.h.bf16 %v1342
        %v3283 = vunpack.c.l.bf16 %v1343
        %v3284 = vunpack.c.h.bf16 %v1343
        %v3285 = vunpack.c.l.bf16 %v1344
        %v3286 = vunpack.c.h.bf16 %v1344
        %v3287 = vunpack.c.l.bf16 %v1345
        %v3288 = vunpack.c.h.bf16 %v1345
        %v3289 = vunpack.c.l.bf16 %v1346
        %v3290 = vunpack.c.h.bf16 %v1346
        %v3291 = vunpack.c.l.bf16 %v1347
        %v3292 = vunpack.c.h.bf16 %v1347
        %v3293 = vunpack.c.l.bf16 %v1348
        %v3294 = vunpack.c.h.bf16 %v1348
        %v3295 = vunpack.c.l.bf16 %v1349
        %v3296 = vunpack.c.h.bf16 %v1349
        %v3297 = vunpack.c.l.bf16 %v1350
        %v3298 = vunpack.c.h.bf16 %v1350
        %v3299 = vunpack.c.l.bf16 %v1351
        %v3300 = vunpack.c.h.bf16 %v1351
        %v3301 = vunpack.c.l.bf16 %v1352
        %v3302 = vunpack.c.h.bf16 %v1352
        %v3303 = vunpack.c.l.bf16 %v1353
        %v3304 = vunpack.c.h.bf16 %v1353
        %v3305 = vunpack.c.l.bf16 %v1354
        %v3306 = vunpack.c.h.bf16 %v1354
        %v3307 = vunpack.c.l.bf16 %v1355
        %v3308 = vunpack.c.h.bf16 %v1355
        %v3309 = vunpack.c.l.bf16 %v1356
        %v3310 = vunpack.c.h.bf16 %v1356
        %v3311 = vunpack.c.l.bf16 %v1357
        %v3312 = vunpack.c.h.bf16 %v1357
        %v3313 = vunpack.c.l.bf16 %v1358
        %v3314 = vunpack.c.h.bf16 %v1358
        %v3315 = vunpack.c.l.bf16 %v1359
        %v3316 = vunpack.c.h.bf16 %v1359
        %v3317 = vunpack.c.l.bf16 %v1360
        %v3318 = vunpack.c.h.bf16 %v1360
        %v3319 = vunpack.c.l.bf16 %v1361
        %v3320 = vunpack.c.h.bf16 %v1361
        %v3321 = vunpack.c.l.bf16 %v1362
        %v3322 = vunpack.c.h.bf16 %v1362
        %v3323 = vunpack.c.l.bf16 %v1363
        %v3324 = vunpack.c.h.bf16 %v1363
        %v3325 = vunpack.c.l.bf16 %v1364
        %v3326 = vunpack.c.h.bf16 %v1364
        %v3327 = vunpack.c.l.bf16 %v1365
        %v3328 = vunpack.c.h.bf16 %v1365
        %v3329 = vunpack.c.l.bf16 %v1366
        %v3330 = vunpack.c.h.bf16 %v1366
        %v3331 = vunpack.c.l.bf16 %v1367
        %v3332 = vunpack.c.h.bf16 %v1367
        %v3333 = vunpack.c.l.bf16 %v1368
        %v3334 = vunpack.c.h.bf16 %v1368
        %v3335 = vunpack.c.l.bf16 %v1369
        %v3336 = vunpack.c.h.bf16 %v1369
        %v3337 = vunpack.c.l.bf16 %v1370
        %v3338 = vunpack.c.h.bf16 %v1370
        %v3339 = vunpack.c.l.bf16 %v1371
        %v3340 = vunpack.c.h.bf16 %v1371
        %v3341 = vunpack.c.l.bf16 %v1372
        %v3342 = vunpack.c.h.bf16 %v1372
        %v3343 = vunpack.c.l.bf16 %v1373
        %v3344 = vunpack.c.h.bf16 %v1373
        %v3345 = vunpack.c.l.bf16 %v1374
        %v3346 = vunpack.c.h.bf16 %v1374
        %v3347 = vunpack.c.l.bf16 %v1375
        %v3348 = vunpack.c.h.bf16 %v1375
        %v3349 = vunpack.c.l.bf16 %v1376
        %v3350 = vunpack.c.h.bf16 %v1376
        %v3351 = vunpack.c.l.bf16 %v1377
        %v3352 = vunpack.c.h.bf16 %v1377
        %v3353 = vunpack.c.l.bf16 %v1378
        %v3354 = vunpack.c.h.bf16 %v1378
        %v3355 = vunpack.c.l.bf16 %v1379
        %v3356 = vunpack.c.h.bf16 %v1379
        %v3357 = vunpack.c.l.bf16 %v1380
        %v3358 = vunpack.c.h.bf16 %v1380
        %v3359 = vunpack.c.l.bf16 %v1381
        %v3360 = vunpack.c.h.bf16 %v1381
        %v3361 = vunpack.c.l.bf16 %v1382
        %v3362 = vunpack.c.h.bf16 %v1382
        %v3363 = vunpack.c.l.bf16 %v1383
        %v3364 = vunpack.c.h.bf16 %v1383
        %v3365 = vunpack.c.l.bf16 %v1384
        %v3366 = vunpack.c.h.bf16 %v1384
        %v3367 = vunpack.c.l.bf16 %v1385
        %v3368 = vunpack.c.h.bf16 %v1385
        %v3369 = vunpack.c.l.bf16 %v1386
        %v3370 = vunpack.c.h.bf16 %v1386
        %v3371 = vunpack.c.l.bf16 %v1387
        %v3372 = vunpack.c.h.bf16 %v1387
        %v3373 = vunpack.c.l.bf16 %v1388
        %v3374 = vunpack.c.h.bf16 %v1388
        %v3375 = vunpack.c.l.bf16 %v1389
        %v3376 = vunpack.c.h.bf16 %v1389
        %v3377 = vunpack.c.l.bf16 %v1390
        %v3378 = vunpack.c.h.bf16 %v1390
        %v3379 = vunpack.c.l.bf16 %v1391
        %v3380 = vunpack.c.h.bf16 %v1391
        %v3381 = vunpack.c.l.bf16 %v1392
        %v3382 = vunpack.c.h.bf16 %v1392
        %v3383 = vunpack.c.l.bf16 %v1393
        %v3384 = vunpack.c.h.bf16 %v1393
        %v3385 = vunpack.c.l.bf16 %v1394
        %v3386 = vunpack.c.h.bf16 %v1394
        %v3387 = vunpack.c.l.bf16 %v1395
        %v3388 = vunpack.c.h.bf16 %v1395
        %v3389 = vunpack.c.l.bf16 %v1396
        %v3390 = vunpack.c.h.bf16 %v1396
        %v3391 = vunpack.c.l.bf16 %v1397
        %v3392 = vunpack.c.h.bf16 %v1397
        %v3393 = vunpack.c.l.bf16 %v1398
        %v3394 = vunpack.c.h.bf16 %v1398
        %v3395 = vunpack.c.l.bf16 %v1399
        %v3396 = vunpack.c.h.bf16 %v1399
        %v3397 = vunpack.c.l.bf16 %v1400
        %v3398 = vunpack.c.h.bf16 %v1400
        %v3399 = vunpack.c.l.bf16 %v1401
        %v3400 = vunpack.c.h.bf16 %v1401
        %v3401 = vunpack.c.l.bf16 %v1402
        %v3402 = vunpack.c.h.bf16 %v1402
        %v3403 = vunpack.c.l.bf16 %v1403
        %v3404 = vunpack.c.h.bf16 %v1403
        %v3405 = vunpack.c.l.bf16 %v1404
        %v3406 = vunpack.c.h.bf16 %v1404
        %v3407 = vunpack.c.l.bf16 %v1405
        %v3408 = vunpack.c.h.bf16 %v1405
        %v3409 = vunpack.c.l.bf16 %v1406
        %v3410 = vunpack.c.h.bf16 %v1406
        %v3411 = vunpack.c.l.bf16 %v1407
        %v3412 = vunpack.c.h.bf16 %v1407
        %v3413 = vunpack.c.l.bf16 %v1408
        %v3414 = vunpack.c.h.bf16 %v1408
        %v3415 = vunpack.c.l.bf16 %v1409
        %v3416 = vunpack.c.h.bf16 %v1409
        %v3417 = vunpack.c.l.bf16 %v1410
        %v3418 = vunpack.c.h.bf16 %v1410
        %v3419 = vunpack.c.l.bf16 %v1411
        %v3420 = vunpack.c.h.bf16 %v1411
        %v3421 = vunpack.c.l.bf16 %v1412
        %v3422 = vunpack.c.h.bf16 %v1412
        %v3423 = vunpack.c.l.bf16 %v1413
        %v3424 = vunpack.c.h.bf16 %v1413
        %v3425 = vunpack.c.l.bf16 %v1414
        %v3426 = vunpack.c.h.bf16 %v1414
        %v3427 = vunpack.c.l.bf16 %v1415
        %v3428 = vunpack.c.h.bf16 %v1415
        %v3429 = vunpack.c.l.bf16 %v1416
        %v3430 = vunpack.c.h.bf16 %v1416
        %v3431 = vunpack.c.l.bf16 %v1417
        %v3432 = vunpack.c.h.bf16 %v1417
        %v3433 = vunpack.c.l.bf16 %v1418
        %v3434 = vunpack.c.h.bf16 %v1418
        %v3435 = vunpack.c.l.bf16 %v1419
        %v3436 = vunpack.c.h.bf16 %v1419
        %v3437 = vunpack.c.l.bf16 %v1420
        %v3438 = vunpack.c.h.bf16 %v1420
        %v3439 = vunpack.c.l.bf16 %v1421
        %v3440 = vunpack.c.h.bf16 %v1421
        %v3441 = vunpack.c.l.bf16 %v1422
        %v3442 = vunpack.c.h.bf16 %v1422
        %v3443 = vunpack.c.l.bf16 %v1423
        %v3444 = vunpack.c.h.bf16 %v1423
        %v3445 = vunpack.c.l.bf16 %v1424
        %v3446 = vunpack.c.h.bf16 %v1424
        %v3447 = vunpack.c.l.bf16 %v1425
        %v3448 = vunpack.c.h.bf16 %v1425
        %v3449 = vunpack.c.l.bf16 %v1426
        %v3450 = vunpack.c.h.bf16 %v1426
        %v3451 = vunpack.c.l.bf16 %v1427
        %v3452 = vunpack.c.h.bf16 %v1427
        %v3453 = vunpack.c.l.bf16 %v1428
        %v3454 = vunpack.c.h.bf16 %v1428
        %v3455 = vunpack.c.l.bf16 %v1429
        %v3456 = vunpack.c.h.bf16 %v1429
        %v3457 = vunpack.c.l.bf16 %v1430
        %v3458 = vunpack.c.h.bf16 %v1430
        %v3459 = vunpack.c.l.bf16 %v1431
        %v3460 = vunpack.c.h.bf16 %v1431
        %v3461 = vunpack.c.l.bf16 %v1432
        %v3462 = vunpack.c.h.bf16 %v1432
        %v3463 = vunpack.c.l.bf16 %v1433
        %v3464 = vunpack.c.h.bf16 %v1433
        %v3465 = vunpack.c.l.bf16 %v1434
        %v3466 = vunpack.c.h.bf16 %v1434
        %v3467 = vunpack.c.l.bf16 %v1435
        %v3468 = vunpack.c.h.bf16 %v1435
        %v3469 = vunpack.c.l.bf16 %v1436
        %v3470 = vunpack.c.h.bf16 %v1436
        %v3471 = vunpack.c.l.bf16 %v1437
        %v3472 = vunpack.c.h.bf16 %v1437
        %v3473 = vunpack.c.l.bf16 %v1438
        %v3474 = vunpack.c.h.bf16 %v1438
        %v3475 = vunpack.c.l.bf16 %v1439
        %v3476 = vunpack.c.h.bf16 %v1439
        %v3477 = vunpack.c.l.bf16 %v1440
        %v3478 = vunpack.c.h.bf16 %v1440
        %v3479 = vunpack.c.l.bf16 %v1441
        %v3480 = vunpack.c.h.bf16 %v1441
        %v3481 = vunpack.c.l.bf16 %v1442
        %v3482 = vunpack.c.h.bf16 %v1442
        %v3483 = vunpack.c.l.bf16 %v1443
        %v3484 = vunpack.c.h.bf16 %v1443
        %v3485 = vunpack.c.l.bf16 %v1444
        %v3486 = vunpack.c.h.bf16 %v1444
        %v3487 = vunpack.c.l.bf16 %v1445
        %v3488 = vunpack.c.h.bf16 %v1445
        %v3489 = vunpack.c.l.bf16 %v1446
        %v3490 = vunpack.c.h.bf16 %v1446
        %v3491 = vunpack.c.l.bf16 %v1447
        %v3492 = vunpack.c.h.bf16 %v1447
        %v3493 = vunpack.c.l.bf16 %v1448
        %v3494 = vunpack.c.h.bf16 %v1448
        %v3495 = vunpack.c.l.bf16 %v1449
        %v3496 = vunpack.c.h.bf16 %v1449
        %v3497 = vunpack.c.l.bf16 %v1450
        %v3498 = vunpack.c.h.bf16 %v1450
        %v3499 = vmax.f32 %v1451, %v1459
        %v3500 = vmax.f32 %v3499, %v1467
        %v3501 = vmax.f32 %v3500, %v1475
        %v3502 = vmax.f32 %v3501, %v1483
        %v3503 = vmax.f32 %v3502, %v1491
        %v3504 = vmax.f32 %v3503, %v1499
        %v3505 = vmax.f32 %v3504, %v1507
        %v3506 = vmax.f32 %v3505, %v1515
        %v3507 = vmax.f32 %v3506, %v1523
        %v3508 = vmax.f32 %v3507, %v1531
        %v3509 = vmax.f32 %v3508, %v1539
        %v3510 = vmax.f32 %v3509, %v1547
        %v3511 = vmax.f32 %v3510, %v1555
        %v3512 = vmax.f32 %v3511, %v1563
        %v3513 = vmax.f32 %v3512, %v1571
        %v3514 = vrot.slane %v3513, 4
        %v3515 = vmax.f32 %v3513, %v3514
        %v3516 = vrot.slane %v3515, 2
        %v3517 = vmax.f32 %v3515, %v3516
        %v3518 = vrot.slane %v3517, 1
        %v3519 = vmax.f32 %v3517, %v3518
        %v3520 = vmax.f32 %v1452, %v1460
        %v3521 = vmax.f32 %v3520, %v1468
        %v3522 = vmax.f32 %v3521, %v1476
        %v3523 = vmax.f32 %v3522, %v1484
        %v3524 = vmax.f32 %v3523, %v1492
        %v3525 = vmax.f32 %v3524, %v1500
        %v3526 = vmax.f32 %v3525, %v1508
        %v3527 = vmax.f32 %v3526, %v1516
        %v3528 = vmax.f32 %v3527, %v1524
        %v3529 = vmax.f32 %v3528, %v1532
        %v3530 = vmax.f32 %v3529, %v1540
        %v3531 = vmax.f32 %v3530, %v1548
        %v3532 = vmax.f32 %v3531, %v1556
        %v3533 = vmax.f32 %v3532, %v1564
        %v3534 = vmax.f32 %v3533, %v1572
        %v3535 = vrot.slane %v3534, 4
        %v3536 = vmax.f32 %v3534, %v3535
        %v3537 = vrot.slane %v3536, 2
        %v3538 = vmax.f32 %v3536, %v3537
        %v3539 = vrot.slane %v3538, 1
        %v3540 = vmax.f32 %v3538, %v3539
        %v3541 = vmax.f32 %v1453, %v1461
        %v3542 = vmax.f32 %v3541, %v1469
        %v3543 = vmax.f32 %v3542, %v1477
        %v3544 = vmax.f32 %v3543, %v1485
        %v3545 = vmax.f32 %v3544, %v1493
        %v3546 = vmax.f32 %v3545, %v1501
        %v3547 = vmax.f32 %v3546, %v1509
        %v3548 = vmax.f32 %v3547, %v1517
        %v3549 = vmax.f32 %v3548, %v1525
        %v3550 = vmax.f32 %v3549, %v1533
        %v3551 = vmax.f32 %v3550, %v1541
        %v3552 = vmax.f32 %v3551, %v1549
        %v3553 = vmax.f32 %v3552, %v1557
        %v3554 = vmax.f32 %v3553, %v1565
        %v3555 = vmax.f32 %v3554, %v1573
        %v3556 = vrot.slane %v3555, 4
        %v3557 = vmax.f32 %v3555, %v3556
        %v3558 = vrot.slane %v3557, 2
        %v3559 = vmax.f32 %v3557, %v3558
        %v3560 = vrot.slane %v3559, 1
        %v3561 = vmax.f32 %v3559, %v3560
        %v3562 = vmax.f32 %v1454, %v1462
        %v3563 = vmax.f32 %v3562, %v1470
        %v3564 = vmax.f32 %v3563, %v1478
        %v3565 = vmax.f32 %v3564, %v1486
        %v3566 = vmax.f32 %v3565, %v1494
        %v3567 = vmax.f32 %v3566, %v1502
        %v3568 = vmax.f32 %v3567, %v1510
        %v3569 = vmax.f32 %v3568, %v1518
        %v3570 = vmax.f32 %v3569, %v1526
        %v3571 = vmax.f32 %v3570, %v1534
        %v3572 = vmax.f32 %v3571, %v1542
        %v3573 = vmax.f32 %v3572, %v1550
        %v3574 = vmax.f32 %v3573, %v1558
        %v3575 = vmax.f32 %v3574, %v1566
        %v3576 = vmax.f32 %v3575, %v1574
        %v3577 = vrot.slane %v3576, 4
        %v3578 = vmax.f32 %v3576, %v3577
        %v3579 = vrot.slane %v3578, 2
        %v3580 = vmax.f32 %v3578, %v3579
        %v3581 = vrot.slane %v3580, 1
        %v3582 = vmax.f32 %v3580, %v3581
        %v3583 = vmax.f32 %v1455, %v1463
        %v3584 = vmax.f32 %v3583, %v1471
        %v3585 = vmax.f32 %v3584, %v1479
        %v3586 = vmax.f32 %v3585, %v1487
        %v3587 = vmax.f32 %v3586, %v1495
        %v3588 = vmax.f32 %v3587, %v1503
        %v3589 = vmax.f32 %v3588, %v1511
        %v3590 = vmax.f32 %v3589, %v1519
        %v3591 = vmax.f32 %v3590, %v1527
        %v3592 = vmax.f32 %v3591, %v1535
        %v3593 = vmax.f32 %v3592, %v1543
        %v3594 = vmax.f32 %v3593, %v1551
        %v3595 = vmax.f32 %v3594, %v1559
        %v3596 = vmax.f32 %v3595, %v1567
        %v3597 = vmax.f32 %v3596, %v1575
        %v3598 = vrot.slane %v3597, 4
        %v3599 = vmax.f32 %v3597, %v3598
        %v3600 = vrot.slane %v3599, 2
        %v3601 = vmax.f32 %v3599, %v3600
        %v3602 = vrot.slane %v3601, 1
        %v3603 = vmax.f32 %v3601, %v3602
        %v3604 = vmax.f32 %v1456, %v1464
        %v3605 = vmax.f32 %v3604, %v1472
        %v3606 = vmax.f32 %v3605, %v1480
        %v3607 = vmax.f32 %v3606, %v1488
        %v3608 = vmax.f32 %v3607, %v1496
        %v3609 = vmax.f32 %v3608, %v1504
        %v3610 = vmax.f32 %v3609, %v1512
        %v3611 = vmax.f32 %v3610, %v1520
        %v3612 = vmax.f32 %v3611, %v1528
        %v3613 = vmax.f32 %v3612, %v1536
        %v3614 = vmax.f32 %v3613, %v1544
        %v3615 = vmax.f32 %v3614, %v1552
        %v3616 = vmax.f32 %v3615, %v1560
        %v3617 = vmax.f32 %v3616, %v1568
        %v3618 = vmax.f32 %v3617, %v1576
        %v3619 = vrot.slane %v3618, 4
        %v3620 = vmax.f32 %v3618, %v3619
        %v3621 = vrot.slane %v3620, 2
        %v3622 = vmax.f32 %v3620, %v3621
        %v3623 = vrot.slane %v3622, 1
        %v3624 = vmax.f32 %v3622, %v3623
        %v3625 = vmax.f32 %v1457, %v1465
        %v3626 = vmax.f32 %v3625, %v1473
        %v3627 = vmax.f32 %v3626, %v1481
        %v3628 = vmax.f32 %v3627, %v1489
        %v3629 = vmax.f32 %v3628, %v1497
        %v3630 = vmax.f32 %v3629, %v1505
        %v3631 = vmax.f32 %v3630, %v1513
        %v3632 = vmax.f32 %v3631, %v1521
        %v3633 = vmax.f32 %v3632, %v1529
        %v3634 = vmax.f32 %v3633, %v1537
        %v3635 = vmax.f32 %v3634, %v1545
        %v3636 = vmax.f32 %v3635, %v1553
        %v3637 = vmax.f32 %v3636, %v1561
        %v3638 = vmax.f32 %v3637, %v1569
        %v3639 = vmax.f32 %v3638, %v1577
        %v3640 = vrot.slane %v3639, 4
        %v3641 = vmax.f32 %v3639, %v3640
        %v3642 = vrot.slane %v3641, 2
        %v3643 = vmax.f32 %v3641, %v3642
        %v3644 = vrot.slane %v3643, 1
        %v3645 = vmax.f32 %v3643, %v3644
        %v3646 = vmax.f32 %v1458, %v1466
        %v3647 = vmax.f32 %v3646, %v1474
        %v3648 = vmax.f32 %v3647, %v1482
        %v3649 = vmax.f32 %v3648, %v1490
        %v3650 = vmax.f32 %v3649, %v1498
        %v3651 = vmax.f32 %v3650, %v1506
        %v3652 = vmax.f32 %v3651, %v1514
        %v3653 = vmax.f32 %v3652, %v1522
        %v3654 = vmax.f32 %v3653, %v1530
        %v3655 = vmax.f32 %v3654, %v1538
        %v3656 = vmax.f32 %v3655, %v1546
        %v3657 = vmax.f32 %v3656, %v1554
        %v3658 = vmax.f32 %v3657, %v1562
        %v3659 = vmax.f32 %v3658, %v1570
        %v3660 = vmax.f32 %v3659, %v1578
        %v3661 = vrot.slane %v3660, 4
        %v3662 = vmax.f32 %v3660, %v3661
        %v3663 = vrot.slane %v3662, 2
        %v3664 = vmax.f32 %v3662, %v3663
        %v3665 = vrot.slane %v3664, 1
        %v3666 = vmax.f32 %v3664, %v3665
        %v3667 = vmax.f32 %v1579, %v1587
        %v3668 = vmax.f32 %v3667, %v1595
        %v3669 = vmax.f32 %v3668, %v1603
        %v3670 = vmax.f32 %v3669, %v1611
        %v3671 = vmax.f32 %v3670, %v1619
        %v3672 = vmax.f32 %v3671, %v1627
        %v3673 = vmax.f32 %v3672, %v1635
        %v3674 = vmax.f32 %v3673, %v1643
        %v3675 = vmax.f32 %v3674, %v1651
        %v3676 = vmax.f32 %v3675, %v1659
        %v3677 = vmax.f32 %v3676, %v1667
        %v3678 = vmax.f32 %v3677, %v1675
        %v3679 = vmax.f32 %v3678, %v1683
        %v3680 = vmax.f32 %v3679, %v1691
        %v3681 = vmax.f32 %v3680, %v1699
        %v3682 = vrot.slane %v3681, 4
        %v3683 = vmax.f32 %v3681, %v3682
        %v3684 = vrot.slane %v3683, 2
        %v3685 = vmax.f32 %v3683, %v3684
        %v3686 = vrot.slane %v3685, 1
        %v3687 = vmax.f32 %v3685, %v3686
        %v3688 = vmax.f32 %v1580, %v1588
        %v3689 = vmax.f32 %v3688, %v1596
        %v3690 = vmax.f32 %v3689, %v1604
        %v3691 = vmax.f32 %v3690, %v1612
        %v3692 = vmax.f32 %v3691, %v1620
        %v3693 = vmax.f32 %v3692, %v1628
        %v3694 = vmax.f32 %v3693, %v1636
        %v3695 = vmax.f32 %v3694, %v1644
        %v3696 = vmax.f32 %v3695, %v1652
        %v3697 = vmax.f32 %v3696, %v1660
        %v3698 = vmax.f32 %v3697, %v1668
        %v3699 = vmax.f32 %v3698, %v1676
        %v3700 = vmax.f32 %v3699, %v1684
        %v3701 = vmax.f32 %v3700, %v1692
        %v3702 = vmax.f32 %v3701, %v1700
        %v3703 = vrot.slane %v3702, 4
        %v3704 = vmax.f32 %v3702, %v3703
        %v3705 = vrot.slane %v3704, 2
        %v3706 = vmax.f32 %v3704, %v3705
        %v3707 = vrot.slane %v3706, 1
        %v3708 = vmax.f32 %v3706, %v3707
        %v3709 = vmax.f32 %v1581, %v1589
        %v3710 = vmax.f32 %v3709, %v1597
        %v3711 = vmax.f32 %v3710, %v1605
        %v3712 = vmax.f32 %v3711, %v1613
        %v3713 = vmax.f32 %v3712, %v1621
        %v3714 = vmax.f32 %v3713, %v1629
        %v3715 = vmax.f32 %v3714, %v1637
        %v3716 = vmax.f32 %v3715, %v1645
        %v3717 = vmax.f32 %v3716, %v1653
        %v3718 = vmax.f32 %v3717, %v1661
        %v3719 = vmax.f32 %v3718, %v1669
        %v3720 = vmax.f32 %v3719, %v1677
        %v3721 = vmax.f32 %v3720, %v1685
        %v3722 = vmax.f32 %v3721, %v1693
        %v3723 = vmax.f32 %v3722, %v1701
        %v3724 = vrot.slane %v3723, 4
        %v3725 = vmax.f32 %v3723, %v3724
        %v3726 = vrot.slane %v3725, 2
        %v3727 = vmax.f32 %v3725, %v3726
        %v3728 = vrot.slane %v3727, 1
        %v3729 = vmax.f32 %v3727, %v3728
        %v3730 = vmax.f32 %v1582, %v1590
        %v3731 = vmax.f32 %v3730, %v1598
        %v3732 = vmax.f32 %v3731, %v1606
        %v3733 = vmax.f32 %v3732, %v1614
        %v3734 = vmax.f32 %v3733, %v1622
        %v3735 = vmax.f32 %v3734, %v1630
        %v3736 = vmax.f32 %v3735, %v1638
        %v3737 = vmax.f32 %v3736, %v1646
        %v3738 = vmax.f32 %v3737, %v1654
        %v3739 = vmax.f32 %v3738, %v1662
        %v3740 = vmax.f32 %v3739, %v1670
        %v3741 = vmax.f32 %v3740, %v1678
        %v3742 = vmax.f32 %v3741, %v1686
        %v3743 = vmax.f32 %v3742, %v1694
        %v3744 = vmax.f32 %v3743, %v1702
        %v3745 = vrot.slane %v3744, 4
        %v3746 = vmax.f32 %v3744, %v3745
        %v3747 = vrot.slane %v3746, 2
        %v3748 = vmax.f32 %v3746, %v3747
        %v3749 = vrot.slane %v3748, 1
        %v3750 = vmax.f32 %v3748, %v3749
        %v3751 = vmax.f32 %v1583, %v1591
        %v3752 = vmax.f32 %v3751, %v1599
        %v3753 = vmax.f32 %v3752, %v1607
        %v3754 = vmax.f32 %v3753, %v1615
        %v3755 = vmax.f32 %v3754, %v1623
        %v3756 = vmax.f32 %v3755, %v1631
        %v3757 = vmax.f32 %v3756, %v1639
        %v3758 = vmax.f32 %v3757, %v1647
        %v3759 = vmax.f32 %v3758, %v1655
        %v3760 = vmax.f32 %v3759, %v1663
        %v3761 = vmax.f32 %v3760, %v1671
        %v3762 = vmax.f32 %v3761, %v1679
        %v3763 = vmax.f32 %v3762, %v1687
        %v3764 = vmax.f32 %v3763, %v1695
        %v3765 = vmax.f32 %v3764, %v1703
        %v3766 = vrot.slane %v3765, 4
        %v3767 = vmax.f32 %v3765, %v3766
        %v3768 = vrot.slane %v3767, 2
        %v3769 = vmax.f32 %v3767, %v3768
        %v3770 = vrot.slane %v3769, 1
        %v3771 = vmax.f32 %v3769, %v3770
        %v3772 = vmax.f32 %v1584, %v1592
        %v3773 = vmax.f32 %v3772, %v1600
        %v3774 = vmax.f32 %v3773, %v1608
        %v3775 = vmax.f32 %v3774, %v1616
        %v3776 = vmax.f32 %v3775, %v1624
        %v3777 = vmax.f32 %v3776, %v1632
        %v3778 = vmax.f32 %v3777, %v1640
        %v3779 = vmax.f32 %v3778, %v1648
        %v3780 = vmax.f32 %v3779, %v1656
        %v3781 = vmax.f32 %v3780, %v1664
        %v3782 = vmax.f32 %v3781, %v1672
        %v3783 = vmax.f32 %v3782, %v1680
        %v3784 = vmax.f32 %v3783, %v1688
        %v3785 = vmax.f32 %v3784, %v1696
        %v3786 = vmax.f32 %v3785, %v1704
        %v3787 = vrot.slane %v3786, 4
        %v3788 = vmax.f32 %v3786, %v3787
        %v3789 = vrot.slane %v3788, 2
        %v3790 = vmax.f32 %v3788, %v3789
        %v3791 = vrot.slane %v3790, 1
        %v3792 = vmax.f32 %v3790, %v3791
        %v3793 = vmax.f32 %v1585, %v1593
        %v3794 = vmax.f32 %v3793, %v1601
        %v3795 = vmax.f32 %v3794, %v1609
        %v3796 = vmax.f32 %v3795, %v1617
        %v3797 = vmax.f32 %v3796, %v1625
        %v3798 = vmax.f32 %v3797, %v1633
        %v3799 = vmax.f32 %v3798, %v1641
        %v3800 = vmax.f32 %v3799, %v1649
        %v3801 = vmax.f32 %v3800, %v1657
        %v3802 = vmax.f32 %v3801, %v1665
        %v3803 = vmax.f32 %v3802, %v1673
        %v3804 = vmax.f32 %v3803, %v1681
        %v3805 = vmax.f32 %v3804, %v1689
        %v3806 = vmax.f32 %v3805, %v1697
        %v3807 = vmax.f32 %v3806, %v1705
        %v3808 = vrot.slane %v3807, 4
        %v3809 = vmax.f32 %v3807, %v3808
        %v3810 = vrot.slane %v3809, 2
        %v3811 = vmax.f32 %v3809, %v3810
        %v3812 = vrot.slane %v3811, 1
        %v3813 = vmax.f32 %v3811, %v3812
        %v3814 = vmax.f32 %v1586, %v1594
        %v3815 = vmax.f32 %v3814, %v1602
        %v3816 = vmax.f32 %v3815, %v1610
        %v3817 = vmax.f32 %v3816, %v1618
        %v3818 = vmax.f32 %v3817, %v1626
        %v3819 = vmax.f32 %v3818, %v1634
        %v3820 = vmax.f32 %v3819, %v1642
        %v3821 = vmax.f32 %v3820, %v1650
        %v3822 = vmax.f32 %v3821, %v1658
        %v3823 = vmax.f32 %v3822, %v1666
        %v3824 = vmax.f32 %v3823, %v1674
        %v3825 = vmax.f32 %v3824, %v1682
        %v3826 = vmax.f32 %v3825, %v1690
        %v3827 = vmax.f32 %v3826, %v1698
        %v3828 = vmax.f32 %v3827, %v1706
        %v3829 = vrot.slane %v3828, 4
        %v3830 = vmax.f32 %v3828, %v3829
        %v3831 = vrot.slane %v3830, 2
        %v3832 = vmax.f32 %v3830, %v3831
        %v3833 = vrot.slane %v3832, 1
        %v3834 = vmax.f32 %v3832, %v3833
        %v3835 = vmax.f32 %v1707, %v1715
        %v3836 = vmax.f32 %v3835, %v1723
        %v3837 = vmax.f32 %v3836, %v1731
        %v3838 = vmax.f32 %v3837, %v1739
        %v3839 = vmax.f32 %v3838, %v1747
        %v3840 = vmax.f32 %v3839, %v1755
        %v3841 = vmax.f32 %v3840, %v1763
        %v3842 = vmax.f32 %v3841, %v1771
        %v3843 = vmax.f32 %v3842, %v1779
        %v3844 = vmax.f32 %v3843, %v1787
        %v3845 = vmax.f32 %v3844, %v1795
        %v3846 = vmax.f32 %v3845, %v1803
        %v3847 = vmax.f32 %v3846, %v1811
        %v3848 = vmax.f32 %v3847, %v1819
        %v3849 = vmax.f32 %v3848, %v1827
        %v3850 = vrot.slane %v3849, 4
        %v3851 = vmax.f32 %v3849, %v3850
        %v3852 = vrot.slane %v3851, 2
        %v3853 = vmax.f32 %v3851, %v3852
        %v3854 = vrot.slane %v3853, 1
        %v3855 = vmax.f32 %v3853, %v3854
        %v3856 = vmax.f32 %v1708, %v1716
        %v3857 = vmax.f32 %v3856, %v1724
        %v3858 = vmax.f32 %v3857, %v1732
        %v3859 = vmax.f32 %v3858, %v1740
        %v3860 = vmax.f32 %v3859, %v1748
        %v3861 = vmax.f32 %v3860, %v1756
        %v3862 = vmax.f32 %v3861, %v1764
        %v3863 = vmax.f32 %v3862, %v1772
        %v3864 = vmax.f32 %v3863, %v1780
        %v3865 = vmax.f32 %v3864, %v1788
        %v3866 = vmax.f32 %v3865, %v1796
        %v3867 = vmax.f32 %v3866, %v1804
        %v3868 = vmax.f32 %v3867, %v1812
        %v3869 = vmax.f32 %v3868, %v1820
        %v3870 = vmax.f32 %v3869, %v1828
        %v3871 = vrot.slane %v3870, 4
        %v3872 = vmax.f32 %v3870, %v3871
        %v3873 = vrot.slane %v3872, 2
        %v3874 = vmax.f32 %v3872, %v3873
        %v3875 = vrot.slane %v3874, 1
        %v3876 = vmax.f32 %v3874, %v3875
        %v3877 = vmax.f32 %v1709, %v1717
        %v3878 = vmax.f32 %v3877, %v1725
        %v3879 = vmax.f32 %v3878, %v1733
        %v3880 = vmax.f32 %v3879, %v1741
        %v3881 = vmax.f32 %v3880, %v1749
        %v3882 = vmax.f32 %v3881, %v1757
        %v3883 = vmax.f32 %v3882, %v1765
        %v3884 = vmax.f32 %v3883, %v1773
        %v3885 = vmax.f32 %v3884, %v1781
        %v3886 = vmax.f32 %v3885, %v1789
        %v3887 = vmax.f32 %v3886, %v1797
        %v3888 = vmax.f32 %v3887, %v1805
        %v3889 = vmax.f32 %v3888, %v1813
        %v3890 = vmax.f32 %v3889, %v1821
        %v3891 = vmax.f32 %v3890, %v1829
        %v3892 = vrot.slane %v3891, 4
        %v3893 = vmax.f32 %v3891, %v3892
        %v3894 = vrot.slane %v3893, 2
        %v3895 = vmax.f32 %v3893, %v3894
        %v3896 = vrot.slane %v3895, 1
        %v3897 = vmax.f32 %v3895, %v3896
        %v3898 = vmax.f32 %v1710, %v1718
        %v3899 = vmax.f32 %v3898, %v1726
        %v3900 = vmax.f32 %v3899, %v1734
        %v3901 = vmax.f32 %v3900, %v1742
        %v3902 = vmax.f32 %v3901, %v1750
        %v3903 = vmax.f32 %v3902, %v1758
        %v3904 = vmax.f32 %v3903, %v1766
        %v3905 = vmax.f32 %v3904, %v1774
        %v3906 = vmax.f32 %v3905, %v1782
        %v3907 = vmax.f32 %v3906, %v1790
        %v3908 = vmax.f32 %v3907, %v1798
        %v3909 = vmax.f32 %v3908, %v1806
        %v3910 = vmax.f32 %v3909, %v1814
        %v3911 = vmax.f32 %v3910, %v1822
        %v3912 = vmax.f32 %v3911, %v1830
        %v3913 = vrot.slane %v3912, 4
        %v3914 = vmax.f32 %v3912, %v3913
        %v3915 = vrot.slane %v3914, 2
        %v3916 = vmax.f32 %v3914, %v3915
        %v3917 = vrot.slane %v3916, 1
        %v3918 = vmax.f32 %v3916, %v3917
        %v3919 = vmax.f32 %v1711, %v1719
        %v3920 = vmax.f32 %v3919, %v1727
        %v3921 = vmax.f32 %v3920, %v1735
        %v3922 = vmax.f32 %v3921, %v1743
        %v3923 = vmax.f32 %v3922, %v1751
        %v3924 = vmax.f32 %v3923, %v1759
        %v3925 = vmax.f32 %v3924, %v1767
        %v3926 = vmax.f32 %v3925, %v1775
        %v3927 = vmax.f32 %v3926, %v1783
        %v3928 = vmax.f32 %v3927, %v1791
        %v3929 = vmax.f32 %v3928, %v1799
        %v3930 = vmax.f32 %v3929, %v1807
        %v3931 = vmax.f32 %v3930, %v1815
        %v3932 = vmax.f32 %v3931, %v1823
        %v3933 = vmax.f32 %v3932, %v1831
        %v3934 = vrot.slane %v3933, 4
        %v3935 = vmax.f32 %v3933, %v3934
        %v3936 = vrot.slane %v3935, 2
        %v3937 = vmax.f32 %v3935, %v3936
        %v3938 = vrot.slane %v3937, 1
        %v3939 = vmax.f32 %v3937, %v3938
        %v3940 = vmax.f32 %v1712, %v1720
        %v3941 = vmax.f32 %v3940, %v1728
        %v3942 = vmax.f32 %v3941, %v1736
        %v3943 = vmax.f32 %v3942, %v1744
        %v3944 = vmax.f32 %v3943, %v1752
        %v3945 = vmax.f32 %v3944, %v1760
        %v3946 = vmax.f32 %v3945, %v1768
        %v3947 = vmax.f32 %v3946, %v1776
        %v3948 = vmax.f32 %v3947, %v1784
        %v3949 = vmax.f32 %v3948, %v1792
        %v3950 = vmax.f32 %v3949, %v1800
        %v3951 = vmax.f32 %v3950, %v1808
        %v3952 = vmax.f32 %v3951, %v1816
        %v3953 = vmax.f32 %v3952, %v1824
        %v3954 = vmax.f32 %v3953, %v1832
        %v3955 = vrot.slane %v3954, 4
        %v3956 = vmax.f32 %v3954, %v3955
        %v3957 = vrot.slane %v3956, 2
        %v3958 = vmax.f32 %v3956, %v3957
        %v3959 = vrot.slane %v3958, 1
        %v3960 = vmax.f32 %v3958, %v3959
        %v3961 = vmax.f32 %v1713, %v1721
        %v3962 = vmax.f32 %v3961, %v1729
        %v3963 = vmax.f32 %v3962, %v1737
        %v3964 = vmax.f32 %v3963, %v1745
        %v3965 = vmax.f32 %v3964, %v1753
        %v3966 = vmax.f32 %v3965, %v1761
        %v3967 = vmax.f32 %v3966, %v1769
        %v3968 = vmax.f32 %v3967, %v1777
        %v3969 = vmax.f32 %v3968, %v1785
        %v3970 = vmax.f32 %v3969, %v1793
        %v3971 = vmax.f32 %v3970, %v1801
        %v3972 = vmax.f32 %v3971, %v1809
        %v3973 = vmax.f32 %v3972, %v1817
        %v3974 = vmax.f32 %v3973, %v1825
        %v3975 = vmax.f32 %v3974, %v1833
        %v3976 = vrot.slane %v3975, 4
        %v3977 = vmax.f32 %v3975, %v3976
        %v3978 = vrot.slane %v3977, 2
        %v3979 = vmax.f32 %v3977, %v3978
        %v3980 = vrot.slane %v3979, 1
        %v3981 = vmax.f32 %v3979, %v3980
        %v3982 = vmax.f32 %v1714, %v1722
        %v3983 = vmax.f32 %v3982, %v1730
        %v3984 = vmax.f32 %v3983, %v1738
        %v3985 = vmax.f32 %v3984, %v1746
        %v3986 = vmax.f32 %v3985, %v1754
        %v3987 = vmax.f32 %v3986, %v1762
        %v3988 = vmax.f32 %v3987, %v1770
        %v3989 = vmax.f32 %v3988, %v1778
        %v3990 = vmax.f32 %v3989, %v1786
        %v3991 = vmax.f32 %v3990, %v1794
        %v3992 = vmax.f32 %v3991, %v1802
        %v3993 = vmax.f32 %v3992, %v1810
        %v3994 = vmax.f32 %v3993, %v1818
        %v3995 = vmax.f32 %v3994, %v1826
        %v3996 = vmax.f32 %v3995, %v1834
        %v3997 = vrot.slane %v3996, 4
        %v3998 = vmax.f32 %v3996, %v3997
        %v3999 = vrot.slane %v3998, 2
        %v4000 = vmax.f32 %v3998, %v3999
        %v4001 = vrot.slane %v4000, 1
        %v4002 = vmax.f32 %v4000, %v4001
        %v4003 = vmax.f32 %v1835, %v1843
        %v4004 = vmax.f32 %v4003, %v1851
        %v4005 = vmax.f32 %v4004, %v1859
        %v4006 = vmax.f32 %v4005, %v1867
        %v4007 = vmax.f32 %v4006, %v1875
        %v4008 = vmax.f32 %v4007, %v1883
        %v4009 = vmax.f32 %v4008, %v1891
        %v4010 = vmax.f32 %v4009, %v1899
        %v4011 = vmax.f32 %v4010, %v1907
        %v4012 = vmax.f32 %v4011, %v1915
        %v4013 = vmax.f32 %v4012, %v1923
        %v4014 = vmax.f32 %v4013, %v1931
        %v4015 = vmax.f32 %v4014, %v1939
        %v4016 = vmax.f32 %v4015, %v1947
        %v4017 = vmax.f32 %v4016, %v1955
        %v4018 = vrot.slane %v4017, 4
        %v4019 = vmax.f32 %v4017, %v4018
        %v4020 = vrot.slane %v4019, 2
        %v4021 = vmax.f32 %v4019, %v4020
        %v4022 = vrot.slane %v4021, 1
        %v4023 = vmax.f32 %v4021, %v4022
        %v4024 = vmax.f32 %v1836, %v1844
        %v4025 = vmax.f32 %v4024, %v1852
        %v4026 = vmax.f32 %v4025, %v1860
        %v4027 = vmax.f32 %v4026, %v1868
        %v4028 = vmax.f32 %v4027, %v1876
        %v4029 = vmax.f32 %v4028, %v1884
        %v4030 = vmax.f32 %v4029, %v1892
        %v4031 = vmax.f32 %v4030, %v1900
        %v4032 = vmax.f32 %v4031, %v1908
        %v4033 = vmax.f32 %v4032, %v1916
        %v4034 = vmax.f32 %v4033, %v1924
        %v4035 = vmax.f32 %v4034, %v1932
        %v4036 = vmax.f32 %v4035, %v1940
        %v4037 = vmax.f32 %v4036, %v1948
        %v4038 = vmax.f32 %v4037, %v1956
        %v4039 = vrot.slane %v4038, 4
        %v4040 = vmax.f32 %v4038, %v4039
        %v4041 = vrot.slane %v4040, 2
        %v4042 = vmax.f32 %v4040, %v4041
        %v4043 = vrot.slane %v4042, 1
        %v4044 = vmax.f32 %v4042, %v4043
        %v4045 = vmax.f32 %v1837, %v1845
        %v4046 = vmax.f32 %v4045, %v1853
        %v4047 = vmax.f32 %v4046, %v1861
        %v4048 = vmax.f32 %v4047, %v1869
        %v4049 = vmax.f32 %v4048, %v1877
        %v4050 = vmax.f32 %v4049, %v1885
        %v4051 = vmax.f32 %v4050, %v1893
        %v4052 = vmax.f32 %v4051, %v1901
        %v4053 = vmax.f32 %v4052, %v1909
        %v4054 = vmax.f32 %v4053, %v1917
        %v4055 = vmax.f32 %v4054, %v1925
        %v4056 = vmax.f32 %v4055, %v1933
        %v4057 = vmax.f32 %v4056, %v1941
        %v4058 = vmax.f32 %v4057, %v1949
        %v4059 = vmax.f32 %v4058, %v1957
        %v4060 = vrot.slane %v4059, 4
        %v4061 = vmax.f32 %v4059, %v4060
        %v4062 = vrot.slane %v4061, 2
        %v4063 = vmax.f32 %v4061, %v4062
        %v4064 = vrot.slane %v4063, 1
        %v4065 = vmax.f32 %v4063, %v4064
        %v4066 = vmax.f32 %v1838, %v1846
        %v4067 = vmax.f32 %v4066, %v1854
        %v4068 = vmax.f32 %v4067, %v1862
        %v4069 = vmax.f32 %v4068, %v1870
        %v4070 = vmax.f32 %v4069, %v1878
        %v4071 = vmax.f32 %v4070, %v1886
        %v4072 = vmax.f32 %v4071, %v1894
        %v4073 = vmax.f32 %v4072, %v1902
        %v4074 = vmax.f32 %v4073, %v1910
        %v4075 = vmax.f32 %v4074, %v1918
        %v4076 = vmax.f32 %v4075, %v1926
        %v4077 = vmax.f32 %v4076, %v1934
        %v4078 = vmax.f32 %v4077, %v1942
        %v4079 = vmax.f32 %v4078, %v1950
        %v4080 = vmax.f32 %v4079, %v1958
        %v4081 = vrot.slane %v4080, 4
        %v4082 = vmax.f32 %v4080, %v4081
        %v4083 = vrot.slane %v4082, 2
        %v4084 = vmax.f32 %v4082, %v4083
        %v4085 = vrot.slane %v4084, 1
        %v4086 = vmax.f32 %v4084, %v4085
        %v4087 = vmax.f32 %v1839, %v1847
        %v4088 = vmax.f32 %v4087, %v1855
        %v4089 = vmax.f32 %v4088, %v1863
        %v4090 = vmax.f32 %v4089, %v1871
        %v4091 = vmax.f32 %v4090, %v1879
        %v4092 = vmax.f32 %v4091, %v1887
        %v4093 = vmax.f32 %v4092, %v1895
        %v4094 = vmax.f32 %v4093, %v1903
        %v4095 = vmax.f32 %v4094, %v1911
        %v4096 = vmax.f32 %v4095, %v1919
        %v4097 = vmax.f32 %v4096, %v1927
        %v4098 = vmax.f32 %v4097, %v1935
        %v4099 = vmax.f32 %v4098, %v1943
        %v4100 = vmax.f32 %v4099, %v1951
        %v4101 = vmax.f32 %v4100, %v1959
        %v4102 = vrot.slane %v4101, 4
        %v4103 = vmax.f32 %v4101, %v4102
        %v4104 = vrot.slane %v4103, 2
        %v4105 = vmax.f32 %v4103, %v4104
        %v4106 = vrot.slane %v4105, 1
        %v4107 = vmax.f32 %v4105, %v4106
        %v4108 = vmax.f32 %v1840, %v1848
        %v4109 = vmax.f32 %v4108, %v1856
        %v4110 = vmax.f32 %v4109, %v1864
        %v4111 = vmax.f32 %v4110, %v1872
        %v4112 = vmax.f32 %v4111, %v1880
        %v4113 = vmax.f32 %v4112, %v1888
        %v4114 = vmax.f32 %v4113, %v1896
        %v4115 = vmax.f32 %v4114, %v1904
        %v4116 = vmax.f32 %v4115, %v1912
        %v4117 = vmax.f32 %v4116, %v1920
        %v4118 = vmax.f32 %v4117, %v1928
        %v4119 = vmax.f32 %v4118, %v1936
        %v4120 = vmax.f32 %v4119, %v1944
        %v4121 = vmax.f32 %v4120, %v1952
        %v4122 = vmax.f32 %v4121, %v1960
        %v4123 = vrot.slane %v4122, 4
        %v4124 = vmax.f32 %v4122, %v4123
        %v4125 = vrot.slane %v4124, 2
        %v4126 = vmax.f32 %v4124, %v4125
        %v4127 = vrot.slane %v4126, 1
        %v4128 = vmax.f32 %v4126, %v4127
        %v4129 = vmax.f32 %v1841, %v1849
        %v4130 = vmax.f32 %v4129, %v1857
        %v4131 = vmax.f32 %v4130, %v1865
        %v4132 = vmax.f32 %v4131, %v1873
        %v4133 = vmax.f32 %v4132, %v1881
        %v4134 = vmax.f32 %v4133, %v1889
        %v4135 = vmax.f32 %v4134, %v1897
        %v4136 = vmax.f32 %v4135, %v1905
        %v4137 = vmax.f32 %v4136, %v1913
        %v4138 = vmax.f32 %v4137, %v1921
        %v4139 = vmax.f32 %v4138, %v1929
        %v4140 = vmax.f32 %v4139, %v1937
        %v4141 = vmax.f32 %v4140, %v1945
        %v4142 = vmax.f32 %v4141, %v1953
        %v4143 = vmax.f32 %v4142, %v1961
        %v4144 = vrot.slane %v4143, 4
        %v4145 = vmax.f32 %v4143, %v4144
        %v4146 = vrot.slane %v4145, 2
        %v4147 = vmax.f32 %v4145, %v4146
        %v4148 = vrot.slane %v4147, 1
        %v4149 = vmax.f32 %v4147, %v4148
        %v4150 = vmax.f32 %v1842, %v1850
        %v4151 = vmax.f32 %v4150, %v1858
        %v4152 = vmax.f32 %v4151, %v1866
        %v4153 = vmax.f32 %v4152, %v1874
        %v4154 = vmax.f32 %v4153, %v1882
        %v4155 = vmax.f32 %v4154, %v1890
        %v4156 = vmax.f32 %v4155, %v1898
        %v4157 = vmax.f32 %v4156, %v1906
        %v4158 = vmax.f32 %v4157, %v1914
        %v4159 = vmax.f32 %v4158, %v1922
        %v4160 = vmax.f32 %v4159, %v1930
        %v4161 = vmax.f32 %v4160, %v1938
        %v4162 = vmax.f32 %v4161, %v1946
        %v4163 = vmax.f32 %v4162, %v1954
        %v4164 = vmax.f32 %v4163, %v1962
        %v4165 = vrot.slane %v4164, 4
        %v4166 = vmax.f32 %v4164, %v4165
        %v4167 = vrot.slane %v4166, 2
        %v4168 = vmax.f32 %v4166, %v4167
        %v4169 = vrot.slane %v4168, 1
        %v4170 = vmax.f32 %v4168, %v4169
        %v4171 = vmax.f32 %v1963, %v1971
        %v4172 = vmax.f32 %v4171, %v1979
        %v4173 = vmax.f32 %v4172, %v1987
        %v4174 = vmax.f32 %v4173, %v1995
        %v4175 = vmax.f32 %v4174, %v2003
        %v4176 = vmax.f32 %v4175, %v2011
        %v4177 = vmax.f32 %v4176, %v2019
        %v4178 = vmax.f32 %v4177, %v2027
        %v4179 = vmax.f32 %v4178, %v2035
        %v4180 = vmax.f32 %v4179, %v2043
        %v4181 = vmax.f32 %v4180, %v2051
        %v4182 = vmax.f32 %v4181, %v2059
        %v4183 = vmax.f32 %v4182, %v2067
        %v4184 = vmax.f32 %v4183, %v2075
        %v4185 = vmax.f32 %v4184, %v2083
        %v4186 = vrot.slane %v4185, 4
        %v4187 = vmax.f32 %v4185, %v4186
        %v4188 = vrot.slane %v4187, 2
        %v4189 = vmax.f32 %v4187, %v4188
        %v4190 = vrot.slane %v4189, 1
        %v4191 = vmax.f32 %v4189, %v4190
        %v4192 = vmax.f32 %v1964, %v1972
        %v4193 = vmax.f32 %v4192, %v1980
        %v4194 = vmax.f32 %v4193, %v1988
        %v4195 = vmax.f32 %v4194, %v1996
        %v4196 = vmax.f32 %v4195, %v2004
        %v4197 = vmax.f32 %v4196, %v2012
        %v4198 = vmax.f32 %v4197, %v2020
        %v4199 = vmax.f32 %v4198, %v2028
        %v4200 = vmax.f32 %v4199, %v2036
        %v4201 = vmax.f32 %v4200, %v2044
        %v4202 = vmax.f32 %v4201, %v2052
        %v4203 = vmax.f32 %v4202, %v2060
        %v4204 = vmax.f32 %v4203, %v2068
        %v4205 = vmax.f32 %v4204, %v2076
        %v4206 = vmax.f32 %v4205, %v2084
        %v4207 = vrot.slane %v4206, 4
        %v4208 = vmax.f32 %v4206, %v4207
        %v4209 = vrot.slane %v4208, 2
        %v4210 = vmax.f32 %v4208, %v4209
        %v4211 = vrot.slane %v4210, 1
        %v4212 = vmax.f32 %v4210, %v4211
        %v4213 = vmax.f32 %v1965, %v1973
        %v4214 = vmax.f32 %v4213, %v1981
        %v4215 = vmax.f32 %v4214, %v1989
        %v4216 = vmax.f32 %v4215, %v1997
        %v4217 = vmax.f32 %v4216, %v2005
        %v4218 = vmax.f32 %v4217, %v2013
        %v4219 = vmax.f32 %v4218, %v2021
        %v4220 = vmax.f32 %v4219, %v2029
        %v4221 = vmax.f32 %v4220, %v2037
        %v4222 = vmax.f32 %v4221, %v2045
        %v4223 = vmax.f32 %v4222, %v2053
        %v4224 = vmax.f32 %v4223, %v2061
        %v4225 = vmax.f32 %v4224, %v2069
        %v4226 = vmax.f32 %v4225, %v2077
        %v4227 = vmax.f32 %v4226, %v2085
        %v4228 = vrot.slane %v4227, 4
        %v4229 = vmax.f32 %v4227, %v4228
        %v4230 = vrot.slane %v4229, 2
        %v4231 = vmax.f32 %v4229, %v4230
        %v4232 = vrot.slane %v4231, 1
        %v4233 = vmax.f32 %v4231, %v4232
        %v4234 = vmax.f32 %v1966, %v1974
        %v4235 = vmax.f32 %v4234, %v1982
        %v4236 = vmax.f32 %v4235, %v1990
        %v4237 = vmax.f32 %v4236, %v1998
        %v4238 = vmax.f32 %v4237, %v2006
        %v4239 = vmax.f32 %v4238, %v2014
        %v4240 = vmax.f32 %v4239, %v2022
        %v4241 = vmax.f32 %v4240, %v2030
        %v4242 = vmax.f32 %v4241, %v2038
        %v4243 = vmax.f32 %v4242, %v2046
        %v4244 = vmax.f32 %v4243, %v2054
        %v4245 = vmax.f32 %v4244, %v2062
        %v4246 = vmax.f32 %v4245, %v2070
        %v4247 = vmax.f32 %v4246, %v2078
        %v4248 = vmax.f32 %v4247, %v2086
        %v4249 = vrot.slane %v4248, 4
        %v4250 = vmax.f32 %v4248, %v4249
        %v4251 = vrot.slane %v4250, 2
        %v4252 = vmax.f32 %v4250, %v4251
        %v4253 = vrot.slane %v4252, 1
        %v4254 = vmax.f32 %v4252, %v4253
        %v4255 = vmax.f32 %v1967, %v1975
        %v4256 = vmax.f32 %v4255, %v1983
        %v4257 = vmax.f32 %v4256, %v1991
        %v4258 = vmax.f32 %v4257, %v1999
        %v4259 = vmax.f32 %v4258, %v2007
        %v4260 = vmax.f32 %v4259, %v2015
        %v4261 = vmax.f32 %v4260, %v2023
        %v4262 = vmax.f32 %v4261, %v2031
        %v4263 = vmax.f32 %v4262, %v2039
        %v4264 = vmax.f32 %v4263, %v2047
        %v4265 = vmax.f32 %v4264, %v2055
        %v4266 = vmax.f32 %v4265, %v2063
        %v4267 = vmax.f32 %v4266, %v2071
        %v4268 = vmax.f32 %v4267, %v2079
        %v4269 = vmax.f32 %v4268, %v2087
        %v4270 = vrot.slane %v4269, 4
        %v4271 = vmax.f32 %v4269, %v4270
        %v4272 = vrot.slane %v4271, 2
        %v4273 = vmax.f32 %v4271, %v4272
        %v4274 = vrot.slane %v4273, 1
        %v4275 = vmax.f32 %v4273, %v4274
        %v4276 = vmax.f32 %v1968, %v1976
        %v4277 = vmax.f32 %v4276, %v1984
        %v4278 = vmax.f32 %v4277, %v1992
        %v4279 = vmax.f32 %v4278, %v2000
        %v4280 = vmax.f32 %v4279, %v2008
        %v4281 = vmax.f32 %v4280, %v2016
        %v4282 = vmax.f32 %v4281, %v2024
        %v4283 = vmax.f32 %v4282, %v2032
        %v4284 = vmax.f32 %v4283, %v2040
        %v4285 = vmax.f32 %v4284, %v2048
        %v4286 = vmax.f32 %v4285, %v2056
        %v4287 = vmax.f32 %v4286, %v2064
        %v4288 = vmax.f32 %v4287, %v2072
        %v4289 = vmax.f32 %v4288, %v2080
        %v4290 = vmax.f32 %v4289, %v2088
        %v4291 = vrot.slane %v4290, 4
        %v4292 = vmax.f32 %v4290, %v4291
        %v4293 = vrot.slane %v4292, 2
        %v4294 = vmax.f32 %v4292, %v4293
        %v4295 = vrot.slane %v4294, 1
        %v4296 = vmax.f32 %v4294, %v4295
        %v4297 = vmax.f32 %v1969, %v1977
        %v4298 = vmax.f32 %v4297, %v1985
        %v4299 = vmax.f32 %v4298, %v1993
        %v4300 = vmax.f32 %v4299, %v2001
        %v4301 = vmax.f32 %v4300, %v2009
        %v4302 = vmax.f32 %v4301, %v2017
        %v4303 = vmax.f32 %v4302, %v2025
        %v4304 = vmax.f32 %v4303, %v2033
        %v4305 = vmax.f32 %v4304, %v2041
        %v4306 = vmax.f32 %v4305, %v2049
        %v4307 = vmax.f32 %v4306, %v2057
        %v4308 = vmax.f32 %v4307, %v2065
        %v4309 = vmax.f32 %v4308, %v2073
        %v4310 = vmax.f32 %v4309, %v2081
        %v4311 = vmax.f32 %v4310, %v2089
        %v4312 = vrot.slane %v4311, 4
        %v4313 = vmax.f32 %v4311, %v4312
        %v4314 = vrot.slane %v4313, 2
        %v4315 = vmax.f32 %v4313, %v4314
        %v4316 = vrot.slane %v4315, 1
        %v4317 = vmax.f32 %v4315, %v4316
        %v4318 = vmax.f32 %v1970, %v1978
        %v4319 = vmax.f32 %v4318, %v1986
        %v4320 = vmax.f32 %v4319, %v1994
        %v4321 = vmax.f32 %v4320, %v2002
        %v4322 = vmax.f32 %v4321, %v2010
        %v4323 = vmax.f32 %v4322, %v2018
        %v4324 = vmax.f32 %v4323, %v2026
        %v4325 = vmax.f32 %v4324, %v2034
        %v4326 = vmax.f32 %v4325, %v2042
        %v4327 = vmax.f32 %v4326, %v2050
        %v4328 = vmax.f32 %v4327, %v2058
        %v4329 = vmax.f32 %v4328, %v2066
        %v4330 = vmax.f32 %v4329, %v2074
        %v4331 = vmax.f32 %v4330, %v2082
        %v4332 = vmax.f32 %v4331, %v2090
        %v4333 = vrot.slane %v4332, 4
        %v4334 = vmax.f32 %v4332, %v4333
        %v4335 = vrot.slane %v4334, 2
        %v4336 = vmax.f32 %v4334, %v4335
        %v4337 = vrot.slane %v4336, 1
        %v4338 = vmax.f32 %v4336, %v4337
        %v4339 = vmax.f32 %v2091, %v2099
        %v4340 = vmax.f32 %v4339, %v2107
        %v4341 = vmax.f32 %v4340, %v2115
        %v4342 = vmax.f32 %v4341, %v2123
        %v4343 = vmax.f32 %v4342, %v2131
        %v4344 = vmax.f32 %v4343, %v2139
        %v4345 = vmax.f32 %v4344, %v2147
        %v4346 = vmax.f32 %v4345, %v2155
        %v4347 = vmax.f32 %v4346, %v2163
        %v4348 = vmax.f32 %v4347, %v2171
        %v4349 = vmax.f32 %v4348, %v2179
        %v4350 = vmax.f32 %v4349, %v2187
        %v4351 = vmax.f32 %v4350, %v2195
        %v4352 = vmax.f32 %v4351, %v2203
        %v4353 = vmax.f32 %v4352, %v2211
        %v4354 = vrot.slane %v4353, 4
        %v4355 = vmax.f32 %v4353, %v4354
        %v4356 = vrot.slane %v4355, 2
        %v4357 = vmax.f32 %v4355, %v4356
        %v4358 = vrot.slane %v4357, 1
        %v4359 = vmax.f32 %v4357, %v4358
        %v4360 = vmax.f32 %v2092, %v2100
        %v4361 = vmax.f32 %v4360, %v2108
        %v4362 = vmax.f32 %v4361, %v2116
        %v4363 = vmax.f32 %v4362, %v2124
        %v4364 = vmax.f32 %v4363, %v2132
        %v4365 = vmax.f32 %v4364, %v2140
        %v4366 = vmax.f32 %v4365, %v2148
        %v4367 = vmax.f32 %v4366, %v2156
        %v4368 = vmax.f32 %v4367, %v2164
        %v4369 = vmax.f32 %v4368, %v2172
        %v4370 = vmax.f32 %v4369, %v2180
        %v4371 = vmax.f32 %v4370, %v2188
        %v4372 = vmax.f32 %v4371, %v2196
        %v4373 = vmax.f32 %v4372, %v2204
        %v4374 = vmax.f32 %v4373, %v2212
        %v4375 = vrot.slane %v4374, 4
        %v4376 = vmax.f32 %v4374, %v4375
        %v4377 = vrot.slane %v4376, 2
        %v4378 = vmax.f32 %v4376, %v4377
        %v4379 = vrot.slane %v4378, 1
        %v4380 = vmax.f32 %v4378, %v4379
        %v4381 = vmax.f32 %v2093, %v2101
        %v4382 = vmax.f32 %v4381, %v2109
        %v4383 = vmax.f32 %v4382, %v2117
        %v4384 = vmax.f32 %v4383, %v2125
        %v4385 = vmax.f32 %v4384, %v2133
        %v4386 = vmax.f32 %v4385, %v2141
        %v4387 = vmax.f32 %v4386, %v2149
        %v4388 = vmax.f32 %v4387, %v2157
        %v4389 = vmax.f32 %v4388, %v2165
        %v4390 = vmax.f32 %v4389, %v2173
        %v4391 = vmax.f32 %v4390, %v2181
        %v4392 = vmax.f32 %v4391, %v2189
        %v4393 = vmax.f32 %v4392, %v2197
        %v4394 = vmax.f32 %v4393, %v2205
        %v4395 = vmax.f32 %v4394, %v2213
        %v4396 = vrot.slane %v4395, 4
        %v4397 = vmax.f32 %v4395, %v4396
        %v4398 = vrot.slane %v4397, 2
        %v4399 = vmax.f32 %v4397, %v4398
        %v4400 = vrot.slane %v4399, 1
        %v4401 = vmax.f32 %v4399, %v4400
        %v4402 = vmax.f32 %v2094, %v2102
        %v4403 = vmax.f32 %v4402, %v2110
        %v4404 = vmax.f32 %v4403, %v2118
        %v4405 = vmax.f32 %v4404, %v2126
        %v4406 = vmax.f32 %v4405, %v2134
        %v4407 = vmax.f32 %v4406, %v2142
        %v4408 = vmax.f32 %v4407, %v2150
        %v4409 = vmax.f32 %v4408, %v2158
        %v4410 = vmax.f32 %v4409, %v2166
        %v4411 = vmax.f32 %v4410, %v2174
        %v4412 = vmax.f32 %v4411, %v2182
        %v4413 = vmax.f32 %v4412, %v2190
        %v4414 = vmax.f32 %v4413, %v2198
        %v4415 = vmax.f32 %v4414, %v2206
        %v4416 = vmax.f32 %v4415, %v2214
        %v4417 = vrot.slane %v4416, 4
        %v4418 = vmax.f32 %v4416, %v4417
        %v4419 = vrot.slane %v4418, 2
        %v4420 = vmax.f32 %v4418, %v4419
        %v4421 = vrot.slane %v4420, 1
        %v4422 = vmax.f32 %v4420, %v4421
        %v4423 = vmax.f32 %v2095, %v2103
        %v4424 = vmax.f32 %v4423, %v2111
        %v4425 = vmax.f32 %v4424, %v2119
        %v4426 = vmax.f32 %v4425, %v2127
        %v4427 = vmax.f32 %v4426, %v2135
        %v4428 = vmax.f32 %v4427, %v2143
        %v4429 = vmax.f32 %v4428, %v2151
        %v4430 = vmax.f32 %v4429, %v2159
        %v4431 = vmax.f32 %v4430, %v2167
        %v4432 = vmax.f32 %v4431, %v2175
        %v4433 = vmax.f32 %v4432, %v2183
        %v4434 = vmax.f32 %v4433, %v2191
        %v4435 = vmax.f32 %v4434, %v2199
        %v4436 = vmax.f32 %v4435, %v2207
        %v4437 = vmax.f32 %v4436, %v2215
        %v4438 = vrot.slane %v4437, 4
        %v4439 = vmax.f32 %v4437, %v4438
        %v4440 = vrot.slane %v4439, 2
        %v4441 = vmax.f32 %v4439, %v4440
        %v4442 = vrot.slane %v4441, 1
        %v4443 = vmax.f32 %v4441, %v4442
        %v4444 = vmax.f32 %v2096, %v2104
        %v4445 = vmax.f32 %v4444, %v2112
        %v4446 = vmax.f32 %v4445, %v2120
        %v4447 = vmax.f32 %v4446, %v2128
        %v4448 = vmax.f32 %v4447, %v2136
        %v4449 = vmax.f32 %v4448, %v2144
        %v4450 = vmax.f32 %v4449, %v2152
        %v4451 = vmax.f32 %v4450, %v2160
        %v4452 = vmax.f32 %v4451, %v2168
        %v4453 = vmax.f32 %v4452, %v2176
        %v4454 = vmax.f32 %v4453, %v2184
        %v4455 = vmax.f32 %v4454, %v2192
        %v4456 = vmax.f32 %v4455, %v2200
        %v4457 = vmax.f32 %v4456, %v2208
        %v4458 = vmax.f32 %v4457, %v2216
        %v4459 = vrot.slane %v4458, 4
        %v4460 = vmax.f32 %v4458, %v4459
        %v4461 = vrot.slane %v4460, 2
        %v4462 = vmax.f32 %v4460, %v4461
        %v4463 = vrot.slane %v4462, 1
        %v4464 = vmax.f32 %v4462, %v4463
        %v4465 = vmax.f32 %v2097, %v2105
        %v4466 = vmax.f32 %v4465, %v2113
        %v4467 = vmax.f32 %v4466, %v2121
        %v4468 = vmax.f32 %v4467, %v2129
        %v4469 = vmax.f32 %v4468, %v2137
        %v4470 = vmax.f32 %v4469, %v2145
        %v4471 = vmax.f32 %v4470, %v2153
        %v4472 = vmax.f32 %v4471, %v2161
        %v4473 = vmax.f32 %v4472, %v2169
        %v4474 = vmax.f32 %v4473, %v2177
        %v4475 = vmax.f32 %v4474, %v2185
        %v4476 = vmax.f32 %v4475, %v2193
        %v4477 = vmax.f32 %v4476, %v2201
        %v4478 = vmax.f32 %v4477, %v2209
        %v4479 = vmax.f32 %v4478, %v2217
        %v4480 = vrot.slane %v4479, 4
        %v4481 = vmax.f32 %v4479, %v4480
        %v4482 = vrot.slane %v4481, 2
        %v4483 = vmax.f32 %v4481, %v4482
        %v4484 = vrot.slane %v4483, 1
        %v4485 = vmax.f32 %v4483, %v4484
        %v4486 = vmax.f32 %v2098, %v2106
        %v4487 = vmax.f32 %v4486, %v2114
        %v4488 = vmax.f32 %v4487, %v2122
        %v4489 = vmax.f32 %v4488, %v2130
        %v4490 = vmax.f32 %v4489, %v2138
        %v4491 = vmax.f32 %v4490, %v2146
        %v4492 = vmax.f32 %v4491, %v2154
        %v4493 = vmax.f32 %v4492, %v2162
        %v4494 = vmax.f32 %v4493, %v2170
        %v4495 = vmax.f32 %v4494, %v2178
        %v4496 = vmax.f32 %v4495, %v2186
        %v4497 = vmax.f32 %v4496, %v2194
        %v4498 = vmax.f32 %v4497, %v2202
        %v4499 = vmax.f32 %v4498, %v2210
        %v4500 = vmax.f32 %v4499, %v2218
        %v4501 = vrot.slane %v4500, 4
        %v4502 = vmax.f32 %v4500, %v4501
        %v4503 = vrot.slane %v4502, 2
        %v4504 = vmax.f32 %v4502, %v4503
        %v4505 = vrot.slane %v4504, 1
        %v4506 = vmax.f32 %v4504, %v4505
        %v4507 = vmax.f32 %v2219, %v2227
        %v4508 = vmax.f32 %v4507, %v2235
        %v4509 = vmax.f32 %v4508, %v2243
        %v4510 = vmax.f32 %v4509, %v2251
        %v4511 = vmax.f32 %v4510, %v2259
        %v4512 = vmax.f32 %v4511, %v2267
        %v4513 = vmax.f32 %v4512, %v2275
        %v4514 = vmax.f32 %v4513, %v2283
        %v4515 = vmax.f32 %v4514, %v2291
        %v4516 = vmax.f32 %v4515, %v2299
        %v4517 = vmax.f32 %v4516, %v2307
        %v4518 = vmax.f32 %v4517, %v2315
        %v4519 = vmax.f32 %v4518, %v2323
        %v4520 = vmax.f32 %v4519, %v2331
        %v4521 = vmax.f32 %v4520, %v2339
        %v4522 = vrot.slane %v4521, 4
        %v4523 = vmax.f32 %v4521, %v4522
        %v4524 = vrot.slane %v4523, 2
        %v4525 = vmax.f32 %v4523, %v4524
        %v4526 = vrot.slane %v4525, 1
        %v4527 = vmax.f32 %v4525, %v4526
        %v4528 = vmax.f32 %v2220, %v2228
        %v4529 = vmax.f32 %v4528, %v2236
        %v4530 = vmax.f32 %v4529, %v2244
        %v4531 = vmax.f32 %v4530, %v2252
        %v4532 = vmax.f32 %v4531, %v2260
        %v4533 = vmax.f32 %v4532, %v2268
        %v4534 = vmax.f32 %v4533, %v2276
        %v4535 = vmax.f32 %v4534, %v2284
        %v4536 = vmax.f32 %v4535, %v2292
        %v4537 = vmax.f32 %v4536, %v2300
        %v4538 = vmax.f32 %v4537, %v2308
        %v4539 = vmax.f32 %v4538, %v2316
        %v4540 = vmax.f32 %v4539, %v2324
        %v4541 = vmax.f32 %v4540, %v2332
        %v4542 = vmax.f32 %v4541, %v2340
        %v4543 = vrot.slane %v4542, 4
        %v4544 = vmax.f32 %v4542, %v4543
        %v4545 = vrot.slane %v4544, 2
        %v4546 = vmax.f32 %v4544, %v4545
        %v4547 = vrot.slane %v4546, 1
        %v4548 = vmax.f32 %v4546, %v4547
        %v4549 = vmax.f32 %v2221, %v2229
        %v4550 = vmax.f32 %v4549, %v2237
        %v4551 = vmax.f32 %v4550, %v2245
        %v4552 = vmax.f32 %v4551, %v2253
        %v4553 = vmax.f32 %v4552, %v2261
        %v4554 = vmax.f32 %v4553, %v2269
        %v4555 = vmax.f32 %v4554, %v2277
        %v4556 = vmax.f32 %v4555, %v2285
        %v4557 = vmax.f32 %v4556, %v2293
        %v4558 = vmax.f32 %v4557, %v2301
        %v4559 = vmax.f32 %v4558, %v2309
        %v4560 = vmax.f32 %v4559, %v2317
        %v4561 = vmax.f32 %v4560, %v2325
        %v4562 = vmax.f32 %v4561, %v2333
        %v4563 = vmax.f32 %v4562, %v2341
        %v4564 = vrot.slane %v4563, 4
        %v4565 = vmax.f32 %v4563, %v4564
        %v4566 = vrot.slane %v4565, 2
        %v4567 = vmax.f32 %v4565, %v4566
        %v4568 = vrot.slane %v4567, 1
        %v4569 = vmax.f32 %v4567, %v4568
        %v4570 = vmax.f32 %v2222, %v2230
        %v4571 = vmax.f32 %v4570, %v2238
        %v4572 = vmax.f32 %v4571, %v2246
        %v4573 = vmax.f32 %v4572, %v2254
        %v4574 = vmax.f32 %v4573, %v2262
        %v4575 = vmax.f32 %v4574, %v2270
        %v4576 = vmax.f32 %v4575, %v2278
        %v4577 = vmax.f32 %v4576, %v2286
        %v4578 = vmax.f32 %v4577, %v2294
        %v4579 = vmax.f32 %v4578, %v2302
        %v4580 = vmax.f32 %v4579, %v2310
        %v4581 = vmax.f32 %v4580, %v2318
        %v4582 = vmax.f32 %v4581, %v2326
        %v4583 = vmax.f32 %v4582, %v2334
        %v4584 = vmax.f32 %v4583, %v2342
        %v4585 = vrot.slane %v4584, 4
        %v4586 = vmax.f32 %v4584, %v4585
        %v4587 = vrot.slane %v4586, 2
        %v4588 = vmax.f32 %v4586, %v4587
        %v4589 = vrot.slane %v4588, 1
        %v4590 = vmax.f32 %v4588, %v4589
        %v4591 = vmax.f32 %v2223, %v2231
        %v4592 = vmax.f32 %v4591, %v2239
        %v4593 = vmax.f32 %v4592, %v2247
        %v4594 = vmax.f32 %v4593, %v2255
        %v4595 = vmax.f32 %v4594, %v2263
        %v4596 = vmax.f32 %v4595, %v2271
        %v4597 = vmax.f32 %v4596, %v2279
        %v4598 = vmax.f32 %v4597, %v2287
        %v4599 = vmax.f32 %v4598, %v2295
        %v4600 = vmax.f32 %v4599, %v2303
        %v4601 = vmax.f32 %v4600, %v2311
        %v4602 = vmax.f32 %v4601, %v2319
        %v4603 = vmax.f32 %v4602, %v2327
        %v4604 = vmax.f32 %v4603, %v2335
        %v4605 = vmax.f32 %v4604, %v2343
        %v4606 = vrot.slane %v4605, 4
        %v4607 = vmax.f32 %v4605, %v4606
        %v4608 = vrot.slane %v4607, 2
        %v4609 = vmax.f32 %v4607, %v4608
        %v4610 = vrot.slane %v4609, 1
        %v4611 = vmax.f32 %v4609, %v4610
        %v4612 = vmax.f32 %v2224, %v2232
        %v4613 = vmax.f32 %v4612, %v2240
        %v4614 = vmax.f32 %v4613, %v2248
        %v4615 = vmax.f32 %v4614, %v2256
        %v4616 = vmax.f32 %v4615, %v2264
        %v4617 = vmax.f32 %v4616, %v2272
        %v4618 = vmax.f32 %v4617, %v2280
        %v4619 = vmax.f32 %v4618, %v2288
        %v4620 = vmax.f32 %v4619, %v2296
        %v4621 = vmax.f32 %v4620, %v2304
        %v4622 = vmax.f32 %v4621, %v2312
        %v4623 = vmax.f32 %v4622, %v2320
        %v4624 = vmax.f32 %v4623, %v2328
        %v4625 = vmax.f32 %v4624, %v2336
        %v4626 = vmax.f32 %v4625, %v2344
        %v4627 = vrot.slane %v4626, 4
        %v4628 = vmax.f32 %v4626, %v4627
        %v4629 = vrot.slane %v4628, 2
        %v4630 = vmax.f32 %v4628, %v4629
        %v4631 = vrot.slane %v4630, 1
        %v4632 = vmax.f32 %v4630, %v4631
        %v4633 = vmax.f32 %v2225, %v2233
        %v4634 = vmax.f32 %v4633, %v2241
        %v4635 = vmax.f32 %v4634, %v2249
        %v4636 = vmax.f32 %v4635, %v2257
        %v4637 = vmax.f32 %v4636, %v2265
        %v4638 = vmax.f32 %v4637, %v2273
        %v4639 = vmax.f32 %v4638, %v2281
        %v4640 = vmax.f32 %v4639, %v2289
        %v4641 = vmax.f32 %v4640, %v2297
        %v4642 = vmax.f32 %v4641, %v2305
        %v4643 = vmax.f32 %v4642, %v2313
        %v4644 = vmax.f32 %v4643, %v2321
        %v4645 = vmax.f32 %v4644, %v2329
        %v4646 = vmax.f32 %v4645, %v2337
        %v4647 = vmax.f32 %v4646, %v2345
        %v4648 = vrot.slane %v4647, 4
        %v4649 = vmax.f32 %v4647, %v4648
        %v4650 = vrot.slane %v4649, 2
        %v4651 = vmax.f32 %v4649, %v4650
        %v4652 = vrot.slane %v4651, 1
        %v4653 = vmax.f32 %v4651, %v4652
        %v4654 = vmax.f32 %v2226, %v2234
        %v4655 = vmax.f32 %v4654, %v2242
        %v4656 = vmax.f32 %v4655, %v2250
        %v4657 = vmax.f32 %v4656, %v2258
        %v4658 = vmax.f32 %v4657, %v2266
        %v4659 = vmax.f32 %v4658, %v2274
        %v4660 = vmax.f32 %v4659, %v2282
        %v4661 = vmax.f32 %v4660, %v2290
        %v4662 = vmax.f32 %v4661, %v2298
        %v4663 = vmax.f32 %v4662, %v2306
        %v4664 = vmax.f32 %v4663, %v2314
        %v4665 = vmax.f32 %v4664, %v2322
        %v4666 = vmax.f32 %v4665, %v2330
        %v4667 = vmax.f32 %v4666, %v2338
        %v4668 = vmax.f32 %v4667, %v2346
        %v4669 = vrot.slane %v4668, 4
        %v4670 = vmax.f32 %v4668, %v4669
        %v4671 = vrot.slane %v4670, 2
        %v4672 = vmax.f32 %v4670, %v4671
        %v4673 = vrot.slane %v4672, 1
        %v4674 = vmax.f32 %v4672, %v4673
        %v4675 = vmax.f32 %v2347, %v2355
        %v4676 = vmax.f32 %v4675, %v2363
        %v4677 = vmax.f32 %v4676, %v2371
        %v4678 = vmax.f32 %v4677, %v2379
        %v4679 = vmax.f32 %v4678, %v2387
        %v4680 = vmax.f32 %v4679, %v2395
        %v4681 = vmax.f32 %v4680, %v2403
        %v4682 = vmax.f32 %v4681, %v2411
        %v4683 = vmax.f32 %v4682, %v2419
        %v4684 = vmax.f32 %v4683, %v2427
        %v4685 = vmax.f32 %v4684, %v2435
        %v4686 = vmax.f32 %v4685, %v2443
        %v4687 = vmax.f32 %v4686, %v2451
        %v4688 = vmax.f32 %v4687, %v2459
        %v4689 = vmax.f32 %v4688, %v2467
        %v4690 = vrot.slane %v4689, 4
        %v4691 = vmax.f32 %v4689, %v4690
        %v4692 = vrot.slane %v4691, 2
        %v4693 = vmax.f32 %v4691, %v4692
        %v4694 = vrot.slane %v4693, 1
        %v4695 = vmax.f32 %v4693, %v4694
        %v4696 = vmax.f32 %v2348, %v2356
        %v4697 = vmax.f32 %v4696, %v2364
        %v4698 = vmax.f32 %v4697, %v2372
        %v4699 = vmax.f32 %v4698, %v2380
        %v4700 = vmax.f32 %v4699, %v2388
        %v4701 = vmax.f32 %v4700, %v2396
        %v4702 = vmax.f32 %v4701, %v2404
        %v4703 = vmax.f32 %v4702, %v2412
        %v4704 = vmax.f32 %v4703, %v2420
        %v4705 = vmax.f32 %v4704, %v2428
        %v4706 = vmax.f32 %v4705, %v2436
        %v4707 = vmax.f32 %v4706, %v2444
        %v4708 = vmax.f32 %v4707, %v2452
        %v4709 = vmax.f32 %v4708, %v2460
        %v4710 = vmax.f32 %v4709, %v2468
        %v4711 = vrot.slane %v4710, 4
        %v4712 = vmax.f32 %v4710, %v4711
        %v4713 = vrot.slane %v4712, 2
        %v4714 = vmax.f32 %v4712, %v4713
        %v4715 = vrot.slane %v4714, 1
        %v4716 = vmax.f32 %v4714, %v4715
        %v4717 = vmax.f32 %v2349, %v2357
        %v4718 = vmax.f32 %v4717, %v2365
        %v4719 = vmax.f32 %v4718, %v2373
        %v4720 = vmax.f32 %v4719, %v2381
        %v4721 = vmax.f32 %v4720, %v2389
        %v4722 = vmax.f32 %v4721, %v2397
        %v4723 = vmax.f32 %v4722, %v2405
        %v4724 = vmax.f32 %v4723, %v2413
        %v4725 = vmax.f32 %v4724, %v2421
        %v4726 = vmax.f32 %v4725, %v2429
        %v4727 = vmax.f32 %v4726, %v2437
        %v4728 = vmax.f32 %v4727, %v2445
        %v4729 = vmax.f32 %v4728, %v2453
        %v4730 = vmax.f32 %v4729, %v2461
        %v4731 = vmax.f32 %v4730, %v2469
        %v4732 = vrot.slane %v4731, 4
        %v4733 = vmax.f32 %v4731, %v4732
        %v4734 = vrot.slane %v4733, 2
        %v4735 = vmax.f32 %v4733, %v4734
        %v4736 = vrot.slane %v4735, 1
        %v4737 = vmax.f32 %v4735, %v4736
        %v4738 = vmax.f32 %v2350, %v2358
        %v4739 = vmax.f32 %v4738, %v2366
        %v4740 = vmax.f32 %v4739, %v2374
        %v4741 = vmax.f32 %v4740, %v2382
        %v4742 = vmax.f32 %v4741, %v2390
        %v4743 = vmax.f32 %v4742, %v2398
        %v4744 = vmax.f32 %v4743, %v2406
        %v4745 = vmax.f32 %v4744, %v2414
        %v4746 = vmax.f32 %v4745, %v2422
        %v4747 = vmax.f32 %v4746, %v2430
        %v4748 = vmax.f32 %v4747, %v2438
        %v4749 = vmax.f32 %v4748, %v2446
        %v4750 = vmax.f32 %v4749, %v2454
        %v4751 = vmax.f32 %v4750, %v2462
        %v4752 = vmax.f32 %v4751, %v2470
        %v4753 = vrot.slane %v4752, 4
        %v4754 = vmax.f32 %v4752, %v4753
        %v4755 = vrot.slane %v4754, 2
        %v4756 = vmax.f32 %v4754, %v4755
        %v4757 = vrot.slane %v4756, 1
        %v4758 = vmax.f32 %v4756, %v4757
        %v4759 = vmax.f32 %v2351, %v2359
        %v4760 = vmax.f32 %v4759, %v2367
        %v4761 = vmax.f32 %v4760, %v2375
        %v4762 = vmax.f32 %v4761, %v2383
        %v4763 = vmax.f32 %v4762, %v2391
        %v4764 = vmax.f32 %v4763, %v2399
        %v4765 = vmax.f32 %v4764, %v2407
        %v4766 = vmax.f32 %v4765, %v2415
        %v4767 = vmax.f32 %v4766, %v2423
        %v4768 = vmax.f32 %v4767, %v2431
        %v4769 = vmax.f32 %v4768, %v2439
        %v4770 = vmax.f32 %v4769, %v2447
        %v4771 = vmax.f32 %v4770, %v2455
        %v4772 = vmax.f32 %v4771, %v2463
        %v4773 = vmax.f32 %v4772, %v2471
        %v4774 = vrot.slane %v4773, 4
        %v4775 = vmax.f32 %v4773, %v4774
        %v4776 = vrot.slane %v4775, 2
        %v4777 = vmax.f32 %v4775, %v4776
        %v4778 = vrot.slane %v4777, 1
        %v4779 = vmax.f32 %v4777, %v4778
        %v4780 = vmax.f32 %v2352, %v2360
        %v4781 = vmax.f32 %v4780, %v2368
        %v4782 = vmax.f32 %v4781, %v2376
        %v4783 = vmax.f32 %v4782, %v2384
        %v4784 = vmax.f32 %v4783, %v2392
        %v4785 = vmax.f32 %v4784, %v2400
        %v4786 = vmax.f32 %v4785, %v2408
        %v4787 = vmax.f32 %v4786, %v2416
        %v4788 = vmax.f32 %v4787, %v2424
        %v4789 = vmax.f32 %v4788, %v2432
        %v4790 = vmax.f32 %v4789, %v2440
        %v4791 = vmax.f32 %v4790, %v2448
        %v4792 = vmax.f32 %v4791, %v2456
        %v4793 = vmax.f32 %v4792, %v2464
        %v4794 = vmax.f32 %v4793, %v2472
        %v4795 = vrot.slane %v4794, 4
        %v4796 = vmax.f32 %v4794, %v4795
        %v4797 = vrot.slane %v4796, 2
        %v4798 = vmax.f32 %v4796, %v4797
        %v4799 = vrot.slane %v4798, 1
        %v4800 = vmax.f32 %v4798, %v4799
        %v4801 = vmax.f32 %v2353, %v2361
        %v4802 = vmax.f32 %v4801, %v2369
        %v4803 = vmax.f32 %v4802, %v2377
        %v4804 = vmax.f32 %v4803, %v2385
        %v4805 = vmax.f32 %v4804, %v2393
        %v4806 = vmax.f32 %v4805, %v2401
        %v4807 = vmax.f32 %v4806, %v2409
        %v4808 = vmax.f32 %v4807, %v2417
        %v4809 = vmax.f32 %v4808, %v2425
        %v4810 = vmax.f32 %v4809, %v2433
        %v4811 = vmax.f32 %v4810, %v2441
        %v4812 = vmax.f32 %v4811, %v2449
        %v4813 = vmax.f32 %v4812, %v2457
        %v4814 = vmax.f32 %v4813, %v2465
        %v4815 = vmax.f32 %v4814, %v2473
        %v4816 = vrot.slane %v4815, 4
        %v4817 = vmax.f32 %v4815, %v4816
        %v4818 = vrot.slane %v4817, 2
        %v4819 = vmax.f32 %v4817, %v4818
        %v4820 = vrot.slane %v4819, 1
        %v4821 = vmax.f32 %v4819, %v4820
        %v4822 = vmax.f32 %v2354, %v2362
        %v4823 = vmax.f32 %v4822, %v2370
        %v4824 = vmax.f32 %v4823, %v2378
        %v4825 = vmax.f32 %v4824, %v2386
        %v4826 = vmax.f32 %v4825, %v2394
        %v4827 = vmax.f32 %v4826, %v2402
        %v4828 = vmax.f32 %v4827, %v2410
        %v4829 = vmax.f32 %v4828, %v2418
        %v4830 = vmax.f32 %v4829, %v2426
        %v4831 = vmax.f32 %v4830, %v2434
        %v4832 = vmax.f32 %v4831, %v2442
        %v4833 = vmax.f32 %v4832, %v2450
        %v4834 = vmax.f32 %v4833, %v2458
        %v4835 = vmax.f32 %v4834, %v2466
        %v4836 = vmax.f32 %v4835, %v2474
        %v4837 = vrot.slane %v4836, 4
        %v4838 = vmax.f32 %v4836, %v4837
        %v4839 = vrot.slane %v4838, 2
        %v4840 = vmax.f32 %v4838, %v4839
        %v4841 = vrot.slane %v4840, 1
        %v4842 = vmax.f32 %v4840, %v4841
        %v4843 = vmax.f32 %v2475, %v2483
        %v4844 = vmax.f32 %v4843, %v2491
        %v4845 = vmax.f32 %v4844, %v2499
        %v4846 = vmax.f32 %v4845, %v2507
        %v4847 = vmax.f32 %v4846, %v2515
        %v4848 = vmax.f32 %v4847, %v2523
        %v4849 = vmax.f32 %v4848, %v2531
        %v4850 = vmax.f32 %v4849, %v2539
        %v4851 = vmax.f32 %v4850, %v2547
        %v4852 = vmax.f32 %v4851, %v2555
        %v4853 = vmax.f32 %v4852, %v2563
        %v4854 = vmax.f32 %v4853, %v2571
        %v4855 = vmax.f32 %v4854, %v2579
        %v4856 = vmax.f32 %v4855, %v2587
        %v4857 = vmax.f32 %v4856, %v2595
        %v4858 = vrot.slane %v4857, 4
        %v4859 = vmax.f32 %v4857, %v4858
        %v4860 = vrot.slane %v4859, 2
        %v4861 = vmax.f32 %v4859, %v4860
        %v4862 = vrot.slane %v4861, 1
        %v4863 = vmax.f32 %v4861, %v4862
        %v4864 = vmax.f32 %v2476, %v2484
        %v4865 = vmax.f32 %v4864, %v2492
        %v4866 = vmax.f32 %v4865, %v2500
        %v4867 = vmax.f32 %v4866, %v2508
        %v4868 = vmax.f32 %v4867, %v2516
        %v4869 = vmax.f32 %v4868, %v2524
        %v4870 = vmax.f32 %v4869, %v2532
        %v4871 = vmax.f32 %v4870, %v2540
        %v4872 = vmax.f32 %v4871, %v2548
        %v4873 = vmax.f32 %v4872, %v2556
        %v4874 = vmax.f32 %v4873, %v2564
        %v4875 = vmax.f32 %v4874, %v2572
        %v4876 = vmax.f32 %v4875, %v2580
        %v4877 = vmax.f32 %v4876, %v2588
        %v4878 = vmax.f32 %v4877, %v2596
        %v4879 = vrot.slane %v4878, 4
        %v4880 = vmax.f32 %v4878, %v4879
        %v4881 = vrot.slane %v4880, 2
        %v4882 = vmax.f32 %v4880, %v4881
        %v4883 = vrot.slane %v4882, 1
        %v4884 = vmax.f32 %v4882, %v4883
        %v4885 = vmax.f32 %v2477, %v2485
        %v4886 = vmax.f32 %v4885, %v2493
        %v4887 = vmax.f32 %v4886, %v2501
        %v4888 = vmax.f32 %v4887, %v2509
        %v4889 = vmax.f32 %v4888, %v2517
        %v4890 = vmax.f32 %v4889, %v2525
        %v4891 = vmax.f32 %v4890, %v2533
        %v4892 = vmax.f32 %v4891, %v2541
        %v4893 = vmax.f32 %v4892, %v2549
        %v4894 = vmax.f32 %v4893, %v2557
        %v4895 = vmax.f32 %v4894, %v2565
        %v4896 = vmax.f32 %v4895, %v2573
        %v4897 = vmax.f32 %v4896, %v2581
        %v4898 = vmax.f32 %v4897, %v2589
        %v4899 = vmax.f32 %v4898, %v2597
        %v4900 = vrot.slane %v4899, 4
        %v4901 = vmax.f32 %v4899, %v4900
        %v4902 = vrot.slane %v4901, 2
        %v4903 = vmax.f32 %v4901, %v4902
        %v4904 = vrot.slane %v4903, 1
        %v4905 = vmax.f32 %v4903, %v4904
        %v4906 = vmax.f32 %v2478, %v2486
        %v4907 = vmax.f32 %v4906, %v2494
        %v4908 = vmax.f32 %v4907, %v2502
        %v4909 = vmax.f32 %v4908, %v2510
        %v4910 = vmax.f32 %v4909, %v2518
        %v4911 = vmax.f32 %v4910, %v2526
        %v4912 = vmax.f32 %v4911, %v2534
        %v4913 = vmax.f32 %v4912, %v2542
        %v4914 = vmax.f32 %v4913, %v2550
        %v4915 = vmax.f32 %v4914, %v2558
        %v4916 = vmax.f32 %v4915, %v2566
        %v4917 = vmax.f32 %v4916, %v2574
        %v4918 = vmax.f32 %v4917, %v2582
        %v4919 = vmax.f32 %v4918, %v2590
        %v4920 = vmax.f32 %v4919, %v2598
        %v4921 = vrot.slane %v4920, 4
        %v4922 = vmax.f32 %v4920, %v4921
        %v4923 = vrot.slane %v4922, 2
        %v4924 = vmax.f32 %v4922, %v4923
        %v4925 = vrot.slane %v4924, 1
        %v4926 = vmax.f32 %v4924, %v4925
        %v4927 = vmax.f32 %v2479, %v2487
        %v4928 = vmax.f32 %v4927, %v2495
        %v4929 = vmax.f32 %v4928, %v2503
        %v4930 = vmax.f32 %v4929, %v2511
        %v4931 = vmax.f32 %v4930, %v2519
        %v4932 = vmax.f32 %v4931, %v2527
        %v4933 = vmax.f32 %v4932, %v2535
        %v4934 = vmax.f32 %v4933, %v2543
        %v4935 = vmax.f32 %v4934, %v2551
        %v4936 = vmax.f32 %v4935, %v2559
        %v4937 = vmax.f32 %v4936, %v2567
        %v4938 = vmax.f32 %v4937, %v2575
        %v4939 = vmax.f32 %v4938, %v2583
        %v4940 = vmax.f32 %v4939, %v2591
        %v4941 = vmax.f32 %v4940, %v2599
        %v4942 = vrot.slane %v4941, 4
        %v4943 = vmax.f32 %v4941, %v4942
        %v4944 = vrot.slane %v4943, 2
        %v4945 = vmax.f32 %v4943, %v4944
        %v4946 = vrot.slane %v4945, 1
        %v4947 = vmax.f32 %v4945, %v4946
        %v4948 = vmax.f32 %v2480, %v2488
        %v4949 = vmax.f32 %v4948, %v2496
        %v4950 = vmax.f32 %v4949, %v2504
        %v4951 = vmax.f32 %v4950, %v2512
        %v4952 = vmax.f32 %v4951, %v2520
        %v4953 = vmax.f32 %v4952, %v2528
        %v4954 = vmax.f32 %v4953, %v2536
        %v4955 = vmax.f32 %v4954, %v2544
        %v4956 = vmax.f32 %v4955, %v2552
        %v4957 = vmax.f32 %v4956, %v2560
        %v4958 = vmax.f32 %v4957, %v2568
        %v4959 = vmax.f32 %v4958, %v2576
        %v4960 = vmax.f32 %v4959, %v2584
        %v4961 = vmax.f32 %v4960, %v2592
        %v4962 = vmax.f32 %v4961, %v2600
        %v4963 = vrot.slane %v4962, 4
        %v4964 = vmax.f32 %v4962, %v4963
        %v4965 = vrot.slane %v4964, 2
        %v4966 = vmax.f32 %v4964, %v4965
        %v4967 = vrot.slane %v4966, 1
        %v4968 = vmax.f32 %v4966, %v4967
        %v4969 = vmax.f32 %v2481, %v2489
        %v4970 = vmax.f32 %v4969, %v2497
        %v4971 = vmax.f32 %v4970, %v2505
        %v4972 = vmax.f32 %v4971, %v2513
        %v4973 = vmax.f32 %v4972, %v2521
        %v4974 = vmax.f32 %v4973, %v2529
        %v4975 = vmax.f32 %v4974, %v2537
        %v4976 = vmax.f32 %v4975, %v2545
        %v4977 = vmax.f32 %v4976, %v2553
        %v4978 = vmax.f32 %v4977, %v2561
        %v4979 = vmax.f32 %v4978, %v2569
        %v4980 = vmax.f32 %v4979, %v2577
        %v4981 = vmax.f32 %v4980, %v2585
        %v4982 = vmax.f32 %v4981, %v2593
        %v4983 = vmax.f32 %v4982, %v2601
        %v4984 = vrot.slane %v4983, 4
        %v4985 = vmax.f32 %v4983, %v4984
        %v4986 = vrot.slane %v4985, 2
        %v4987 = vmax.f32 %v4985, %v4986
        %v4988 = vrot.slane %v4987, 1
        %v4989 = vmax.f32 %v4987, %v4988
        %v4990 = vmax.f32 %v2482, %v2490
        %v4991 = vmax.f32 %v4990, %v2498
        %v4992 = vmax.f32 %v4991, %v2506
        %v4993 = vmax.f32 %v4992, %v2514
        %v4994 = vmax.f32 %v4993, %v2522
        %v4995 = vmax.f32 %v4994, %v2530
        %v4996 = vmax.f32 %v4995, %v2538
        %v4997 = vmax.f32 %v4996, %v2546
        %v4998 = vmax.f32 %v4997, %v2554
        %v4999 = vmax.f32 %v4998, %v2562
        %v5000 = vmax.f32 %v4999, %v2570
        %v5001 = vmax.f32 %v5000, %v2578
        %v5002 = vmax.f32 %v5001, %v2586
        %v5003 = vmax.f32 %v5002, %v2594
        %v5004 = vmax.f32 %v5003, %v2602
        %v5005 = vrot.slane %v5004, 4
        %v5006 = vmax.f32 %v5004, %v5005
        %v5007 = vrot.slane %v5006, 2
        %v5008 = vmax.f32 %v5006, %v5007
        %v5009 = vrot.slane %v5008, 1
        %v5010 = vmax.f32 %v5008, %v5009
        %v5011 = vmax.f32 %v2603, %v2611
        %v5012 = vmax.f32 %v5011, %v2619
        %v5013 = vmax.f32 %v5012, %v2627
        %v5014 = vmax.f32 %v5013, %v2635
        %v5015 = vmax.f32 %v5014, %v2643
        %v5016 = vmax.f32 %v5015, %v2651
        %v5017 = vmax.f32 %v5016, %v2659
        %v5018 = vmax.f32 %v5017, %v2667
        %v5019 = vmax.f32 %v5018, %v2675
        %v5020 = vmax.f32 %v5019, %v2683
        %v5021 = vmax.f32 %v5020, %v2691
        %v5022 = vmax.f32 %v5021, %v2699
        %v5023 = vmax.f32 %v5022, %v2707
        %v5024 = vmax.f32 %v5023, %v2715
        %v5025 = vmax.f32 %v5024, %v2723
        %v5026 = vrot.slane %v5025, 4
        %v5027 = vmax.f32 %v5025, %v5026
        %v5028 = vrot.slane %v5027, 2
        %v5029 = vmax.f32 %v5027, %v5028
        %v5030 = vrot.slane %v5029, 1
        %v5031 = vmax.f32 %v5029, %v5030
        %v5032 = vmax.f32 %v2604, %v2612
        %v5033 = vmax.f32 %v5032, %v2620
        %v5034 = vmax.f32 %v5033, %v2628
        %v5035 = vmax.f32 %v5034, %v2636
        %v5036 = vmax.f32 %v5035, %v2644
        %v5037 = vmax.f32 %v5036, %v2652
        %v5038 = vmax.f32 %v5037, %v2660
        %v5039 = vmax.f32 %v5038, %v2668
        %v5040 = vmax.f32 %v5039, %v2676
        %v5041 = vmax.f32 %v5040, %v2684
        %v5042 = vmax.f32 %v5041, %v2692
        %v5043 = vmax.f32 %v5042, %v2700
        %v5044 = vmax.f32 %v5043, %v2708
        %v5045 = vmax.f32 %v5044, %v2716
        %v5046 = vmax.f32 %v5045, %v2724
        %v5047 = vrot.slane %v5046, 4
        %v5048 = vmax.f32 %v5046, %v5047
        %v5049 = vrot.slane %v5048, 2
        %v5050 = vmax.f32 %v5048, %v5049
        %v5051 = vrot.slane %v5050, 1
        %v5052 = vmax.f32 %v5050, %v5051
        %v5053 = vmax.f32 %v2605, %v2613
        %v5054 = vmax.f32 %v5053, %v2621
        %v5055 = vmax.f32 %v5054, %v2629
        %v5056 = vmax.f32 %v5055, %v2637
        %v5057 = vmax.f32 %v5056, %v2645
        %v5058 = vmax.f32 %v5057, %v2653
        %v5059 = vmax.f32 %v5058, %v2661
        %v5060 = vmax.f32 %v5059, %v2669
        %v5061 = vmax.f32 %v5060, %v2677
        %v5062 = vmax.f32 %v5061, %v2685
        %v5063 = vmax.f32 %v5062, %v2693
        %v5064 = vmax.f32 %v5063, %v2701
        %v5065 = vmax.f32 %v5064, %v2709
        %v5066 = vmax.f32 %v5065, %v2717
        %v5067 = vmax.f32 %v5066, %v2725
        %v5068 = vrot.slane %v5067, 4
        %v5069 = vmax.f32 %v5067, %v5068
        %v5070 = vrot.slane %v5069, 2
        %v5071 = vmax.f32 %v5069, %v5070
        %v5072 = vrot.slane %v5071, 1
        %v5073 = vmax.f32 %v5071, %v5072
        %v5074 = vmax.f32 %v2606, %v2614
        %v5075 = vmax.f32 %v5074, %v2622
        %v5076 = vmax.f32 %v5075, %v2630
        %v5077 = vmax.f32 %v5076, %v2638
        %v5078 = vmax.f32 %v5077, %v2646
        %v5079 = vmax.f32 %v5078, %v2654
        %v5080 = vmax.f32 %v5079, %v2662
        %v5081 = vmax.f32 %v5080, %v2670
        %v5082 = vmax.f32 %v5081, %v2678
        %v5083 = vmax.f32 %v5082, %v2686
        %v5084 = vmax.f32 %v5083, %v2694
        %v5085 = vmax.f32 %v5084, %v2702
        %v5086 = vmax.f32 %v5085, %v2710
        %v5087 = vmax.f32 %v5086, %v2718
        %v5088 = vmax.f32 %v5087, %v2726
        %v5089 = vrot.slane %v5088, 4
        %v5090 = vmax.f32 %v5088, %v5089
        %v5091 = vrot.slane %v5090, 2
        %v5092 = vmax.f32 %v5090, %v5091
        %v5093 = vrot.slane %v5092, 1
        %v5094 = vmax.f32 %v5092, %v5093
        %v5095 = vmax.f32 %v2607, %v2615
        %v5096 = vmax.f32 %v5095, %v2623
        %v5097 = vmax.f32 %v5096, %v2631
        %v5098 = vmax.f32 %v5097, %v2639
        %v5099 = vmax.f32 %v5098, %v2647
        %v5100 = vmax.f32 %v5099, %v2655
        %v5101 = vmax.f32 %v5100, %v2663
        %v5102 = vmax.f32 %v5101, %v2671
        %v5103 = vmax.f32 %v5102, %v2679
        %v5104 = vmax.f32 %v5103, %v2687
        %v5105 = vmax.f32 %v5104, %v2695
        %v5106 = vmax.f32 %v5105, %v2703
        %v5107 = vmax.f32 %v5106, %v2711
        %v5108 = vmax.f32 %v5107, %v2719
        %v5109 = vmax.f32 %v5108, %v2727
        %v5110 = vrot.slane %v5109, 4
        %v5111 = vmax.f32 %v5109, %v5110
        %v5112 = vrot.slane %v5111, 2
        %v5113 = vmax.f32 %v5111, %v5112
        %v5114 = vrot.slane %v5113, 1
        %v5115 = vmax.f32 %v5113, %v5114
        %v5116 = vmax.f32 %v2608, %v2616
        %v5117 = vmax.f32 %v5116, %v2624
        %v5118 = vmax.f32 %v5117, %v2632
        %v5119 = vmax.f32 %v5118, %v2640
        %v5120 = vmax.f32 %v5119, %v2648
        %v5121 = vmax.f32 %v5120, %v2656
        %v5122 = vmax.f32 %v5121, %v2664
        %v5123 = vmax.f32 %v5122, %v2672
        %v5124 = vmax.f32 %v5123, %v2680
        %v5125 = vmax.f32 %v5124, %v2688
        %v5126 = vmax.f32 %v5125, %v2696
        %v5127 = vmax.f32 %v5126, %v2704
        %v5128 = vmax.f32 %v5127, %v2712
        %v5129 = vmax.f32 %v5128, %v2720
        %v5130 = vmax.f32 %v5129, %v2728
        %v5131 = vrot.slane %v5130, 4
        %v5132 = vmax.f32 %v5130, %v5131
        %v5133 = vrot.slane %v5132, 2
        %v5134 = vmax.f32 %v5132, %v5133
        %v5135 = vrot.slane %v5134, 1
        %v5136 = vmax.f32 %v5134, %v5135
        %v5137 = vmax.f32 %v2609, %v2617
        %v5138 = vmax.f32 %v5137, %v2625
        %v5139 = vmax.f32 %v5138, %v2633
        %v5140 = vmax.f32 %v5139, %v2641
        %v5141 = vmax.f32 %v5140, %v2649
        %v5142 = vmax.f32 %v5141, %v2657
        %v5143 = vmax.f32 %v5142, %v2665
        %v5144 = vmax.f32 %v5143, %v2673
        %v5145 = vmax.f32 %v5144, %v2681
        %v5146 = vmax.f32 %v5145, %v2689
        %v5147 = vmax.f32 %v5146, %v2697
        %v5148 = vmax.f32 %v5147, %v2705
        %v5149 = vmax.f32 %v5148, %v2713
        %v5150 = vmax.f32 %v5149, %v2721
        %v5151 = vmax.f32 %v5150, %v2729
        %v5152 = vrot.slane %v5151, 4
        %v5153 = vmax.f32 %v5151, %v5152
        %v5154 = vrot.slane %v5153, 2
        %v5155 = vmax.f32 %v5153, %v5154
        %v5156 = vrot.slane %v5155, 1
        %v5157 = vmax.f32 %v5155, %v5156
        %v5158 = vmax.f32 %v2610, %v2618
        %v5159 = vmax.f32 %v5158, %v2626
        %v5160 = vmax.f32 %v5159, %v2634
        %v5161 = vmax.f32 %v5160, %v2642
        %v5162 = vmax.f32 %v5161, %v2650
        %v5163 = vmax.f32 %v5162, %v2658
        %v5164 = vmax.f32 %v5163, %v2666
        %v5165 = vmax.f32 %v5164, %v2674
        %v5166 = vmax.f32 %v5165, %v2682
        %v5167 = vmax.f32 %v5166, %v2690
        %v5168 = vmax.f32 %v5167, %v2698
        %v5169 = vmax.f32 %v5168, %v2706
        %v5170 = vmax.f32 %v5169, %v2714
        %v5171 = vmax.f32 %v5170, %v2722
        %v5172 = vmax.f32 %v5171, %v2730
        %v5173 = vrot.slane %v5172, 4
        %v5174 = vmax.f32 %v5172, %v5173
        %v5175 = vrot.slane %v5174, 2
        %v5176 = vmax.f32 %v5174, %v5175
        %v5177 = vrot.slane %v5176, 1
        %v5178 = vmax.f32 %v5176, %v5177
        %v5179 = vmax.f32 %v2731, %v2739
        %v5180 = vmax.f32 %v5179, %v2747
        %v5181 = vmax.f32 %v5180, %v2755
        %v5182 = vmax.f32 %v5181, %v2763
        %v5183 = vmax.f32 %v5182, %v2771
        %v5184 = vmax.f32 %v5183, %v2779
        %v5185 = vmax.f32 %v5184, %v2787
        %v5186 = vmax.f32 %v5185, %v2795
        %v5187 = vmax.f32 %v5186, %v2803
        %v5188 = vmax.f32 %v5187, %v2811
        %v5189 = vmax.f32 %v5188, %v2819
        %v5190 = vmax.f32 %v5189, %v2827
        %v5191 = vmax.f32 %v5190, %v2835
        %v5192 = vmax.f32 %v5191, %v2843
        %v5193 = vmax.f32 %v5192, %v2851
        %v5194 = vrot.slane %v5193, 4
        %v5195 = vmax.f32 %v5193, %v5194
        %v5196 = vrot.slane %v5195, 2
        %v5197 = vmax.f32 %v5195, %v5196
        %v5198 = vrot.slane %v5197, 1
        %v5199 = vmax.f32 %v5197, %v5198
        %v5200 = vmax.f32 %v2732, %v2740
        %v5201 = vmax.f32 %v5200, %v2748
        %v5202 = vmax.f32 %v5201, %v2756
        %v5203 = vmax.f32 %v5202, %v2764
        %v5204 = vmax.f32 %v5203, %v2772
        %v5205 = vmax.f32 %v5204, %v2780
        %v5206 = vmax.f32 %v5205, %v2788
        %v5207 = vmax.f32 %v5206, %v2796
        %v5208 = vmax.f32 %v5207, %v2804
        %v5209 = vmax.f32 %v5208, %v2812
        %v5210 = vmax.f32 %v5209, %v2820
        %v5211 = vmax.f32 %v5210, %v2828
        %v5212 = vmax.f32 %v5211, %v2836
        %v5213 = vmax.f32 %v5212, %v2844
        %v5214 = vmax.f32 %v5213, %v2852
        %v5215 = vrot.slane %v5214, 4
        %v5216 = vmax.f32 %v5214, %v5215
        %v5217 = vrot.slane %v5216, 2
        %v5218 = vmax.f32 %v5216, %v5217
        %v5219 = vrot.slane %v5218, 1
        %v5220 = vmax.f32 %v5218, %v5219
        %v5221 = vmax.f32 %v2733, %v2741
        %v5222 = vmax.f32 %v5221, %v2749
        %v5223 = vmax.f32 %v5222, %v2757
        %v5224 = vmax.f32 %v5223, %v2765
        %v5225 = vmax.f32 %v5224, %v2773
        %v5226 = vmax.f32 %v5225, %v2781
        %v5227 = vmax.f32 %v5226, %v2789
        %v5228 = vmax.f32 %v5227, %v2797
        %v5229 = vmax.f32 %v5228, %v2805
        %v5230 = vmax.f32 %v5229, %v2813
        %v5231 = vmax.f32 %v5230, %v2821
        %v5232 = vmax.f32 %v5231, %v2829
        %v5233 = vmax.f32 %v5232, %v2837
        %v5234 = vmax.f32 %v5233, %v2845
        %v5235 = vmax.f32 %v5234, %v2853
        %v5236 = vrot.slane %v5235, 4
        %v5237 = vmax.f32 %v5235, %v5236
        %v5238 = vrot.slane %v5237, 2
        %v5239 = vmax.f32 %v5237, %v5238
        %v5240 = vrot.slane %v5239, 1
        %v5241 = vmax.f32 %v5239, %v5240
        %v5242 = vmax.f32 %v2734, %v2742
        %v5243 = vmax.f32 %v5242, %v2750
        %v5244 = vmax.f32 %v5243, %v2758
        %v5245 = vmax.f32 %v5244, %v2766
        %v5246 = vmax.f32 %v5245, %v2774
        %v5247 = vmax.f32 %v5246, %v2782
        %v5248 = vmax.f32 %v5247, %v2790
        %v5249 = vmax.f32 %v5248, %v2798
        %v5250 = vmax.f32 %v5249, %v2806
        %v5251 = vmax.f32 %v5250, %v2814
        %v5252 = vmax.f32 %v5251, %v2822
        %v5253 = vmax.f32 %v5252, %v2830
        %v5254 = vmax.f32 %v5253, %v2838
        %v5255 = vmax.f32 %v5254, %v2846
        %v5256 = vmax.f32 %v5255, %v2854
        %v5257 = vrot.slane %v5256, 4
        %v5258 = vmax.f32 %v5256, %v5257
        %v5259 = vrot.slane %v5258, 2
        %v5260 = vmax.f32 %v5258, %v5259
        %v5261 = vrot.slane %v5260, 1
        %v5262 = vmax.f32 %v5260, %v5261
        %v5263 = vmax.f32 %v2735, %v2743
        %v5264 = vmax.f32 %v5263, %v2751
        %v5265 = vmax.f32 %v5264, %v2759
        %v5266 = vmax.f32 %v5265, %v2767
        %v5267 = vmax.f32 %v5266, %v2775
        %v5268 = vmax.f32 %v5267, %v2783
        %v5269 = vmax.f32 %v5268, %v2791
        %v5270 = vmax.f32 %v5269, %v2799
        %v5271 = vmax.f32 %v5270, %v2807
        %v5272 = vmax.f32 %v5271, %v2815
        %v5273 = vmax.f32 %v5272, %v2823
        %v5274 = vmax.f32 %v5273, %v2831
        %v5275 = vmax.f32 %v5274, %v2839
        %v5276 = vmax.f32 %v5275, %v2847
        %v5277 = vmax.f32 %v5276, %v2855
        %v5278 = vrot.slane %v5277, 4
        %v5279 = vmax.f32 %v5277, %v5278
        %v5280 = vrot.slane %v5279, 2
        %v5281 = vmax.f32 %v5279, %v5280
        %v5282 = vrot.slane %v5281, 1
        %v5283 = vmax.f32 %v5281, %v5282
        %v5284 = vmax.f32 %v2736, %v2744
        %v5285 = vmax.f32 %v5284, %v2752
        %v5286 = vmax.f32 %v5285, %v2760
        %v5287 = vmax.f32 %v5286, %v2768
        %v5288 = vmax.f32 %v5287, %v2776
        %v5289 = vmax.f32 %v5288, %v2784
        %v5290 = vmax.f32 %v5289, %v2792
        %v5291 = vmax.f32 %v5290, %v2800
        %v5292 = vmax.f32 %v5291, %v2808
        %v5293 = vmax.f32 %v5292, %v2816
        %v5294 = vmax.f32 %v5293, %v2824
        %v5295 = vmax.f32 %v5294, %v2832
        %v5296 = vmax.f32 %v5295, %v2840
        %v5297 = vmax.f32 %v5296, %v2848
        %v5298 = vmax.f32 %v5297, %v2856
        %v5299 = vrot.slane %v5298, 4
        %v5300 = vmax.f32 %v5298, %v5299
        %v5301 = vrot.slane %v5300, 2
        %v5302 = vmax.f32 %v5300, %v5301
        %v5303 = vrot.slane %v5302, 1
        %v5304 = vmax.f32 %v5302, %v5303
        %v5305 = vmax.f32 %v2737, %v2745
        %v5306 = vmax.f32 %v5305, %v2753
        %v5307 = vmax.f32 %v5306, %v2761
        %v5308 = vmax.f32 %v5307, %v2769
        %v5309 = vmax.f32 %v5308, %v2777
        %v5310 = vmax.f32 %v5309, %v2785
        %v5311 = vmax.f32 %v5310, %v2793
        %v5312 = vmax.f32 %v5311, %v2801
        %v5313 = vmax.f32 %v5312, %v2809
        %v5314 = vmax.f32 %v5313, %v2817
        %v5315 = vmax.f32 %v5314, %v2825
        %v5316 = vmax.f32 %v5315, %v2833
        %v5317 = vmax.f32 %v5316, %v2841
        %v5318 = vmax.f32 %v5317, %v2849
        %v5319 = vmax.f32 %v5318, %v2857
        %v5320 = vrot.slane %v5319, 4
        %v5321 = vmax.f32 %v5319, %v5320
        %v5322 = vrot.slane %v5321, 2
        %v5323 = vmax.f32 %v5321, %v5322
        %v5324 = vrot.slane %v5323, 1
        %v5325 = vmax.f32 %v5323, %v5324
        %v5326 = vmax.f32 %v2738, %v2746
        %v5327 = vmax.f32 %v5326, %v2754
        %v5328 = vmax.f32 %v5327, %v2762
        %v5329 = vmax.f32 %v5328, %v2770
        %v5330 = vmax.f32 %v5329, %v2778
        %v5331 = vmax.f32 %v5330, %v2786
        %v5332 = vmax.f32 %v5331, %v2794
        %v5333 = vmax.f32 %v5332, %v2802
        %v5334 = vmax.f32 %v5333, %v2810
        %v5335 = vmax.f32 %v5334, %v2818
        %v5336 = vmax.f32 %v5335, %v2826
        %v5337 = vmax.f32 %v5336, %v2834
        %v5338 = vmax.f32 %v5337, %v2842
        %v5339 = vmax.f32 %v5338, %v2850
        %v5340 = vmax.f32 %v5339, %v2858
        %v5341 = vrot.slane %v5340, 4
        %v5342 = vmax.f32 %v5340, %v5341
        %v5343 = vrot.slane %v5342, 2
        %v5344 = vmax.f32 %v5342, %v5343
        %v5345 = vrot.slane %v5344, 1
        %v5346 = vmax.f32 %v5344, %v5345
        %v5347 = vmax.f32 %v2859, %v2867
        %v5348 = vmax.f32 %v5347, %v2875
        %v5349 = vmax.f32 %v5348, %v2883
        %v5350 = vmax.f32 %v5349, %v2891
        %v5351 = vmax.f32 %v5350, %v2899
        %v5352 = vmax.f32 %v5351, %v2907
        %v5353 = vmax.f32 %v5352, %v2915
        %v5354 = vmax.f32 %v5353, %v2923
        %v5355 = vmax.f32 %v5354, %v2931
        %v5356 = vmax.f32 %v5355, %v2939
        %v5357 = vmax.f32 %v5356, %v2947
        %v5358 = vmax.f32 %v5357, %v2955
        %v5359 = vmax.f32 %v5358, %v2963
        %v5360 = vmax.f32 %v5359, %v2971
        %v5361 = vmax.f32 %v5360, %v2979
        %v5362 = vrot.slane %v5361, 4
        %v5363 = vmax.f32 %v5361, %v5362
        %v5364 = vrot.slane %v5363, 2
        %v5365 = vmax.f32 %v5363, %v5364
        %v5366 = vrot.slane %v5365, 1
        %v5367 = vmax.f32 %v5365, %v5366
        %v5368 = vmax.f32 %v2860, %v2868
        %v5369 = vmax.f32 %v5368, %v2876
        %v5370 = vmax.f32 %v5369, %v2884
        %v5371 = vmax.f32 %v5370, %v2892
        %v5372 = vmax.f32 %v5371, %v2900
        %v5373 = vmax.f32 %v5372, %v2908
        %v5374 = vmax.f32 %v5373, %v2916
        %v5375 = vmax.f32 %v5374, %v2924
        %v5376 = vmax.f32 %v5375, %v2932
        %v5377 = vmax.f32 %v5376, %v2940
        %v5378 = vmax.f32 %v5377, %v2948
        %v5379 = vmax.f32 %v5378, %v2956
        %v5380 = vmax.f32 %v5379, %v2964
        %v5381 = vmax.f32 %v5380, %v2972
        %v5382 = vmax.f32 %v5381, %v2980
        %v5383 = vrot.slane %v5382, 4
        %v5384 = vmax.f32 %v5382, %v5383
        %v5385 = vrot.slane %v5384, 2
        %v5386 = vmax.f32 %v5384, %v5385
        %v5387 = vrot.slane %v5386, 1
        %v5388 = vmax.f32 %v5386, %v5387
        %v5389 = vmax.f32 %v2861, %v2869
        %v5390 = vmax.f32 %v5389, %v2877
        %v5391 = vmax.f32 %v5390, %v2885
        %v5392 = vmax.f32 %v5391, %v2893
        %v5393 = vmax.f32 %v5392, %v2901
        %v5394 = vmax.f32 %v5393, %v2909
        %v5395 = vmax.f32 %v5394, %v2917
        %v5396 = vmax.f32 %v5395, %v2925
        %v5397 = vmax.f32 %v5396, %v2933
        %v5398 = vmax.f32 %v5397, %v2941
        %v5399 = vmax.f32 %v5398, %v2949
        %v5400 = vmax.f32 %v5399, %v2957
        %v5401 = vmax.f32 %v5400, %v2965
        %v5402 = vmax.f32 %v5401, %v2973
        %v5403 = vmax.f32 %v5402, %v2981
        %v5404 = vrot.slane %v5403, 4
        %v5405 = vmax.f32 %v5403, %v5404
        %v5406 = vrot.slane %v5405, 2
        %v5407 = vmax.f32 %v5405, %v5406
        %v5408 = vrot.slane %v5407, 1
        %v5409 = vmax.f32 %v5407, %v5408
        %v5410 = vmax.f32 %v2862, %v2870
        %v5411 = vmax.f32 %v5410, %v2878
        %v5412 = vmax.f32 %v5411, %v2886
        %v5413 = vmax.f32 %v5412, %v2894
        %v5414 = vmax.f32 %v5413, %v2902
        %v5415 = vmax.f32 %v5414, %v2910
        %v5416 = vmax.f32 %v5415, %v2918
        %v5417 = vmax.f32 %v5416, %v2926
        %v5418 = vmax.f32 %v5417, %v2934
        %v5419 = vmax.f32 %v5418, %v2942
        %v5420 = vmax.f32 %v5419, %v2950
        %v5421 = vmax.f32 %v5420, %v2958
        %v5422 = vmax.f32 %v5421, %v2966
        %v5423 = vmax.f32 %v5422, %v2974
        %v5424 = vmax.f32 %v5423, %v2982
        %v5425 = vrot.slane %v5424, 4
        %v5426 = vmax.f32 %v5424, %v5425
        %v5427 = vrot.slane %v5426, 2
        %v5428 = vmax.f32 %v5426, %v5427
        %v5429 = vrot.slane %v5428, 1
        %v5430 = vmax.f32 %v5428, %v5429
        %v5431 = vmax.f32 %v2863, %v2871
        %v5432 = vmax.f32 %v5431, %v2879
        %v5433 = vmax.f32 %v5432, %v2887
        %v5434 = vmax.f32 %v5433, %v2895
        %v5435 = vmax.f32 %v5434, %v2903
        %v5436 = vmax.f32 %v5435, %v2911
        %v5437 = vmax.f32 %v5436, %v2919
        %v5438 = vmax.f32 %v5437, %v2927
        %v5439 = vmax.f32 %v5438, %v2935
        %v5440 = vmax.f32 %v5439, %v2943
        %v5441 = vmax.f32 %v5440, %v2951
        %v5442 = vmax.f32 %v5441, %v2959
        %v5443 = vmax.f32 %v5442, %v2967
        %v5444 = vmax.f32 %v5443, %v2975
        %v5445 = vmax.f32 %v5444, %v2983
        %v5446 = vrot.slane %v5445, 4
        %v5447 = vmax.f32 %v5445, %v5446
        %v5448 = vrot.slane %v5447, 2
        %v5449 = vmax.f32 %v5447, %v5448
        %v5450 = vrot.slane %v5449, 1
        %v5451 = vmax.f32 %v5449, %v5450
        %v5452 = vmax.f32 %v2864, %v2872
        %v5453 = vmax.f32 %v5452, %v2880
        %v5454 = vmax.f32 %v5453, %v2888
        %v5455 = vmax.f32 %v5454, %v2896
        %v5456 = vmax.f32 %v5455, %v2904
        %v5457 = vmax.f32 %v5456, %v2912
        %v5458 = vmax.f32 %v5457, %v2920
        %v5459 = vmax.f32 %v5458, %v2928
        %v5460 = vmax.f32 %v5459, %v2936
        %v5461 = vmax.f32 %v5460, %v2944
        %v5462 = vmax.f32 %v5461, %v2952
        %v5463 = vmax.f32 %v5462, %v2960
        %v5464 = vmax.f32 %v5463, %v2968
        %v5465 = vmax.f32 %v5464, %v2976
        %v5466 = vmax.f32 %v5465, %v2984
        %v5467 = vrot.slane %v5466, 4
        %v5468 = vmax.f32 %v5466, %v5467
        %v5469 = vrot.slane %v5468, 2
        %v5470 = vmax.f32 %v5468, %v5469
        %v5471 = vrot.slane %v5470, 1
        %v5472 = vmax.f32 %v5470, %v5471
        %v5473 = vmax.f32 %v2865, %v2873
        %v5474 = vmax.f32 %v5473, %v2881
        %v5475 = vmax.f32 %v5474, %v2889
        %v5476 = vmax.f32 %v5475, %v2897
        %v5477 = vmax.f32 %v5476, %v2905
        %v5478 = vmax.f32 %v5477, %v2913
        %v5479 = vmax.f32 %v5478, %v2921
        %v5480 = vmax.f32 %v5479, %v2929
        %v5481 = vmax.f32 %v5480, %v2937
        %v5482 = vmax.f32 %v5481, %v2945
        %v5483 = vmax.f32 %v5482, %v2953
        %v5484 = vmax.f32 %v5483, %v2961
        %v5485 = vmax.f32 %v5484, %v2969
        %v5486 = vmax.f32 %v5485, %v2977
        %v5487 = vmax.f32 %v5486, %v2985
        %v5488 = vrot.slane %v5487, 4
        %v5489 = vmax.f32 %v5487, %v5488
        %v5490 = vrot.slane %v5489, 2
        %v5491 = vmax.f32 %v5489, %v5490
        %v5492 = vrot.slane %v5491, 1
        %v5493 = vmax.f32 %v5491, %v5492
        %v5494 = vmax.f32 %v2866, %v2874
        %v5495 = vmax.f32 %v5494, %v2882
        %v5496 = vmax.f32 %v5495, %v2890
        %v5497 = vmax.f32 %v5496, %v2898
        %v5498 = vmax.f32 %v5497, %v2906
        %v5499 = vmax.f32 %v5498, %v2914
        %v5500 = vmax.f32 %v5499, %v2922
        %v5501 = vmax.f32 %v5500, %v2930
        %v5502 = vmax.f32 %v5501, %v2938
        %v5503 = vmax.f32 %v5502, %v2946
        %v5504 = vmax.f32 %v5503, %v2954
        %v5505 = vmax.f32 %v5504, %v2962
        %v5506 = vmax.f32 %v5505, %v2970
        %v5507 = vmax.f32 %v5506, %v2978
        %v5508 = vmax.f32 %v5507, %v2986
        %v5509 = vrot.slane %v5508, 4
        %v5510 = vmax.f32 %v5508, %v5509
        %v5511 = vrot.slane %v5510, 2
        %v5512 = vmax.f32 %v5510, %v5511
        %v5513 = vrot.slane %v5512, 1
        %v5514 = vmax.f32 %v5512, %v5513
        %v5515 = vmax.f32 %v2987, %v2995
        %v5516 = vmax.f32 %v5515, %v3003
        %v5517 = vmax.f32 %v5516, %v3011
        %v5518 = vmax.f32 %v5517, %v3019
        %v5519 = vmax.f32 %v5518, %v3027
        %v5520 = vmax.f32 %v5519, %v3035
        %v5521 = vmax.f32 %v5520, %v3043
        %v5522 = vmax.f32 %v5521, %v3051
        %v5523 = vmax.f32 %v5522, %v3059
        %v5524 = vmax.f32 %v5523, %v3067
        %v5525 = vmax.f32 %v5524, %v3075
        %v5526 = vmax.f32 %v5525, %v3083
        %v5527 = vmax.f32 %v5526, %v3091
        %v5528 = vmax.f32 %v5527, %v3099
        %v5529 = vmax.f32 %v5528, %v3107
        %v5530 = vrot.slane %v5529, 4
        %v5531 = vmax.f32 %v5529, %v5530
        %v5532 = vrot.slane %v5531, 2
        %v5533 = vmax.f32 %v5531, %v5532
        %v5534 = vrot.slane %v5533, 1
        %v5535 = vmax.f32 %v5533, %v5534
        %v5536 = vmax.f32 %v2988, %v2996
        %v5537 = vmax.f32 %v5536, %v3004
        %v5538 = vmax.f32 %v5537, %v3012
        %v5539 = vmax.f32 %v5538, %v3020
        %v5540 = vmax.f32 %v5539, %v3028
        %v5541 = vmax.f32 %v5540, %v3036
        %v5542 = vmax.f32 %v5541, %v3044
        %v5543 = vmax.f32 %v5542, %v3052
        %v5544 = vmax.f32 %v5543, %v3060
        %v5545 = vmax.f32 %v5544, %v3068
        %v5546 = vmax.f32 %v5545, %v3076
        %v5547 = vmax.f32 %v5546, %v3084
        %v5548 = vmax.f32 %v5547, %v3092
        %v5549 = vmax.f32 %v5548, %v3100
        %v5550 = vmax.f32 %v5549, %v3108
        %v5551 = vrot.slane %v5550, 4
        %v5552 = vmax.f32 %v5550, %v5551
        %v5553 = vrot.slane %v5552, 2
        %v5554 = vmax.f32 %v5552, %v5553
        %v5555 = vrot.slane %v5554, 1
        %v5556 = vmax.f32 %v5554, %v5555
        %v5557 = vmax.f32 %v2989, %v2997
        %v5558 = vmax.f32 %v5557, %v3005
        %v5559 = vmax.f32 %v5558, %v3013
        %v5560 = vmax.f32 %v5559, %v3021
        %v5561 = vmax.f32 %v5560, %v3029
        %v5562 = vmax.f32 %v5561, %v3037
        %v5563 = vmax.f32 %v5562, %v3045
        %v5564 = vmax.f32 %v5563, %v3053
        %v5565 = vmax.f32 %v5564, %v3061
        %v5566 = vmax.f32 %v5565, %v3069
        %v5567 = vmax.f32 %v5566, %v3077
        %v5568 = vmax.f32 %v5567, %v3085
        %v5569 = vmax.f32 %v5568, %v3093
        %v5570 = vmax.f32 %v5569, %v3101
        %v5571 = vmax.f32 %v5570, %v3109
        %v5572 = vrot.slane %v5571, 4
        %v5573 = vmax.f32 %v5571, %v5572
        %v5574 = vrot.slane %v5573, 2
        %v5575 = vmax.f32 %v5573, %v5574
        %v5576 = vrot.slane %v5575, 1
        %v5577 = vmax.f32 %v5575, %v5576
        %v5578 = vmax.f32 %v2990, %v2998
        %v5579 = vmax.f32 %v5578, %v3006
        %v5580 = vmax.f32 %v5579, %v3014
        %v5581 = vmax.f32 %v5580, %v3022
        %v5582 = vmax.f32 %v5581, %v3030
        %v5583 = vmax.f32 %v5582, %v3038
        %v5584 = vmax.f32 %v5583, %v3046
        %v5585 = vmax.f32 %v5584, %v3054
        %v5586 = vmax.f32 %v5585, %v3062
        %v5587 = vmax.f32 %v5586, %v3070
        %v5588 = vmax.f32 %v5587, %v3078
        %v5589 = vmax.f32 %v5588, %v3086
        %v5590 = vmax.f32 %v5589, %v3094
        %v5591 = vmax.f32 %v5590, %v3102
        %v5592 = vmax.f32 %v5591, %v3110
        %v5593 = vrot.slane %v5592, 4
        %v5594 = vmax.f32 %v5592, %v5593
        %v5595 = vrot.slane %v5594, 2
        %v5596 = vmax.f32 %v5594, %v5595
        %v5597 = vrot.slane %v5596, 1
        %v5598 = vmax.f32 %v5596, %v5597
        %v5599 = vmax.f32 %v2991, %v2999
        %v5600 = vmax.f32 %v5599, %v3007
        %v5601 = vmax.f32 %v5600, %v3015
        %v5602 = vmax.f32 %v5601, %v3023
        %v5603 = vmax.f32 %v5602, %v3031
        %v5604 = vmax.f32 %v5603, %v3039
        %v5605 = vmax.f32 %v5604, %v3047
        %v5606 = vmax.f32 %v5605, %v3055
        %v5607 = vmax.f32 %v5606, %v3063
        %v5608 = vmax.f32 %v5607, %v3071
        %v5609 = vmax.f32 %v5608, %v3079
        %v5610 = vmax.f32 %v5609, %v3087
        %v5611 = vmax.f32 %v5610, %v3095
        %v5612 = vmax.f32 %v5611, %v3103
        %v5613 = vmax.f32 %v5612, %v3111
        %v5614 = vrot.slane %v5613, 4
        %v5615 = vmax.f32 %v5613, %v5614
        %v5616 = vrot.slane %v5615, 2
        %v5617 = vmax.f32 %v5615, %v5616
        %v5618 = vrot.slane %v5617, 1
        %v5619 = vmax.f32 %v5617, %v5618
        %v5620 = vmax.f32 %v2992, %v3000
        %v5621 = vmax.f32 %v5620, %v3008
        %v5622 = vmax.f32 %v5621, %v3016
        %v5623 = vmax.f32 %v5622, %v3024
        %v5624 = vmax.f32 %v5623, %v3032
        %v5625 = vmax.f32 %v5624, %v3040
        %v5626 = vmax.f32 %v5625, %v3048
        %v5627 = vmax.f32 %v5626, %v3056
        %v5628 = vmax.f32 %v5627, %v3064
        %v5629 = vmax.f32 %v5628, %v3072
        %v5630 = vmax.f32 %v5629, %v3080
        %v5631 = vmax.f32 %v5630, %v3088
        %v5632 = vmax.f32 %v5631, %v3096
        %v5633 = vmax.f32 %v5632, %v3104
        %v5634 = vmax.f32 %v5633, %v3112
        %v5635 = vrot.slane %v5634, 4
        %v5636 = vmax.f32 %v5634, %v5635
        %v5637 = vrot.slane %v5636, 2
        %v5638 = vmax.f32 %v5636, %v5637
        %v5639 = vrot.slane %v5638, 1
        %v5640 = vmax.f32 %v5638, %v5639
        %v5641 = vmax.f32 %v2993, %v3001
        %v5642 = vmax.f32 %v5641, %v3009
        %v5643 = vmax.f32 %v5642, %v3017
        %v5644 = vmax.f32 %v5643, %v3025
        %v5645 = vmax.f32 %v5644, %v3033
        %v5646 = vmax.f32 %v5645, %v3041
        %v5647 = vmax.f32 %v5646, %v3049
        %v5648 = vmax.f32 %v5647, %v3057
        %v5649 = vmax.f32 %v5648, %v3065
        %v5650 = vmax.f32 %v5649, %v3073
        %v5651 = vmax.f32 %v5650, %v3081
        %v5652 = vmax.f32 %v5651, %v3089
        %v5653 = vmax.f32 %v5652, %v3097
        %v5654 = vmax.f32 %v5653, %v3105
        %v5655 = vmax.f32 %v5654, %v3113
        %v5656 = vrot.slane %v5655, 4
        %v5657 = vmax.f32 %v5655, %v5656
        %v5658 = vrot.slane %v5657, 2
        %v5659 = vmax.f32 %v5657, %v5658
        %v5660 = vrot.slane %v5659, 1
        %v5661 = vmax.f32 %v5659, %v5660
        %v5662 = vmax.f32 %v2994, %v3002
        %v5663 = vmax.f32 %v5662, %v3010
        %v5664 = vmax.f32 %v5663, %v3018
        %v5665 = vmax.f32 %v5664, %v3026
        %v5666 = vmax.f32 %v5665, %v3034
        %v5667 = vmax.f32 %v5666, %v3042
        %v5668 = vmax.f32 %v5667, %v3050
        %v5669 = vmax.f32 %v5668, %v3058
        %v5670 = vmax.f32 %v5669, %v3066
        %v5671 = vmax.f32 %v5670, %v3074
        %v5672 = vmax.f32 %v5671, %v3082
        %v5673 = vmax.f32 %v5672, %v3090
        %v5674 = vmax.f32 %v5673, %v3098
        %v5675 = vmax.f32 %v5674, %v3106
        %v5676 = vmax.f32 %v5675, %v3114
        %v5677 = vrot.slane %v5676, 4
        %v5678 = vmax.f32 %v5676, %v5677
        %v5679 = vrot.slane %v5678, 2
        %v5680 = vmax.f32 %v5678, %v5679
        %v5681 = vrot.slane %v5680, 1
        %v5682 = vmax.f32 %v5680, %v5681
        %v5683 = vmax.f32 %v3115, %v3123
        %v5684 = vmax.f32 %v5683, %v3131
        %v5685 = vmax.f32 %v5684, %v3139
        %v5686 = vmax.f32 %v5685, %v3147
        %v5687 = vmax.f32 %v5686, %v3155
        %v5688 = vmax.f32 %v5687, %v3163
        %v5689 = vmax.f32 %v5688, %v3171
        %v5690 = vmax.f32 %v5689, %v3179
        %v5691 = vmax.f32 %v5690, %v3187
        %v5692 = vmax.f32 %v5691, %v3195
        %v5693 = vmax.f32 %v5692, %v3203
        %v5694 = vmax.f32 %v5693, %v3211
        %v5695 = vmax.f32 %v5694, %v3219
        %v5696 = vmax.f32 %v5695, %v3227
        %v5697 = vmax.f32 %v5696, %v3235
        %v5698 = vrot.slane %v5697, 4
        %v5699 = vmax.f32 %v5697, %v5698
        %v5700 = vrot.slane %v5699, 2
        %v5701 = vmax.f32 %v5699, %v5700
        %v5702 = vrot.slane %v5701, 1
        %v5703 = vmax.f32 %v5701, %v5702
        %v5704 = vmax.f32 %v3116, %v3124
        %v5705 = vmax.f32 %v5704, %v3132
        %v5706 = vmax.f32 %v5705, %v3140
        %v5707 = vmax.f32 %v5706, %v3148
        %v5708 = vmax.f32 %v5707, %v3156
        %v5709 = vmax.f32 %v5708, %v3164
        %v5710 = vmax.f32 %v5709, %v3172
        %v5711 = vmax.f32 %v5710, %v3180
        %v5712 = vmax.f32 %v5711, %v3188
        %v5713 = vmax.f32 %v5712, %v3196
        %v5714 = vmax.f32 %v5713, %v3204
        %v5715 = vmax.f32 %v5714, %v3212
        %v5716 = vmax.f32 %v5715, %v3220
        %v5717 = vmax.f32 %v5716, %v3228
        %v5718 = vmax.f32 %v5717, %v3236
        %v5719 = vrot.slane %v5718, 4
        %v5720 = vmax.f32 %v5718, %v5719
        %v5721 = vrot.slane %v5720, 2
        %v5722 = vmax.f32 %v5720, %v5721
        %v5723 = vrot.slane %v5722, 1
        %v5724 = vmax.f32 %v5722, %v5723
        %v5725 = vmax.f32 %v3117, %v3125
        %v5726 = vmax.f32 %v5725, %v3133
        %v5727 = vmax.f32 %v5726, %v3141
        %v5728 = vmax.f32 %v5727, %v3149
        %v5729 = vmax.f32 %v5728, %v3157
        %v5730 = vmax.f32 %v5729, %v3165
        %v5731 = vmax.f32 %v5730, %v3173
        %v5732 = vmax.f32 %v5731, %v3181
        %v5733 = vmax.f32 %v5732, %v3189
        %v5734 = vmax.f32 %v5733, %v3197
        %v5735 = vmax.f32 %v5734, %v3205
        %v5736 = vmax.f32 %v5735, %v3213
        %v5737 = vmax.f32 %v5736, %v3221
        %v5738 = vmax.f32 %v5737, %v3229
        %v5739 = vmax.f32 %v5738, %v3237
        %v5740 = vrot.slane %v5739, 4
        %v5741 = vmax.f32 %v5739, %v5740
        %v5742 = vrot.slane %v5741, 2
        %v5743 = vmax.f32 %v5741, %v5742
        %v5744 = vrot.slane %v5743, 1
        %v5745 = vmax.f32 %v5743, %v5744
        %v5746 = vmax.f32 %v3118, %v3126
        %v5747 = vmax.f32 %v5746, %v3134
        %v5748 = vmax.f32 %v5747, %v3142
        %v5749 = vmax.f32 %v5748, %v3150
        %v5750 = vmax.f32 %v5749, %v3158
        %v5751 = vmax.f32 %v5750, %v3166
        %v5752 = vmax.f32 %v5751, %v3174
        %v5753 = vmax.f32 %v5752, %v3182
        %v5754 = vmax.f32 %v5753, %v3190
        %v5755 = vmax.f32 %v5754, %v3198
        %v5756 = vmax.f32 %v5755, %v3206
        %v5757 = vmax.f32 %v5756, %v3214
        %v5758 = vmax.f32 %v5757, %v3222
        %v5759 = vmax.f32 %v5758, %v3230
        %v5760 = vmax.f32 %v5759, %v3238
        %v5761 = vrot.slane %v5760, 4
        %v5762 = vmax.f32 %v5760, %v5761
        %v5763 = vrot.slane %v5762, 2
        %v5764 = vmax.f32 %v5762, %v5763
        %v5765 = vrot.slane %v5764, 1
        %v5766 = vmax.f32 %v5764, %v5765
        %v5767 = vmax.f32 %v3119, %v3127
        %v5768 = vmax.f32 %v5767, %v3135
        %v5769 = vmax.f32 %v5768, %v3143
        %v5770 = vmax.f32 %v5769, %v3151
        %v5771 = vmax.f32 %v5770, %v3159
        %v5772 = vmax.f32 %v5771, %v3167
        %v5773 = vmax.f32 %v5772, %v3175
        %v5774 = vmax.f32 %v5773, %v3183
        %v5775 = vmax.f32 %v5774, %v3191
        %v5776 = vmax.f32 %v5775, %v3199
        %v5777 = vmax.f32 %v5776, %v3207
        %v5778 = vmax.f32 %v5777, %v3215
        %v5779 = vmax.f32 %v5778, %v3223
        %v5780 = vmax.f32 %v5779, %v3231
        %v5781 = vmax.f32 %v5780, %v3239
        %v5782 = vrot.slane %v5781, 4
        %v5783 = vmax.f32 %v5781, %v5782
        %v5784 = vrot.slane %v5783, 2
        %v5785 = vmax.f32 %v5783, %v5784
        %v5786 = vrot.slane %v5785, 1
        %v5787 = vmax.f32 %v5785, %v5786
        %v5788 = vmax.f32 %v3120, %v3128
        %v5789 = vmax.f32 %v5788, %v3136
        %v5790 = vmax.f32 %v5789, %v3144
        %v5791 = vmax.f32 %v5790, %v3152
        %v5792 = vmax.f32 %v5791, %v3160
        %v5793 = vmax.f32 %v5792, %v3168
        %v5794 = vmax.f32 %v5793, %v3176
        %v5795 = vmax.f32 %v5794, %v3184
        %v5796 = vmax.f32 %v5795, %v3192
        %v5797 = vmax.f32 %v5796, %v3200
        %v5798 = vmax.f32 %v5797, %v3208
        %v5799 = vmax.f32 %v5798, %v3216
        %v5800 = vmax.f32 %v5799, %v3224
        %v5801 = vmax.f32 %v5800, %v3232
        %v5802 = vmax.f32 %v5801, %v3240
        %v5803 = vrot.slane %v5802, 4
        %v5804 = vmax.f32 %v5802, %v5803
        %v5805 = vrot.slane %v5804, 2
        %v5806 = vmax.f32 %v5804, %v5805
        %v5807 = vrot.slane %v5806, 1
        %v5808 = vmax.f32 %v5806, %v5807
        %v5809 = vmax.f32 %v3121, %v3129
        %v5810 = vmax.f32 %v5809, %v3137
        %v5811 = vmax.f32 %v5810, %v3145
        %v5812 = vmax.f32 %v5811, %v3153
        %v5813 = vmax.f32 %v5812, %v3161
        %v5814 = vmax.f32 %v5813, %v3169
        %v5815 = vmax.f32 %v5814, %v3177
        %v5816 = vmax.f32 %v5815, %v3185
        %v5817 = vmax.f32 %v5816, %v3193
        %v5818 = vmax.f32 %v5817, %v3201
        %v5819 = vmax.f32 %v5818, %v3209
        %v5820 = vmax.f32 %v5819, %v3217
        %v5821 = vmax.f32 %v5820, %v3225
        %v5822 = vmax.f32 %v5821, %v3233
        %v5823 = vmax.f32 %v5822, %v3241
        %v5824 = vrot.slane %v5823, 4
        %v5825 = vmax.f32 %v5823, %v5824
        %v5826 = vrot.slane %v5825, 2
        %v5827 = vmax.f32 %v5825, %v5826
        %v5828 = vrot.slane %v5827, 1
        %v5829 = vmax.f32 %v5827, %v5828
        %v5830 = vmax.f32 %v3122, %v3130
        %v5831 = vmax.f32 %v5830, %v3138
        %v5832 = vmax.f32 %v5831, %v3146
        %v5833 = vmax.f32 %v5832, %v3154
        %v5834 = vmax.f32 %v5833, %v3162
        %v5835 = vmax.f32 %v5834, %v3170
        %v5836 = vmax.f32 %v5835, %v3178
        %v5837 = vmax.f32 %v5836, %v3186
        %v5838 = vmax.f32 %v5837, %v3194
        %v5839 = vmax.f32 %v5838, %v3202
        %v5840 = vmax.f32 %v5839, %v3210
        %v5841 = vmax.f32 %v5840, %v3218
        %v5842 = vmax.f32 %v5841, %v3226
        %v5843 = vmax.f32 %v5842, %v3234
        %v5844 = vmax.f32 %v5843, %v3242
        %v5845 = vrot.slane %v5844, 4
        %v5846 = vmax.f32 %v5844, %v5845
        %v5847 = vrot.slane %v5846, 2
        %v5848 = vmax.f32 %v5846, %v5847
        %v5849 = vrot.slane %v5848, 1
        %v5850 = vmax.f32 %v5848, %v5849
        %v5851 = vmax.f32 %v3243, %v3251
        %v5852 = vmax.f32 %v5851, %v3259
        %v5853 = vmax.f32 %v5852, %v3267
        %v5854 = vmax.f32 %v5853, %v3275
        %v5855 = vmax.f32 %v5854, %v3283
        %v5856 = vmax.f32 %v5855, %v3291
        %v5857 = vmax.f32 %v5856, %v3299
        %v5858 = vmax.f32 %v5857, %v3307
        %v5859 = vmax.f32 %v5858, %v3315
        %v5860 = vmax.f32 %v5859, %v3323
        %v5861 = vmax.f32 %v5860, %v3331
        %v5862 = vmax.f32 %v5861, %v3339
        %v5863 = vmax.f32 %v5862, %v3347
        %v5864 = vmax.f32 %v5863, %v3355
        %v5865 = vmax.f32 %v5864, %v3363
        %v5866 = vrot.slane %v5865, 4
        %v5867 = vmax.f32 %v5865, %v5866
        %v5868 = vrot.slane %v5867, 2
        %v5869 = vmax.f32 %v5867, %v5868
        %v5870 = vrot.slane %v5869, 1
        %v5871 = vmax.f32 %v5869, %v5870
        %v5872 = vmax.f32 %v3244, %v3252
        %v5873 = vmax.f32 %v5872, %v3260
        %v5874 = vmax.f32 %v5873, %v3268
        %v5875 = vmax.f32 %v5874, %v3276
        %v5876 = vmax.f32 %v5875, %v3284
        %v5877 = vmax.f32 %v5876, %v3292
        %v5878 = vmax.f32 %v5877, %v3300
        %v5879 = vmax.f32 %v5878, %v3308
        %v5880 = vmax.f32 %v5879, %v3316
        %v5881 = vmax.f32 %v5880, %v3324
        %v5882 = vmax.f32 %v5881, %v3332
        %v5883 = vmax.f32 %v5882, %v3340
        %v5884 = vmax.f32 %v5883, %v3348
        %v5885 = vmax.f32 %v5884, %v3356
        %v5886 = vmax.f32 %v5885, %v3364
        %v5887 = vrot.slane %v5886, 4
        %v5888 = vmax.f32 %v5886, %v5887
        %v5889 = vrot.slane %v5888, 2
        %v5890 = vmax.f32 %v5888, %v5889
        %v5891 = vrot.slane %v5890, 1
        %v5892 = vmax.f32 %v5890, %v5891
        %v5893 = vmax.f32 %v3245, %v3253
        %v5894 = vmax.f32 %v5893, %v3261
        %v5895 = vmax.f32 %v5894, %v3269
        %v5896 = vmax.f32 %v5895, %v3277
        %v5897 = vmax.f32 %v5896, %v3285
        %v5898 = vmax.f32 %v5897, %v3293
        %v5899 = vmax.f32 %v5898, %v3301
        %v5900 = vmax.f32 %v5899, %v3309
        %v5901 = vmax.f32 %v5900, %v3317
        %v5902 = vmax.f32 %v5901, %v3325
        %v5903 = vmax.f32 %v5902, %v3333
        %v5904 = vmax.f32 %v5903, %v3341
        %v5905 = vmax.f32 %v5904, %v3349
        %v5906 = vmax.f32 %v5905, %v3357
        %v5907 = vmax.f32 %v5906, %v3365
        %v5908 = vrot.slane %v5907, 4
        %v5909 = vmax.f32 %v5907, %v5908
        %v5910 = vrot.slane %v5909, 2
        %v5911 = vmax.f32 %v5909, %v5910
        %v5912 = vrot.slane %v5911, 1
        %v5913 = vmax.f32 %v5911, %v5912
        %v5914 = vmax.f32 %v3246, %v3254
        %v5915 = vmax.f32 %v5914, %v3262
        %v5916 = vmax.f32 %v5915, %v3270
        %v5917 = vmax.f32 %v5916, %v3278
        %v5918 = vmax.f32 %v5917, %v3286
        %v5919 = vmax.f32 %v5918, %v3294
        %v5920 = vmax.f32 %v5919, %v3302
        %v5921 = vmax.f32 %v5920, %v3310
        %v5922 = vmax.f32 %v5921, %v3318
        %v5923 = vmax.f32 %v5922, %v3326
        %v5924 = vmax.f32 %v5923, %v3334
        %v5925 = vmax.f32 %v5924, %v3342
        %v5926 = vmax.f32 %v5925, %v3350
        %v5927 = vmax.f32 %v5926, %v3358
        %v5928 = vmax.f32 %v5927, %v3366
        %v5929 = vrot.slane %v5928, 4
        %v5930 = vmax.f32 %v5928, %v5929
        %v5931 = vrot.slane %v5930, 2
        %v5932 = vmax.f32 %v5930, %v5931
        %v5933 = vrot.slane %v5932, 1
        %v5934 = vmax.f32 %v5932, %v5933
        %v5935 = vmax.f32 %v3247, %v3255
        %v5936 = vmax.f32 %v5935, %v3263
        %v5937 = vmax.f32 %v5936, %v3271
        %v5938 = vmax.f32 %v5937, %v3279
        %v5939 = vmax.f32 %v5938, %v3287
        %v5940 = vmax.f32 %v5939, %v3295
        %v5941 = vmax.f32 %v5940, %v3303
        %v5942 = vmax.f32 %v5941, %v3311
        %v5943 = vmax.f32 %v5942, %v3319
        %v5944 = vmax.f32 %v5943, %v3327
        %v5945 = vmax.f32 %v5944, %v3335
        %v5946 = vmax.f32 %v5945, %v3343
        %v5947 = vmax.f32 %v5946, %v3351
        %v5948 = vmax.f32 %v5947, %v3359
        %v5949 = vmax.f32 %v5948, %v3367
        %v5950 = vrot.slane %v5949, 4
        %v5951 = vmax.f32 %v5949, %v5950
        %v5952 = vrot.slane %v5951, 2
        %v5953 = vmax.f32 %v5951, %v5952
        %v5954 = vrot.slane %v5953, 1
        %v5955 = vmax.f32 %v5953, %v5954
        %v5956 = vmax.f32 %v3248, %v3256
        %v5957 = vmax.f32 %v5956, %v3264
        %v5958 = vmax.f32 %v5957, %v3272
        %v5959 = vmax.f32 %v5958, %v3280
        %v5960 = vmax.f32 %v5959, %v3288
        %v5961 = vmax.f32 %v5960, %v3296
        %v5962 = vmax.f32 %v5961, %v3304
        %v5963 = vmax.f32 %v5962, %v3312
        %v5964 = vmax.f32 %v5963, %v3320
        %v5965 = vmax.f32 %v5964, %v3328
        %v5966 = vmax.f32 %v5965, %v3336
        %v5967 = vmax.f32 %v5966, %v3344
        %v5968 = vmax.f32 %v5967, %v3352
        %v5969 = vmax.f32 %v5968, %v3360
        %v5970 = vmax.f32 %v5969, %v3368
        %v5971 = vrot.slane %v5970, 4
        %v5972 = vmax.f32 %v5970, %v5971
        %v5973 = vrot.slane %v5972, 2
        %v5974 = vmax.f32 %v5972, %v5973
        %v5975 = vrot.slane %v5974, 1
        %v5976 = vmax.f32 %v5974, %v5975
        %v5977 = vmax.f32 %v3249, %v3257
        %v5978 = vmax.f32 %v5977, %v3265
        %v5979 = vmax.f32 %v5978, %v3273
        %v5980 = vmax.f32 %v5979, %v3281
        %v5981 = vmax.f32 %v5980, %v3289
        %v5982 = vmax.f32 %v5981, %v3297
        %v5983 = vmax.f32 %v5982, %v3305
        %v5984 = vmax.f32 %v5983, %v3313
        %v5985 = vmax.f32 %v5984, %v3321
        %v5986 = vmax.f32 %v5985, %v3329
        %v5987 = vmax.f32 %v5986, %v3337
        %v5988 = vmax.f32 %v5987, %v3345
        %v5989 = vmax.f32 %v5988, %v3353
        %v5990 = vmax.f32 %v5989, %v3361
        %v5991 = vmax.f32 %v5990, %v3369
        %v5992 = vrot.slane %v5991, 4
        %v5993 = vmax.f32 %v5991, %v5992
        %v5994 = vrot.slane %v5993, 2
        %v5995 = vmax.f32 %v5993, %v5994
        %v5996 = vrot.slane %v5995, 1
        %v5997 = vmax.f32 %v5995, %v5996
        %v5998 = vmax.f32 %v3250, %v3258
        %v5999 = vmax.f32 %v5998, %v3266
        %v6000 = vmax.f32 %v5999, %v3274
        %v6001 = vmax.f32 %v6000, %v3282
        %v6002 = vmax.f32 %v6001, %v3290
        %v6003 = vmax.f32 %v6002, %v3298
        %v6004 = vmax.f32 %v6003, %v3306
        %v6005 = vmax.f32 %v6004, %v3314
        %v6006 = vmax.f32 %v6005, %v3322
        %v6007 = vmax.f32 %v6006, %v3330
        %v6008 = vmax.f32 %v6007, %v3338
        %v6009 = vmax.f32 %v6008, %v3346
        %v6010 = vmax.f32 %v6009, %v3354
        %v6011 = vmax.f32 %v6010, %v3362
        %v6012 = vmax.f32 %v6011, %v3370
        %v6013 = vrot.slane %v6012, 4
        %v6014 = vmax.f32 %v6012, %v6013
        %v6015 = vrot.slane %v6014, 2
        %v6016 = vmax.f32 %v6014, %v6015
        %v6017 = vrot.slane %v6016, 1
        %v6018 = vmax.f32 %v6016, %v6017
        %v6019 = vmax.f32 %v3371, %v3379
        %v6020 = vmax.f32 %v6019, %v3387
        %v6021 = vmax.f32 %v6020, %v3395
        %v6022 = vmax.f32 %v6021, %v3403
        %v6023 = vmax.f32 %v6022, %v3411
        %v6024 = vmax.f32 %v6023, %v3419
        %v6025 = vmax.f32 %v6024, %v3427
        %v6026 = vmax.f32 %v6025, %v3435
        %v6027 = vmax.f32 %v6026, %v3443
        %v6028 = vmax.f32 %v6027, %v3451
        %v6029 = vmax.f32 %v6028, %v3459
        %v6030 = vmax.f32 %v6029, %v3467
        %v6031 = vmax.f32 %v6030, %v3475
        %v6032 = vmax.f32 %v6031, %v3483
        %v6033 = vmax.f32 %v6032, %v3491
        %v6034 = vrot.slane %v6033, 4
        %v6035 = vmax.f32 %v6033, %v6034
        %v6036 = vrot.slane %v6035, 2
        %v6037 = vmax.f32 %v6035, %v6036
        %v6038 = vrot.slane %v6037, 1
        %v6039 = vmax.f32 %v6037, %v6038
        %v6040 = vmax.f32 %v3372, %v3380
        %v6041 = vmax.f32 %v6040, %v3388
        %v6042 = vmax.f32 %v6041, %v3396
        %v6043 = vmax.f32 %v6042, %v3404
        %v6044 = vmax.f32 %v6043, %v3412
        %v6045 = vmax.f32 %v6044, %v3420
        %v6046 = vmax.f32 %v6045, %v3428
        %v6047 = vmax.f32 %v6046, %v3436
        %v6048 = vmax.f32 %v6047, %v3444
        %v6049 = vmax.f32 %v6048, %v3452
        %v6050 = vmax.f32 %v6049, %v3460
        %v6051 = vmax.f32 %v6050, %v3468
        %v6052 = vmax.f32 %v6051, %v3476
        %v6053 = vmax.f32 %v6052, %v3484
        %v6054 = vmax.f32 %v6053, %v3492
        %v6055 = vrot.slane %v6054, 4
        %v6056 = vmax.f32 %v6054, %v6055
        %v6057 = vrot.slane %v6056, 2
        %v6058 = vmax.f32 %v6056, %v6057
        %v6059 = vrot.slane %v6058, 1
        %v6060 = vmax.f32 %v6058, %v6059
        %v6061 = vmax.f32 %v3373, %v3381
        %v6062 = vmax.f32 %v6061, %v3389
        %v6063 = vmax.f32 %v6062, %v3397
        %v6064 = vmax.f32 %v6063, %v3405
        %v6065 = vmax.f32 %v6064, %v3413
        %v6066 = vmax.f32 %v6065, %v3421
        %v6067 = vmax.f32 %v6066, %v3429
        %v6068 = vmax.f32 %v6067, %v3437
        %v6069 = vmax.f32 %v6068, %v3445
        %v6070 = vmax.f32 %v6069, %v3453
        %v6071 = vmax.f32 %v6070, %v3461
        %v6072 = vmax.f32 %v6071, %v3469
        %v6073 = vmax.f32 %v6072, %v3477
        %v6074 = vmax.f32 %v6073, %v3485
        %v6075 = vmax.f32 %v6074, %v3493
        %v6076 = vrot.slane %v6075, 4
        %v6077 = vmax.f32 %v6075, %v6076
        %v6078 = vrot.slane %v6077, 2
        %v6079 = vmax.f32 %v6077, %v6078
        %v6080 = vrot.slane %v6079, 1
        %v6081 = vmax.f32 %v6079, %v6080
        %v6082 = vmax.f32 %v3374, %v3382
        %v6083 = vmax.f32 %v6082, %v3390
        %v6084 = vmax.f32 %v6083, %v3398
        %v6085 = vmax.f32 %v6084, %v3406
        %v6086 = vmax.f32 %v6085, %v3414
        %v6087 = vmax.f32 %v6086, %v3422
        %v6088 = vmax.f32 %v6087, %v3430
        %v6089 = vmax.f32 %v6088, %v3438
        %v6090 = vmax.f32 %v6089, %v3446
        %v6091 = vmax.f32 %v6090, %v3454
        %v6092 = vmax.f32 %v6091, %v3462
        %v6093 = vmax.f32 %v6092, %v3470
        %v6094 = vmax.f32 %v6093, %v3478
        %v6095 = vmax.f32 %v6094, %v3486
        %v6096 = vmax.f32 %v6095, %v3494
        %v6097 = vrot.slane %v6096, 4
        %v6098 = vmax.f32 %v6096, %v6097
        %v6099 = vrot.slane %v6098, 2
        %v6100 = vmax.f32 %v6098, %v6099
        %v6101 = vrot.slane %v6100, 1
        %v6102 = vmax.f32 %v6100, %v6101
        %v6103 = vmax.f32 %v3375, %v3383
        %v6104 = vmax.f32 %v6103, %v3391
        %v6105 = vmax.f32 %v6104, %v3399
        %v6106 = vmax.f32 %v6105, %v3407
        %v6107 = vmax.f32 %v6106, %v3415
        %v6108 = vmax.f32 %v6107, %v3423
        %v6109 = vmax.f32 %v6108, %v3431
        %v6110 = vmax.f32 %v6109, %v3439
        %v6111 = vmax.f32 %v6110, %v3447
        %v6112 = vmax.f32 %v6111, %v3455
        %v6113 = vmax.f32 %v6112, %v3463
        %v6114 = vmax.f32 %v6113, %v3471
        %v6115 = vmax.f32 %v6114, %v3479
        %v6116 = vmax.f32 %v6115, %v3487
        %v6117 = vmax.f32 %v6116, %v3495
        %v6118 = vrot.slane %v6117, 4
        %v6119 = vmax.f32 %v6117, %v6118
        %v6120 = vrot.slane %v6119, 2
        %v6121 = vmax.f32 %v6119, %v6120
        %v6122 = vrot.slane %v6121, 1
        %v6123 = vmax.f32 %v6121, %v6122
        %v6124 = vmax.f32 %v3376, %v3384
        %v6125 = vmax.f32 %v6124, %v3392
        %v6126 = vmax.f32 %v6125, %v3400
        %v6127 = vmax.f32 %v6126, %v3408
        %v6128 = vmax.f32 %v6127, %v3416
        %v6129 = vmax.f32 %v6128, %v3424
        %v6130 = vmax.f32 %v6129, %v3432
        %v6131 = vmax.f32 %v6130, %v3440
        %v6132 = vmax.f32 %v6131, %v3448
        %v6133 = vmax.f32 %v6132, %v3456
        %v6134 = vmax.f32 %v6133, %v3464
        %v6135 = vmax.f32 %v6134, %v3472
        %v6136 = vmax.f32 %v6135, %v3480
        %v6137 = vmax.f32 %v6136, %v3488
        %v6138 = vmax.f32 %v6137, %v3496
        %v6139 = vrot.slane %v6138, 4
        %v6140 = vmax.f32 %v6138, %v6139
        %v6141 = vrot.slane %v6140, 2
        %v6142 = vmax.f32 %v6140, %v6141
        %v6143 = vrot.slane %v6142, 1
        %v6144 = vmax.f32 %v6142, %v6143
        %v6145 = vmax.f32 %v3377, %v3385
        %v6146 = vmax.f32 %v6145, %v3393
        %v6147 = vmax.f32 %v6146, %v3401
        %v6148 = vmax.f32 %v6147, %v3409
        %v6149 = vmax.f32 %v6148, %v3417
        %v6150 = vmax.f32 %v6149, %v3425
        %v6151 = vmax.f32 %v6150, %v3433
        %v6152 = vmax.f32 %v6151, %v3441
        %v6153 = vmax.f32 %v6152, %v3449
        %v6154 = vmax.f32 %v6153, %v3457
        %v6155 = vmax.f32 %v6154, %v3465
        %v6156 = vmax.f32 %v6155, %v3473
        %v6157 = vmax.f32 %v6156, %v3481
        %v6158 = vmax.f32 %v6157, %v3489
        %v6159 = vmax.f32 %v6158, %v3497
        %v6160 = vrot.slane %v6159, 4
        %v6161 = vmax.f32 %v6159, %v6160
        %v6162 = vrot.slane %v6161, 2
        %v6163 = vmax.f32 %v6161, %v6162
        %v6164 = vrot.slane %v6163, 1
        %v6165 = vmax.f32 %v6163, %v6164
        %v6166 = vmax.f32 %v3378, %v3386
        %v6167 = vmax.f32 %v6166, %v3394
        %v6168 = vmax.f32 %v6167, %v3402
        %v6169 = vmax.f32 %v6168, %v3410
        %v6170 = vmax.f32 %v6169, %v3418
        %v6171 = vmax.f32 %v6170, %v3426
        %v6172 = vmax.f32 %v6171, %v3434
        %v6173 = vmax.f32 %v6172, %v3442
        %v6174 = vmax.f32 %v6173, %v3450
        %v6175 = vmax.f32 %v6174, %v3458
        %v6176 = vmax.f32 %v6175, %v3466
        %v6177 = vmax.f32 %v6176, %v3474
        %v6178 = vmax.f32 %v6177, %v3482
        %v6179 = vmax.f32 %v6178, %v3490
        %v6180 = vmax.f32 %v6179, %v3498
        %v6181 = vrot.slane %v6180, 4
        %v6182 = vmax.f32 %v6180, %v6181
        %v6183 = vrot.slane %v6182, 2
        %v6184 = vmax.f32 %v6182, %v6183
        %v6185 = vrot.slane %v6184, 1
        %v6186 = vmax.f32 %v6184, %v6185
        %v6187 = vpack.c.bf16 %v3540, %v3519
        %v6188 = vpack.c.bf16 %v3582, %v3561
        %v6189 = vpack.c.bf16 %v3624, %v3603
        %v6190 = vpack.c.bf16 %v3666, %v3645
        %v6191 = vpack.c.bf16 %v3708, %v3687
        %v6192 = vpack.c.bf16 %v3750, %v3729
        %v6193 = vpack.c.bf16 %v3792, %v3771
        %v6194 = vpack.c.bf16 %v3834, %v3813
        %v6195 = vpack.c.bf16 %v3876, %v3855
        %v6196 = vpack.c.bf16 %v3918, %v3897
        %v6197 = vpack.c.bf16 %v3960, %v3939
        %v6198 = vpack.c.bf16 %v4002, %v3981
        %v6199 = vpack.c.bf16 %v4044, %v4023
        %v6200 = vpack.c.bf16 %v4086, %v4065
        %v6201 = vpack.c.bf16 %v4128, %v4107
        %v6202 = vpack.c.bf16 %v4170, %v4149
        %v6203 = vpack.c.bf16 %v4212, %v4191
        %v6204 = vpack.c.bf16 %v4254, %v4233
        %v6205 = vpack.c.bf16 %v4296, %v4275
        %v6206 = vpack.c.bf16 %v4338, %v4317
        %v6207 = vpack.c.bf16 %v4380, %v4359
        %v6208 = vpack.c.bf16 %v4422, %v4401
        %v6209 = vpack.c.bf16 %v4464, %v4443
        %v6210 = vpack.c.bf16 %v4506, %v4485
        %v6211 = vpack.c.bf16 %v4548, %v4527
        %v6212 = vpack.c.bf16 %v4590, %v4569
        %v6213 = vpack.c.bf16 %v4632, %v4611
        %v6214 = vpack.c.bf16 %v4674, %v4653
        %v6215 = vpack.c.bf16 %v4716, %v4695
        %v6216 = vpack.c.bf16 %v4758, %v4737
        %v6217 = vpack.c.bf16 %v4800, %v4779
        %v6218 = vpack.c.bf16 %v4842, %v4821
        %v6219 = vpack.c.bf16 %v4884, %v4863
        %v6220 = vpack.c.bf16 %v4926, %v4905
        %v6221 = vpack.c.bf16 %v4968, %v4947
        %v6222 = vpack.c.bf16 %v5010, %v4989
        %v6223 = vpack.c.bf16 %v5052, %v5031
        %v6224 = vpack.c.bf16 %v5094, %v5073
        %v6225 = vpack.c.bf16 %v5136, %v5115
        %v6226 = vpack.c.bf16 %v5178, %v5157
        %v6227 = vpack.c.bf16 %v5220, %v5199
        %v6228 = vpack.c.bf16 %v5262, %v5241
        %v6229 = vpack.c.bf16 %v5304, %v5283
        %v6230 = vpack.c.bf16 %v5346, %v5325
        %v6231 = vpack.c.bf16 %v5388, %v5367
        %v6232 = vpack.c.bf16 %v5430, %v5409
        %v6233 = vpack.c.bf16 %v5472, %v5451
        %v6234 = vpack.c.bf16 %v5514, %v5493
        %v6235 = vpack.c.bf16 %v5556, %v5535
        %v6236 = vpack.c.bf16 %v5598, %v5577
        %v6237 = vpack.c.bf16 %v5640, %v5619
        %v6238 = vpack.c.bf16 %v5682, %v5661
        %v6239 = vpack.c.bf16 %v5724, %v5703
        %v6240 = vpack.c.bf16 %v5766, %v5745
        %v6241 = vpack.c.bf16 %v5808, %v5787
        %v6242 = vpack.c.bf16 %v5850, %v5829
        %v6243 = vpack.c.bf16 %v5892, %v5871
        %v6244 = vpack.c.bf16 %v5934, %v5913
        %v6245 = vpack.c.bf16 %v5976, %v5955
        %v6246 = vpack.c.bf16 %v6018, %v5997
        %v6247 = vpack.c.bf16 %v6060, %v6039
        %v6248 = vpack.c.bf16 %v6102, %v6081
        %v6249 = vpack.c.bf16 %v6144, %v6123
        %v6250 = vpack.c.bf16 %v6186, %v6165
        %v6251 = vunpack.c.l.bf16 %v6187
        %v6252 = vunpack.c.h.bf16 %v6187
        %v6253 = vunpack.c.l.bf16 %v6188
        %v6254 = vunpack.c.h.bf16 %v6188
        %v6255 = vunpack.c.l.bf16 %v6189
        %v6256 = vunpack.c.h.bf16 %v6189
        %v6257 = vunpack.c.l.bf16 %v6190
        %v6258 = vunpack.c.h.bf16 %v6190
        %v6259 = vunpack.c.l.bf16 %v6191
        %v6260 = vunpack.c.h.bf16 %v6191
        %v6261 = vunpack.c.l.bf16 %v6192
        %v6262 = vunpack.c.h.bf16 %v6192
        %v6263 = vunpack.c.l.bf16 %v6193
        %v6264 = vunpack.c.h.bf16 %v6193
        %v6265 = vunpack.c.l.bf16 %v6194
        %v6266 = vunpack.c.h.bf16 %v6194
        %v6267 = vunpack.c.l.bf16 %v6195
        %v6268 = vunpack.c.h.bf16 %v6195
        %v6269 = vunpack.c.l.bf16 %v6196
        %v6270 = vunpack.c.h.bf16 %v6196
        %v6271 = vunpack.c.l.bf16 %v6197
        %v6272 = vunpack.c.h.bf16 %v6197
        %v6273 = vunpack.c.l.bf16 %v6198
        %v6274 = vunpack.c.h.bf16 %v6198
        %v6275 = vunpack.c.l.bf16 %v6199
        %v6276 = vunpack.c.h.bf16 %v6199
        %v6277 = vunpack.c.l.bf16 %v6200
        %v6278 = vunpack.c.h.bf16 %v6200
        %v6279 = vunpack.c.l.bf16 %v6201
        %v6280 = vunpack.c.h.bf16 %v6201
        %v6281 = vunpack.c.l.bf16 %v6202
        %v6282 = vunpack.c.h.bf16 %v6202
        %v6283 = vunpack.c.l.bf16 %v6203
        %v6284 = vunpack.c.h.bf16 %v6203
        %v6285 = vunpack.c.l.bf16 %v6204
        %v6286 = vunpack.c.h.bf16 %v6204
        %v6287 = vunpack.c.l.bf16 %v6205
        %v6288 = vunpack.c.h.bf16 %v6205
        %v6289 = vunpack.c.l.bf16 %v6206
        %v6290 = vunpack.c.h.bf16 %v6206
        %v6291 = vunpack.c.l.bf16 %v6207
        %v6292 = vunpack.c.h.bf16 %v6207
        %v6293 = vunpack.c.l.bf16 %v6208
        %v6294 = vunpack.c.h.bf16 %v6208
        %v6295 = vunpack.c.l.bf16 %v6209
        %v6296 = vunpack.c.h.bf16 %v6209
        %v6297 = vunpack.c.l.bf16 %v6210
        %v6298 = vunpack.c.h.bf16 %v6210
        %v6299 = vunpack.c.l.bf16 %v6211
        %v6300 = vunpack.c.h.bf16 %v6211
        %v6301 = vunpack.c.l.bf16 %v6212
        %v6302 = vunpack.c.h.bf16 %v6212
        %v6303 = vunpack.c.l.bf16 %v6213
        %v6304 = vunpack.c.h.bf16 %v6213
        %v6305 = vunpack.c.l.bf16 %v6214
        %v6306 = vunpack.c.h.bf16 %v6214
        %v6307 = vunpack.c.l.bf16 %v6215
        %v6308 = vunpack.c.h.bf16 %v6215
        %v6309 = vunpack.c.l.bf16 %v6216
        %v6310 = vunpack.c.h.bf16 %v6216
        %v6311 = vunpack.c.l.bf16 %v6217
        %v6312 = vunpack.c.h.bf16 %v6217
        %v6313 = vunpack.c.l.bf16 %v6218
        %v6314 = vunpack.c.h.bf16 %v6218
        %v6315 = vunpack.c.l.bf16 %v6219
        %v6316 = vunpack.c.h.bf16 %v6219
        %v6317 = vunpack.c.l.bf16 %v6220
        %v6318 = vunpack.c.h.bf16 %v6220
        %v6319 = vunpack.c.l.bf16 %v6221
        %v6320 = vunpack.c.h.bf16 %v6221
        %v6321 = vunpack.c.l.bf16 %v6222
        %v6322 = vunpack.c.h.bf16 %v6222
        %v6323 = vunpack.c.l.bf16 %v6223
        %v6324 = vunpack.c.h.bf16 %v6223
        %v6325 = vunpack.c.l.bf16 %v6224
        %v6326 = vunpack.c.h.bf16 %v6224
        %v6327 = vunpack.c.l.bf16 %v6225
        %v6328 = vunpack.c.h.bf16 %v6225
        %v6329 = vunpack.c.l.bf16 %v6226
        %v6330 = vunpack.c.h.bf16 %v6226
        %v6331 = vunpack.c.l.bf16 %v6227
        %v6332 = vunpack.c.h.bf16 %v6227
        %v6333 = vunpack.c.l.bf16 %v6228
        %v6334 = vunpack.c.h.bf16 %v6228
        %v6335 = vunpack.c.l.bf16 %v6229
        %v6336 = vunpack.c.h.bf16 %v6229
        %v6337 = vunpack.c.l.bf16 %v6230
        %v6338 = vunpack.c.h.bf16 %v6230
        %v6339 = vunpack.c.l.bf16 %v6231
        %v6340 = vunpack.c.h.bf16 %v6231
        %v6341 = vunpack.c.l.bf16 %v6232
        %v6342 = vunpack.c.h.bf16 %v6232
        %v6343 = vunpack.c.l.bf16 %v6233
        %v6344 = vunpack.c.h.bf16 %v6233
        %v6345 = vunpack.c.l.bf16 %v6234
        %v6346 = vunpack.c.h.bf16 %v6234
        %v6347 = vunpack.c.l.bf16 %v6235
        %v6348 = vunpack.c.h.bf16 %v6235
        %v6349 = vunpack.c.l.bf16 %v6236
        %v6350 = vunpack.c.h.bf16 %v6236
        %v6351 = vunpack.c.l.bf16 %v6237
        %v6352 = vunpack.c.h.bf16 %v6237
        %v6353 = vunpack.c.l.bf16 %v6238
        %v6354 = vunpack.c.h.bf16 %v6238
        %v6355 = vunpack.c.l.bf16 %v6239
        %v6356 = vunpack.c.h.bf16 %v6239
        %v6357 = vunpack.c.l.bf16 %v6240
        %v6358 = vunpack.c.h.bf16 %v6240
        %v6359 = vunpack.c.l.bf16 %v6241
        %v6360 = vunpack.c.h.bf16 %v6241
        %v6361 = vunpack.c.l.bf16 %v6242
        %v6362 = vunpack.c.h.bf16 %v6242
        %v6363 = vunpack.c.l.bf16 %v6243
        %v6364 = vunpack.c.h.bf16 %v6243
        %v6365 = vunpack.c.l.bf16 %v6244
        %v6366 = vunpack.c.h.bf16 %v6244
        %v6367 = vunpack.c.l.bf16 %v6245
        %v6368 = vunpack.c.h.bf16 %v6245
        %v6369 = vunpack.c.l.bf16 %v6246
        %v6370 = vunpack.c.h.bf16 %v6246
        %v6371 = vunpack.c.l.bf16 %v6247
        %v6372 = vunpack.c.h.bf16 %v6247
        %v6373 = vunpack.c.l.bf16 %v6248
        %v6374 = vunpack.c.h.bf16 %v6248
        %v6375 = vunpack.c.l.bf16 %v6249
        %v6376 = vunpack.c.h.bf16 %v6249
        %v6377 = vunpack.c.l.bf16 %v6250
        %v6378 = vunpack.c.h.bf16 %v6250
        %v6379 = vld [vmem:[#allocation2] sm:$0xff]
        %v6380 = vld [vmem:[#allocation2 + $0x8] sm:$0xff]
        %v6381 = vld [vmem:[#allocation2 + $0x10] sm:$0xff]
        %v6382 = vld [vmem:[#allocation2 + $0x18] sm:$0xff]
        %v6383 = vld [vmem:[#allocation2 + $0x20] sm:$0xff]
        %v6384 = vld [vmem:[#allocation2 + $0x28] sm:$0xff]
        %v6385 = vld [vmem:[#allocation2 + $0x30] sm:$0xff]
        %v6386 = vld [vmem:[#allocation2 + $0x38] sm:$0xff]
        %v6387 = vld [vmem:[#allocation2 + $0x40] sm:$0xff]
        %v6388 = vld [vmem:[#allocation2 + $0x48] sm:$0xff]
        %v6389 = vld [vmem:[#allocation2 + $0x50] sm:$0xff]
        %v6390 = vld [vmem:[#allocation2 + $0x58] sm:$0xff]
        %v6391 = vld [vmem:[#allocation2 + $0x60] sm:$0xff]
        %v6392 = vld [vmem:[#allocation2 + $0x68] sm:$0xff]
        %v6393 = vld [vmem:[#allocation2 + $0x70] sm:$0xff]
        %v6394 = vld [vmem:[#allocation2 + $0x78] sm:$0xff]
        %vm6523 = vcmask 1041409
        %v6524 = vsel %vm6523, %v6259, %v6251
        %vm6525 = vcmask 1042434
        %v6526 = vsel %vm6525, %v6267, %v6524
        %vm6527 = vcmask 1043459
        %v6528 = vsel %vm6527, %v6275, %v6526
        %vm6529 = vcmask 1044484
        %v6530 = vsel %vm6529, %v6283, %v6528
        %vm6531 = vcmask 1045509
        %v6532 = vsel %vm6531, %v6291, %v6530
        %vm6533 = vcmask 1046534
        %v6534 = vsel %vm6533, %v6299, %v6532
        %vm6535 = vcmask 1047559
        %v6536 = vsel %vm6535, %v6307, %v6534
        %v6537 = vsel %vm6523, %v6260, %v6252
        %v6538 = vsel %vm6525, %v6268, %v6537
        %v6539 = vsel %vm6527, %v6276, %v6538
        %v6540 = vsel %vm6529, %v6284, %v6539
        %v6541 = vsel %vm6531, %v6292, %v6540
        %v6542 = vsel %vm6533, %v6300, %v6541
        %v6543 = vsel %vm6535, %v6308, %v6542
        %v6544 = vsel %vm6523, %v6261, %v6253
        %v6545 = vsel %vm6525, %v6269, %v6544
        %v6546 = vsel %vm6527, %v6277, %v6545
        %v6547 = vsel %vm6529, %v6285, %v6546
        %v6548 = vsel %vm6531, %v6293, %v6547
        %v6549 = vsel %vm6533, %v6301, %v6548
        %v6550 = vsel %vm6535, %v6309, %v6549
        %v6551 = vsel %vm6523, %v6262, %v6254
        %v6552 = vsel %vm6525, %v6270, %v6551
        %v6553 = vsel %vm6527, %v6278, %v6552
        %v6554 = vsel %vm6529, %v6286, %v6553
        %v6555 = vsel %vm6531, %v6294, %v6554
        %v6556 = vsel %vm6533, %v6302, %v6555
        %v6557 = vsel %vm6535, %v6310, %v6556
        %v6558 = vsel %vm6523, %v6263, %v6255
        %v6559 = vsel %vm6525, %v6271, %v6558
        %v6560 = vsel %vm6527, %v6279, %v6559
        %v6561 = vsel %vm6529, %v6287, %v6560
        %v6562 = vsel %vm6531, %v6295, %v6561
        %v6563 = vsel %vm6533, %v6303, %v6562
        %v6564 = vsel %vm6535, %v6311, %v6563
        %v6565 = vsel %vm6523, %v6264, %v6256
        %v6566 = vsel %vm6525, %v6272, %v6565
        %v6567 = vsel %vm6527, %v6280, %v6566
        %v6568 = vsel %vm6529, %v6288, %v6567
        %v6569 = vsel %vm6531, %v6296, %v6568
        %v6570 = vsel %vm6533, %v6304, %v6569
        %v6571 = vsel %vm6535, %v6312, %v6570
        %v6572 = vsel %vm6523, %v6265, %v6257
        %v6573 = vsel %vm6525, %v6273, %v6572
        %v6574 = vsel %vm6527, %v6281, %v6573
        %v6575 = vsel %vm6529, %v6289, %v6574
        %v6576 = vsel %vm6531, %v6297, %v6575
        %v6577 = vsel %vm6533, %v6305, %v6576
        %v6578 = vsel %vm6535, %v6313, %v6577
        %v6579 = vsel %vm6523, %v6266, %v6258
        %v6580 = vsel %vm6525, %v6274, %v6579
        %v6581 = vsel %vm6527, %v6282, %v6580
        %v6582 = vsel %vm6529, %v6290, %v6581
        %v6583 = vsel %vm6531, %v6298, %v6582
        %v6584 = vsel %vm6533, %v6306, %v6583
        %v6585 = vsel %vm6535, %v6314, %v6584
        %v6586 = vsel %vm6523, %v6323, %v6315
        %v6587 = vsel %vm6525, %v6331, %v6586
        %v6588 = vsel %vm6527, %v6339, %v6587
        %v6589 = vsel %vm6529, %v6347, %v6588
        %v6590 = vsel %vm6531, %v6355, %v6589
        %v6591 = vsel %vm6533, %v6363, %v6590
        %v6592 = vsel %vm6535, %v6371, %v6591
        %v6593 = vsel %vm6523, %v6324, %v6316
        %v6594 = vsel %vm6525, %v6332, %v6593
        %v6595 = vsel %vm6527, %v6340, %v6594
        %v6596 = vsel %vm6529, %v6348, %v6595
        %v6597 = vsel %vm6531, %v6356, %v6596
        %v6598 = vsel %vm6533, %v6364, %v6597
        %v6599 = vsel %vm6535, %v6372, %v6598
        %v6600 = vsel %vm6523, %v6325, %v6317
        %v6601 = vsel %vm6525, %v6333, %v6600
        %v6602 = vsel %vm6527, %v6341, %v6601
        %v6603 = vsel %vm6529, %v6349, %v6602
        %v6604 = vsel %vm6531, %v6357, %v6603
        %v6605 = vsel %vm6533, %v6365, %v6604
        %v6606 = vsel %vm6535, %v6373, %v6605
        %v6607 = vsel %vm6523, %v6326, %v6318
        %v6608 = vsel %vm6525, %v6334, %v6607
        %v6609 = vsel %vm6527, %v6342, %v6608
        %v6610 = vsel %vm6529, %v6350, %v6609
        %v6611 = vsel %vm6531, %v6358, %v6610
        %v6612 = vsel %vm6533, %v6366, %v6611
        %v6613 = vsel %vm6535, %v6374, %v6612
        %v6614 = vsel %vm6523, %v6327, %v6319
        %v6615 = vsel %vm6525, %v6335, %v6614
        %v6616 = vsel %vm6527, %v6343, %v6615
        %v6617 = vsel %vm6529, %v6351, %v6616
        %v6618 = vsel %vm6531, %v6359, %v6617
        %v6619 = vsel %vm6533, %v6367, %v6618
        %v6620 = vsel %vm6535, %v6375, %v6619
        %v6621 = vsel %vm6523, %v6328, %v6320
        %v6622 = vsel %vm6525, %v6336, %v6621
        %v6623 = vsel %vm6527, %v6344, %v6622
        %v6624 = vsel %vm6529, %v6352, %v6623
        %v6625 = vsel %vm6531, %v6360, %v6624
        %v6626 = vsel %vm6533, %v6368, %v6625
        %v6627 = vsel %vm6535, %v6376, %v6626
        %v6628 = vsel %vm6523, %v6329, %v6321
        %v6629 = vsel %vm6525, %v6337, %v6628
        %v6630 = vsel %vm6527, %v6345, %v6629
        %v6631 = vsel %vm6529, %v6353, %v6630
        %v6632 = vsel %vm6531, %v6361, %v6631
        %v6633 = vsel %vm6533, %v6369, %v6632
        %v6634 = vsel %vm6535, %v6377, %v6633
        %v6635 = vsel %vm6523, %v6330, %v6322
        %v6636 = vsel %vm6525, %v6338, %v6635
        %v6637 = vsel %vm6527, %v6346, %v6636
        %v6638 = vsel %vm6529, %v6354, %v6637
        %v6639 = vsel %vm6531, %v6362, %v6638
        %v6640 = vsel %vm6533, %v6370, %v6639
        %v6641 = vsel %vm6535, %v6378, %v6640
        %v6658 = vmax.f32 %v6379, %v6536
        %v6659 = vmax.f32 %v6380, %v6543
        %v6660 = vmax.f32 %v6381, %v6550
        %v6661 = vmax.f32 %v6382, %v6557
        %v6662 = vmax.f32 %v6383, %v6564
        %v6663 = vmax.f32 %v6384, %v6571
        %v6664 = vmax.f32 %v6385, %v6578
        %v6665 = vmax.f32 %v6386, %v6585
        %v6666 = vmax.f32 %v6387, %v6592
        %v6667 = vmax.f32 %v6388, %v6599
        %v6668 = vmax.f32 %v6389, %v6606
        %v6669 = vmax.f32 %v6390, %v6613
        %v6670 = vmax.f32 %v6391, %v6620
        %v6671 = vmax.f32 %v6392, %v6627
        %v6672 = vmax.f32 %v6393, %v6634
        %v6673 = vmax.f32 %v6394, %v6641
        %6674 = vst [vmem:[#allocation2] sm:$0xff] %v6658
        %6675 = vst [vmem:[#allocation2 + $0x8] sm:$0xff] %v6659
        %6676 = vst [vmem:[#allocation2 + $0x10] sm:$0xff] %v6660
        %6677 = vst [vmem:[#allocation2 + $0x18] sm:$0xff] %v6661
        %6678 = vst [vmem:[#allocation2 + $0x20] sm:$0xff] %v6662
        %6679 = vst [vmem:[#allocation2 + $0x28] sm:$0xff] %v6663
        %6680 = vst [vmem:[#allocation2 + $0x30] sm:$0xff] %v6664
        %6681 = vst [vmem:[#allocation2 + $0x38] sm:$0xff] %v6665
        %6682 = vst [vmem:[#allocation2 + $0x40] sm:$0xff] %v6666
        %6683 = vst [vmem:[#allocation2 + $0x48] sm:$0xff] %v6667
        %6684 = vst [vmem:[#allocation2 + $0x50] sm:$0xff] %v6668
        %6685 = vst [vmem:[#allocation2 + $0x58] sm:$0xff] %v6669
        %6686 = vst [vmem:[#allocation2 + $0x60] sm:$0xff] %v6670
        %6687 = vst [vmem:[#allocation2 + $0x68] sm:$0xff] %v6671
        %6688 = vst [vmem:[#allocation2 + $0x70] sm:$0xff] %v6672
        %6689 = vst [vmem:[#allocation2 + $0x78] sm:$0xff] %v6673
        %p6690 = scmp.eq.s32.totalorder %s25, 1
        // Predicated region
        $region81: #{tpu_custom_call.1} parent=47 // pred_check
          %p6691 = pneg %p6690
        $region82: #{tpu_custom_call.1} parent=47 // pred_check_branch
          %6693 = sbr.rel (%p6691) target = $region84
        $region83: #{tpu_custom_call.1} parent=47 // pred_region
          %v6694 = vld [vmem:[#allocation2] sm:$0xff]
          %v6695 = vld [vmem:[#allocation2 + $0x8] sm:$0xff]
          %v6696 = vld [vmem:[#allocation2 + $0x10] sm:$0xff]
          %v6697 = vld [vmem:[#allocation2 + $0x18] sm:$0xff]
          %v6698 = vld [vmem:[#allocation2 + $0x20] sm:$0xff]
          %v6699 = vld [vmem:[#allocation2 + $0x28] sm:$0xff]
          %v6700 = vld [vmem:[#allocation2 + $0x30] sm:$0xff]
          %v6701 = vld [vmem:[#allocation2 + $0x38] sm:$0xff]
          %v6702 = vld [vmem:[#allocation2 + $0x40] sm:$0xff]
          %v6703 = vld [vmem:[#allocation2 + $0x48] sm:$0xff]
          %v6704 = vld [vmem:[#allocation2 + $0x50] sm:$0xff]
          %v6705 = vld [vmem:[#allocation2 + $0x58] sm:$0xff]
          %v6706 = vld [vmem:[#allocation2 + $0x60] sm:$0xff]
          %v6707 = vld [vmem:[#allocation2 + $0x68] sm:$0xff]
          %v6708 = vld [vmem:[#allocation2 + $0x70] sm:$0xff]
          %v6709 = vld [vmem:[#allocation2 + $0x78] sm:$0xff]
          %v6710 = vpack.c.bf16 %v6702, %v6694
          %v6711 = vpack.c.bf16 %v6703, %v6695
          %v6712 = vpack.c.bf16 %v6704, %v6696
          %v6713 = vpack.c.bf16 %v6705, %v6697
          %v6714 = vpack.c.bf16 %v6706, %v6698
          %v6715 = vpack.c.bf16 %v6707, %v6699
          %v6716 = vpack.c.bf16 %v6708, %v6700
          %v6717 = vpack.c.bf16 %v6709, %v6701
          %v6718 = vld [vmem:[#allocation6] sm:$0xff]
          %v6719 = vld [vmem:[#allocation6 + $0x8] sm:$0xff]
          %v6720 = vld [vmem:[#allocation6 + $0x10] sm:$0xff]
          %v6721 = vld [vmem:[#allocation6 + $0x18] sm:$0xff]
          %v6722 = vld [vmem:[#allocation6 + $0x20] sm:$0xff]
          %v6723 = vld [vmem:[#allocation6 + $0x28] sm:$0xff]
          %v6724 = vld [vmem:[#allocation6 + $0x30] sm:$0xff]
          %v6725 = vld [vmem:[#allocation6 + $0x38] sm:$0xff]
          %v6726 = vld [vmem:[#allocation6 + $0x40] sm:$0xff]
          %v6727 = vld [vmem:[#allocation6 + $0x48] sm:$0xff]
          %v6728 = vld [vmem:[#allocation6 + $0x50] sm:$0xff]
          %v6729 = vld [vmem:[#allocation6 + $0x58] sm:$0xff]
          %v6730 = vld [vmem:[#allocation6 + $0x60] sm:$0xff]
          %v6731 = vld [vmem:[#allocation6 + $0x68] sm:$0xff]
          %v6732 = vld [vmem:[#allocation6 + $0x70] sm:$0xff]
          %v6733 = vld [vmem:[#allocation6 + $0x78] sm:$0xff]
          %v6734 = vld [vmem:[#allocation6 + $0x80] sm:$0xff]
          %v6735 = vld [vmem:[#allocation6 + $0x88] sm:$0xff]
          %v6736 = vld [vmem:[#allocation6 + $0x90] sm:$0xff]
          %v6737 = vld [vmem:[#allocation6 + $0x98] sm:$0xff]
          %v6738 = vld [vmem:[#allocation6 + $0xa0] sm:$0xff]
          %v6739 = vld [vmem:[#allocation6 + $0xa8] sm:$0xff]
          %v6740 = vld [vmem:[#allocation6 + $0xb0] sm:$0xff]
          %v6741 = vld [vmem:[#allocation6 + $0xb8] sm:$0xff]
          %v6742 = vld [vmem:[#allocation6 + $0xc0] sm:$0xff]
          %v6743 = vld [vmem:[#allocation6 + $0xc8] sm:$0xff]
          %v6744 = vld [vmem:[#allocation6 + $0xd0] sm:$0xff]
          %v6745 = vld [vmem:[#allocation6 + $0xd8] sm:$0xff]
          %v6746 = vld [vmem:[#allocation6 + $0xe0] sm:$0xff]
          %v6747 = vld [vmem:[#allocation6 + $0xe8] sm:$0xff]
          %v6748 = vld [vmem:[#allocation6 + $0xf0] sm:$0xff]
          %v6749 = vld [vmem:[#allocation6 + $0xf8] sm:$0xff]
          %v6750 = vld [vmem:[#allocation6 + $0x100] sm:$0xff]
          %v6751 = vld [vmem:[#allocation6 + $0x108] sm:$0xff]
          %v6752 = vld [vmem:[#allocation6 + $0x110] sm:$0xff]
          %v6753 = vld [vmem:[#allocation6 + $0x118] sm:$0xff]
          %v6754 = vld [vmem:[#allocation6 + $0x120] sm:$0xff]
          %v6755 = vld [vmem:[#allocation6 + $0x128] sm:$0xff]
          %v6756 = vld [vmem:[#allocation6 + $0x130] sm:$0xff]
          %v6757 = vld [vmem:[#allocation6 + $0x138] sm:$0xff]
          %v6758 = vld [vmem:[#allocation6 + $0x140] sm:$0xff]
          %v6759 = vld [vmem:[#allocation6 + $0x148] sm:$0xff]
          %v6760 = vld [vmem:[#allocation6 + $0x150] sm:$0xff]
          %v6761 = vld [vmem:[#allocation6 + $0x158] sm:$0xff]
          %v6762 = vld [vmem:[#allocation6 + $0x160] sm:$0xff]
          %v6763 = vld [vmem:[#allocation6 + $0x168] sm:$0xff]
          %v6764 = vld [vmem:[#allocation6 + $0x170] sm:$0xff]
          %v6765 = vld [vmem:[#allocation6 + $0x178] sm:$0xff]
          %v6766 = vld [vmem:[#allocation6 + $0x180] sm:$0xff]
          %v6767 = vld [vmem:[#allocation6 + $0x188] sm:$0xff]
          %v6768 = vld [vmem:[#allocation6 + $0x190] sm:$0xff]
          %v6769 = vld [vmem:[#allocation6 + $0x198] sm:$0xff]
          %v6770 = vld [vmem:[#allocation6 + $0x1a0] sm:$0xff]
          %v6771 = vld [vmem:[#allocation6 + $0x1a8] sm:$0xff]
          %v6772 = vld [vmem:[#allocation6 + $0x1b0] sm:$0xff]
          %v6773 = vld [vmem:[#allocation6 + $0x1b8] sm:$0xff]
          %v6774 = vld [vmem:[#allocation6 + $0x1c0] sm:$0xff]
          %v6775 = vld [vmem:[#allocation6 + $0x1c8] sm:$0xff]
          %v6776 = vld [vmem:[#allocation6 + $0x1d0] sm:$0xff]
          %v6777 = vld [vmem:[#allocation6 + $0x1d8] sm:$0xff]
          %v6778 = vld [vmem:[#allocation6 + $0x1e0] sm:$0xff]
          %v6779 = vld [vmem:[#allocation6 + $0x1e8] sm:$0xff]
          %v6780 = vld [vmem:[#allocation6 + $0x1f0] sm:$0xff]
          %v6781 = vld [vmem:[#allocation6 + $0x1f8] sm:$0xff]
          %v6782 = vld [vmem:[#allocation6 + $0x200] sm:$0xff]
          %v6783 = vld [vmem:[#allocation6 + $0x208] sm:$0xff]
          %v6784 = vld [vmem:[#allocation6 + $0x210] sm:$0xff]
          %v6785 = vld [vmem:[#allocation6 + $0x218] sm:$0xff]
          %v6786 = vld [vmem:[#allocation6 + $0x220] sm:$0xff]
          %v6787 = vld [vmem:[#allocation6 + $0x228] sm:$0xff]
          %v6788 = vld [vmem:[#allocation6 + $0x230] sm:$0xff]
          %v6789 = vld [vmem:[#allocation6 + $0x238] sm:$0xff]
          %v6790 = vld [vmem:[#allocation6 + $0x240] sm:$0xff]
          %v6791 = vld [vmem:[#allocation6 + $0x248] sm:$0xff]
          %v6792 = vld [vmem:[#allocation6 + $0x250] sm:$0xff]
          %v6793 = vld [vmem:[#allocation6 + $0x258] sm:$0xff]
          %v6794 = vld [vmem:[#allocation6 + $0x260] sm:$0xff]
          %v6795 = vld [vmem:[#allocation6 + $0x268] sm:$0xff]
          %v6796 = vld [vmem:[#allocation6 + $0x270] sm:$0xff]
          %v6797 = vld [vmem:[#allocation6 + $0x278] sm:$0xff]
          %v6798 = vld [vmem:[#allocation6 + $0x280] sm:$0xff]
          %v6799 = vld [vmem:[#allocation6 + $0x288] sm:$0xff]
          %v6800 = vld [vmem:[#allocation6 + $0x290] sm:$0xff]
          %v6801 = vld [vmem:[#allocation6 + $0x298] sm:$0xff]
          %v6802 = vld [vmem:[#allocation6 + $0x2a0] sm:$0xff]
          %v6803 = vld [vmem:[#allocation6 + $0x2a8] sm:$0xff]
          %v6804 = vld [vmem:[#allocation6 + $0x2b0] sm:$0xff]
          %v6805 = vld [vmem:[#allocation6 + $0x2b8] sm:$0xff]
          %v6806 = vld [vmem:[#allocation6 + $0x2c0] sm:$0xff]
          %v6807 = vld [vmem:[#allocation6 + $0x2c8] sm:$0xff]
          %v6808 = vld [vmem:[#allocation6 + $0x2d0] sm:$0xff]
          %v6809 = vld [vmem:[#allocation6 + $0x2d8] sm:$0xff]
          %v6810 = vld [vmem:[#allocation6 + $0x2e0] sm:$0xff]
          %v6811 = vld [vmem:[#allocation6 + $0x2e8] sm:$0xff]
          %v6812 = vld [vmem:[#allocation6 + $0x2f0] sm:$0xff]
          %v6813 = vld [vmem:[#allocation6 + $0x2f8] sm:$0xff]
          %v6814 = vld [vmem:[#allocation6 + $0x300] sm:$0xff]
          %v6815 = vld [vmem:[#allocation6 + $0x308] sm:$0xff]
          %v6816 = vld [vmem:[#allocation6 + $0x310] sm:$0xff]
          %v6817 = vld [vmem:[#allocation6 + $0x318] sm:$0xff]
          %v6818 = vld [vmem:[#allocation6 + $0x320] sm:$0xff]
          %v6819 = vld [vmem:[#allocation6 + $0x328] sm:$0xff]
          %v6820 = vld [vmem:[#allocation6 + $0x330] sm:$0xff]
          %v6821 = vld [vmem:[#allocation6 + $0x338] sm:$0xff]
          %v6822 = vld [vmem:[#allocation6 + $0x340] sm:$0xff]
          %v6823 = vld [vmem:[#allocation6 + $0x348] sm:$0xff]
          %v6824 = vld [vmem:[#allocation6 + $0x350] sm:$0xff]
          %v6825 = vld [vmem:[#allocation6 + $0x358] sm:$0xff]
          %v6826 = vld [vmem:[#allocation6 + $0x360] sm:$0xff]
          %v6827 = vld [vmem:[#allocation6 + $0x368] sm:$0xff]
          %v6828 = vld [vmem:[#allocation6 + $0x370] sm:$0xff]
          %v6829 = vld [vmem:[#allocation6 + $0x378] sm:$0xff]
          %v6830 = vld [vmem:[#allocation6 + $0x380] sm:$0xff]
          %v6831 = vld [vmem:[#allocation6 + $0x388] sm:$0xff]
          %v6832 = vld [vmem:[#allocation6 + $0x390] sm:$0xff]
          %v6833 = vld [vmem:[#allocation6 + $0x398] sm:$0xff]
          %v6834 = vld [vmem:[#allocation6 + $0x3a0] sm:$0xff]
          %v6835 = vld [vmem:[#allocation6 + $0x3a8] sm:$0xff]
          %v6836 = vld [vmem:[#allocation6 + $0x3b0] sm:$0xff]
          %v6837 = vld [vmem:[#allocation6 + $0x3b8] sm:$0xff]
          %v6838 = vld [vmem:[#allocation6 + $0x3c0] sm:$0xff]
          %v6839 = vld [vmem:[#allocation6 + $0x3c8] sm:$0xff]
          %v6840 = vld [vmem:[#allocation6 + $0x3d0] sm:$0xff]
          %v6841 = vld [vmem:[#allocation6 + $0x3d8] sm:$0xff]
          %v6842 = vld [vmem:[#allocation6 + $0x3e0] sm:$0xff]
          %v6843 = vld [vmem:[#allocation6 + $0x3e8] sm:$0xff]
          %v6844 = vld [vmem:[#allocation6 + $0x3f0] sm:$0xff]
          %v6845 = vld [vmem:[#allocation6 + $0x3f8] sm:$0xff]
          %v6846 = vld [vmem:[#allocation6 + $0x400] sm:$0xff]
          %v6847 = vld [vmem:[#allocation6 + $0x408] sm:$0xff]
          %v6848 = vld [vmem:[#allocation6 + $0x410] sm:$0xff]
          %v6849 = vld [vmem:[#allocation6 + $0x418] sm:$0xff]
          %v6850 = vld [vmem:[#allocation6 + $0x420] sm:$0xff]
          %v6851 = vld [vmem:[#allocation6 + $0x428] sm:$0xff]
          %v6852 = vld [vmem:[#allocation6 + $0x430] sm:$0xff]
          %v6853 = vld [vmem:[#allocation6 + $0x438] sm:$0xff]
          %v6854 = vld [vmem:[#allocation6 + $0x440] sm:$0xff]
          %v6855 = vld [vmem:[#allocation6 + $0x448] sm:$0xff]
          %v6856 = vld [vmem:[#allocation6 + $0x450] sm:$0xff]
          %v6857 = vld [vmem:[#allocation6 + $0x458] sm:$0xff]
          %v6858 = vld [vmem:[#allocation6 + $0x460] sm:$0xff]
          %v6859 = vld [vmem:[#allocation6 + $0x468] sm:$0xff]
          %v6860 = vld [vmem:[#allocation6 + $0x470] sm:$0xff]
          %v6861 = vld [vmem:[#allocation6 + $0x478] sm:$0xff]
          %v6862 = vld [vmem:[#allocation6 + $0x480] sm:$0xff]
          %v6863 = vld [vmem:[#allocation6 + $0x488] sm:$0xff]
          %v6864 = vld [vmem:[#allocation6 + $0x490] sm:$0xff]
          %v6865 = vld [vmem:[#allocation6 + $0x498] sm:$0xff]
          %v6866 = vld [vmem:[#allocation6 + $0x4a0] sm:$0xff]
          %v6867 = vld [vmem:[#allocation6 + $0x4a8] sm:$0xff]
          %v6868 = vld [vmem:[#allocation6 + $0x4b0] sm:$0xff]
          %v6869 = vld [vmem:[#allocation6 + $0x4b8] sm:$0xff]
          %v6870 = vld [vmem:[#allocation6 + $0x4c0] sm:$0xff]
          %v6871 = vld [vmem:[#allocation6 + $0x4c8] sm:$0xff]
          %v6872 = vld [vmem:[#allocation6 + $0x4d0] sm:$0xff]
          %v6873 = vld [vmem:[#allocation6 + $0x4d8] sm:$0xff]
          %v6874 = vld [vmem:[#allocation6 + $0x4e0] sm:$0xff]
          %v6875 = vld [vmem:[#allocation6 + $0x4e8] sm:$0xff]
          %v6876 = vld [vmem:[#allocation6 + $0x4f0] sm:$0xff]
          %v6877 = vld [vmem:[#allocation6 + $0x4f8] sm:$0xff]
          %v6878 = vld [vmem:[#allocation6 + $0x500] sm:$0xff]
          %v6879 = vld [vmem:[#allocation6 + $0x508] sm:$0xff]
          %v6880 = vld [vmem:[#allocation6 + $0x510] sm:$0xff]
          %v6881 = vld [vmem:[#allocation6 + $0x518] sm:$0xff]
          %v6882 = vld [vmem:[#allocation6 + $0x520] sm:$0xff]
          %v6883 = vld [vmem:[#allocation6 + $0x528] sm:$0xff]
          %v6884 = vld [vmem:[#allocation6 + $0x530] sm:$0xff]
          %v6885 = vld [vmem:[#allocation6 + $0x538] sm:$0xff]
          %v6886 = vld [vmem:[#allocation6 + $0x540] sm:$0xff]
          %v6887 = vld [vmem:[#allocation6 + $0x548] sm:$0xff]
          %v6888 = vld [vmem:[#allocation6 + $0x550] sm:$0xff]
          %v6889 = vld [vmem:[#allocation6 + $0x558] sm:$0xff]
          %v6890 = vld [vmem:[#allocation6 + $0x560] sm:$0xff]
          %v6891 = vld [vmem:[#allocation6 + $0x568] sm:$0xff]
          %v6892 = vld [vmem:[#allocation6 + $0x570] sm:$0xff]
          %v6893 = vld [vmem:[#allocation6 + $0x578] sm:$0xff]
          %v6894 = vld [vmem:[#allocation6 + $0x580] sm:$0xff]
          %v6895 = vld [vmem:[#allocation6 + $0x588] sm:$0xff]
          %v6896 = vld [vmem:[#allocation6 + $0x590] sm:$0xff]
          %v6897 = vld [vmem:[#allocation6 + $0x598] sm:$0xff]
          %v6898 = vld [vmem:[#allocation6 + $0x5a0] sm:$0xff]
          %v6899 = vld [vmem:[#allocation6 + $0x5a8] sm:$0xff]
          %v6900 = vld [vmem:[#allocation6 + $0x5b0] sm:$0xff]
          %v6901 = vld [vmem:[#allocation6 + $0x5b8] sm:$0xff]
          %v6902 = vld [vmem:[#allocation6 + $0x5c0] sm:$0xff]
          %v6903 = vld [vmem:[#allocation6 + $0x5c8] sm:$0xff]
          %v6904 = vld [vmem:[#allocation6 + $0x5d0] sm:$0xff]
          %v6905 = vld [vmem:[#allocation6 + $0x5d8] sm:$0xff]
          %v6906 = vld [vmem:[#allocation6 + $0x5e0] sm:$0xff]
          %v6907 = vld [vmem:[#allocation6 + $0x5e8] sm:$0xff]
          %v6908 = vld [vmem:[#allocation6 + $0x5f0] sm:$0xff]
          %v6909 = vld [vmem:[#allocation6 + $0x5f8] sm:$0xff]
          %v6910 = vld [vmem:[#allocation6 + $0x600] sm:$0xff]
          %v6911 = vld [vmem:[#allocation6 + $0x608] sm:$0xff]
          %v6912 = vld [vmem:[#allocation6 + $0x610] sm:$0xff]
          %v6913 = vld [vmem:[#allocation6 + $0x618] sm:$0xff]
          %v6914 = vld [vmem:[#allocation6 + $0x620] sm:$0xff]
          %v6915 = vld [vmem:[#allocation6 + $0x628] sm:$0xff]
          %v6916 = vld [vmem:[#allocation6 + $0x630] sm:$0xff]
          %v6917 = vld [vmem:[#allocation6 + $0x638] sm:$0xff]
          %v6918 = vld [vmem:[#allocation6 + $0x640] sm:$0xff]
          %v6919 = vld [vmem:[#allocation6 + $0x648] sm:$0xff]
          %v6920 = vld [vmem:[#allocation6 + $0x650] sm:$0xff]
          %v6921 = vld [vmem:[#allocation6 + $0x658] sm:$0xff]
          %v6922 = vld [vmem:[#allocation6 + $0x660] sm:$0xff]
          %v6923 = vld [vmem:[#allocation6 + $0x668] sm:$0xff]
          %v6924 = vld [vmem:[#allocation6 + $0x670] sm:$0xff]
          %v6925 = vld [vmem:[#allocation6 + $0x678] sm:$0xff]
          %v6926 = vld [vmem:[#allocation6 + $0x680] sm:$0xff]
          %v6927 = vld [vmem:[#allocation6 + $0x688] sm:$0xff]
          %v6928 = vld [vmem:[#allocation6 + $0x690] sm:$0xff]
          %v6929 = vld [vmem:[#allocation6 + $0x698] sm:$0xff]
          %v6930 = vld [vmem:[#allocation6 + $0x6a0] sm:$0xff]
          %v6931 = vld [vmem:[#allocation6 + $0x6a8] sm:$0xff]
          %v6932 = vld [vmem:[#allocation6 + $0x6b0] sm:$0xff]
          %v6933 = vld [vmem:[#allocation6 + $0x6b8] sm:$0xff]
          %v6934 = vld [vmem:[#allocation6 + $0x6c0] sm:$0xff]
          %v6935 = vld [vmem:[#allocation6 + $0x6c8] sm:$0xff]
          %v6936 = vld [vmem:[#allocation6 + $0x6d0] sm:$0xff]
          %v6937 = vld [vmem:[#allocation6 + $0x6d8] sm:$0xff]
          %v6938 = vld [vmem:[#allocation6 + $0x6e0] sm:$0xff]
          %v6939 = vld [vmem:[#allocation6 + $0x6e8] sm:$0xff]
          %v6940 = vld [vmem:[#allocation6 + $0x6f0] sm:$0xff]
          %v6941 = vld [vmem:[#allocation6 + $0x6f8] sm:$0xff]
          %v6942 = vld [vmem:[#allocation6 + $0x700] sm:$0xff]
          %v6943 = vld [vmem:[#allocation6 + $0x708] sm:$0xff]
          %v6944 = vld [vmem:[#allocation6 + $0x710] sm:$0xff]
          %v6945 = vld [vmem:[#allocation6 + $0x718] sm:$0xff]
          %v6946 = vld [vmem:[#allocation6 + $0x720] sm:$0xff]
          %v6947 = vld [vmem:[#allocation6 + $0x728] sm:$0xff]
          %v6948 = vld [vmem:[#allocation6 + $0x730] sm:$0xff]
          %v6949 = vld [vmem:[#allocation6 + $0x738] sm:$0xff]
          %v6950 = vld [vmem:[#allocation6 + $0x740] sm:$0xff]
          %v6951 = vld [vmem:[#allocation6 + $0x748] sm:$0xff]
          %v6952 = vld [vmem:[#allocation6 + $0x750] sm:$0xff]
          %v6953 = vld [vmem:[#allocation6 + $0x758] sm:$0xff]
          %v6954 = vld [vmem:[#allocation6 + $0x760] sm:$0xff]
          %v6955 = vld [vmem:[#allocation6 + $0x768] sm:$0xff]
          %v6956 = vld [vmem:[#allocation6 + $0x770] sm:$0xff]
          %v6957 = vld [vmem:[#allocation6 + $0x778] sm:$0xff]
          %v6958 = vld [vmem:[#allocation6 + $0x780] sm:$0xff]
          %v6959 = vld [vmem:[#allocation6 + $0x788] sm:$0xff]
          %v6960 = vld [vmem:[#allocation6 + $0x790] sm:$0xff]
          %v6961 = vld [vmem:[#allocation6 + $0x798] sm:$0xff]
          %v6962 = vld [vmem:[#allocation6 + $0x7a0] sm:$0xff]
          %v6963 = vld [vmem:[#allocation6 + $0x7a8] sm:$0xff]
          %v6964 = vld [vmem:[#allocation6 + $0x7b0] sm:$0xff]
          %v6965 = vld [vmem:[#allocation6 + $0x7b8] sm:$0xff]
          %v6966 = vld [vmem:[#allocation6 + $0x7c0] sm:$0xff]
          %v6967 = vld [vmem:[#allocation6 + $0x7c8] sm:$0xff]
          %v6968 = vld [vmem:[#allocation6 + $0x7d0] sm:$0xff]
          %v6969 = vld [vmem:[#allocation6 + $0x7d8] sm:$0xff]
          %v6970 = vld [vmem:[#allocation6 + $0x7e0] sm:$0xff]
          %v6971 = vld [vmem:[#allocation6 + $0x7e8] sm:$0xff]
          %v6972 = vld [vmem:[#allocation6 + $0x7f0] sm:$0xff]
          %v6973 = vld [vmem:[#allocation6 + $0x7f8] sm:$0xff]
          %v7230 = vunpack.c.l.b16 %v6718
          %v7231 = vunpack.c.h.b16 %v6718
          %v7232 = vunpack.c.l.b16 %v6719
          %v7233 = vunpack.c.h.b16 %v6719
          %v7234 = vunpack.c.l.b16 %v6720
          %v7235 = vunpack.c.h.b16 %v6720
          %v7236 = vunpack.c.l.b16 %v6721
          %v7237 = vunpack.c.h.b16 %v6721
          %v7238 = vunpack.c.l.b16 %v6722
          %v7239 = vunpack.c.h.b16 %v6722
          %v7240 = vunpack.c.l.b16 %v6723
          %v7241 = vunpack.c.h.b16 %v6723
          %v7242 = vunpack.c.l.b16 %v6724
          %v7243 = vunpack.c.h.b16 %v6724
          %v7244 = vunpack.c.l.b16 %v6725
          %v7245 = vunpack.c.h.b16 %v6725
          %v7246 = vunpack.c.l.b16 %v6726
          %v7247 = vunpack.c.h.b16 %v6726
          %v7248 = vunpack.c.l.b16 %v6727
          %v7249 = vunpack.c.h.b16 %v6727
          %v7250 = vunpack.c.l.b16 %v6728
          %v7251 = vunpack.c.h.b16 %v6728
          %v7252 = vunpack.c.l.b16 %v6729
          %v7253 = vunpack.c.h.b16 %v6729
          %v7254 = vunpack.c.l.b16 %v6730
          %v7255 = vunpack.c.h.b16 %v6730
          %v7256 = vunpack.c.l.b16 %v6731
          %v7257 = vunpack.c.h.b16 %v6731
          %v7258 = vunpack.c.l.b16 %v6732
          %v7259 = vunpack.c.h.b16 %v6732
          %v7260 = vunpack.c.l.b16 %v6733
          %v7261 = vunpack.c.h.b16 %v6733
          %v7262 = vunpack.c.l.b16 %v6734
          %v7263 = vunpack.c.h.b16 %v6734
          %v7264 = vunpack.c.l.b16 %v6735
          %v7265 = vunpack.c.h.b16 %v6735
          %v7266 = vunpack.c.l.b16 %v6736
          %v7267 = vunpack.c.h.b16 %v6736
          %v7268 = vunpack.c.l.b16 %v6737
          %v7269 = vunpack.c.h.b16 %v6737
          %v7270 = vunpack.c.l.b16 %v6738
          %v7271 = vunpack.c.h.b16 %v6738
          %v7272 = vunpack.c.l.b16 %v6739
          %v7273 = vunpack.c.h.b16 %v6739
          %v7274 = vunpack.c.l.b16 %v6740
          %v7275 = vunpack.c.h.b16 %v6740
          %v7276 = vunpack.c.l.b16 %v6741
          %v7277 = vunpack.c.h.b16 %v6741
          %v7278 = vunpack.c.l.b16 %v6742
          %v7279 = vunpack.c.h.b16 %v6742
          %v7280 = vunpack.c.l.b16 %v6743
          %v7281 = vunpack.c.h.b16 %v6743
          %v7282 = vunpack.c.l.b16 %v6744
          %v7283 = vunpack.c.h.b16 %v6744
          %v7284 = vunpack.c.l.b16 %v6745
          %v7285 = vunpack.c.h.b16 %v6745
          %v7286 = vunpack.c.l.b16 %v6746
          %v7287 = vunpack.c.h.b16 %v6746
          %v7288 = vunpack.c.l.b16 %v6747
          %v7289 = vunpack.c.h.b16 %v6747
          %v7290 = vunpack.c.l.b16 %v6748
          %v7291 = vunpack.c.h.b16 %v6748
          %v7292 = vunpack.c.l.b16 %v6749
          %v7293 = vunpack.c.h.b16 %v6749
          %v7294 = vunpack.c.l.b16 %v6750
          %v7295 = vunpack.c.h.b16 %v6750
          %v7296 = vunpack.c.l.b16 %v6751
          %v7297 = vunpack.c.h.b16 %v6751
          %v7298 = vunpack.c.l.b16 %v6752
          %v7299 = vunpack.c.h.b16 %v6752
          %v7300 = vunpack.c.l.b16 %v6753
          %v7301 = vunpack.c.h.b16 %v6753
          %v7302 = vunpack.c.l.b16 %v6754
          %v7303 = vunpack.c.h.b16 %v6754
          %v7304 = vunpack.c.l.b16 %v6755
          %v7305 = vunpack.c.h.b16 %v6755
          %v7306 = vunpack.c.l.b16 %v6756
          %v7307 = vunpack.c.h.b16 %v6756
          %v7308 = vunpack.c.l.b16 %v6757
          %v7309 = vunpack.c.h.b16 %v6757
          %v7310 = vunpack.c.l.b16 %v6758
          %v7311 = vunpack.c.h.b16 %v6758
          %v7312 = vunpack.c.l.b16 %v6759
          %v7313 = vunpack.c.h.b16 %v6759
          %v7314 = vunpack.c.l.b16 %v6760
          %v7315 = vunpack.c.h.b16 %v6760
          %v7316 = vunpack.c.l.b16 %v6761
          %v7317 = vunpack.c.h.b16 %v6761
          %v7318 = vunpack.c.l.b16 %v6762
          %v7319 = vunpack.c.h.b16 %v6762
          %v7320 = vunpack.c.l.b16 %v6763
          %v7321 = vunpack.c.h.b16 %v6763
          %v7322 = vunpack.c.l.b16 %v6764
          %v7323 = vunpack.c.h.b16 %v6764
          %v7324 = vunpack.c.l.b16 %v6765
          %v7325 = vunpack.c.h.b16 %v6765
          %v7326 = vunpack.c.l.b16 %v6766
          %v7327 = vunpack.c.h.b16 %v6766
          %v7328 = vunpack.c.l.b16 %v6767
          %v7329 = vunpack.c.h.b16 %v6767
          %v7330 = vunpack.c.l.b16 %v6768
          %v7331 = vunpack.c.h.b16 %v6768
          %v7332 = vunpack.c.l.b16 %v6769
          %v7333 = vunpack.c.h.b16 %v6769
          %v7334 = vunpack.c.l.b16 %v6770
          %v7335 = vunpack.c.h.b16 %v6770
          %v7336 = vunpack.c.l.b16 %v6771
          %v7337 = vunpack.c.h.b16 %v6771
          %v7338 = vunpack.c.l.b16 %v6772
          %v7339 = vunpack.c.h.b16 %v6772
          %v7340 = vunpack.c.l.b16 %v6773
          %v7341 = vunpack.c.h.b16 %v6773
          %v7342 = vunpack.c.l.b16 %v6774
          %v7343 = vunpack.c.h.b16 %v6774
          %v7344 = vunpack.c.l.b16 %v6775
          %v7345 = vunpack.c.h.b16 %v6775
          %v7346 = vunpack.c.l.b16 %v6776
          %v7347 = vunpack.c.h.b16 %v6776
          %v7348 = vunpack.c.l.b16 %v6777
          %v7349 = vunpack.c.h.b16 %v6777
          %v7350 = vunpack.c.l.b16 %v6778
          %v7351 = vunpack.c.h.b16 %v6778
          %v7352 = vunpack.c.l.b16 %v6779
          %v7353 = vunpack.c.h.b16 %v6779
          %v7354 = vunpack.c.l.b16 %v6780
          %v7355 = vunpack.c.h.b16 %v6780
          %v7356 = vunpack.c.l.b16 %v6781
          %v7357 = vunpack.c.h.b16 %v6781
          %v7358 = vunpack.c.l.b16 %v6782
          %v7359 = vunpack.c.h.b16 %v6782
          %v7360 = vunpack.c.l.b16 %v6783
          %v7361 = vunpack.c.h.b16 %v6783
          %v7362 = vunpack.c.l.b16 %v6784
          %v7363 = vunpack.c.h.b16 %v6784
          %v7364 = vunpack.c.l.b16 %v6785
          %v7365 = vunpack.c.h.b16 %v6785
          %v7366 = vunpack.c.l.b16 %v6786
          %v7367 = vunpack.c.h.b16 %v6786
          %v7368 = vunpack.c.l.b16 %v6787
          %v7369 = vunpack.c.h.b16 %v6787
          %v7370 = vunpack.c.l.b16 %v6788
          %v7371 = vunpack.c.h.b16 %v6788
          %v7372 = vunpack.c.l.b16 %v6789
          %v7373 = vunpack.c.h.b16 %v6789
          %v7374 = vunpack.c.l.b16 %v6790
          %v7375 = vunpack.c.h.b16 %v6790
          %v7376 = vunpack.c.l.b16 %v6791
          %v7377 = vunpack.c.h.b16 %v6791
          %v7378 = vunpack.c.l.b16 %v6792
          %v7379 = vunpack.c.h.b16 %v6792
          %v7380 = vunpack.c.l.b16 %v6793
          %v7381 = vunpack.c.h.b16 %v6793
          %v7382 = vunpack.c.l.b16 %v6794
          %v7383 = vunpack.c.h.b16 %v6794
          %v7384 = vunpack.c.l.b16 %v6795
          %v7385 = vunpack.c.h.b16 %v6795
          %v7386 = vunpack.c.l.b16 %v6796
          %v7387 = vunpack.c.h.b16 %v6796
          %v7388 = vunpack.c.l.b16 %v6797
          %v7389 = vunpack.c.h.b16 %v6797
          %v7390 = vunpack.c.l.b16 %v6798
          %v7391 = vunpack.c.h.b16 %v6798
          %v7392 = vunpack.c.l.b16 %v6799
          %v7393 = vunpack.c.h.b16 %v6799
          %v7394 = vunpack.c.l.b16 %v6800
          %v7395 = vunpack.c.h.b16 %v6800
          %v7396 = vunpack.c.l.b16 %v6801
          %v7397 = vunpack.c.h.b16 %v6801
          %v7398 = vunpack.c.l.b16 %v6802
          %v7399 = vunpack.c.h.b16 %v6802
          %v7400 = vunpack.c.l.b16 %v6803
          %v7401 = vunpack.c.h.b16 %v6803
          %v7402 = vunpack.c.l.b16 %v6804
          %v7403 = vunpack.c.h.b16 %v6804
          %v7404 = vunpack.c.l.b16 %v6805
          %v7405 = vunpack.c.h.b16 %v6805
          %v7406 = vunpack.c.l.b16 %v6806
          %v7407 = vunpack.c.h.b16 %v6806
          %v7408 = vunpack.c.l.b16 %v6807
          %v7409 = vunpack.c.h.b16 %v6807
          %v7410 = vunpack.c.l.b16 %v6808
          %v7411 = vunpack.c.h.b16 %v6808
          %v7412 = vunpack.c.l.b16 %v6809
          %v7413 = vunpack.c.h.b16 %v6809
          %v7414 = vunpack.c.l.b16 %v6810
          %v7415 = vunpack.c.h.b16 %v6810
          %v7416 = vunpack.c.l.b16 %v6811
          %v7417 = vunpack.c.h.b16 %v6811
          %v7418 = vunpack.c.l.b16 %v6812
          %v7419 = vunpack.c.h.b16 %v6812
          %v7420 = vunpack.c.l.b16 %v6813
          %v7421 = vunpack.c.h.b16 %v6813
          %v7422 = vunpack.c.l.b16 %v6814
          %v7423 = vunpack.c.h.b16 %v6814
          %v7424 = vunpack.c.l.b16 %v6815
          %v7425 = vunpack.c.h.b16 %v6815
          %v7426 = vunpack.c.l.b16 %v6816
          %v7427 = vunpack.c.h.b16 %v6816
          %v7428 = vunpack.c.l.b16 %v6817
          %v7429 = vunpack.c.h.b16 %v6817
          %v7430 = vunpack.c.l.b16 %v6818
          %v7431 = vunpack.c.h.b16 %v6818
          %v7432 = vunpack.c.l.b16 %v6819
          %v7433 = vunpack.c.h.b16 %v6819
          %v7434 = vunpack.c.l.b16 %v6820
          %v7435 = vunpack.c.h.b16 %v6820
          %v7436 = vunpack.c.l.b16 %v6821
          %v7437 = vunpack.c.h.b16 %v6821
          %v7438 = vunpack.c.l.b16 %v6822
          %v7439 = vunpack.c.h.b16 %v6822
          %v7440 = vunpack.c.l.b16 %v6823
          %v7441 = vunpack.c.h.b16 %v6823
          %v7442 = vunpack.c.l.b16 %v6824
          %v7443 = vunpack.c.h.b16 %v6824
          %v7444 = vunpack.c.l.b16 %v6825
          %v7445 = vunpack.c.h.b16 %v6825
          %v7446 = vunpack.c.l.b16 %v6826
          %v7447 = vunpack.c.h.b16 %v6826
          %v7448 = vunpack.c.l.b16 %v6827
          %v7449 = vunpack.c.h.b16 %v6827
          %v7450 = vunpack.c.l.b16 %v6828
          %v7451 = vunpack.c.h.b16 %v6828
          %v7452 = vunpack.c.l.b16 %v6829
          %v7453 = vunpack.c.h.b16 %v6829
          %v7454 = vunpack.c.l.b16 %v6830
          %v7455 = vunpack.c.h.b16 %v6830
          %v7456 = vunpack.c.l.b16 %v6831
          %v7457 = vunpack.c.h.b16 %v6831
          %v7458 = vunpack.c.l.b16 %v6832
          %v7459 = vunpack.c.h.b16 %v6832
          %v7460 = vunpack.c.l.b16 %v6833
          %v7461 = vunpack.c.h.b16 %v6833
          %v7462 = vunpack.c.l.b16 %v6834
          %v7463 = vunpack.c.h.b16 %v6834
          %v7464 = vunpack.c.l.b16 %v6835
          %v7465 = vunpack.c.h.b16 %v6835
          %v7466 = vunpack.c.l.b16 %v6836
          %v7467 = vunpack.c.h.b16 %v6836
          %v7468 = vunpack.c.l.b16 %v6837
          %v7469 = vunpack.c.h.b16 %v6837
          %v7470 = vunpack.c.l.b16 %v6838
          %v7471 = vunpack.c.h.b16 %v6838
          %v7472 = vunpack.c.l.b16 %v6839
          %v7473 = vunpack.c.h.b16 %v6839
          %v7474 = vunpack.c.l.b16 %v6840
          %v7475 = vunpack.c.h.b16 %v6840
          %v7476 = vunpack.c.l.b16 %v6841
          %v7477 = vunpack.c.h.b16 %v6841
          %v7478 = vunpack.c.l.b16 %v6842
          %v7479 = vunpack.c.h.b16 %v6842
          %v7480 = vunpack.c.l.b16 %v6843
          %v7481 = vunpack.c.h.b16 %v6843
          %v7482 = vunpack.c.l.b16 %v6844
          %v7483 = vunpack.c.h.b16 %v6844
          %v7484 = vunpack.c.l.b16 %v6845
          %v7485 = vunpack.c.h.b16 %v6845
          %v7486 = vunpack.c.l.b16 %v6846
          %v7487 = vunpack.c.h.b16 %v6846
          %v7488 = vunpack.c.l.b16 %v6847
          %v7489 = vunpack.c.h.b16 %v6847
          %v7490 = vunpack.c.l.b16 %v6848
          %v7491 = vunpack.c.h.b16 %v6848
          %v7492 = vunpack.c.l.b16 %v6849
          %v7493 = vunpack.c.h.b16 %v6849
          %v7494 = vunpack.c.l.b16 %v6850
          %v7495 = vunpack.c.h.b16 %v6850
          %v7496 = vunpack.c.l.b16 %v6851
          %v7497 = vunpack.c.h.b16 %v6851
          %v7498 = vunpack.c.l.b16 %v6852
          %v7499 = vunpack.c.h.b16 %v6852
          %v7500 = vunpack.c.l.b16 %v6853
          %v7501 = vunpack.c.h.b16 %v6853
          %v7502 = vunpack.c.l.b16 %v6854
          %v7503 = vunpack.c.h.b16 %v6854
          %v7504 = vunpack.c.l.b16 %v6855
          %v7505 = vunpack.c.h.b16 %v6855
          %v7506 = vunpack.c.l.b16 %v6856
          %v7507 = vunpack.c.h.b16 %v6856
          %v7508 = vunpack.c.l.b16 %v6857
          %v7509 = vunpack.c.h.b16 %v6857
          %v7510 = vunpack.c.l.b16 %v6858
          %v7511 = vunpack.c.h.b16 %v6858
          %v7512 = vunpack.c.l.b16 %v6859
          %v7513 = vunpack.c.h.b16 %v6859
          %v7514 = vunpack.c.l.b16 %v6860
          %v7515 = vunpack.c.h.b16 %v6860
          %v7516 = vunpack.c.l.b16 %v6861
          %v7517 = vunpack.c.h.b16 %v6861
          %v7518 = vunpack.c.l.b16 %v6862
          %v7519 = vunpack.c.h.b16 %v6862
          %v7520 = vunpack.c.l.b16 %v6863
          %v7521 = vunpack.c.h.b16 %v6863
          %v7522 = vunpack.c.l.b16 %v6864
          %v7523 = vunpack.c.h.b16 %v6864
          %v7524 = vunpack.c.l.b16 %v6865
          %v7525 = vunpack.c.h.b16 %v6865
          %v7526 = vunpack.c.l.b16 %v6866
          %v7527 = vunpack.c.h.b16 %v6866
          %v7528 = vunpack.c.l.b16 %v6867
          %v7529 = vunpack.c.h.b16 %v6867
          %v7530 = vunpack.c.l.b16 %v6868
          %v7531 = vunpack.c.h.b16 %v6868
          %v7532 = vunpack.c.l.b16 %v6869
          %v7533 = vunpack.c.h.b16 %v6869
          %v7534 = vunpack.c.l.b16 %v6870
          %v7535 = vunpack.c.h.b16 %v6870
          %v7536 = vunpack.c.l.b16 %v6871
          %v7537 = vunpack.c.h.b16 %v6871
          %v7538 = vunpack.c.l.b16 %v6872
          %v7539 = vunpack.c.h.b16 %v6872
          %v7540 = vunpack.c.l.b16 %v6873
          %v7541 = vunpack.c.h.b16 %v6873
          %v7542 = vunpack.c.l.b16 %v6874
          %v7543 = vunpack.c.h.b16 %v6874
          %v7544 = vunpack.c.l.b16 %v6875
          %v7545 = vunpack.c.h.b16 %v6875
          %v7546 = vunpack.c.l.b16 %v6876
          %v7547 = vunpack.c.h.b16 %v6876
          %v7548 = vunpack.c.l.b16 %v6877
          %v7549 = vunpack.c.h.b16 %v6877
          %v7550 = vunpack.c.l.b16 %v6878
          %v7551 = vunpack.c.h.b16 %v6878
          %v7552 = vunpack.c.l.b16 %v6879
          %v7553 = vunpack.c.h.b16 %v6879
          %v7554 = vunpack.c.l.b16 %v6880
          %v7555 = vunpack.c.h.b16 %v6880
          %v7556 = vunpack.c.l.b16 %v6881
          %v7557 = vunpack.c.h.b16 %v6881
          %v7558 = vunpack.c.l.b16 %v6882
          %v7559 = vunpack.c.h.b16 %v6882
          %v7560 = vunpack.c.l.b16 %v6883
          %v7561 = vunpack.c.h.b16 %v6883
          %v7562 = vunpack.c.l.b16 %v6884
          %v7563 = vunpack.c.h.b16 %v6884
          %v7564 = vunpack.c.l.b16 %v6885
          %v7565 = vunpack.c.h.b16 %v6885
          %v7566 = vunpack.c.l.b16 %v6886
          %v7567 = vunpack.c.h.b16 %v6886
          %v7568 = vunpack.c.l.b16 %v6887
          %v7569 = vunpack.c.h.b16 %v6887
          %v7570 = vunpack.c.l.b16 %v6888
          %v7571 = vunpack.c.h.b16 %v6888
          %v7572 = vunpack.c.l.b16 %v6889
          %v7573 = vunpack.c.h.b16 %v6889
          %v7574 = vunpack.c.l.b16 %v6890
          %v7575 = vunpack.c.h.b16 %v6890
          %v7576 = vunpack.c.l.b16 %v6891
          %v7577 = vunpack.c.h.b16 %v6891
          %v7578 = vunpack.c.l.b16 %v6892
          %v7579 = vunpack.c.h.b16 %v6892
          %v7580 = vunpack.c.l.b16 %v6893
          %v7581 = vunpack.c.h.b16 %v6893
          %v7582 = vunpack.c.l.b16 %v6894
          %v7583 = vunpack.c.h.b16 %v6894
          %v7584 = vunpack.c.l.b16 %v6895
          %v7585 = vunpack.c.h.b16 %v6895
          %v7586 = vunpack.c.l.b16 %v6896
          %v7587 = vunpack.c.h.b16 %v6896
          %v7588 = vunpack.c.l.b16 %v6897
          %v7589 = vunpack.c.h.b16 %v6897
          %v7590 = vunpack.c.l.b16 %v6898
          %v7591 = vunpack.c.h.b16 %v6898
          %v7592 = vunpack.c.l.b16 %v6899
          %v7593 = vunpack.c.h.b16 %v6899
          %v7594 = vunpack.c.l.b16 %v6900
          %v7595 = vunpack.c.h.b16 %v6900
          %v7596 = vunpack.c.l.b16 %v6901
          %v7597 = vunpack.c.h.b16 %v6901
          %v7598 = vunpack.c.l.b16 %v6902
          %v7599 = vunpack.c.h.b16 %v6902
          %v7600 = vunpack.c.l.b16 %v6903
          %v7601 = vunpack.c.h.b16 %v6903
          %v7602 = vunpack.c.l.b16 %v6904
          %v7603 = vunpack.c.h.b16 %v6904
          %v7604 = vunpack.c.l.b16 %v6905
          %v7605 = vunpack.c.h.b16 %v6905
          %v7606 = vunpack.c.l.b16 %v6906
          %v7607 = vunpack.c.h.b16 %v6906
          %v7608 = vunpack.c.l.b16 %v6907
          %v7609 = vunpack.c.h.b16 %v6907
          %v7610 = vunpack.c.l.b16 %v6908
          %v7611 = vunpack.c.h.b16 %v6908
          %v7612 = vunpack.c.l.b16 %v6909
          %v7613 = vunpack.c.h.b16 %v6909
          %v7614 = vunpack.c.l.b16 %v6910
          %v7615 = vunpack.c.h.b16 %v6910
          %v7616 = vunpack.c.l.b16 %v6911
          %v7617 = vunpack.c.h.b16 %v6911
          %v7618 = vunpack.c.l.b16 %v6912
          %v7619 = vunpack.c.h.b16 %v6912
          %v7620 = vunpack.c.l.b16 %v6913
          %v7621 = vunpack.c.h.b16 %v6913
          %v7622 = vunpack.c.l.b16 %v6914
          %v7623 = vunpack.c.h.b16 %v6914
          %v7624 = vunpack.c.l.b16 %v6915
          %v7625 = vunpack.c.h.b16 %v6915
          %v7626 = vunpack.c.l.b16 %v6916
          %v7627 = vunpack.c.h.b16 %v6916
          %v7628 = vunpack.c.l.b16 %v6917
          %v7629 = vunpack.c.h.b16 %v6917
          %v7630 = vunpack.c.l.b16 %v6918
          %v7631 = vunpack.c.h.b16 %v6918
          %v7632 = vunpack.c.l.b16 %v6919
          %v7633 = vunpack.c.h.b16 %v6919
          %v7634 = vunpack.c.l.b16 %v6920
          %v7635 = vunpack.c.h.b16 %v6920
          %v7636 = vunpack.c.l.b16 %v6921
          %v7637 = vunpack.c.h.b16 %v6921
          %v7638 = vunpack.c.l.b16 %v6922
          %v7639 = vunpack.c.h.b16 %v6922
          %v7640 = vunpack.c.l.b16 %v6923
          %v7641 = vunpack.c.h.b16 %v6923
          %v7642 = vunpack.c.l.b16 %v6924
          %v7643 = vunpack.c.h.b16 %v6924
          %v7644 = vunpack.c.l.b16 %v6925
          %v7645 = vunpack.c.h.b16 %v6925
          %v7646 = vunpack.c.l.b16 %v6926
          %v7647 = vunpack.c.h.b16 %v6926
          %v7648 = vunpack.c.l.b16 %v6927
          %v7649 = vunpack.c.h.b16 %v6927
          %v7650 = vunpack.c.l.b16 %v6928
          %v7651 = vunpack.c.h.b16 %v6928
          %v7652 = vunpack.c.l.b16 %v6929
          %v7653 = vunpack.c.h.b16 %v6929
          %v7654 = vunpack.c.l.b16 %v6930
          %v7655 = vunpack.c.h.b16 %v6930
          %v7656 = vunpack.c.l.b16 %v6931
          %v7657 = vunpack.c.h.b16 %v6931
          %v7658 = vunpack.c.l.b16 %v6932
          %v7659 = vunpack.c.h.b16 %v6932
          %v7660 = vunpack.c.l.b16 %v6933
          %v7661 = vunpack.c.h.b16 %v6933
          %v7662 = vunpack.c.l.b16 %v6934
          %v7663 = vunpack.c.h.b16 %v6934
          %v7664 = vunpack.c.l.b16 %v6935
          %v7665 = vunpack.c.h.b16 %v6935
          %v7666 = vunpack.c.l.b16 %v6936
          %v7667 = vunpack.c.h.b16 %v6936
          %v7668 = vunpack.c.l.b16 %v6937
          %v7669 = vunpack.c.h.b16 %v6937
          %v7670 = vunpack.c.l.b16 %v6938
          %v7671 = vunpack.c.h.b16 %v6938
          %v7672 = vunpack.c.l.b16 %v6939
          %v7673 = vunpack.c.h.b16 %v6939
          %v7674 = vunpack.c.l.b16 %v6940
          %v7675 = vunpack.c.h.b16 %v6940
          %v7676 = vunpack.c.l.b16 %v6941
          %v7677 = vunpack.c.h.b16 %v6941
          %v7678 = vunpack.c.l.b16 %v6942
          %v7679 = vunpack.c.h.b16 %v6942
          %v7680 = vunpack.c.l.b16 %v6943
          %v7681 = vunpack.c.h.b16 %v6943
          %v7682 = vunpack.c.l.b16 %v6944
          %v7683 = vunpack.c.h.b16 %v6944
          %v7684 = vunpack.c.l.b16 %v6945
          %v7685 = vunpack.c.h.b16 %v6945
          %v7686 = vunpack.c.l.b16 %v6946
          %v7687 = vunpack.c.h.b16 %v6946
          %v7688 = vunpack.c.l.b16 %v6947
          %v7689 = vunpack.c.h.b16 %v6947
          %v7690 = vunpack.c.l.b16 %v6948
          %v7691 = vunpack.c.h.b16 %v6948
          %v7692 = vunpack.c.l.b16 %v6949
          %v7693 = vunpack.c.h.b16 %v6949
          %v7694 = vunpack.c.l.b16 %v6950
          %v7695 = vunpack.c.h.b16 %v6950
          %v7696 = vunpack.c.l.b16 %v6951
          %v7697 = vunpack.c.h.b16 %v6951
          %v7698 = vunpack.c.l.b16 %v6952
          %v7699 = vunpack.c.h.b16 %v6952
          %v7700 = vunpack.c.l.b16 %v6953
          %v7701 = vunpack.c.h.b16 %v6953
          %v7702 = vunpack.c.l.b16 %v6954
          %v7703 = vunpack.c.h.b16 %v6954
          %v7704 = vunpack.c.l.b16 %v6955
          %v7705 = vunpack.c.h.b16 %v6955
          %v7706 = vunpack.c.l.b16 %v6956
          %v7707 = vunpack.c.h.b16 %v6956
          %v7708 = vunpack.c.l.b16 %v6957
          %v7709 = vunpack.c.h.b16 %v6957
          %v7710 = vunpack.c.l.b16 %v6958
          %v7711 = vunpack.c.h.b16 %v6958
          %v7712 = vunpack.c.l.b16 %v6959
          %v7713 = vunpack.c.h.b16 %v6959
          %v7714 = vunpack.c.l.b16 %v6960
          %v7715 = vunpack.c.h.b16 %v6960
          %v7716 = vunpack.c.l.b16 %v6961
          %v7717 = vunpack.c.h.b16 %v6961
          %v7718 = vunpack.c.l.b16 %v6962
          %v7719 = vunpack.c.h.b16 %v6962
          %v7720 = vunpack.c.l.b16 %v6963
          %v7721 = vunpack.c.h.b16 %v6963
          %v7722 = vunpack.c.l.b16 %v6964
          %v7723 = vunpack.c.h.b16 %v6964
          %v7724 = vunpack.c.l.b16 %v6965
          %v7725 = vunpack.c.h.b16 %v6965
          %v7726 = vunpack.c.l.b16 %v6966
          %v7727 = vunpack.c.h.b16 %v6966
          %v7728 = vunpack.c.l.b16 %v6967
          %v7729 = vunpack.c.h.b16 %v6967
          %v7730 = vunpack.c.l.b16 %v6968
          %v7731 = vunpack.c.h.b16 %v6968
          %v7732 = vunpack.c.l.b16 %v6969
          %v7733 = vunpack.c.h.b16 %v6969
          %v7734 = vunpack.c.l.b16 %v6970
          %v7735 = vunpack.c.h.b16 %v6970
          %v7736 = vunpack.c.l.b16 %v6971
          %v7737 = vunpack.c.h.b16 %v6971
          %v7738 = vunpack.c.l.b16 %v6972
          %v7739 = vunpack.c.h.b16 %v6972
          %v7740 = vunpack.c.l.b16 %v6973
          %v7741 = vunpack.c.h.b16 %v6973
          %v7742 = vpack.c.b16 %v7234, %v7230
          %v7743 = vpack.c.b16 %v7235, %v7231
          %v7744 = vpack.c.b16 %v7236, %v7232
          %v7745 = vpack.c.b16 %v7237, %v7233
          %v7746 = vpack.c.b16 %v7242, %v7238
          %v7747 = vpack.c.b16 %v7243, %v7239
          %v7748 = vpack.c.b16 %v7244, %v7240
          %v7749 = vpack.c.b16 %v7245, %v7241
          %v7750 = vpack.c.b16 %v7250, %v7246
          %v7751 = vpack.c.b16 %v7251, %v7247
          %v7752 = vpack.c.b16 %v7252, %v7248
          %v7753 = vpack.c.b16 %v7253, %v7249
          %v7754 = vpack.c.b16 %v7258, %v7254
          %v7755 = vpack.c.b16 %v7259, %v7255
          %v7756 = vpack.c.b16 %v7260, %v7256
          %v7757 = vpack.c.b16 %v7261, %v7257
          %v7758 = vpack.c.b16 %v7266, %v7262
          %v7759 = vpack.c.b16 %v7267, %v7263
          %v7760 = vpack.c.b16 %v7268, %v7264
          %v7761 = vpack.c.b16 %v7269, %v7265
          %v7762 = vpack.c.b16 %v7274, %v7270
          %v7763 = vpack.c.b16 %v7275, %v7271
          %v7764 = vpack.c.b16 %v7276, %v7272
          %v7765 = vpack.c.b16 %v7277, %v7273
          %v7766 = vpack.c.b16 %v7282, %v7278
          %v7767 = vpack.c.b16 %v7283, %v7279
          %v7768 = vpack.c.b16 %v7284, %v7280
          %v7769 = vpack.c.b16 %v7285, %v7281
          %v7770 = vpack.c.b16 %v7290, %v7286
          %v7771 = vpack.c.b16 %v7291, %v7287
          %v7772 = vpack.c.b16 %v7292, %v7288
          %v7773 = vpack.c.b16 %v7293, %v7289
          %v7774 = vpack.c.b16 %v7298, %v7294
          %v7775 = vpack.c.b16 %v7299, %v7295
          %v7776 = vpack.c.b16 %v7300, %v7296
          %v7777 = vpack.c.b16 %v7301, %v7297
          %v7778 = vpack.c.b16 %v7306, %v7302
          %v7779 = vpack.c.b16 %v7307, %v7303
          %v7780 = vpack.c.b16 %v7308, %v7304
          %v7781 = vpack.c.b16 %v7309, %v7305
          %v7782 = vpack.c.b16 %v7314, %v7310
          %v7783 = vpack.c.b16 %v7315, %v7311
          %v7784 = vpack.c.b16 %v7316, %v7312
          %v7785 = vpack.c.b16 %v7317, %v7313
          %v7786 = vpack.c.b16 %v7322, %v7318
          %v7787 = vpack.c.b16 %v7323, %v7319
          %v7788 = vpack.c.b16 %v7324, %v7320
          %v7789 = vpack.c.b16 %v7325, %v7321
          %v7790 = vpack.c.b16 %v7330, %v7326
          %v7791 = vpack.c.b16 %v7331, %v7327
          %v7792 = vpack.c.b16 %v7332, %v7328
          %v7793 = vpack.c.b16 %v7333, %v7329
          %v7794 = vpack.c.b16 %v7338, %v7334
          %v7795 = vpack.c.b16 %v7339, %v7335
          %v7796 = vpack.c.b16 %v7340, %v7336
          %v7797 = vpack.c.b16 %v7341, %v7337
          %v7798 = vpack.c.b16 %v7346, %v7342
          %v7799 = vpack.c.b16 %v7347, %v7343
          %v7800 = vpack.c.b16 %v7348, %v7344
          %v7801 = vpack.c.b16 %v7349, %v7345
          %v7802 = vpack.c.b16 %v7354, %v7350
          %v7803 = vpack.c.b16 %v7355, %v7351
          %v7804 = vpack.c.b16 %v7356, %v7352
          %v7805 = vpack.c.b16 %v7357, %v7353
          %v7806 = vpack.c.b16 %v7362, %v7358
          %v7807 = vpack.c.b16 %v7363, %v7359
          %v7808 = vpack.c.b16 %v7364, %v7360
          %v7809 = vpack.c.b16 %v7365, %v7361
          %v7810 = vpack.c.b16 %v7370, %v7366
          %v7811 = vpack.c.b16 %v7371, %v7367
          %v7812 = vpack.c.b16 %v7372, %v7368
          %v7813 = vpack.c.b16 %v7373, %v7369
          %v7814 = vpack.c.b16 %v7378, %v7374
          %v7815 = vpack.c.b16 %v7379, %v7375
          %v7816 = vpack.c.b16 %v7380, %v7376
          %v7817 = vpack.c.b16 %v7381, %v7377
          %v7818 = vpack.c.b16 %v7386, %v7382
          %v7819 = vpack.c.b16 %v7387, %v7383
          %v7820 = vpack.c.b16 %v7388, %v7384
          %v7821 = vpack.c.b16 %v7389, %v7385
          %v7822 = vpack.c.b16 %v7394, %v7390
          %v7823 = vpack.c.b16 %v7395, %v7391
          %v7824 = vpack.c.b16 %v7396, %v7392
          %v7825 = vpack.c.b16 %v7397, %v7393
          %v7826 = vpack.c.b16 %v7402, %v7398
          %v7827 = vpack.c.b16 %v7403, %v7399
          %v7828 = vpack.c.b16 %v7404, %v7400
          %v7829 = vpack.c.b16 %v7405, %v7401
          %v7830 = vpack.c.b16 %v7410, %v7406
          %v7831 = vpack.c.b16 %v7411, %v7407
          %v7832 = vpack.c.b16 %v7412, %v7408
          %v7833 = vpack.c.b16 %v7413, %v7409
          %v7834 = vpack.c.b16 %v7418, %v7414
          %v7835 = vpack.c.b16 %v7419, %v7415
          %v7836 = vpack.c.b16 %v7420, %v7416
          %v7837 = vpack.c.b16 %v7421, %v7417
          %v7838 = vpack.c.b16 %v7426, %v7422
          %v7839 = vpack.c.b16 %v7427, %v7423
          %v7840 = vpack.c.b16 %v7428, %v7424
          %v7841 = vpack.c.b16 %v7429, %v7425
          %v7842 = vpack.c.b16 %v7434, %v7430
          %v7843 = vpack.c.b16 %v7435, %v7431
          %v7844 = vpack.c.b16 %v7436, %v7432
          %v7845 = vpack.c.b16 %v7437, %v7433
          %v7846 = vpack.c.b16 %v7442, %v7438
          %v7847 = vpack.c.b16 %v7443, %v7439
          %v7848 = vpack.c.b16 %v7444, %v7440
          %v7849 = vpack.c.b16 %v7445, %v7441
          %v7850 = vpack.c.b16 %v7450, %v7446
          %v7851 = vpack.c.b16 %v7451, %v7447
          %v7852 = vpack.c.b16 %v7452, %v7448
          %v7853 = vpack.c.b16 %v7453, %v7449
          %v7854 = vpack.c.b16 %v7458, %v7454
          %v7855 = vpack.c.b16 %v7459, %v7455
          %v7856 = vpack.c.b16 %v7460, %v7456
          %v7857 = vpack.c.b16 %v7461, %v7457
          %v7858 = vpack.c.b16 %v7466, %v7462
          %v7859 = vpack.c.b16 %v7467, %v7463
          %v7860 = vpack.c.b16 %v7468, %v7464
          %v7861 = vpack.c.b16 %v7469, %v7465
          %v7862 = vpack.c.b16 %v7474, %v7470
          %v7863 = vpack.c.b16 %v7475, %v7471
          %v7864 = vpack.c.b16 %v7476, %v7472
          %v7865 = vpack.c.b16 %v7477, %v7473
          %v7866 = vpack.c.b16 %v7482, %v7478
          %v7867 = vpack.c.b16 %v7483, %v7479
          %v7868 = vpack.c.b16 %v7484, %v7480
          %v7869 = vpack.c.b16 %v7485, %v7481
          %v7870 = vpack.c.b16 %v7490, %v7486
          %v7871 = vpack.c.b16 %v7491, %v7487
          %v7872 = vpack.c.b16 %v7492, %v7488
          %v7873 = vpack.c.b16 %v7493, %v7489
          %v7874 = vpack.c.b16 %v7498, %v7494
          %v7875 = vpack.c.b16 %v7499, %v7495
          %v7876 = vpack.c.b16 %v7500, %v7496
          %v7877 = vpack.c.b16 %v7501, %v7497
          %v7878 = vpack.c.b16 %v7506, %v7502
          %v7879 = vpack.c.b16 %v7507, %v7503
          %v7880 = vpack.c.b16 %v7508, %v7504
          %v7881 = vpack.c.b16 %v7509, %v7505
          %v7882 = vpack.c.b16 %v7514, %v7510
          %v7883 = vpack.c.b16 %v7515, %v7511
          %v7884 = vpack.c.b16 %v7516, %v7512
          %v7885 = vpack.c.b16 %v7517, %v7513
          %v7886 = vpack.c.b16 %v7522, %v7518
          %v7887 = vpack.c.b16 %v7523, %v7519
          %v7888 = vpack.c.b16 %v7524, %v7520
          %v7889 = vpack.c.b16 %v7525, %v7521
          %v7890 = vpack.c.b16 %v7530, %v7526
          %v7891 = vpack.c.b16 %v7531, %v7527
          %v7892 = vpack.c.b16 %v7532, %v7528
          %v7893 = vpack.c.b16 %v7533, %v7529
          %v7894 = vpack.c.b16 %v7538, %v7534
          %v7895 = vpack.c.b16 %v7539, %v7535
          %v7896 = vpack.c.b16 %v7540, %v7536
          %v7897 = vpack.c.b16 %v7541, %v7537
          %v7898 = vpack.c.b16 %v7546, %v7542
          %v7899 = vpack.c.b16 %v7547, %v7543
          %v7900 = vpack.c.b16 %v7548, %v7544
          %v7901 = vpack.c.b16 %v7549, %v7545
          %v7902 = vpack.c.b16 %v7554, %v7550
          %v7903 = vpack.c.b16 %v7555, %v7551
          %v7904 = vpack.c.b16 %v7556, %v7552
          %v7905 = vpack.c.b16 %v7557, %v7553
          %v7906 = vpack.c.b16 %v7562, %v7558
          %v7907 = vpack.c.b16 %v7563, %v7559
          %v7908 = vpack.c.b16 %v7564, %v7560
          %v7909 = vpack.c.b16 %v7565, %v7561
          %v7910 = vpack.c.b16 %v7570, %v7566
          %v7911 = vpack.c.b16 %v7571, %v7567
          %v7912 = vpack.c.b16 %v7572, %v7568
          %v7913 = vpack.c.b16 %v7573, %v7569
          %v7914 = vpack.c.b16 %v7578, %v7574
          %v7915 = vpack.c.b16 %v7579, %v7575
          %v7916 = vpack.c.b16 %v7580, %v7576
          %v7917 = vpack.c.b16 %v7581, %v7577
          %v7918 = vpack.c.b16 %v7586, %v7582
          %v7919 = vpack.c.b16 %v7587, %v7583
          %v7920 = vpack.c.b16 %v7588, %v7584
          %v7921 = vpack.c.b16 %v7589, %v7585
          %v7922 = vpack.c.b16 %v7594, %v7590
          %v7923 = vpack.c.b16 %v7595, %v7591
          %v7924 = vpack.c.b16 %v7596, %v7592
          %v7925 = vpack.c.b16 %v7597, %v7593
          %v7926 = vpack.c.b16 %v7602, %v7598
          %v7927 = vpack.c.b16 %v7603, %v7599
          %v7928 = vpack.c.b16 %v7604, %v7600
          %v7929 = vpack.c.b16 %v7605, %v7601
          %v7930 = vpack.c.b16 %v7610, %v7606
          %v7931 = vpack.c.b16 %v7611, %v7607
          %v7932 = vpack.c.b16 %v7612, %v7608
          %v7933 = vpack.c.b16 %v7613, %v7609
          %v7934 = vpack.c.b16 %v7618, %v7614
          %v7935 = vpack.c.b16 %v7619, %v7615
          %v7936 = vpack.c.b16 %v7620, %v7616
          %v7937 = vpack.c.b16 %v7621, %v7617
          %v7938 = vpack.c.b16 %v7626, %v7622
          %v7939 = vpack.c.b16 %v7627, %v7623
          %v7940 = vpack.c.b16 %v7628, %v7624
          %v7941 = vpack.c.b16 %v7629, %v7625
          %v7942 = vpack.c.b16 %v7634, %v7630
          %v7943 = vpack.c.b16 %v7635, %v7631
          %v7944 = vpack.c.b16 %v7636, %v7632
          %v7945 = vpack.c.b16 %v7637, %v7633
          %v7946 = vpack.c.b16 %v7642, %v7638
          %v7947 = vpack.c.b16 %v7643, %v7639
          %v7948 = vpack.c.b16 %v7644, %v7640
          %v7949 = vpack.c.b16 %v7645, %v7641
          %v7950 = vpack.c.b16 %v7650, %v7646
          %v7951 = vpack.c.b16 %v7651, %v7647
          %v7952 = vpack.c.b16 %v7652, %v7648
          %v7953 = vpack.c.b16 %v7653, %v7649
          %v7954 = vpack.c.b16 %v7658, %v7654
          %v7955 = vpack.c.b16 %v7659, %v7655
          %v7956 = vpack.c.b16 %v7660, %v7656
          %v7957 = vpack.c.b16 %v7661, %v7657
          %v7958 = vpack.c.b16 %v7666, %v7662
          %v7959 = vpack.c.b16 %v7667, %v7663
          %v7960 = vpack.c.b16 %v7668, %v7664
          %v7961 = vpack.c.b16 %v7669, %v7665
          %v7962 = vpack.c.b16 %v7674, %v7670
          %v7963 = vpack.c.b16 %v7675, %v7671
          %v7964 = vpack.c.b16 %v7676, %v7672
          %v7965 = vpack.c.b16 %v7677, %v7673
          %v7966 = vpack.c.b16 %v7682, %v7678
          %v7967 = vpack.c.b16 %v7683, %v7679
          %v7968 = vpack.c.b16 %v7684, %v7680
          %v7969 = vpack.c.b16 %v7685, %v7681
          %v7970 = vpack.c.b16 %v7690, %v7686
          %v7971 = vpack.c.b16 %v7691, %v7687
          %v7972 = vpack.c.b16 %v7692, %v7688
          %v7973 = vpack.c.b16 %v7693, %v7689
          %v7974 = vpack.c.b16 %v7698, %v7694
          %v7975 = vpack.c.b16 %v7699, %v7695
          %v7976 = vpack.c.b16 %v7700, %v7696
          %v7977 = vpack.c.b16 %v7701, %v7697
          %v7978 = vpack.c.b16 %v7706, %v7702
          %v7979 = vpack.c.b16 %v7707, %v7703
          %v7980 = vpack.c.b16 %v7708, %v7704
          %v7981 = vpack.c.b16 %v7709, %v7705
          %v7982 = vpack.c.b16 %v7714, %v7710
          %v7983 = vpack.c.b16 %v7715, %v7711
          %v7984 = vpack.c.b16 %v7716, %v7712
          %v7985 = vpack.c.b16 %v7717, %v7713
          %v7986 = vpack.c.b16 %v7722, %v7718
          %v7987 = vpack.c.b16 %v7723, %v7719
          %v7988 = vpack.c.b16 %v7724, %v7720
          %v7989 = vpack.c.b16 %v7725, %v7721
          %v7990 = vpack.c.b16 %v7730, %v7726
          %v7991 = vpack.c.b16 %v7731, %v7727
          %v7992 = vpack.c.b16 %v7732, %v7728
          %v7993 = vpack.c.b16 %v7733, %v7729
          %v7994 = vpack.c.b16 %v7738, %v7734
          %v7995 = vpack.c.b16 %v7739, %v7735
          %v7996 = vpack.c.b16 %v7740, %v7736
          %v7997 = vpack.c.b16 %v7741, %v7737
          %8254 = vmatpush.bf16.msra.mxu0 %v7770
          %8255 = vmatpush.bf16.msra.mxu0 %v7766
          %8256 = vmatpush.bf16.msra.mxu0 %v7762
          %8257 = vmatpush.bf16.msra.mxu0 %v7758
          %8258 = vmatpush.bf16.msra.mxu0 %v7754
          %8259 = vmatpush.bf16.msra.mxu0 %v7750
          %8260 = vmatpush.bf16.msra.mxu0 %v7746
          %8261 = vmatpush.bf16.msra.mxu0 %v7742
          %8262 = vmatmul.bf16.gmra.mxu0 %v6710
          %v8263 = vpop.f32.mrf.mxu0
          %v8264 = vadd.f32 0.0, %v8263
          %v8265 = vpop.f32.mrf.mxu0
          %v8266 = vadd.f32 0.0, %v8265
          %8267 = vdwg.mxu0
          %8268 = vmatpush.bf16.msra.mxu0 %v7802
          %8269 = vmatpush.bf16.msra.mxu0 %v7798
          %8270 = vmatpush.bf16.msra.mxu0 %v7794
          %8271 = vmatpush.bf16.msra.mxu0 %v7790
          %8272 = vmatpush.bf16.msra.mxu0 %v7786
          %8273 = vmatpush.bf16.msra.mxu0 %v7782
          %8274 = vmatpush.bf16.msra.mxu0 %v7778
          %8275 = vmatpush.bf16.msra.mxu0 %v7774
          %8276 = vmatmul.bf16.gmra.mxu0 %v6711
          %v8277 = vpop.f32.mrf.mxu0
          %v8278 = vadd.f32 %v8264, %v8277
          %v8279 = vpop.f32.mrf.mxu0
          %v8280 = vadd.f32 %v8266, %v8279
          %8281 = vdwg.mxu0
          %8282 = vmatpush.bf16.msra.mxu0 %v7834
          %8283 = vmatpush.bf16.msra.mxu0 %v7830
          %8284 = vmatpush.bf16.msra.mxu0 %v7826
          %8285 = vmatpush.bf16.msra.mxu0 %v7822
          %8286 = vmatpush.bf16.msra.mxu0 %v7818
          %8287 = vmatpush.bf16.msra.mxu0 %v7814
          %8288 = vmatpush.bf16.msra.mxu0 %v7810
          %8289 = vmatpush.bf16.msra.mxu0 %v7806
          %8290 = vmatmul.bf16.gmra.mxu0 %v6712
          %v8291 = vpop.f32.mrf.mxu0
          %v8292 = vadd.f32 %v8278, %v8291
          %v8293 = vpop.f32.mrf.mxu0
          %v8294 = vadd.f32 %v8280, %v8293
          %8295 = vdwg.mxu0
          %8296 = vmatpush.bf16.msra.mxu0 %v7866
          %8297 = vmatpush.bf16.msra.mxu0 %v7862
          %8298 = vmatpush.bf16.msra.mxu0 %v7858
          %8299 = vmatpush.bf16.msra.mxu0 %v7854
          %8300 = vmatpush.bf16.msra.mxu0 %v7850
          %8301 = vmatpush.bf16.msra.mxu0 %v7846
          %8302 = vmatpush.bf16.msra.mxu0 %v7842
          %8303 = vmatpush.bf16.msra.mxu0 %v7838
          %8304 = vmatmul.bf16.gmra.mxu0 %v6713
          %v8305 = vpop.f32.mrf.mxu0
          %v8306 = vadd.f32 %v8292, %v8305
          %v8307 = vpop.f32.mrf.mxu0
          %v8308 = vadd.f32 %v8294, %v8307
          %8309 = vdwg.mxu0
          %8310 = vmatpush.bf16.msra.mxu0 %v7898
          %8311 = vmatpush.bf16.msra.mxu0 %v7894
          %8312 = vmatpush.bf16.msra.mxu0 %v7890
          %8313 = vmatpush.bf16.msra.mxu0 %v7886
          %8314 = vmatpush.bf16.msra.mxu0 %v7882
          %8315 = vmatpush.bf16.msra.mxu0 %v7878
          %8316 = vmatpush.bf16.msra.mxu0 %v7874
          %8317 = vmatpush.bf16.msra.mxu0 %v7870
          %8318 = vmatmul.bf16.gmra.mxu0 %v6714
          %v8319 = vpop.f32.mrf.mxu0
          %v8320 = vadd.f32 %v8306, %v8319
          %v8321 = vpop.f32.mrf.mxu0
          %v8322 = vadd.f32 %v8308, %v8321
          %8323 = vdwg.mxu0
          %8324 = vmatpush.bf16.msra.mxu0 %v7930
          %8325 = vmatpush.bf16.msra.mxu0 %v7926
          %8326 = vmatpush.bf16.msra.mxu0 %v7922
          %8327 = vmatpush.bf16.msra.mxu0 %v7918
          %8328 = vmatpush.bf16.msra.mxu0 %v7914
          %8329 = vmatpush.bf16.msra.mxu0 %v7910
          %8330 = vmatpush.bf16.msra.mxu0 %v7906
          %8331 = vmatpush.bf16.msra.mxu0 %v7902
          %8332 = vmatmul.bf16.gmra.mxu0 %v6715
          %v8333 = vpop.f32.mrf.mxu0
          %v8334 = vadd.f32 %v8320, %v8333
          %v8335 = vpop.f32.mrf.mxu0
          %v8336 = vadd.f32 %v8322, %v8335
          %8337 = vdwg.mxu0
          %8338 = vmatpush.bf16.msra.mxu0 %v7962
          %8339 = vmatpush.bf16.msra.mxu0 %v7958
          %8340 = vmatpush.bf16.msra.mxu0 %v7954
          %8341 = vmatpush.bf16.msra.mxu0 %v7950
          %8342 = vmatpush.bf16.msra.mxu0 %v7946
          %8343 = vmatpush.bf16.msra.mxu0 %v7942
          %8344 = vmatpush.bf16.msra.mxu0 %v7938
          %8345 = vmatpush.bf16.msra.mxu0 %v7934
          %8346 = vmatmul.bf16.gmra.mxu0 %v6716
          %v8347 = vpop.f32.mrf.mxu0
          %v8348 = vadd.f32 %v8334, %v8347
          %v8349 = vpop.f32.mrf.mxu0
          %v8350 = vadd.f32 %v8336, %v8349
          %8351 = vdwg.mxu0
          %8352 = vmatpush.bf16.msra.mxu0 %v7994
          %8353 = vmatpush.bf16.msra.mxu0 %v7990
          %8354 = vmatpush.bf16.msra.mxu0 %v7986
          %8355 = vmatpush.bf16.msra.mxu0 %v7982
          %8356 = vmatpush.bf16.msra.mxu0 %v7978
          %8357 = vmatpush.bf16.msra.mxu0 %v7974
          %8358 = vmatpush.bf16.msra.mxu0 %v7970
          %8359 = vmatpush.bf16.msra.mxu0 %v7966
          %8360 = vmatmul.bf16.gmra.mxu0 %v6717
          %v8361 = vpop.f32.mrf.mxu0
          %v8362 = vadd.f32 %v8348, %v8361
          %v8363 = vpop.f32.mrf.mxu0
          %v8364 = vadd.f32 %v8350, %v8363
          %8365 = vdwg.mxu0
          %8366 = vmatpush.bf16.msra.mxu0 %v7771
          %8367 = vmatpush.bf16.msra.mxu0 %v7767
          %8368 = vmatpush.bf16.msra.mxu0 %v7763
          %8369 = vmatpush.bf16.msra.mxu0 %v7759
          %8370 = vmatpush.bf16.msra.mxu0 %v7755
          %8371 = vmatpush.bf16.msra.mxu0 %v7751
          %8372 = vmatpush.bf16.msra.mxu0 %v7747
          %8373 = vmatpush.bf16.msra.mxu0 %v7743
          %8374 = vmatmul.bf16.gmra.mxu0 %v6710
          %v8375 = vpop.f32.mrf.mxu0
          %v8376 = vadd.f32 0.0, %v8375
          %v8377 = vpop.f32.mrf.mxu0
          %v8378 = vadd.f32 0.0, %v8377
          %8379 = vdwg.mxu0
          %8380 = vmatpush.bf16.msra.mxu0 %v7803
          %8381 = vmatpush.bf16.msra.mxu0 %v7799
          %8382 = vmatpush.bf16.msra.mxu0 %v7795
          %8383 = vmatpush.bf16.msra.mxu0 %v7791
          %8384 = vmatpush.bf16.msra.mxu0 %v7787
          %8385 = vmatpush.bf16.msra.mxu0 %v7783
          %8386 = vmatpush.bf16.msra.mxu0 %v7779
          %8387 = vmatpush.bf16.msra.mxu0 %v7775
          %8388 = vmatmul.bf16.gmra.mxu0 %v6711
          %v8389 = vpop.f32.mrf.mxu0
          %v8390 = vadd.f32 %v8376, %v8389
          %v8391 = vpop.f32.mrf.mxu0
          %v8392 = vadd.f32 %v8378, %v8391
          %8393 = vdwg.mxu0
          %8394 = vmatpush.bf16.msra.mxu0 %v7835
          %8395 = vmatpush.bf16.msra.mxu0 %v7831
          %8396 = vmatpush.bf16.msra.mxu0 %v7827
          %8397 = vmatpush.bf16.msra.mxu0 %v7823
          %8398 = vmatpush.bf16.msra.mxu0 %v7819
          %8399 = vmatpush.bf16.msra.mxu0 %v7815
          %8400 = vmatpush.bf16.msra.mxu0 %v7811
          %8401 = vmatpush.bf16.msra.mxu0 %v7807
          %8402 = vmatmul.bf16.gmra.mxu0 %v6712
          %v8403 = vpop.f32.mrf.mxu0
          %v8404 = vadd.f32 %v8390, %v8403
          %v8405 = vpop.f32.mrf.mxu0
          %v8406 = vadd.f32 %v8392, %v8405
          %8407 = vdwg.mxu0
          %8408 = vmatpush.bf16.msra.mxu0 %v7867
          %8409 = vmatpush.bf16.msra.mxu0 %v7863
          %8410 = vmatpush.bf16.msra.mxu0 %v7859
          %8411 = vmatpush.bf16.msra.mxu0 %v7855
          %8412 = vmatpush.bf16.msra.mxu0 %v7851
          %8413 = vmatpush.bf16.msra.mxu0 %v7847
          %8414 = vmatpush.bf16.msra.mxu0 %v7843
          %8415 = vmatpush.bf16.msra.mxu0 %v7839
          %8416 = vmatmul.bf16.gmra.mxu0 %v6713
          %v8417 = vpop.f32.mrf.mxu0
          %v8418 = vadd.f32 %v8404, %v8417
          %v8419 = vpop.f32.mrf.mxu0
          %v8420 = vadd.f32 %v8406, %v8419
          %8421 = vdwg.mxu0
          %8422 = vmatpush.bf16.msra.mxu0 %v7899
          %8423 = vmatpush.bf16.msra.mxu0 %v7895
          %8424 = vmatpush.bf16.msra.mxu0 %v7891
          %8425 = vmatpush.bf16.msra.mxu0 %v7887
          %8426 = vmatpush.bf16.msra.mxu0 %v7883
          %8427 = vmatpush.bf16.msra.mxu0 %v7879
          %8428 = vmatpush.bf16.msra.mxu0 %v7875
          %8429 = vmatpush.bf16.msra.mxu0 %v7871
          %8430 = vmatmul.bf16.gmra.mxu0 %v6714
          %v8431 = vpop.f32.mrf.mxu0
          %v8432 = vadd.f32 %v8418, %v8431
          %v8433 = vpop.f32.mrf.mxu0
          %v8434 = vadd.f32 %v8420, %v8433
          %8435 = vdwg.mxu0
          %8436 = vmatpush.bf16.msra.mxu0 %v7931
          %8437 = vmatpush.bf16.msra.mxu0 %v7927
          %8438 = vmatpush.bf16.msra.mxu0 %v7923
          %8439 = vmatpush.bf16.msra.mxu0 %v7919
          %8440 = vmatpush.bf16.msra.mxu0 %v7915
          %8441 = vmatpush.bf16.msra.mxu0 %v7911
          %8442 = vmatpush.bf16.msra.mxu0 %v7907
          %8443 = vmatpush.bf16.msra.mxu0 %v7903
          %8444 = vmatmul.bf16.gmra.mxu0 %v6715
          %v8445 = vpop.f32.mrf.mxu0
          %v8446 = vadd.f32 %v8432, %v8445
          %v8447 = vpop.f32.mrf.mxu0
          %v8448 = vadd.f32 %v8434, %v8447
          %8449 = vdwg.mxu0
          %8450 = vmatpush.bf16.msra.mxu0 %v7963
          %8451 = vmatpush.bf16.msra.mxu0 %v7959
          %8452 = vmatpush.bf16.msra.mxu0 %v7955
          %8453 = vmatpush.bf16.msra.mxu0 %v7951
          %8454 = vmatpush.bf16.msra.mxu0 %v7947
          %8455 = vmatpush.bf16.msra.mxu0 %v7943
          %8456 = vmatpush.bf16.msra.mxu0 %v7939
          %8457 = vmatpush.bf16.msra.mxu0 %v7935
          %8458 = vmatmul.bf16.gmra.mxu0 %v6716
          %v8459 = vpop.f32.mrf.mxu0
          %v8460 = vadd.f32 %v8446, %v8459
          %v8461 = vpop.f32.mrf.mxu0
          %v8462 = vadd.f32 %v8448, %v8461
          %8463 = vdwg.mxu0
          %8464 = vmatpush.bf16.msra.mxu0 %v7995
          %8465 = vmatpush.bf16.msra.mxu0 %v7991
          %8466 = vmatpush.bf16.msra.mxu0 %v7987
          %8467 = vmatpush.bf16.msra.mxu0 %v7983
          %8468 = vmatpush.bf16.msra.mxu0 %v7979
          %8469 = vmatpush.bf16.msra.mxu0 %v7975
          %8470 = vmatpush.bf16.msra.mxu0 %v7971
          %8471 = vmatpush.bf16.msra.mxu0 %v7967
          %8472 = vmatmul.bf16.gmra.mxu0 %v6717
          %v8473 = vpop.f32.mrf.mxu0
          %v8474 = vadd.f32 %v8460, %v8473
          %v8475 = vpop.f32.mrf.mxu0
          %v8476 = vadd.f32 %v8462, %v8475
          %8477 = vdwg.mxu0
          %8478 = vmatpush.bf16.msra.mxu0 %v7772
          %8479 = vmatpush.bf16.msra.mxu0 %v7768
          %8480 = vmatpush.bf16.msra.mxu0 %v7764
          %8481 = vmatpush.bf16.msra.mxu0 %v7760
          %8482 = vmatpush.bf16.msra.mxu0 %v7756
          %8483 = vmatpush.bf16.msra.mxu0 %v7752
          %8484 = vmatpush.bf16.msra.mxu0 %v7748
          %8485 = vmatpush.bf16.msra.mxu0 %v7744
          %8486 = vmatmul.bf16.gmra.mxu0 %v6710
          %v8487 = vpop.f32.mrf.mxu0
          %v8488 = vadd.f32 0.0, %v8487
          %v8489 = vpop.f32.mrf.mxu0
          %v8490 = vadd.f32 0.0, %v8489
          %8491 = vdwg.mxu0
          %8492 = vmatpush.bf16.msra.mxu0 %v7804
          %8493 = vmatpush.bf16.msra.mxu0 %v7800
          %8494 = vmatpush.bf16.msra.mxu0 %v7796
          %8495 = vmatpush.bf16.msra.mxu0 %v7792
          %8496 = vmatpush.bf16.msra.mxu0 %v7788
          %8497 = vmatpush.bf16.msra.mxu0 %v7784
          %8498 = vmatpush.bf16.msra.mxu0 %v7780
          %8499 = vmatpush.bf16.msra.mxu0 %v7776
          %8500 = vmatmul.bf16.gmra.mxu0 %v6711
          %v8501 = vpop.f32.mrf.mxu0
          %v8502 = vadd.f32 %v8488, %v8501
          %v8503 = vpop.f32.mrf.mxu0
          %v8504 = vadd.f32 %v8490, %v8503
          %8505 = vdwg.mxu0
          %8506 = vmatpush.bf16.msra.mxu0 %v7836
          %8507 = vmatpush.bf16.msra.mxu0 %v7832
          %8508 = vmatpush.bf16.msra.mxu0 %v7828
          %8509 = vmatpush.bf16.msra.mxu0 %v7824
          %8510 = vmatpush.bf16.msra.mxu0 %v7820
          %8511 = vmatpush.bf16.msra.mxu0 %v7816
          %8512 = vmatpush.bf16.msra.mxu0 %v7812
          %8513 = vmatpush.bf16.msra.mxu0 %v7808
          %8514 = vmatmul.bf16.gmra.mxu0 %v6712
          %v8515 = vpop.f32.mrf.mxu0
          %v8516 = vadd.f32 %v8502, %v8515
          %v8517 = vpop.f32.mrf.mxu0
          %v8518 = vadd.f32 %v8504, %v8517
          %8519 = vdwg.mxu0
          %8520 = vmatpush.bf16.msra.mxu0 %v7868
          %8521 = vmatpush.bf16.msra.mxu0 %v7864
          %8522 = vmatpush.bf16.msra.mxu0 %v7860
          %8523 = vmatpush.bf16.msra.mxu0 %v7856
          %8524 = vmatpush.bf16.msra.mxu0 %v7852
          %8525 = vmatpush.bf16.msra.mxu0 %v7848
          %8526 = vmatpush.bf16.msra.mxu0 %v7844
          %8527 = vmatpush.bf16.msra.mxu0 %v7840
          %8528 = vmatmul.bf16.gmra.mxu0 %v6713
          %v8529 = vpop.f32.mrf.mxu0
          %v8530 = vadd.f32 %v8516, %v8529
          %v8531 = vpop.f32.mrf.mxu0
          %v8532 = vadd.f32 %v8518, %v8531
          %8533 = vdwg.mxu0
          %8534 = vmatpush.bf16.msra.mxu0 %v7900
          %8535 = vmatpush.bf16.msra.mxu0 %v7896
          %8536 = vmatpush.bf16.msra.mxu0 %v7892
          %8537 = vmatpush.bf16.msra.mxu0 %v7888
          %8538 = vmatpush.bf16.msra.mxu0 %v7884
          %8539 = vmatpush.bf16.msra.mxu0 %v7880
          %8540 = vmatpush.bf16.msra.mxu0 %v7876
          %8541 = vmatpush.bf16.msra.mxu0 %v7872
          %8542 = vmatmul.bf16.gmra.mxu0 %v6714
          %v8543 = vpop.f32.mrf.mxu0
          %v8544 = vadd.f32 %v8530, %v8543
          %v8545 = vpop.f32.mrf.mxu0
          %v8546 = vadd.f32 %v8532, %v8545
          %8547 = vdwg.mxu0
          %8548 = vmatpush.bf16.msra.mxu0 %v7932
          %8549 = vmatpush.bf16.msra.mxu0 %v7928
          %8550 = vmatpush.bf16.msra.mxu0 %v7924
          %8551 = vmatpush.bf16.msra.mxu0 %v7920
          %8552 = vmatpush.bf16.msra.mxu0 %v7916
          %8553 = vmatpush.bf16.msra.mxu0 %v7912
          %8554 = vmatpush.bf16.msra.mxu0 %v7908
          %8555 = vmatpush.bf16.msra.mxu0 %v7904
          %8556 = vmatmul.bf16.gmra.mxu0 %v6715
          %v8557 = vpop.f32.mrf.mxu0
          %v8558 = vadd.f32 %v8544, %v8557
          %v8559 = vpop.f32.mrf.mxu0
          %v8560 = vadd.f32 %v8546, %v8559
          %8561 = vdwg.mxu0
          %8562 = vmatpush.bf16.msra.mxu0 %v7964
          %8563 = vmatpush.bf16.msra.mxu0 %v7960
          %8564 = vmatpush.bf16.msra.mxu0 %v7956
          %8565 = vmatpush.bf16.msra.mxu0 %v7952
          %8566 = vmatpush.bf16.msra.mxu0 %v7948
          %8567 = vmatpush.bf16.msra.mxu0 %v7944
          %8568 = vmatpush.bf16.msra.mxu0 %v7940
          %8569 = vmatpush.bf16.msra.mxu0 %v7936
          %8570 = vmatmul.bf16.gmra.mxu0 %v6716
          %v8571 = vpop.f32.mrf.mxu0
          %v8572 = vadd.f32 %v8558, %v8571
          %v8573 = vpop.f32.mrf.mxu0
          %v8574 = vadd.f32 %v8560, %v8573
          %8575 = vdwg.mxu0
          %8576 = vmatpush.bf16.msra.mxu0 %v7996
          %8577 = vmatpush.bf16.msra.mxu0 %v7992
          %8578 = vmatpush.bf16.msra.mxu0 %v7988
          %8579 = vmatpush.bf16.msra.mxu0 %v7984
          %8580 = vmatpush.bf16.msra.mxu0 %v7980
          %8581 = vmatpush.bf16.msra.mxu0 %v7976
          %8582 = vmatpush.bf16.msra.mxu0 %v7972
          %8583 = vmatpush.bf16.msra.mxu0 %v7968
          %8584 = vmatmul.bf16.gmra.mxu0 %v6717
          %v8585 = vpop.f32.mrf.mxu0
          %v8586 = vadd.f32 %v8572, %v8585
          %v8587 = vpop.f32.mrf.mxu0
          %v8588 = vadd.f32 %v8574, %v8587
          %8589 = vdwg.mxu0
          %8590 = vmatpush.bf16.msra.mxu0 %v7773
          %8591 = vmatpush.bf16.msra.mxu0 %v7769
          %8592 = vmatpush.bf16.msra.mxu0 %v7765
          %8593 = vmatpush.bf16.msra.mxu0 %v7761
          %8594 = vmatpush.bf16.msra.mxu0 %v7757
          %8595 = vmatpush.bf16.msra.mxu0 %v7753
          %8596 = vmatpush.bf16.msra.mxu0 %v7749
          %8597 = vmatpush.bf16.msra.mxu0 %v7745
          %8598 = vmatmul.bf16.gmra.mxu0 %v6710
          %v8599 = vpop.f32.mrf.mxu0
          %v8600 = vadd.f32 0.0, %v8599
          %v8601 = vpop.f32.mrf.mxu0
          %v8602 = vadd.f32 0.0, %v8601
          %8603 = vdwg.mxu0
          %8604 = vmatpush.bf16.msra.mxu0 %v7805
          %8605 = vmatpush.bf16.msra.mxu0 %v7801
          %8606 = vmatpush.bf16.msra.mxu0 %v7797
          %8607 = vmatpush.bf16.msra.mxu0 %v7793
          %8608 = vmatpush.bf16.msra.mxu0 %v7789
          %8609 = vmatpush.bf16.msra.mxu0 %v7785
          %8610 = vmatpush.bf16.msra.mxu0 %v7781
          %8611 = vmatpush.bf16.msra.mxu0 %v7777
          %8612 = vmatmul.bf16.gmra.mxu0 %v6711
          %v8613 = vpop.f32.mrf.mxu0
          %v8614 = vadd.f32 %v8600, %v8613
          %v8615 = vpop.f32.mrf.mxu0
          %v8616 = vadd.f32 %v8602, %v8615
          %8617 = vdwg.mxu0
          %8618 = vmatpush.bf16.msra.mxu0 %v7837
          %8619 = vmatpush.bf16.msra.mxu0 %v7833
          %8620 = vmatpush.bf16.msra.mxu0 %v7829
          %8621 = vmatpush.bf16.msra.mxu0 %v7825
          %8622 = vmatpush.bf16.msra.mxu0 %v7821
          %8623 = vmatpush.bf16.msra.mxu0 %v7817
          %8624 = vmatpush.bf16.msra.mxu0 %v7813
          %8625 = vmatpush.bf16.msra.mxu0 %v7809
          %8626 = vmatmul.bf16.gmra.mxu0 %v6712
          %v8627 = vpop.f32.mrf.mxu0
          %v8628 = vadd.f32 %v8614, %v8627
          %v8629 = vpop.f32.mrf.mxu0
          %v8630 = vadd.f32 %v8616, %v8629
          %8631 = vdwg.mxu0
          %8632 = vmatpush.bf16.msra.mxu0 %v7869
          %8633 = vmatpush.bf16.msra.mxu0 %v7865
          %8634 = vmatpush.bf16.msra.mxu0 %v7861
          %8635 = vmatpush.bf16.msra.mxu0 %v7857
          %8636 = vmatpush.bf16.msra.mxu0 %v7853
          %8637 = vmatpush.bf16.msra.mxu0 %v7849
          %8638 = vmatpush.bf16.msra.mxu0 %v7845
          %8639 = vmatpush.bf16.msra.mxu0 %v7841
          %8640 = vmatmul.bf16.gmra.mxu0 %v6713
          %v8641 = vpop.f32.mrf.mxu0
          %v8642 = vadd.f32 %v8628, %v8641
          %v8643 = vpop.f32.mrf.mxu0
          %v8644 = vadd.f32 %v8630, %v8643
          %8645 = vdwg.mxu0
          %8646 = vmatpush.bf16.msra.mxu0 %v7901
          %8647 = vmatpush.bf16.msra.mxu0 %v7897
          %8648 = vmatpush.bf16.msra.mxu0 %v7893
          %8649 = vmatpush.bf16.msra.mxu0 %v7889
          %8650 = vmatpush.bf16.msra.mxu0 %v7885
          %8651 = vmatpush.bf16.msra.mxu0 %v7881
          %8652 = vmatpush.bf16.msra.mxu0 %v7877
          %8653 = vmatpush.bf16.msra.mxu0 %v7873
          %8654 = vmatmul.bf16.gmra.mxu0 %v6714
          %v8655 = vpop.f32.mrf.mxu0
          %v8656 = vadd.f32 %v8642, %v8655
          %v8657 = vpop.f32.mrf.mxu0
          %v8658 = vadd.f32 %v8644, %v8657
          %8659 = vdwg.mxu0
          %8660 = vmatpush.bf16.msra.mxu0 %v7933
          %8661 = vmatpush.bf16.msra.mxu0 %v7929
          %8662 = vmatpush.bf16.msra.mxu0 %v7925
          %8663 = vmatpush.bf16.msra.mxu0 %v7921
          %8664 = vmatpush.bf16.msra.mxu0 %v7917
          %8665 = vmatpush.bf16.msra.mxu0 %v7913
          %8666 = vmatpush.bf16.msra.mxu0 %v7909
          %8667 = vmatpush.bf16.msra.mxu0 %v7905
          %8668 = vmatmul.bf16.gmra.mxu0 %v6715
          %v8669 = vpop.f32.mrf.mxu0
          %v8670 = vadd.f32 %v8656, %v8669
          %v8671 = vpop.f32.mrf.mxu0
          %v8672 = vadd.f32 %v8658, %v8671
          %8673 = vdwg.mxu0
          %8674 = vmatpush.bf16.msra.mxu0 %v7965
          %8675 = vmatpush.bf16.msra.mxu0 %v7961
          %8676 = vmatpush.bf16.msra.mxu0 %v7957
          %8677 = vmatpush.bf16.msra.mxu0 %v7953
          %8678 = vmatpush.bf16.msra.mxu0 %v7949
          %8679 = vmatpush.bf16.msra.mxu0 %v7945
          %8680 = vmatpush.bf16.msra.mxu0 %v7941
          %8681 = vmatpush.bf16.msra.mxu0 %v7937
          %8682 = vmatmul.bf16.gmra.mxu0 %v6716
          %v8683 = vpop.f32.mrf.mxu0
          %v8684 = vadd.f32 %v8670, %v8683
          %v8685 = vpop.f32.mrf.mxu0
          %v8686 = vadd.f32 %v8672, %v8685
          %8687 = vdwg.mxu0
          %8688 = vmatpush.bf16.msra.mxu0 %v7997
          %8689 = vmatpush.bf16.msra.mxu0 %v7993
          %8690 = vmatpush.bf16.msra.mxu0 %v7989
          %8691 = vmatpush.bf16.msra.mxu0 %v7985
          %8692 = vmatpush.bf16.msra.mxu0 %v7981
          %8693 = vmatpush.bf16.msra.mxu0 %v7977
          %8694 = vmatpush.bf16.msra.mxu0 %v7973
          %8695 = vmatpush.bf16.msra.mxu0 %v7969
          %8696 = vmatmul.bf16.gmra.mxu0 %v6717
          %v8697 = vpop.f32.mrf.mxu0
          %v8698 = vadd.f32 %v8684, %v8697
          %v8699 = vpop.f32.mrf.mxu0
          %v8700 = vadd.f32 %v8686, %v8699
          %8701 = vdwg.mxu0
          %v8702 = vld [vmem:[#allocation8] sm:$0xff]
          %v8703 = vadd.f32 %v8362, %v8364
          %v8704 = vrot.slane %v8703, 4
          %v8705 = vadd.f32 %v8703, %v8704
          %v8706 = vrot.slane %v8705, 2
          %v8707 = vadd.f32 %v8705, %v8706
          %v8708 = vrot.slane %v8707, 1
          %v8709 = vadd.f32 %v8707, %v8708
          %v8710 = vadd.f32 %v8474, %v8476
          %v8711 = vrot.slane %v8710, 4
          %v8712 = vadd.f32 %v8710, %v8711
          %v8713 = vrot.slane %v8712, 2
          %v8714 = vadd.f32 %v8712, %v8713
          %v8715 = vrot.slane %v8714, 1
          %v8716 = vadd.f32 %v8714, %v8715
          %v8717 = vadd.f32 %v8586, %v8588
          %v8718 = vrot.slane %v8717, 4
          %v8719 = vadd.f32 %v8717, %v8718
          %v8720 = vrot.slane %v8719, 2
          %v8721 = vadd.f32 %v8719, %v8720
          %v8722 = vrot.slane %v8721, 1
          %v8723 = vadd.f32 %v8721, %v8722
          %v8724 = vadd.f32 %v8698, %v8700
          %v8725 = vrot.slane %v8724, 4
          %v8726 = vadd.f32 %v8724, %v8725
          %v8727 = vrot.slane %v8726, 2
          %v8728 = vadd.f32 %v8726, %v8727
          %v8729 = vrot.slane %v8728, 1
          %v8730 = vadd.f32 %v8728, %v8729
          %v8731 = vrcp.pop 16.0
          %v8732 = vmul.f32 16.0, %v8731
          %v8733 = vsub.f32 1.0, %v8732
          %v8734 = vmul.f32 %v8731, %v8733
          %v8735 = vadd.f32 %v8731, %v8734
          %vm8736 = vweird.f32 %v8731
          %v8737 = vsel %vm8736, %v8731, %v8735
          %v8738 = vmul.f32 %v8709, %v8737
          %v8739 = vmul.f32 %v8716, %v8737
          %v8740 = vmul.f32 %v8723, %v8737
          %v8741 = vmul.f32 %v8730, %v8737
          %v8742 = vsub.f32 %v8362, %v8738
          %v8743 = vsub.f32 %v8474, %v8739
          %v8744 = vsub.f32 %v8586, %v8740
          %v8745 = vsub.f32 %v8698, %v8741
          %v8746 = vsub.f32 %v8364, %v8738
          %v8747 = vsub.f32 %v8476, %v8739
          %v8748 = vsub.f32 %v8588, %v8740
          %v8749 = vsub.f32 %v8700, %v8741
          %v8750 = vmul.f32 %v8742, %v8742
          %v8751 = vmul.f32 %v8743, %v8743
          %v8752 = vmul.f32 %v8744, %v8744
          %v8753 = vmul.f32 %v8745, %v8745
          %v8754 = vmul.f32 %v8746, %v8746
          %v8755 = vmul.f32 %v8747, %v8747
          %v8756 = vmul.f32 %v8748, %v8748
          %v8757 = vmul.f32 %v8749, %v8749
          %v8758 = vadd.f32 %v8750, %v8754
          %v8759 = vrot.slane %v8758, 4
          %v8760 = vadd.f32 %v8758, %v8759
          %v8761 = vrot.slane %v8760, 2
          %v8762 = vadd.f32 %v8760, %v8761
          %v8763 = vrot.slane %v8762, 1
          %v8764 = vadd.f32 %v8762, %v8763
          %v8765 = vadd.f32 %v8751, %v8755
          %v8766 = vrot.slane %v8765, 4
          %v8767 = vadd.f32 %v8765, %v8766
          %v8768 = vrot.slane %v8767, 2
          %v8769 = vadd.f32 %v8767, %v8768
          %v8770 = vrot.slane %v8769, 1
          %v8771 = vadd.f32 %v8769, %v8770
          %v8772 = vadd.f32 %v8752, %v8756
          %v8773 = vrot.slane %v8772, 4
          %v8774 = vadd.f32 %v8772, %v8773
          %v8775 = vrot.slane %v8774, 2
          %v8776 = vadd.f32 %v8774, %v8775
          %v8777 = vrot.slane %v8776, 1
          %v8778 = vadd.f32 %v8776, %v8777
          %v8779 = vadd.f32 %v8753, %v8757
          %v8780 = vrot.slane %v8779, 4
          %v8781 = vadd.f32 %v8779, %v8780
          %v8782 = vrot.slane %v8781, 2
          %v8783 = vadd.f32 %v8781, %v8782
          %v8784 = vrot.slane %v8783, 1
          %v8785 = vadd.f32 %v8783, %v8784
          %v8786 = vmul.f32 %v8764, %v8737
          %v8787 = vmul.f32 %v8771, %v8737
          %v8788 = vmul.f32 %v8778, %v8737
          %v8789 = vmul.f32 %v8785, %v8737
          %v8790 = vadd.f32 %v8786, 1e-05
          %v8791 = vadd.f32 %v8787, 1e-05
          %v8792 = vadd.f32 %v8788, 1e-05
          %v8793 = vadd.f32 %v8789, 1e-05
          %v8794 = vrsqrt.pop %v8790
          %v8795 = vmul.f32 %v8794, %v8790
          %v8796 = vmul.f32 %v8795, %v8794
          %v8797 = vmul.f32 0.5, %v8796
          %v8798 = vsub.f32 1.5, %v8797
          %v8799 = vmul.f32 %v8794, %v8798
          %vm8800 = vweird.f32 %v8790
          %vm8801 = vweird.f32 %v8794
          %vm8802 = vmor %vm8800, %vm8801
          %v8803 = vsel %vm8802, %v8794, %v8799
          %v8804 = vrsqrt.pop %v8791
          %v8805 = vmul.f32 %v8804, %v8791
          %v8806 = vmul.f32 %v8805, %v8804
          %v8807 = vmul.f32 0.5, %v8806
          %v8808 = vsub.f32 1.5, %v8807
          %v8809 = vmul.f32 %v8804, %v8808
          %vm8810 = vweird.f32 %v8791
          %vm8811 = vweird.f32 %v8804
          %vm8812 = vmor %vm8810, %vm8811
          %v8813 = vsel %vm8812, %v8804, %v8809
          %v8814 = vrsqrt.pop %v8792
          %v8815 = vmul.f32 %v8814, %v8792
          %v8816 = vmul.f32 %v8815, %v8814
          %v8817 = vmul.f32 0.5, %v8816
          %v8818 = vsub.f32 1.5, %v8817
          %v8819 = vmul.f32 %v8814, %v8818
          %vm8820 = vweird.f32 %v8792
          %vm8821 = vweird.f32 %v8814
          %vm8822 = vmor %vm8820, %vm8821
          %v8823 = vsel %vm8822, %v8814, %v8819
          %v8824 = vrsqrt.pop %v8793
          %v8825 = vmul.f32 %v8824, %v8793
          %v8826 = vmul.f32 %v8825, %v8824
          %v8827 = vmul.f32 0.5, %v8826
          %v8828 = vsub.f32 1.5, %v8827
          %v8829 = vmul.f32 %v8824, %v8828
          %vm8830 = vweird.f32 %v8793
          %vm8831 = vweird.f32 %v8824
          %vm8832 = vmor %vm8830, %vm8831
          %v8833 = vsel %vm8832, %v8824, %v8829
          %v8838 = vrot.slane %v8813, 6
          %v8839 = vrot.slane %v8823, 4
          %v8840 = vrot.slane %v8833, 2
          %vm8841 = vcmask 1041408
          %v8842 = vsel %vm8841, %v8803, %v8838
          %vm8843 = vcmask 1045508
          %v8844 = vsel %vm8843, %v8839, %v8840
          %vm8845 = vcmask 1043456
          %v8846 = vsel %vm8845, %v8842, %v8844
          %v8848 = vmul.f32 %v8702, %v8846
          %v8850 = vperm.slane %v8848, 0
          %v8851 = vperm.slane %v8848, 2
          %v8852 = vperm.slane %v8848, 4
          %v8853 = vperm.slane %v8848, 6
          %v8858 = vmul.f32 %v8738, %v8850
          %v8859 = vmul.f32 %v8739, %v8851
          %v8860 = vmul.f32 %v8740, %v8852
          %v8861 = vmul.f32 %v8741, %v8853
          %v8866 = vrot.slane %v8859, 6
          %v8867 = vrot.slane %v8860, 4
          %v8868 = vrot.slane %v8861, 2
          %v8869 = vsel %vm8841, %v8858, %v8866
          %v8870 = vsel %vm8843, %v8867, %v8868
          %v8871 = vsel %vm8845, %v8869, %v8870
          %v8872 = vrot.slane %v8871, 7
          %v8874 = vsub.f32 %v8702, %v8872
          %v8875 = vperm.slane %v8850, 0
          %v8876 = vperm.slane %v8851, 0
          %v8877 = vperm.slane %v8852, 0
          %v8878 = vperm.slane %v8853, 0
          %v8879 = vmul.f32 %v8362, %v8875
          %v8880 = vmul.f32 %v8474, %v8876
          %v8881 = vmul.f32 %v8586, %v8877
          %v8882 = vmul.f32 %v8698, %v8878
          %v8883 = vmul.f32 %v8364, %v8875
          %v8884 = vmul.f32 %v8476, %v8876
          %v8885 = vmul.f32 %v8588, %v8877
          %v8886 = vmul.f32 %v8700, %v8878
          %v8888 = vperm.slane %v8874, 1
          %v8889 = vperm.slane %v8874, 3
          %v8890 = vperm.slane %v8874, 5
          %v8891 = vperm.slane %v8874, 7
          %v8896 = vperm.slane %v8888, 1
          %v8897 = vperm.slane %v8889, 1
          %v8898 = vperm.slane %v8890, 1
          %v8899 = vperm.slane %v8891, 1
          %v8900 = vadd.f32 %v8879, %v8896
          %v8901 = vadd.f32 %v8880, %v8897
          %v8902 = vadd.f32 %v8881, %v8898
          %v8903 = vadd.f32 %v8882, %v8899
          %v8904 = vadd.f32 %v8883, %v8896
          %v8905 = vadd.f32 %v8884, %v8897
          %v8906 = vadd.f32 %v8885, %v8898
          %v8907 = vadd.f32 %v8886, %v8899
          %v8908 = vmax.f32 %v8900, 0.0
          %v8909 = vmax.f32 %v8901, 0.0
          %v8910 = vmax.f32 %v8902, 0.0
          %v8911 = vmax.f32 %v8903, 0.0
          %v8912 = vmax.f32 %v8904, 0.0
          %v8913 = vmax.f32 %v8905, 0.0
          %v8914 = vmax.f32 %v8906, 0.0
          %v8915 = vmax.f32 %v8907, 0.0
          %v8916 = vpack.c.bf16 %v8912, %v8908
          %v8917 = vpack.c.bf16 %v8913, %v8909
          %v8918 = vpack.c.bf16 %v8914, %v8910
          %v8919 = vpack.c.bf16 %v8915, %v8911
          %v8920 = vld [vmem:[#allocation9] sm:$0xff]
          %v8921 = vld [vmem:[#allocation9 + $0x8] sm:$0xff]
          %v8922 = vld [vmem:[#allocation9 + $0x10] sm:$0xff]
          %v8923 = vld [vmem:[#allocation9 + $0x18] sm:$0xff]
          %v8924 = vld [vmem:[#allocation9 + $0x20] sm:$0xff]
          %v8925 = vld [vmem:[#allocation9 + $0x28] sm:$0xff]
          %v8926 = vld [vmem:[#allocation9 + $0x30] sm:$0xff]
          %v8927 = vld [vmem:[#allocation9 + $0x38] sm:$0xff]
          %v8928 = vld [vmem:[#allocation9 + $0x40] sm:$0xff]
          %v8929 = vld [vmem:[#allocation9 + $0x48] sm:$0xff]
          %v8930 = vld [vmem:[#allocation9 + $0x50] sm:$0xff]
          %v8931 = vld [vmem:[#allocation9 + $0x58] sm:$0xff]
          %v8932 = vld [vmem:[#allocation9 + $0x60] sm:$0xff]
          %v8933 = vld [vmem:[#allocation9 + $0x68] sm:$0xff]
          %v8934 = vld [vmem:[#allocation9 + $0x70] sm:$0xff]
          %v8935 = vld [vmem:[#allocation9 + $0x78] sm:$0xff]
          %v8936 = vld [vmem:[#allocation9 + $0x80] sm:$0xff]
          %v8937 = vld [vmem:[#allocation9 + $0x88] sm:$0xff]
          %v8938 = vld [vmem:[#allocation9 + $0x90] sm:$0xff]
          %v8939 = vld [vmem:[#allocation9 + $0x98] sm:$0xff]
          %v8940 = vld [vmem:[#allocation9 + $0xa0] sm:$0xff]
          %v8941 = vld [vmem:[#allocation9 + $0xa8] sm:$0xff]
          %v8942 = vld [vmem:[#allocation9 + $0xb0] sm:$0xff]
          %v8943 = vld [vmem:[#allocation9 + $0xb8] sm:$0xff]
          %v8944 = vld [vmem:[#allocation9 + $0xc0] sm:$0xff]
          %v8945 = vld [vmem:[#allocation9 + $0xc8] sm:$0xff]
          %v8946 = vld [vmem:[#allocation9 + $0xd0] sm:$0xff]
          %v8947 = vld [vmem:[#allocation9 + $0xd8] sm:$0xff]
          %v8948 = vld [vmem:[#allocation9 + $0xe0] sm:$0xff]
          %v8949 = vld [vmem:[#allocation9 + $0xe8] sm:$0xff]
          %v8950 = vld [vmem:[#allocation9 + $0xf0] sm:$0xff]
          %v8951 = vld [vmem:[#allocation9 + $0xf8] sm:$0xff]
          %v8952 = vld [vmem:[#allocation9 + $0x100] sm:$0xff]
          %v8953 = vld [vmem:[#allocation9 + $0x108] sm:$0xff]
          %v8954 = vld [vmem:[#allocation9 + $0x110] sm:$0xff]
          %v8955 = vld [vmem:[#allocation9 + $0x118] sm:$0xff]
          %v8956 = vld [vmem:[#allocation9 + $0x120] sm:$0xff]
          %v8957 = vld [vmem:[#allocation9 + $0x128] sm:$0xff]
          %v8958 = vld [vmem:[#allocation9 + $0x130] sm:$0xff]
          %v8959 = vld [vmem:[#allocation9 + $0x138] sm:$0xff]
          %v8960 = vld [vmem:[#allocation9 + $0x140] sm:$0xff]
          %v8961 = vld [vmem:[#allocation9 + $0x148] sm:$0xff]
          %v8962 = vld [vmem:[#allocation9 + $0x150] sm:$0xff]
          %v8963 = vld [vmem:[#allocation9 + $0x158] sm:$0xff]
          %v8964 = vld [vmem:[#allocation9 + $0x160] sm:$0xff]
          %v8965 = vld [vmem:[#allocation9 + $0x168] sm:$0xff]
          %v8966 = vld [vmem:[#allocation9 + $0x170] sm:$0xff]
          %v8967 = vld [vmem:[#allocation9 + $0x178] sm:$0xff]
          %v8968 = vld [vmem:[#allocation9 + $0x180] sm:$0xff]
          %v8969 = vld [vmem:[#allocation9 + $0x188] sm:$0xff]
          %v8970 = vld [vmem:[#allocation9 + $0x190] sm:$0xff]
          %v8971 = vld [vmem:[#allocation9 + $0x198] sm:$0xff]
          %v8972 = vld [vmem:[#allocation9 + $0x1a0] sm:$0xff]
          %v8973 = vld [vmem:[#allocation9 + $0x1a8] sm:$0xff]
          %v8974 = vld [vmem:[#allocation9 + $0x1b0] sm:$0xff]
          %v8975 = vld [vmem:[#allocation9 + $0x1b8] sm:$0xff]
          %v8976 = vld [vmem:[#allocation9 + $0x1c0] sm:$0xff]
          %v8977 = vld [vmem:[#allocation9 + $0x1c8] sm:$0xff]
          %v8978 = vld [vmem:[#allocation9 + $0x1d0] sm:$0xff]
          %v8979 = vld [vmem:[#allocation9 + $0x1d8] sm:$0xff]
          %v8980 = vld [vmem:[#allocation9 + $0x1e0] sm:$0xff]
          %v8981 = vld [vmem:[#allocation9 + $0x1e8] sm:$0xff]
          %v8982 = vld [vmem:[#allocation9 + $0x1f0] sm:$0xff]
          %v8983 = vld [vmem:[#allocation9 + $0x1f8] sm:$0xff]
          %v9048 = vunpack.c.l.b16 %v8920
          %v9049 = vunpack.c.h.b16 %v8920
          %v9050 = vunpack.c.l.b16 %v8921
          %v9051 = vunpack.c.h.b16 %v8921
          %v9052 = vunpack.c.l.b16 %v8922
          %v9053 = vunpack.c.h.b16 %v8922
          %v9054 = vunpack.c.l.b16 %v8923
          %v9055 = vunpack.c.h.b16 %v8923
          %v9056 = vunpack.c.l.b16 %v8924
          %v9057 = vunpack.c.h.b16 %v8924
          %v9058 = vunpack.c.l.b16 %v8925
          %v9059 = vunpack.c.h.b16 %v8925
          %v9060 = vunpack.c.l.b16 %v8926
          %v9061 = vunpack.c.h.b16 %v8926
          %v9062 = vunpack.c.l.b16 %v8927
          %v9063 = vunpack.c.h.b16 %v8927
          %v9064 = vunpack.c.l.b16 %v8928
          %v9065 = vunpack.c.h.b16 %v8928
          %v9066 = vunpack.c.l.b16 %v8929
          %v9067 = vunpack.c.h.b16 %v8929
          %v9068 = vunpack.c.l.b16 %v8930
          %v9069 = vunpack.c.h.b16 %v8930
          %v9070 = vunpack.c.l.b16 %v8931
          %v9071 = vunpack.c.h.b16 %v8931
          %v9072 = vunpack.c.l.b16 %v8932
          %v9073 = vunpack.c.h.b16 %v8932
          %v9074 = vunpack.c.l.b16 %v8933
          %v9075 = vunpack.c.h.b16 %v8933
          %v9076 = vunpack.c.l.b16 %v8934
          %v9077 = vunpack.c.h.b16 %v8934
          %v9078 = vunpack.c.l.b16 %v8935
          %v9079 = vunpack.c.h.b16 %v8935
          %v9080 = vunpack.c.l.b16 %v8936
          %v9081 = vunpack.c.h.b16 %v8936
          %v9082 = vunpack.c.l.b16 %v8937
          %v9083 = vunpack.c.h.b16 %v8937
          %v9084 = vunpack.c.l.b16 %v8938
          %v9085 = vunpack.c.h.b16 %v8938
          %v9086 = vunpack.c.l.b16 %v8939
          %v9087 = vunpack.c.h.b16 %v8939
          %v9088 = vunpack.c.l.b16 %v8940
          %v9089 = vunpack.c.h.b16 %v8940
          %v9090 = vunpack.c.l.b16 %v8941
          %v9091 = vunpack.c.h.b16 %v8941
          %v9092 = vunpack.c.l.b16 %v8942
          %v9093 = vunpack.c.h.b16 %v8942
          %v9094 = vunpack.c.l.b16 %v8943
          %v9095 = vunpack.c.h.b16 %v8943
          %v9096 = vunpack.c.l.b16 %v8944
          %v9097 = vunpack.c.h.b16 %v8944
          %v9098 = vunpack.c.l.b16 %v8945
          %v9099 = vunpack.c.h.b16 %v8945
          %v9100 = vunpack.c.l.b16 %v8946
          %v9101 = vunpack.c.h.b16 %v8946
          %v9102 = vunpack.c.l.b16 %v8947
          %v9103 = vunpack.c.h.b16 %v8947
          %v9104 = vunpack.c.l.b16 %v8948
          %v9105 = vunpack.c.h.b16 %v8948
          %v9106 = vunpack.c.l.b16 %v8949
          %v9107 = vunpack.c.h.b16 %v8949
          %v9108 = vunpack.c.l.b16 %v8950
          %v9109 = vunpack.c.h.b16 %v8950
          %v9110 = vunpack.c.l.b16 %v8951
          %v9111 = vunpack.c.h.b16 %v8951
          %v9112 = vunpack.c.l.b16 %v8952
          %v9113 = vunpack.c.h.b16 %v8952
          %v9114 = vunpack.c.l.b16 %v8953
          %v9115 = vunpack.c.h.b16 %v8953
          %v9116 = vunpack.c.l.b16 %v8954
          %v9117 = vunpack.c.h.b16 %v8954
          %v9118 = vunpack.c.l.b16 %v8955
          %v9119 = vunpack.c.h.b16 %v8955
          %v9120 = vunpack.c.l.b16 %v8956
          %v9121 = vunpack.c.h.b16 %v8956
          %v9122 = vunpack.c.l.b16 %v8957
          %v9123 = vunpack.c.h.b16 %v8957
          %v9124 = vunpack.c.l.b16 %v8958
          %v9125 = vunpack.c.h.b16 %v8958
          %v9126 = vunpack.c.l.b16 %v8959
          %v9127 = vunpack.c.h.b16 %v8959
          %v9128 = vunpack.c.l.b16 %v8960
          %v9129 = vunpack.c.h.b16 %v8960
          %v9130 = vunpack.c.l.b16 %v8961
          %v9131 = vunpack.c.h.b16 %v8961
          %v9132 = vunpack.c.l.b16 %v8962
          %v9133 = vunpack.c.h.b16 %v8962
          %v9134 = vunpack.c.l.b16 %v8963
          %v9135 = vunpack.c.h.b16 %v8963
          %v9136 = vunpack.c.l.b16 %v8964
          %v9137 = vunpack.c.h.b16 %v8964
          %v9138 = vunpack.c.l.b16 %v8965
          %v9139 = vunpack.c.h.b16 %v8965
          %v9140 = vunpack.c.l.b16 %v8966
          %v9141 = vunpack.c.h.b16 %v8966
          %v9142 = vunpack.c.l.b16 %v8967
          %v9143 = vunpack.c.h.b16 %v8967
          %v9144 = vunpack.c.l.b16 %v8968
          %v9145 = vunpack.c.h.b16 %v8968
          %v9146 = vunpack.c.l.b16 %v8969
          %v9147 = vunpack.c.h.b16 %v8969
          %v9148 = vunpack.c.l.b16 %v8970
          %v9149 = vunpack.c.h.b16 %v8970
          %v9150 = vunpack.c.l.b16 %v8971
          %v9151 = vunpack.c.h.b16 %v8971
          %v9152 = vunpack.c.l.b16 %v8972
          %v9153 = vunpack.c.h.b16 %v8972
          %v9154 = vunpack.c.l.b16 %v8973
          %v9155 = vunpack.c.h.b16 %v8973
          %v9156 = vunpack.c.l.b16 %v8974
          %v9157 = vunpack.c.h.b16 %v8974
          %v9158 = vunpack.c.l.b16 %v8975
          %v9159 = vunpack.c.h.b16 %v8975
          %v9160 = vunpack.c.l.b16 %v8976
          %v9161 = vunpack.c.h.b16 %v8976
          %v9162 = vunpack.c.l.b16 %v8977
          %v9163 = vunpack.c.h.b16 %v8977
          %v9164 = vunpack.c.l.b16 %v8978
          %v9165 = vunpack.c.h.b16 %v8978
          %v9166 = vunpack.c.l.b16 %v8979
          %v9167 = vunpack.c.h.b16 %v8979
          %v9168 = vunpack.c.l.b16 %v8980
          %v9169 = vunpack.c.h.b16 %v8980
          %v9170 = vunpack.c.l.b16 %v8981
          %v9171 = vunpack.c.h.b16 %v8981
          %v9172 = vunpack.c.l.b16 %v8982
          %v9173 = vunpack.c.h.b16 %v8982
          %v9174 = vunpack.c.l.b16 %v8983
          %v9175 = vunpack.c.h.b16 %v8983
          %v9176 = vpack.c.b16 %v9050, %v9048
          %v9177 = vpack.c.b16 %v9051, %v9049
          %v9178 = vpack.c.b16 %v9054, %v9052
          %v9179 = vpack.c.b16 %v9055, %v9053
          %v9180 = vpack.c.b16 %v9058, %v9056
          %v9181 = vpack.c.b16 %v9059, %v9057
          %v9182 = vpack.c.b16 %v9062, %v9060
          %v9183 = vpack.c.b16 %v9063, %v9061
          %v9184 = vpack.c.b16 %v9066, %v9064
          %v9185 = vpack.c.b16 %v9067, %v9065
          %v9186 = vpack.c.b16 %v9070, %v9068
          %v9187 = vpack.c.b16 %v9071, %v9069
          %v9188 = vpack.c.b16 %v9074, %v9072
          %v9189 = vpack.c.b16 %v9075, %v9073
          %v9190 = vpack.c.b16 %v9078, %v9076
          %v9191 = vpack.c.b16 %v9079, %v9077
          %v9192 = vpack.c.b16 %v9082, %v9080
          %v9193 = vpack.c.b16 %v9083, %v9081
          %v9194 = vpack.c.b16 %v9086, %v9084
          %v9195 = vpack.c.b16 %v9087, %v9085
          %v9196 = vpack.c.b16 %v9090, %v9088
          %v9197 = vpack.c.b16 %v9091, %v9089
          %v9198 = vpack.c.b16 %v9094, %v9092
          %v9199 = vpack.c.b16 %v9095, %v9093
          %v9200 = vpack.c.b16 %v9098, %v9096
          %v9201 = vpack.c.b16 %v9099, %v9097
          %v9202 = vpack.c.b16 %v9102, %v9100
          %v9203 = vpack.c.b16 %v9103, %v9101
          %v9204 = vpack.c.b16 %v9106, %v9104
          %v9205 = vpack.c.b16 %v9107, %v9105
          %v9206 = vpack.c.b16 %v9110, %v9108
          %v9207 = vpack.c.b16 %v9111, %v9109
          %v9208 = vpack.c.b16 %v9114, %v9112
          %v9209 = vpack.c.b16 %v9115, %v9113
          %v9210 = vpack.c.b16 %v9118, %v9116
          %v9211 = vpack.c.b16 %v9119, %v9117
          %v9212 = vpack.c.b16 %v9122, %v9120
          %v9213 = vpack.c.b16 %v9123, %v9121
          %v9214 = vpack.c.b16 %v9126, %v9124
          %v9215 = vpack.c.b16 %v9127, %v9125
          %v9216 = vpack.c.b16 %v9130, %v9128
          %v9217 = vpack.c.b16 %v9131, %v9129
          %v9218 = vpack.c.b16 %v9134, %v9132
          %v9219 = vpack.c.b16 %v9135, %v9133
          %v9220 = vpack.c.b16 %v9138, %v9136
          %v9221 = vpack.c.b16 %v9139, %v9137
          %v9222 = vpack.c.b16 %v9142, %v9140
          %v9223 = vpack.c.b16 %v9143, %v9141
          %v9224 = vpack.c.b16 %v9146, %v9144
          %v9225 = vpack.c.b16 %v9147, %v9145
          %v9226 = vpack.c.b16 %v9150, %v9148
          %v9227 = vpack.c.b16 %v9151, %v9149
          %v9228 = vpack.c.b16 %v9154, %v9152
          %v9229 = vpack.c.b16 %v9155, %v9153
          %v9230 = vpack.c.b16 %v9158, %v9156
          %v9231 = vpack.c.b16 %v9159, %v9157
          %v9232 = vpack.c.b16 %v9162, %v9160
          %v9233 = vpack.c.b16 %v9163, %v9161
          %v9234 = vpack.c.b16 %v9166, %v9164
          %v9235 = vpack.c.b16 %v9167, %v9165
          %v9236 = vpack.c.b16 %v9170, %v9168
          %v9237 = vpack.c.b16 %v9171, %v9169
          %v9238 = vpack.c.b16 %v9174, %v9172
          %v9239 = vpack.c.b16 %v9175, %v9173
          %9304 = vmatpush.bf16.msra.mxu0 %v9190
          %9305 = vmatpush.bf16.msra.mxu0 %v9188
          %9306 = vmatpush.bf16.msra.mxu0 %v9186
          %9307 = vmatpush.bf16.msra.mxu0 %v9184
          %9308 = vmatpush.bf16.msra.mxu0 %v9182
          %9309 = vmatpush.bf16.msra.mxu0 %v9180
          %9310 = vmatpush.bf16.msra.mxu0 %v9178
          %9311 = vmatpush.bf16.msra.mxu0 %v9176
          %9312 = vmatmul.bf16.gmra.mxu0 %v8916
          %v9313 = vpop.f32.mrf.mxu0
          %v9314 = vadd.f32 0.0, %v9313
          %v9315 = vpop.f32.mrf.mxu0
          %v9316 = vadd.f32 0.0, %v9315
          %9317 = vdwg.mxu0
          %9318 = vmatpush.bf16.msra.mxu0 %v9206
          %9319 = vmatpush.bf16.msra.mxu0 %v9204
          %9320 = vmatpush.bf16.msra.mxu0 %v9202
          %9321 = vmatpush.bf16.msra.mxu0 %v9200
          %9322 = vmatpush.bf16.msra.mxu0 %v9198
          %9323 = vmatpush.bf16.msra.mxu0 %v9196
          %9324 = vmatpush.bf16.msra.mxu0 %v9194
          %9325 = vmatpush.bf16.msra.mxu0 %v9192
          %9326 = vmatmul.bf16.gmra.mxu0 %v8917
          %v9327 = vpop.f32.mrf.mxu0
          %v9328 = vadd.f32 %v9314, %v9327
          %v9329 = vpop.f32.mrf.mxu0
          %v9330 = vadd.f32 %v9316, %v9329
          %9331 = vdwg.mxu0
          %9332 = vmatpush.bf16.msra.mxu0 %v9222
          %9333 = vmatpush.bf16.msra.mxu0 %v9220
          %9334 = vmatpush.bf16.msra.mxu0 %v9218
          %9335 = vmatpush.bf16.msra.mxu0 %v9216
          %9336 = vmatpush.bf16.msra.mxu0 %v9214
          %9337 = vmatpush.bf16.msra.mxu0 %v9212
          %9338 = vmatpush.bf16.msra.mxu0 %v9210
          %9339 = vmatpush.bf16.msra.mxu0 %v9208
          %9340 = vmatmul.bf16.gmra.mxu0 %v8918
          %v9341 = vpop.f32.mrf.mxu0
          %v9342 = vadd.f32 %v9328, %v9341
          %v9343 = vpop.f32.mrf.mxu0
          %v9344 = vadd.f32 %v9330, %v9343
          %9345 = vdwg.mxu0
          %9346 = vmatpush.bf16.msra.mxu0 %v9238
          %9347 = vmatpush.bf16.msra.mxu0 %v9236
          %9348 = vmatpush.bf16.msra.mxu0 %v9234
          %9349 = vmatpush.bf16.msra.mxu0 %v9232
          %9350 = vmatpush.bf16.msra.mxu0 %v9230
          %9351 = vmatpush.bf16.msra.mxu0 %v9228
          %9352 = vmatpush.bf16.msra.mxu0 %v9226
          %9353 = vmatpush.bf16.msra.mxu0 %v9224
          %9354 = vmatmul.bf16.gmra.mxu0 %v8919
          %v9355 = vpop.f32.mrf.mxu0
          %v9356 = vadd.f32 %v9342, %v9355
          %v9357 = vpop.f32.mrf.mxu0
          %v9358 = vadd.f32 %v9344, %v9357
          %9359 = vdwg.mxu0
          %9360 = vmatpush.bf16.msra.mxu0 %v9191
          %9361 = vmatpush.bf16.msra.mxu0 %v9189
          %9362 = vmatpush.bf16.msra.mxu0 %v9187
          %9363 = vmatpush.bf16.msra.mxu0 %v9185
          %9364 = vmatpush.bf16.msra.mxu0 %v9183
          %9365 = vmatpush.bf16.msra.mxu0 %v9181
          %9366 = vmatpush.bf16.msra.mxu0 %v9179
          %9367 = vmatpush.bf16.msra.mxu0 %v9177
          %9368 = vmatmul.bf16.gmra.mxu0 %v8916
          %v9369 = vpop.f32.mrf.mxu0
          %v9370 = vadd.f32 0.0, %v9369
          %v9371 = vpop.f32.mrf.mxu0
          %v9372 = vadd.f32 0.0, %v9371
          %9373 = vdwg.mxu0
          %9374 = vmatpush.bf16.msra.mxu0 %v9207
          %9375 = vmatpush.bf16.msra.mxu0 %v9205
          %9376 = vmatpush.bf16.msra.mxu0 %v9203
          %9377 = vmatpush.bf16.msra.mxu0 %v9201
          %9378 = vmatpush.bf16.msra.mxu0 %v9199
          %9379 = vmatpush.bf16.msra.mxu0 %v9197
          %9380 = vmatpush.bf16.msra.mxu0 %v9195
          %9381 = vmatpush.bf16.msra.mxu0 %v9193
          %9382 = vmatmul.bf16.gmra.mxu0 %v8917
          %v9383 = vpop.f32.mrf.mxu0
          %v9384 = vadd.f32 %v9370, %v9383
          %v9385 = vpop.f32.mrf.mxu0
          %v9386 = vadd.f32 %v9372, %v9385
          %9387 = vdwg.mxu0
          %9388 = vmatpush.bf16.msra.mxu0 %v9223
          %9389 = vmatpush.bf16.msra.mxu0 %v9221
          %9390 = vmatpush.bf16.msra.mxu0 %v9219
          %9391 = vmatpush.bf16.msra.mxu0 %v9217
          %9392 = vmatpush.bf16.msra.mxu0 %v9215
          %9393 = vmatpush.bf16.msra.mxu0 %v9213
          %9394 = vmatpush.bf16.msra.mxu0 %v9211
          %9395 = vmatpush.bf16.msra.mxu0 %v9209
          %9396 = vmatmul.bf16.gmra.mxu0 %v8918
          %v9397 = vpop.f32.mrf.mxu0
          %v9398 = vadd.f32 %v9384, %v9397
          %v9399 = vpop.f32.mrf.mxu0
          %v9400 = vadd.f32 %v9386, %v9399
          %9401 = vdwg.mxu0
          %9402 = vmatpush.bf16.msra.mxu0 %v9239
          %9403 = vmatpush.bf16.msra.mxu0 %v9237
          %9404 = vmatpush.bf16.msra.mxu0 %v9235
          %9405 = vmatpush.bf16.msra.mxu0 %v9233
          %9406 = vmatpush.bf16.msra.mxu0 %v9231
          %9407 = vmatpush.bf16.msra.mxu0 %v9229
          %9408 = vmatpush.bf16.msra.mxu0 %v9227
          %9409 = vmatpush.bf16.msra.mxu0 %v9225
          %9410 = vmatmul.bf16.gmra.mxu0 %v8919
          %v9411 = vpop.f32.mrf.mxu0
          %v9412 = vadd.f32 %v9398, %v9411
          %v9413 = vpop.f32.mrf.mxu0
          %v9414 = vadd.f32 %v9400, %v9413
          %9415 = vdwg.mxu0
          %v9416 = vld [vmem:[#allocation11] sm:$0xf]
          %v9417 = vadd.f32 %v9356, %v9358
          %v9418 = vrot.slane %v9417, 4
          %v9419 = vadd.f32 %v9417, %v9418
          %v9420 = vrot.slane %v9419, 2
          %v9421 = vadd.f32 %v9419, %v9420
          %v9422 = vrot.slane %v9421, 1
          %v9423 = vadd.f32 %v9421, %v9422
          %v9424 = vadd.f32 %v9412, %v9414
          %v9425 = vrot.slane %v9424, 4
          %v9426 = vadd.f32 %v9424, %v9425
          %v9427 = vrot.slane %v9426, 2
          %v9428 = vadd.f32 %v9426, %v9427
          %v9429 = vrot.slane %v9428, 1
          %v9430 = vadd.f32 %v9428, %v9429
          %v9431 = vmul.f32 %v9423, %v8737
          %v9432 = vmul.f32 %v9430, %v8737
          %v9433 = vsub.f32 %v9356, %v9431
          %v9434 = vsub.f32 %v9412, %v9432
          %v9435 = vsub.f32 %v9358, %v9431
          %v9436 = vsub.f32 %v9414, %v9432
          %v9437 = vmul.f32 %v9433, %v9433
          %v9438 = vmul.f32 %v9434, %v9434
          %v9439 = vmul.f32 %v9435, %v9435
          %v9440 = vmul.f32 %v9436, %v9436
          %v9441 = vadd.f32 %v9437, %v9439
          %v9442 = vrot.slane %v9441, 4
          %v9443 = vadd.f32 %v9441, %v9442
          %v9444 = vrot.slane %v9443, 2
          %v9445 = vadd.f32 %v9443, %v9444
          %v9446 = vrot.slane %v9445, 1
          %v9447 = vadd.f32 %v9445, %v9446
          %v9448 = vadd.f32 %v9438, %v9440
          %v9449 = vrot.slane %v9448, 4
          %v9450 = vadd.f32 %v9448, %v9449
          %v9451 = vrot.slane %v9450, 2
          %v9452 = vadd.f32 %v9450, %v9451
          %v9453 = vrot.slane %v9452, 1
          %v9454 = vadd.f32 %v9452, %v9453
          %v9455 = vmul.f32 %v9447, %v8737
          %v9456 = vmul.f32 %v9454, %v8737
          %v9457 = vadd.f32 %v9455, 1e-05
          %v9458 = vadd.f32 %v9456, 1e-05
          %v9459 = vrsqrt.pop %v9457
          %v9460 = vmul.f32 %v9459, %v9457
          %v9461 = vmul.f32 %v9460, %v9459
          %v9462 = vmul.f32 0.5, %v9461
          %v9463 = vsub.f32 1.5, %v9462
          %v9464 = vmul.f32 %v9459, %v9463
          %vm9465 = vweird.f32 %v9457
          %vm9466 = vweird.f32 %v9459
          %vm9467 = vmor %vm9465, %vm9466
          %v9468 = vsel %vm9467, %v9459, %v9464
          %v9469 = vrsqrt.pop %v9458
          %v9470 = vmul.f32 %v9469, %v9458
          %v9471 = vmul.f32 %v9470, %v9469
          %v9472 = vmul.f32 0.5, %v9471
          %v9473 = vsub.f32 1.5, %v9472
          %v9474 = vmul.f32 %v9469, %v9473
          %vm9475 = vweird.f32 %v9458
          %vm9476 = vweird.f32 %v9469
          %vm9477 = vmor %vm9475, %vm9476
          %v9478 = vsel %vm9477, %v9469, %v9474
          %v9481 = vrot.slane %v9478, 6
          %v9482 = vsel %vm8841, %v9468, %v9481
          %v9484 = vmul.f32 %v9416, %v9482
          %v9486 = vperm.slane %v9484, 0
          %v9487 = vperm.slane %v9484, 2
          %v9490 = vmul.f32 %v9431, %v9486
          %v9491 = vmul.f32 %v9432, %v9487
          %v9494 = vrot.slane %v9491, 6
          %v9495 = vsel %vm8841, %v9490, %v9494
          %v9496 = vrot.slane %v9495, 7
          %v9498 = vsub.f32 %v9416, %v9496
          %v9499 = vperm.slane %v9486, 0
          %v9500 = vperm.slane %v9487, 0
          %v9501 = vmul.f32 %v9356, %v9499
          %v9502 = vmul.f32 %v9412, %v9500
          %v9503 = vmul.f32 %v9358, %v9499
          %v9504 = vmul.f32 %v9414, %v9500
          %v9506 = vperm.slane %v9498, 1
          %v9507 = vperm.slane %v9498, 3
          %v9510 = vperm.slane %v9506, 1
          %v9511 = vperm.slane %v9507, 1
          %v9512 = vadd.f32 %v9501, %v9510
          %v9513 = vadd.f32 %v9502, %v9511
          %v9514 = vadd.f32 %v9503, %v9510
          %v9515 = vadd.f32 %v9504, %v9511
          %v9516 = vmax.f32 %v9512, 0.0
          %v9517 = vmax.f32 %v9513, 0.0
          %v9518 = vmax.f32 %v9514, 0.0
          %v9519 = vmax.f32 %v9515, 0.0
          %v9520 = vpack.c.bf16 %v9518, %v9516
          %v9521 = vpack.c.bf16 %v9519, %v9517
          %v9522 = vld [vmem:[#allocation12] sm:$0xf]
          %v9523 = vld [vmem:[#allocation12 + $0x4] sm:$0xf]
          %v9524 = vld [vmem:[#allocation12 + $0x8] sm:$0xf]
          %v9525 = vld [vmem:[#allocation12 + $0xc] sm:$0xf]
          %v9526 = vld [vmem:[#allocation12 + $0x10] sm:$0xf]
          %v9527 = vld [vmem:[#allocation12 + $0x14] sm:$0xf]
          %v9528 = vld [vmem:[#allocation12 + $0x18] sm:$0xf]
          %v9529 = vld [vmem:[#allocation12 + $0x1c] sm:$0xf]
          %v9530 = vld [vmem:[#allocation12 + $0x20] sm:$0xf]
          %v9531 = vld [vmem:[#allocation12 + $0x24] sm:$0xf]
          %v9532 = vld [vmem:[#allocation12 + $0x28] sm:$0xf]
          %v9533 = vld [vmem:[#allocation12 + $0x2c] sm:$0xf]
          %v9534 = vld [vmem:[#allocation12 + $0x30] sm:$0xf]
          %v9535 = vld [vmem:[#allocation12 + $0x34] sm:$0xf]
          %v9536 = vld [vmem:[#allocation12 + $0x38] sm:$0xf]
          %v9537 = vld [vmem:[#allocation12 + $0x3c] sm:$0xf]
          %v9538 = vld [vmem:[#allocation12 + $0x40] sm:$0xf]
          %v9539 = vld [vmem:[#allocation12 + $0x44] sm:$0xf]
          %v9540 = vld [vmem:[#allocation12 + $0x48] sm:$0xf]
          %v9541 = vld [vmem:[#allocation12 + $0x4c] sm:$0xf]
          %v9542 = vld [vmem:[#allocation12 + $0x50] sm:$0xf]
          %v9543 = vld [vmem:[#allocation12 + $0x54] sm:$0xf]
          %v9544 = vld [vmem:[#allocation12 + $0x58] sm:$0xf]
          %v9545 = vld [vmem:[#allocation12 + $0x5c] sm:$0xf]
          %v9546 = vld [vmem:[#allocation12 + $0x60] sm:$0xf]
          %v9547 = vld [vmem:[#allocation12 + $0x64] sm:$0xf]
          %v9548 = vld [vmem:[#allocation12 + $0x68] sm:$0xf]
          %v9549 = vld [vmem:[#allocation12 + $0x6c] sm:$0xf]
          %v9550 = vld [vmem:[#allocation12 + $0x70] sm:$0xf]
          %v9551 = vld [vmem:[#allocation12 + $0x74] sm:$0xf]
          %v9552 = vld [vmem:[#allocation12 + $0x78] sm:$0xf]
          %v9553 = vld [vmem:[#allocation12 + $0x7c] sm:$0xf]
          %v9554 = vld [vmem:[#allocation14] sm:$0x1]
          %v9556 = vperm.slane %v9554, 0
          %v9590 = vunpack.c.l.b16 %v9522
          %v9591 = vunpack.c.l.b16 %v9523
          %v9592 = vunpack.c.l.b16 %v9524
          %v9593 = vunpack.c.l.b16 %v9525
          %v9594 = vunpack.c.l.b16 %v9526
          %v9595 = vunpack.c.l.b16 %v9527
          %v9596 = vunpack.c.l.b16 %v9528
          %v9597 = vunpack.c.l.b16 %v9529
          %v9598 = vunpack.c.l.b16 %v9530
          %v9599 = vunpack.c.l.b16 %v9531
          %v9600 = vunpack.c.l.b16 %v9532
          %v9601 = vunpack.c.l.b16 %v9533
          %v9602 = vunpack.c.l.b16 %v9534
          %v9603 = vunpack.c.l.b16 %v9535
          %v9604 = vunpack.c.l.b16 %v9536
          %v9605 = vunpack.c.l.b16 %v9537
          %v9606 = vunpack.c.l.b16 %v9538
          %v9607 = vunpack.c.l.b16 %v9539
          %v9608 = vunpack.c.l.b16 %v9540
          %v9609 = vunpack.c.l.b16 %v9541
          %v9610 = vunpack.c.l.b16 %v9542
          %v9611 = vunpack.c.l.b16 %v9543
          %v9612 = vunpack.c.l.b16 %v9544
          %v9613 = vunpack.c.l.b16 %v9545
          %v9614 = vunpack.c.l.b16 %v9546
          %v9615 = vunpack.c.l.b16 %v9547
          %v9616 = vunpack.c.l.b16 %v9548
          %v9617 = vunpack.c.l.b16 %v9549
          %v9618 = vunpack.c.l.b16 %v9550
          %v9619 = vunpack.c.l.b16 %v9551
          %v9620 = vunpack.c.l.b16 %v9552
          %v9621 = vunpack.c.l.b16 %v9553
          %v9622 = vpack.c.b16 %v9591, %v9590
          %v9623 = vpack.c.b16 %v9593, %v9592
          %v9624 = vpack.c.b16 %v9595, %v9594
          %v9625 = vpack.c.b16 %v9597, %v9596
          %v9626 = vpack.c.b16 %v9599, %v9598
          %v9627 = vpack.c.b16 %v9601, %v9600
          %v9628 = vpack.c.b16 %v9603, %v9602
          %v9629 = vpack.c.b16 %v9605, %v9604
          %v9630 = vpack.c.b16 %v9607, %v9606
          %v9631 = vpack.c.b16 %v9609, %v9608
          %v9632 = vpack.c.b16 %v9611, %v9610
          %v9633 = vpack.c.b16 %v9613, %v9612
          %v9634 = vpack.c.b16 %v9615, %v9614
          %v9635 = vpack.c.b16 %v9617, %v9616
          %v9636 = vpack.c.b16 %v9619, %v9618
          %v9637 = vpack.c.b16 %v9621, %v9620
          %9654 = vmatpush.bf16.msra.mxu0 %v9629
          %9655 = vmatpush.bf16.msra.mxu0 %v9628
          %9656 = vmatpush.bf16.msra.mxu0 %v9627
          %9657 = vmatpush.bf16.msra.mxu0 %v9626
          %9658 = vmatpush.bf16.msra.mxu0 %v9625
          %9659 = vmatpush.bf16.msra.mxu0 %v9624
          %9660 = vmatpush.bf16.msra.mxu0 %v9623
          %9661 = vmatpush.bf16.msra.mxu0 %v9622
          %9662 = vmatmul.bf16.gmra.mxu0 %v9520
          %v9663 = vpop.f32.mrf.mxu0
          %v9664 = vadd.f32 %v9556, %v9663
          %v9665 = vpop.f32.mrf.mxu0
          %v9666 = vadd.f32 %v9556, %v9665
          %9667 = vdwg.mxu0
          %9668 = vmatpush.bf16.msra.mxu0 %v9637
          %9669 = vmatpush.bf16.msra.mxu0 %v9636
          %9670 = vmatpush.bf16.msra.mxu0 %v9635
          %9671 = vmatpush.bf16.msra.mxu0 %v9634
          %9672 = vmatpush.bf16.msra.mxu0 %v9633
          %9673 = vmatpush.bf16.msra.mxu0 %v9632
          %9674 = vmatpush.bf16.msra.mxu0 %v9631
          %9675 = vmatpush.bf16.msra.mxu0 %v9630
          %9676 = vmatmul.bf16.gmra.mxu0 %v9521
          %v9677 = vpop.f32.mrf.mxu0
          %v9678 = vadd.f32 %v9664, %v9677
          %v9679 = vpop.f32.mrf.mxu0
          %v9680 = vadd.f32 %v9666, %v9679
          %9681 = vdwg.mxu0
          %9682 = vst [vmem:[#allocation15] sm:$0xff] %v9678
          %9683 = vst [vmem:[#allocation15 + $0x8] sm:$0xff] %v9680
        $region84: #{tpu_custom_call.1} parent=47 // pred_fallthru
          _
        // Predicated region
        $region85: #{tpu_custom_call.1} parent=47 // pred_check
          %p9684 = pneg %p190
        $region86: #{tpu_custom_call.1} parent=47 // pred_check_branch
          %9686 = sbr.rel (%p9684) target = $region88
        $region87: #{tpu_custom_call.1} parent=47 // pred_region
          %9688 = vsyncadd [#allocation5], 0
          %s9689 = sshll.u32 [#allocation15], 4
          %s9690 = int_to_ptr.vmem [resolvable:$true] %s9689
          %s9691 = sshll.u32 %s7, 4
          %s9692 = int_to_ptr.hbm [resolvable:$true] %s9691
          %9697 = dma.vmem_to_hbm [thread:$0]  %s9690, 256, %s9692, [#allocation5], 128, 128, 8
        $region88: #{tpu_custom_call.1} parent=47 // pred_fallthru
          _
        // Predicated region
        $region89: #{tpu_custom_call.1} parent=47 // pred_check
          %p9698 = pneg %p190
        $region90: #{tpu_custom_call.1} parent=47 // pred_check_branch
          %9700 = sbr.rel (%p9698) target = $region92
        $region91: #{tpu_custom_call.1} parent=47 // pred_region
          %9702 = dma.done [#allocation5], 256
        $region92: #{tpu_custom_call.1} parent=47 // pred_fallthru
          _
      $region48: #{tpu_custom_call.1} parent=5 // pred_fallthru
        _
      %p9703 = scmp.le.s32.totalorder 2, %s20
      // Predicated region
      $region93: #{tpu_custom_call.1} parent=5 // pred_check
        %p9704 = pneg %p9703
      $region94: #{tpu_custom_call.1} parent=5 // pred_check_branch
        %9706 = sbr.rel (%p9704) target = $region96
      $region95: #{tpu_custom_call.1} parent=5 // pred_region
        %s9707 = ssub.s32 %s20, 2
      $region96: #{tpu_custom_call.1} parent=5 // pred_fallthru
        _
    $region6: #{tpu_custom_call.1} parent=1 // loop_footer
      %s24 = sadd.s32 1, %s20
    $region7: #{tpu_custom_call.1} parent=1 // loop_footer_branch
      %19 = sbr.rel target = $region3
    $region8: #{tpu_custom_call.1} parent=1 // loop_exit
      _
    %9708 = vsyncpa [#allocation4], 1
    %s9709 = scalar_lea.sflag [#allocation4], 1
    %9710 = vsyncpa %s9709, 1
    %9711 = vsyncpa [#allocation7], 1
    %9712 = vsyncpa [#allocation10], 1
    %9713 = vsyncpa [#allocation13], 1
    %9714 = vsyncpa [#allocation5], 1
    %s9715 = scalar_lea.sflag [#allocation5], 1
    %9716 = vsyncpa %s9715, 1

</llo_original>
